<compile_context>
chip_gen: v7x
topology: tpu7x:2x2x1
jax: 0.10.0
libtpu: 0.0.40
codegen_flags: <defaults>
</compile_context>

<pallas_src>
import numpy as np
import jax
import jax.numpy as jnp
from jax.experimental import pallas as pl
from jax.experimental.pallas import tpu as pltpu


# ----------------------------------------------------------------------------
# Kernel
# ----------------------------------------------------------------------------
def _make_kernel(C, inv_ns, pools):
    bf16 = jnp.bfloat16

    def dotf(a, b):
        return jnp.dot(a, b, preferred_element_type=jnp.float32)

    def kernel(*refs):
        *in_refs, out_ref, sbuf = refs          # sbuf: VMEM shift buffer (f32)
        it = iter(in_refs)
        nxt = lambda: next(it)

        def conv_block(a, inv_n, pool):
            wb = nxt()                          # (3, Li, Lo)  bf16  banded conv weights
            vec = nxt()[...]                    # (3, Lo)      f32   [bias_tiled, gamma, beta]
            srow = nxt()[...]                   # (Bt, R)      f32   valid-row sum per sample
            rep = nxt()[...]                    # (R, Bt)      f32   = srow.T (also zeroes tails)
            rmat = nxt()[...]                   # (Lo, C)      f32   per-channel column sum
            tmat = nxt()[...]                   # (C, Lo)      f32   per-channel column tile

            nrows, nlin = a.shape

            # ---- conv 3x3: kh row shifts via shift-buffer offset reads ----
            sbuf[0:nrows, 0:nlin] = a
            sbuf[nrows:nrows + 8, 0:nlin] = jnp.zeros((8, nlin), jnp.float32)
            y = dotf(a.astype(bf16), wb[0])
            y = y + dotf(sbuf[1:nrows + 1, 0:nlin].astype(bf16), wb[1])
            y = y + dotf(sbuf[2:nrows + 2, 0:nlin].astype(bf16), wb[2])
            y = y + vec[0:1, :]                 # conv bias (tiled over columns)

            # ---- InstanceNorm (single-pass stats, all f32) + affine + ReLU ----
            s1 = dotf(srow, dotf(y, rmat))      # (Bt, C) per-(sample,channel) sum
            s2 = dotf(srow, dotf(y * y, rmat))  # ... and sum of squares
            mean = s1 * inv_n
            var = jnp.maximum(s2 * inv_n - mean * mean, 0.0)
            scale = jax.lax.rsqrt(var + 1e-5) * vec[1:2, 0:C]
            shift = vec[2:3, 0:C] - mean * scale
            scale_f = dotf(dotf(rep, scale), tmat)   # broadcast back; 0 on garbage rows
            shift_f = dotf(dotf(rep, shift), tmat)
            y = jnp.maximum(y * scale_f + shift_f, 0.0)
            if not pool:
                return y

            # ---- 2x2 maxpool: columns (lanes) first, then rows ----
            pcol = nxt()                        # (2, Lo, Lp)  bf16 even/odd column selections
            prow = nxt()                        # (2, Rp, R)   bf16 even/odd row selections
            y16 = y.astype(bf16)
            hm = jnp.maximum(dotf(y16, pcol[0]), dotf(y16, pcol[1])).astype(bf16)
            return jnp.maximum(dotf(prow[0], hm), dotf(prow[1], hm))

        a = nxt()[...]                          # x tile: (Bt*H, W) f32
        for inv_n, pool in zip(inv_ns, pools):
            a = conv_block(a, inv_n, pool)

        # ---- fc (torch NCHW flatten order folded into weight slabs) + sigmoid ----
        fsel = nxt()                            # (3, Bt, R3)  f32 row selections
        fwm = nxt()                             # (3, 3C, M)   f32 weight slabs
        fb = nxt()[...]                         # (1, M)       f32
        z = dotf(dotf(fsel[0], a), fwm[0])
        z = z + dotf(dotf(fsel[1], a), fwm[1])
        z = z + dotf(dotf(fsel[2], a), fwm[2])
        z = z + fb
        out_ref[...] = 1.0 / (1.0 + jnp.exp(-z))

    return kernel


# ----------------------------------------------------------------------------
# Operand construction (wrapper-side weight/layout plumbing, plain numpy)
# ----------------------------------------------------------------------------
def _build_operands(params, C, M, Bt, dims):
    (H, W, H1, W1, P1h, P1w, H2, W2, P2h, P2w, H3, W3) = dims
    f32 = np.float32
    eye_bt = np.eye(Bt, dtype=f32)

    def kron(m):
        return np.kron(eye_bt, m.astype(f32))

    def banded_w(w_oihw, kh, w_in, c_in):       # (w_in*c_in, w_out*C)
        w_out = w_in - 2
        wk = np.asarray(w_oihw, f32)            # (C_out, C_in, 3, 3)
        m = np.zeros((w_in * c_in, w_out * C), f32)
        for j in range(w_out):
            for kw in range(3):
                m[(j + kw) * c_in:(j + kw + 1) * c_in,
                  j * C:(j + 1) * C] = wk[:, :, kh, kw].T
        return m

    def conv_w(wkey, w_in, c_in):
        return np.stack([banded_w(params[wkey], kh, w_in, c_in) for kh in range(3)])

    def vec_rows(bkey, gkey, ekey, w_out):      # (3, w_out*C): bias row, gamma, beta
        v = np.zeros((3, w_out * C), f32)
        v[0] = np.tile(np.asarray(params[bkey], f32), w_out)
        v[1, :C] = np.asarray(params[gkey], f32)
        v[2, :C] = np.asarray(params[ekey], f32)
        return v

    def srow_mask(h_in, valid):                 # (Bt, Bt*h_in), ones on valid rows only
        m = np.zeros((1, h_in), f32)
        m[0, :valid] = 1.0
        return kron(m)

    def chan_sum(w_out):                        # (w_out*C, C)
        r = np.zeros((w_out * C, C), f32)
        for j in range(w_out):
            r[j * C + np.arange(C), np.arange(C)] = 1.0
        return r

    def pool_row(hp, h_in):                     # (2, Bt*hp, Bt*h_in)
        s = np.zeros((2, hp, h_in), f32)
        s[0, np.arange(hp), 2 * np.arange(hp)] = 1.0
        s[1, np.arange(hp), 2 * np.arange(hp) + 1] = 1.0
        return np.stack([kron(s[0]), kron(s[1])])

    def pool_col(wp):                           # (2, 2*wp*C, wp*C)
        s = np.zeros((2, 2 * wp * C, wp * C), f32)
        for par in range(2):
            for j in range(wp):
                s[par, (2 * j + par) * C + np.arange(C), j * C + np.arange(C)] = 1.0
        return s

    def block_ops(wkey, bkey, gkey, ekey, h_in, w_in, c_in, pool):
        h_out, w_out = h_in - 2, w_in - 2
        r = chan_sum(w_out)
        srow = srow_mask(h_in, h_out)
        ops = [(conv_w(wkey, w_in, c_in), jnp.bfloat16),
               (vec_rows(bkey, gkey, ekey, w_out), None),
               (srow, None),
               (srow.T.copy(), None),
               (r, None),
               (r.T.copy(), None)]
        if pool:
            ops.append((pool_col(w_out // 2), jnp.bfloat16))
            ops.append((pool_row(h_out // 2, h_in), jnp.bfloat16))
        return ops

    def fc_ops():
        fw = np.asarray(params['fcw'], f32)     # (M, C*9), torch NCHW flatten order
        fsel = np.zeros((3, Bt, Bt * P2h), f32)
        fsl = np.zeros((3, 3 * C, M), f32)
        for h in range(3):
            sel = np.zeros((1, P2h), f32)
            sel[0, h] = 1.0
            fsel[h] = kron(sel)
            for w in range(3):
                for c in range(C):
                    fsl[h, w * C + c, :] = fw[:, c * 9 + h * 3 + w]
        return [(fsel, None), (fsl, None),
                (np.asarray(params['fcb'], f32)[None, :], None)]

    ops = []
    ops += block_ops('w1', 'b1', 'g1', 'e1', H, W, 1, True)
    ops += block_ops('w2', 'b2', 'g2', 'e2', P1h, P1w, C, True)
    ops += block_ops('w3', 'b3', 'g3', 'e3', P2h, P2w, C, False)
    ops += fc_ops()
    return [jnp.asarray(a, dtype=(dt if dt is not None else jnp.float32))
            for a, dt in ops]


# ----------------------------------------------------------------------------
# Wrapper
# ----------------------------------------------------------------------------
def nm_forward_pallas(x_nchw, params, C, M):
    B, Cin, H, W = x_nchw.shape
    assert Cin == 1
    H1, W1 = H - 2, W - 2
    P1h, P1w = H1 // 2, W1 // 2
    H2, W2 = P1h - 2, P1w - 2
    P2h, P2w = H2 // 2, W2 // 2
    H3, W3 = P2h - 2, P2w - 2
    assert (H3, W3) == (3, 3), "NM.fc expects a 3x3 spatial map before flatten"
    dims = (H, W, H1, W1, P1h, P1w, H2, W2, P2h, P2w, H3, W3)

    # Batch tile: multiples of 8 (legal block shapes).  Prefer 32 (MXU-friendly
    # M dims), but keep >= 2 grid steps whenever B > 8 so megacore / v7x's two
    # TensorCores both get work; B <= 8 stays a single step (no padded extra
    # work on single-TC v5e/v6e).
    if B <= 8:
        Bt = 8
    else:
        Bt = 32
        while Bt > 8 and (B + Bt - 1) // Bt < 2:
            Bt //= 2
    Bp = ((B + Bt - 1) // Bt) * Bt

    x = x_nchw.astype(jnp.float32).reshape(B, H, W)     # squeeze the size-1 channel
    if Bp != B:
        x = jnp.concatenate([x, jnp.zeros((Bp - B, H, W), jnp.float32)], axis=0)
    x_flat = x.reshape(Bp * H, W)                       # rows=(sample,row), lanes=W

    ops = _build_operands(params, C, M, Bt, dims)
    ins = [x_flat] + ops

    in_specs = [pl.BlockSpec((Bt * H, W), lambda b: (b, 0))]
    in_specs += [pl.BlockSpec(tuple(o.shape), lambda b, n=o.ndim: (0,) * n)
                 for o in ops]
    out_spec = pl.BlockSpec((Bt, M), lambda b: (b, 0))

    scr_lanes = max(W, P1w * C, P2w * C)
    scratch = [pltpu.VMEM((Bt * H + 8, scr_lanes), jnp.float32)]

    kernel = _make_kernel(
        C,
        (1.0 / (H1 * W1), 1.0 / (H2 * W2), 1.0 / (H3 * W3)),
        (True, True, False))

    grid_spec = pltpu.PrefetchScalarGridSpec(
        num_scalar_prefetch=0,
        grid=(Bp // Bt,),
        in_specs=in_specs,
        out_specs=out_spec,
        scratch_shapes=scratch)

    out = pl.pallas_call(
        kernel,
        out_shape=jax.ShapeDtypeStruct((Bp, M), jnp.float32),
        grid_spec=grid_spec,
        compiler_params=pltpu.CompilerParams(
            dimension_semantics=("parallel",),
            vmem_limit_bytes=32 * 1024 * 1024),
    )(*ins)
    return out[:B]


# ----------------------------------------------------------------------------
# Pure-JAX reference (mirrors the PyTorch module, NCHW throughout)
# ----------------------------------------------------------------------------
def nm_forward_ref(x, p):
    hi = jax.lax.Precision.HIGHEST

    def block(x, w, b, g, e, pool):
        y = jax.lax.conv_general_dilated(
            x, w, (1, 1), 'VALID',
            dimension_numbers=('NCHW', 'OIHW', 'NCHW'), precision=hi)
        y = y + b[None, :, None, None]
        m = jnp.mean(y, axis=(2, 3), keepdims=True)
        v = jnp.mean((y - m) ** 2, axis=(2, 3), keepdims=True)
        y = (y - m) * jax.lax.rsqrt(v + 1e-5) * g[None, :, None, None] + e[None, :, None, None]
        y = jnp.maximum(y, 0.0)
        if pool:
            y = jax.lax.reduce_window(y, -jnp.inf, jax.lax.max,
                                      (1, 1, 2, 2), (1, 1, 2, 2), 'VALID')
        return y

    y = block(x, p['w1'], p['b1'], p['g1'], p['e1'], True)
    y = block(y, p['w2'], p['b2'], p['g2'], p['e2'], True)
    y = block(y, p['w3'], p['b3'], p['g3'], p['e3'], False)
    flat = y.reshape(y.shape[0], -1)
    z = jnp.dot(flat, p['fcw'].T, precision=hi) + p['fcb']
    return jax.nn.sigmoid(z)


if __name__ == "__main__":
    C, M = 8, 16                       # channels, mask_size
    B, H, W = 2, 26, 26                # 26x26 input -> 3x3 before the FC, as NM requires

    key = jax.random.PRNGKey(0)
    ks = jax.random.split(key, 16)
    nrm = lambda k, s, sc: sc * jax.random.normal(k, s, jnp.float32)
    params = {
        'w1': nrm(ks[0], (C, 1, 3, 3), 0.3), 'b1': nrm(ks[1], (C,), 0.1),
        'g1': 1.0 + nrm(ks[2], (C,), 0.1),   'e1': nrm(ks[3], (C,), 0.1),
        'w2': nrm(ks[4], (C, C, 3, 3), 0.2), 'b2': nrm(ks[5], (C,), 0.1),
        'g2': 1.0 + nrm(ks[6], (C,), 0.1),   'e2': nrm(ks[7], (C,), 0.1),
        'w3': nrm(ks[8], (C, C, 3, 3), 0.2), 'b3': nrm(ks[9], (C,), 0.1),
        'g3': 1.0 + nrm(ks[10], (C,), 0.1),  'e3': nrm(ks[11], (C,), 0.1),
        'fcw': nrm(ks[12], (M, C * 3 * 3), 0.2), 'fcb': nrm(ks[13], (M,), 0.1),
    }
    x = jax.random.normal(ks[14], (B, 1, H, W), jnp.float32)

    out = nm_forward_pallas(x, params, C, M)
    jax.block_until_ready(out)

    ref = nm_forward_ref(x, params)
    assert out.shape == (B, M)
    # bf16 MXU operands with f32 accumulation: allow a slightly looser bound.
    assert float(jnp.max(jnp.abs(out - ref))) < 3e-2, "mismatch vs pure-JAX reference"

    print("KERNEL_OK")
</pallas_src>

<mosaic_0001>
module attributes {stable_mosaic.version = 11 : i64} {
  func.func @kernel(%arg0: i32, %arg1: memref<208x26xf32, #tpu.memory_space<vmem>>, %arg2: memref<3x26x192xbf16, #tpu.memory_space<vmem>>, %arg3: memref<3x192xf32, #tpu.memory_space<vmem>>, %arg4: memref<8x208xf32, #tpu.memory_space<vmem>>, %arg5: memref<208x8xf32, #tpu.memory_space<vmem>>, %arg6: memref<192x8xf32, #tpu.memory_space<vmem>>, %arg7: memref<8x192xf32, #tpu.memory_space<vmem>>, %arg8: memref<2x192x96xbf16, #tpu.memory_space<vmem>>, %arg9: memref<2x96x208xbf16, #tpu.memory_space<vmem>>, %arg10: memref<3x96x80xbf16, #tpu.memory_space<vmem>>, %arg11: memref<3x80xf32, #tpu.memory_space<vmem>>, %arg12: memref<8x96xf32, #tpu.memory_space<vmem>>, %arg13: memref<96x8xf32, #tpu.memory_space<vmem>>, %arg14: memref<80x8xf32, #tpu.memory_space<vmem>>, %arg15: memref<8x80xf32, #tpu.memory_space<vmem>>, %arg16: memref<2x80x40xbf16, #tpu.memory_space<vmem>>, %arg17: memref<2x40x96xbf16, #tpu.memory_space<vmem>>, %arg18: memref<3x40x24xbf16, #tpu.memory_space<vmem>>, %arg19: memref<3x24xf32, #tpu.memory_space<vmem>>, %arg20: memref<8x40xf32, #tpu.memory_space<vmem>>, %arg21: memref<40x8xf32, #tpu.memory_space<vmem>>, %arg22: memref<24x8xf32, #tpu.memory_space<vmem>>, %arg23: memref<8x24xf32, #tpu.memory_space<vmem>>, %arg24: memref<3x8x40xf32, #tpu.memory_space<vmem>>, %arg25: memref<3x24x16xf32, #tpu.memory_space<vmem>>, %arg26: memref<1x16xf32, #tpu.memory_space<vmem>>, %arg27: memref<8x16xf32, #tpu.memory_space<vmem>>, %arg28: memref<216x96xf32, #tpu.memory_space<vmem>>) attributes {dimension_semantics = [#tpu.dimension_semantics<parallel>], iteration_bounds = array<i64: 1>, scalar_prefetch = 0 : i64, scratch_operands = 1 : i64, tpu.core_type = #tpu.core_type<tc>, window_params = [{transform_indices = @transform_0, window_bounds = array<i64: 208, 26>}, {pipeline_mode = #tpu.pipeline_mode<synchronous>, transform_indices = @transform_1, window_bounds = array<i64: 3, 26, 192>}, {pipeline_mode = #tpu.pipeline_mode<synchronous>, transform_indices = @transform_2, window_bounds = array<i64: 3, 192>}, {pipeline_mode = #tpu.pipeline_mode<synchronous>, transform_indices = @transform_3, window_bounds = array<i64: 8, 208>}, {pipeline_mode = #tpu.pipeline_mode<synchronous>, transform_indices = @transform_4, window_bounds = array<i64: 208, 8>}, {pipeline_mode = #tpu.pipeline_mode<synchronous>, transform_indices = @transform_5, window_bounds = array<i64: 192, 8>}, {pipeline_mode = #tpu.pipeline_mode<synchronous>, transform_indices = @transform_6, window_bounds = array<i64: 8, 192>}, {pipeline_mode = #tpu.pipeline_mode<synchronous>, transform_indices = @transform_7, window_bounds = array<i64: 2, 192, 96>}, {pipeline_mode = #tpu.pipeline_mode<synchronous>, transform_indices = @transform_8, window_bounds = array<i64: 2, 96, 208>}, {pipeline_mode = #tpu.pipeline_mode<synchronous>, transform_indices = @transform_9, window_bounds = array<i64: 3, 96, 80>}, {pipeline_mode = #tpu.pipeline_mode<synchronous>, transform_indices = @transform_10, window_bounds = array<i64: 3, 80>}, {pipeline_mode = #tpu.pipeline_mode<synchronous>, transform_indices = @transform_11, window_bounds = array<i64: 8, 96>}, {pipeline_mode = #tpu.pipeline_mode<synchronous>, transform_indices = @transform_12, window_bounds = array<i64: 96, 8>}, {pipeline_mode = #tpu.pipeline_mode<synchronous>, transform_indices = @transform_13, window_bounds = array<i64: 80, 8>}, {pipeline_mode = #tpu.pipeline_mode<synchronous>, transform_indices = @transform_14, window_bounds = array<i64: 8, 80>}, {pipeline_mode = #tpu.pipeline_mode<synchronous>, transform_indices = @transform_15, window_bounds = array<i64: 2, 80, 40>}, {pipeline_mode = #tpu.pipeline_mode<synchronous>, transform_indices = @transform_16, window_bounds = array<i64: 2, 40, 96>}, {pipeline_mode = #tpu.pipeline_mode<synchronous>, transform_indices = @transform_17, window_bounds = array<i64: 3, 40, 24>}, {pipeline_mode = #tpu.pipeline_mode<synchronous>, transform_indices = @transform_18, window_bounds = array<i64: 3, 24>}, {pipeline_mode = #tpu.pipeline_mode<synchronous>, transform_indices = @transform_19, window_bounds = array<i64: 8, 40>}, {pipeline_mode = #tpu.pipeline_mode<synchronous>, transform_indices = @transform_20, window_bounds = array<i64: 40, 8>}, {pipeline_mode = #tpu.pipeline_mode<synchronous>, transform_indices = @transform_21, window_bounds = array<i64: 24, 8>}, {pipeline_mode = #tpu.pipeline_mode<synchronous>, transform_indices = @transform_22, window_bounds = array<i64: 8, 24>}, {pipeline_mode = #tpu.pipeline_mode<synchronous>, transform_indices = @transform_23, window_bounds = array<i64: 3, 8, 40>}, {pipeline_mode = #tpu.pipeline_mode<synchronous>, transform_indices = @transform_24, window_bounds = array<i64: 3, 24, 16>}, {pipeline_mode = #tpu.pipeline_mode<synchronous>, transform_indices = @transform_25, window_bounds = array<i64: 1, 16>}, {transform_indices = @transform_26, window_bounds = array<i64: 8, 16>}]} {
    %c0 = arith.constant 0 : index
    %c0_0 = arith.constant 0 : index
    %0 = vector.load %arg1[%c0, %c0_0] : memref<208x26xf32, #tpu.memory_space<vmem>>, vector<208x26xf32>
    %c0_1 = arith.constant 0 : index
    %c0_2 = arith.constant 0 : index
    %1 = vector.load %arg3[%c0_1, %c0_2] : memref<3x192xf32, #tpu.memory_space<vmem>>, vector<3x192xf32>
    %c0_3 = arith.constant 0 : index
    %c0_4 = arith.constant 0 : index
    %2 = vector.load %arg4[%c0_3, %c0_4] : memref<8x208xf32, #tpu.memory_space<vmem>>, vector<8x208xf32>
    %c0_5 = arith.constant 0 : index
    %c0_6 = arith.constant 0 : index
    %3 = vector.load %arg5[%c0_5, %c0_6] : memref<208x8xf32, #tpu.memory_space<vmem>>, vector<208x8xf32>
    %c0_7 = arith.constant 0 : index
    %c0_8 = arith.constant 0 : index
    %4 = vector.load %arg6[%c0_7, %c0_8] : memref<192x8xf32, #tpu.memory_space<vmem>>, vector<192x8xf32>
    %c0_9 = arith.constant 0 : index
    %c0_10 = arith.constant 0 : index
    %5 = vector.load %arg7[%c0_9, %c0_10] : memref<8x192xf32, #tpu.memory_space<vmem>>, vector<8x192xf32>
    %c0_11 = arith.constant 0 : index
    %c0_12 = arith.constant 0 : index
    %6 = vector.load %arg28[%c0_11, %c0_12] : memref<216x96xf32, #tpu.memory_space<vmem>>, vector<208x26xf32>
    tpu.vector_store %arg28[%c0_11, %c0_12], %0 {strides = array<i32>} : memref<216x96xf32, #tpu.memory_space<vmem>>, vector<208x26xf32>,
    %cst = arith.constant 0.000000e+00 : f32
    %7 = vector.broadcast %cst : f32 to vector<8x26xf32>
    %c208 = arith.constant 208 : index
    %c0_13 = arith.constant 0 : index
    %8 = vector.load %arg28[%c208, %c0_13] : memref<216x96xf32, #tpu.memory_space<vmem>>, vector<8x26xf32>
    tpu.vector_store %arg28[%c208, %c0_13], %7 {strides = array<i32>} : memref<216x96xf32, #tpu.memory_space<vmem>>, vector<8x26xf32>,
    %9 = arith.truncf %0 : vector<208x26xf32> to vector<208x26xbf16>
    %c0_14 = arith.constant 0 : index
    %c0_15 = arith.constant 0 : index
    %c0_16 = arith.constant 0 : index
    %10 = vector.load %arg2[%c0_14, %c0_15, %c0_16] : memref<3x26x192xbf16, #tpu.memory_space<vmem>>, vector<1x26x192xbf16>
    %11 = vector.shape_cast %10 : vector<1x26x192xbf16> to vector<26x192xbf16>
    %cst_17 = arith.constant dense<0.000000e+00> : vector<208x192xf32>
    %12 = tpu.matmul %9, %11, %cst_17 {dimension_numbers = #tpu.dot_dimension_numbers<[1], [0], [0], [1], [0, 0, 1, 1], [], []>} : vector<208x26xbf16>, vector<26x192xbf16>, vector<208x192xf32> -> vector<208x192xf32>
    %c1 = arith.constant 1 : index
    %c0_18 = arith.constant 0 : index
    %13 = vector.load %arg28[%c1, %c0_18] : memref<216x96xf32, #tpu.memory_space<vmem>>, vector<208x26xf32>
    %14 = arith.truncf %13 : vector<208x26xf32> to vector<208x26xbf16>
    %c1_19 = arith.constant 1 : index
    %c0_20 = arith.constant 0 : index
    %c0_21 = arith.constant 0 : index
    %15 = vector.load %arg2[%c1_19, %c0_20, %c0_21] : memref<3x26x192xbf16, #tpu.memory_space<vmem>>, vector<1x26x192xbf16>
    %16 = vector.shape_cast %15 : vector<1x26x192xbf16> to vector<26x192xbf16>
    %cst_22 = arith.constant dense<0.000000e+00> : vector<208x192xf32>
    %17 = tpu.matmul %14, %16, %cst_22 {dimension_numbers = #tpu.dot_dimension_numbers<[1], [0], [0], [1], [0, 0, 1, 1], [], []>} : vector<208x26xbf16>, vector<26x192xbf16>, vector<208x192xf32> -> vector<208x192xf32>
    %18 = arith.addf %12, %17 : vector<208x192xf32>
    %c2 = arith.constant 2 : index
    %c0_23 = arith.constant 0 : index
    %19 = vector.load %arg28[%c2, %c0_23] : memref<216x96xf32, #tpu.memory_space<vmem>>, vector<208x26xf32>
    %20 = arith.truncf %19 : vector<208x26xf32> to vector<208x26xbf16>
    %c2_24 = arith.constant 2 : index
    %c0_25 = arith.constant 0 : index
    %c0_26 = arith.constant 0 : index
    %21 = vector.load %arg2[%c2_24, %c0_25, %c0_26] : memref<3x26x192xbf16, #tpu.memory_space<vmem>>, vector<1x26x192xbf16>
    %22 = vector.shape_cast %21 : vector<1x26x192xbf16> to vector<26x192xbf16>
    %cst_27 = arith.constant dense<0.000000e+00> : vector<208x192xf32>
    %23 = tpu.matmul %20, %22, %cst_27 {dimension_numbers = #tpu.dot_dimension_numbers<[1], [0], [0], [1], [0, 0, 1, 1], [], []>} : vector<208x26xbf16>, vector<26x192xbf16>, vector<208x192xf32> -> vector<208x192xf32>
    %24 = arith.addf %18, %23 : vector<208x192xf32>
    %25 = vector.extract_strided_slice %1 {offsets = [0, 0], sizes = [1, 192], strides = [1, 1]} : vector<3x192xf32> to vector<1x192xf32>
    %26 = vector.broadcast %25 : vector<1x192xf32> to vector<208x192xf32>
    %27 = arith.addf %24, %26 : vector<208x192xf32>
    %cst_28 = arith.constant dense<0.000000e+00> : vector<208x8xf32>
    %28 = tpu.matmul %27, %4, %cst_28 {dimension_numbers = #tpu.dot_dimension_numbers<[1], [0], [0], [1], [0, 0, 1, 1], [], []>} : vector<208x192xf32>, vector<192x8xf32>, vector<208x8xf32> -> vector<208x8xf32>
    %cst_29 = arith.constant dense<0.000000e+00> : vector<8x8xf32>
    %29 = tpu.matmul %2, %28, %cst_29 {dimension_numbers = #tpu.dot_dimension_numbers<[1], [0], [0], [1], [0, 0, 1, 1], [], []>} : vector<8x208xf32>, vector<208x8xf32>, vector<8x8xf32> -> vector<8x8xf32>
    %30 = arith.mulf %27, %27 : vector<208x192xf32>
    %cst_30 = arith.constant dense<0.000000e+00> : vector<208x8xf32>
    %31 = tpu.matmul %30, %4, %cst_30 {dimension_numbers = #tpu.dot_dimension_numbers<[1], [0], [0], [1], [0, 0, 1, 1], [], []>} : vector<208x192xf32>, vector<192x8xf32>, vector<208x8xf32> -> vector<208x8xf32>
    %cst_31 = arith.constant dense<0.000000e+00> : vector<8x8xf32>
    %32 = tpu.matmul %2, %31, %cst_31 {dimension_numbers = #tpu.dot_dimension_numbers<[1], [0], [0], [1], [0, 0, 1, 1], [], []>} : vector<8x208xf32>, vector<208x8xf32>, vector<8x8xf32> -> vector<8x8xf32>
    %cst_32 = arith.constant 0.00173611112 : f32
    %33 = vector.broadcast %cst_32 : f32 to vector<8x8xf32>
    %34 = arith.mulf %29, %33 : vector<8x8xf32>
    %cst_33 = arith.constant 0.00173611112 : f32
    %35 = vector.broadcast %cst_33 : f32 to vector<8x8xf32>
    %36 = arith.mulf %32, %35 : vector<8x8xf32>
    %37 = arith.mulf %34, %34 : vector<8x8xf32>
    %38 = arith.subf %36, %37 : vector<8x8xf32>
    %cst_34 = arith.constant 0.000000e+00 : f32
    %39 = vector.broadcast %cst_34 : f32 to vector<8x8xf32>
    %40 = arith.maximumf %38, %39 : vector<8x8xf32>
    %cst_35 = arith.constant 9.99999974E-6 : f32
    %41 = vector.broadcast %cst_35 : f32 to vector<8x8xf32>
    %42 = arith.addf %40, %41 : vector<8x8xf32>
    %43 = math.rsqrt %42 : vector<8x8xf32>
    %44 = vector.extract_strided_slice %1 {offsets = [1, 0], sizes = [1, 8], strides = [1, 1]} : vector<3x192xf32> to vector<1x8xf32>
    %45 = vector.broadcast %44 : vector<1x8xf32> to vector<8x8xf32>
    %46 = arith.mulf %43, %45 : vector<8x8xf32>
    %47 = vector.extract_strided_slice %1 {offsets = [2, 0], sizes = [1, 8], strides = [1, 1]} : vector<3x192xf32> to vector<1x8xf32>
    %48 = arith.mulf %34, %46 : vector<8x8xf32>
    %49 = vector.broadcast %47 : vector<1x8xf32> to vector<8x8xf32>
    %50 = arith.subf %49, %48 : vector<8x8xf32>
    %cst_36 = arith.constant dense<0.000000e+00> : vector<208x8xf32>
    %51 = tpu.matmul %3, %46, %cst_36 {dimension_numbers = #tpu.dot_dimension_numbers<[1], [0], [0], [1], [0, 0, 1, 1], [], []>} : vector<208x8xf32>, vector<8x8xf32>, vector<208x8xf32> -> vector<208x8xf32>
    %cst_37 = arith.constant dense<0.000000e+00> : vector<208x192xf32>
    %52 = tpu.matmul %51, %5, %cst_37 {dimension_numbers = #tpu.dot_dimension_numbers<[1], [0], [0], [1], [0, 0, 1, 1], [], []>} : vector<208x8xf32>, vector<8x192xf32>, vector<208x192xf32> -> vector<208x192xf32>
    %cst_38 = arith.constant dense<0.000000e+00> : vector<208x8xf32>
    %53 = tpu.matmul %3, %50, %cst_38 {dimension_numbers = #tpu.dot_dimension_numbers<[1], [0], [0], [1], [0, 0, 1, 1], [], []>} : vector<208x8xf32>, vector<8x8xf32>, vector<208x8xf32> -> vector<208x8xf32>
    %cst_39 = arith.constant dense<0.000000e+00> : vector<208x192xf32>
    %54 = tpu.matmul %53, %5, %cst_39 {dimension_numbers = #tpu.dot_dimension_numbers<[1], [0], [0], [1], [0, 0, 1, 1], [], []>} : vector<208x8xf32>, vector<8x192xf32>, vector<208x192xf32> -> vector<208x192xf32>
    %55 = arith.mulf %27, %52 : vector<208x192xf32>
    %56 = arith.addf %55, %54 : vector<208x192xf32>
    %cst_40 = arith.constant 0.000000e+00 : f32
    %57 = vector.broadcast %cst_40 : f32 to vector<208x192xf32>
    %58 = arith.maximumf %56, %57 : vector<208x192xf32>
    %59 = arith.truncf %58 : vector<208x192xf32> to vector<208x192xbf16>
    %c0_41 = arith.constant 0 : index
    %c0_42 = arith.constant 0 : index
    %c0_43 = arith.constant 0 : index
    %60 = vector.load %arg8[%c0_41, %c0_42, %c0_43] : memref<2x192x96xbf16, #tpu.memory_space<vmem>>, vector<1x192x96xbf16>
    %61 = vector.shape_cast %60 : vector<1x192x96xbf16> to vector<192x96xbf16>
    %cst_44 = arith.constant dense<0.000000e+00> : vector<208x96xf32>
    %62 = tpu.matmul %59, %61, %cst_44 {dimension_numbers = #tpu.dot_dimension_numbers<[1], [0], [0], [1], [0, 0, 1, 1], [], []>} : vector<208x192xbf16>, vector<192x96xbf16>, vector<208x96xf32> -> vector<208x96xf32>
    %c1_45 = arith.constant 1 : index
    %c0_46 = arith.constant 0 : index
    %c0_47 = arith.constant 0 : index
    %63 = vector.load %arg8[%c1_45, %c0_46, %c0_47] : memref<2x192x96xbf16, #tpu.memory_space<vmem>>, vector<1x192x96xbf16>
    %64 = vector.shape_cast %63 : vector<1x192x96xbf16> to vector<192x96xbf16>
    %cst_48 = arith.constant dense<0.000000e+00> : vector<208x96xf32>
    %65 = tpu.matmul %59, %64, %cst_48 {dimension_numbers = #tpu.dot_dimension_numbers<[1], [0], [0], [1], [0, 0, 1, 1], [], []>} : vector<208x192xbf16>, vector<192x96xbf16>, vector<208x96xf32> -> vector<208x96xf32>
    %66 = arith.maximumf %62, %65 : vector<208x96xf32>
    %67 = arith.truncf %66 : vector<208x96xf32> to vector<208x96xbf16>
    %c0_49 = arith.constant 0 : index
    %c0_50 = arith.constant 0 : index
    %c0_51 = arith.constant 0 : index
    %68 = vector.load %arg9[%c0_49, %c0_50, %c0_51] : memref<2x96x208xbf16, #tpu.memory_space<vmem>>, vector<1x96x208xbf16>
    %69 = vector.shape_cast %68 : vector<1x96x208xbf16> to vector<96x208xbf16>
    %cst_52 = arith.constant dense<0.000000e+00> : vector<96x96xf32>
    %70 = tpu.matmul %69, %67, %cst_52 {dimension_numbers = #tpu.dot_dimension_numbers<[1], [0], [0], [1], [0, 0, 1, 1], [], []>} : vector<96x208xbf16>, vector<208x96xbf16>, vector<96x96xf32> -> vector<96x96xf32>
    %c1_53 = arith.constant 1 : index
    %c0_54 = arith.constant 0 : index
    %c0_55 = arith.constant 0 : index
    %71 = vector.load %arg9[%c1_53, %c0_54, %c0_55] : memref<2x96x208xbf16, #tpu.memory_space<vmem>>, vector<1x96x208xbf16>
    %72 = vector.shape_cast %71 : vector<1x96x208xbf16> to vector<96x208xbf16>
    %cst_56 = arith.constant dense<0.000000e+00> : vector<96x96xf32>
    %73 = tpu.matmul %72, %67, %cst_56 {dimension_numbers = #tpu.dot_dimension_numbers<[1], [0], [0], [1], [0, 0, 1, 1], [], []>} : vector<96x208xbf16>, vector<208x96xbf16>, vector<96x96xf32> -> vector<96x96xf32>
    %74 = arith.maximumf %70, %73 : vector<96x96xf32>
    %c0_57 = arith.constant 0 : index
    %c0_58 = arith.constant 0 : index
    %75 = vector.load %arg11[%c0_57, %c0_58] : memref<3x80xf32, #tpu.memory_space<vmem>>, vector<3x80xf32>
    %c0_59 = arith.constant 0 : index
    %c0_60 = arith.constant 0 : index
    %76 = vector.load %arg12[%c0_59, %c0_60] : memref<8x96xf32, #tpu.memory_space<vmem>>, vector<8x96xf32>
    %c0_61 = arith.constant 0 : index
    %c0_62 = arith.constant 0 : index
    %77 = vector.load %arg13[%c0_61, %c0_62] : memref<96x8xf32, #tpu.memory_space<vmem>>, vector<96x8xf32>
    %c0_63 = arith.constant 0 : index
    %c0_64 = arith.constant 0 : index
    %78 = vector.load %arg14[%c0_63, %c0_64] : memref<80x8xf32, #tpu.memory_space<vmem>>, vector<80x8xf32>
    %c0_65 = arith.constant 0 : index
    %c0_66 = arith.constant 0 : index
    %79 = vector.load %arg15[%c0_65, %c0_66] : memref<8x80xf32, #tpu.memory_space<vmem>>, vector<8x80xf32>
    %c0_67 = arith.constant 0 : index
    %c0_68 = arith.constant 0 : index
    %80 = vector.load %arg28[%c0_67, %c0_68] : memref<216x96xf32, #tpu.memory_space<vmem>>, vector<96x96xf32>
    tpu.vector_store %arg28[%c0_67, %c0_68], %74 {strides = array<i32>} : memref<216x96xf32, #tpu.memory_space<vmem>>, vector<96x96xf32>,
    %cst_69 = arith.constant 0.000000e+00 : f32
    %81 = vector.broadcast %cst_69 : f32 to vector<8x96xf32>
    %c96 = arith.constant 96 : index
    %c0_70 = arith.constant 0 : index
    %82 = vector.load %arg28[%c96, %c0_70] : memref<216x96xf32, #tpu.memory_space<vmem>>, vector<8x96xf32>
    tpu.vector_store %arg28[%c96, %c0_70], %81 {strides = array<i32>} : memref<216x96xf32, #tpu.memory_space<vmem>>, vector<8x96xf32>,
    %83 = arith.truncf %74 : vector<96x96xf32> to vector<96x96xbf16>
    %c0_71 = arith.constant 0 : index
    %c0_72 = arith.constant 0 : index
    %c0_73 = arith.constant 0 : index
    %84 = vector.load %arg10[%c0_71, %c0_72, %c0_73] : memref<3x96x80xbf16, #tpu.memory_space<vmem>>, vector<1x96x80xbf16>
    %85 = vector.shape_cast %84 : vector<1x96x80xbf16> to vector<96x80xbf16>
    %cst_74 = arith.constant dense<0.000000e+00> : vector<96x80xf32>
    %86 = tpu.matmul %83, %85, %cst_74 {dimension_numbers = #tpu.dot_dimension_numbers<[1], [0], [0], [1], [0, 0, 1, 1], [], []>} : vector<96x96xbf16>, vector<96x80xbf16>, vector<96x80xf32> -> vector<96x80xf32>
    %c1_75 = arith.constant 1 : index
    %c0_76 = arith.constant 0 : index
    %87 = vector.load %arg28[%c1_75, %c0_76] : memref<216x96xf32, #tpu.memory_space<vmem>>, vector<96x96xf32>
    %88 = arith.truncf %87 : vector<96x96xf32> to vector<96x96xbf16>
    %c1_77 = arith.constant 1 : index
    %c0_78 = arith.constant 0 : index
    %c0_79 = arith.constant 0 : index
    %89 = vector.load %arg10[%c1_77, %c0_78, %c0_79] : memref<3x96x80xbf16, #tpu.memory_space<vmem>>, vector<1x96x80xbf16>
    %90 = vector.shape_cast %89 : vector<1x96x80xbf16> to vector<96x80xbf16>
    %cst_80 = arith.constant dense<0.000000e+00> : vector<96x80xf32>
    %91 = tpu.matmul %88, %90, %cst_80 {dimension_numbers = #tpu.dot_dimension_numbers<[1], [0], [0], [1], [0, 0, 1, 1], [], []>} : vector<96x96xbf16>, vector<96x80xbf16>, vector<96x80xf32> -> vector<96x80xf32>
    %92 = arith.addf %86, %91 : vector<96x80xf32>
    %c2_81 = arith.constant 2 : index
    %c0_82 = arith.constant 0 : index
    %93 = vector.load %arg28[%c2_81, %c0_82] : memref<216x96xf32, #tpu.memory_space<vmem>>, vector<96x96xf32>
    %94 = arith.truncf %93 : vector<96x96xf32> to vector<96x96xbf16>
    %c2_83 = arith.constant 2 : index
    %c0_84 = arith.constant 0 : index
    %c0_85 = arith.constant 0 : index
    %95 = vector.load %arg10[%c2_83, %c0_84, %c0_85] : memref<3x96x80xbf16, #tpu.memory_space<vmem>>, vector<1x96x80xbf16>
    %96 = vector.shape_cast %95 : vector<1x96x80xbf16> to vector<96x80xbf16>
    %cst_86 = arith.constant dense<0.000000e+00> : vector<96x80xf32>
    %97 = tpu.matmul %94, %96, %cst_86 {dimension_numbers = #tpu.dot_dimension_numbers<[1], [0], [0], [1], [0, 0, 1, 1], [], []>} : vector<96x96xbf16>, vector<96x80xbf16>, vector<96x80xf32> -> vector<96x80xf32>
    %98 = arith.addf %92, %97 : vector<96x80xf32>
    %99 = vector.extract_strided_slice %75 {offsets = [0, 0], sizes = [1, 80], strides = [1, 1]} : vector<3x80xf32> to vector<1x80xf32>
    %100 = vector.broadcast %99 : vector<1x80xf32> to vector<96x80xf32>
    %101 = arith.addf %98, %100 : vector<96x80xf32>
    %cst_87 = arith.constant dense<0.000000e+00> : vector<96x8xf32>
    %102 = tpu.matmul %101, %78, %cst_87 {dimension_numbers = #tpu.dot_dimension_numbers<[1], [0], [0], [1], [0, 0, 1, 1], [], []>} : vector<96x80xf32>, vector<80x8xf32>, vector<96x8xf32> -> vector<96x8xf32>
    %cst_88 = arith.constant dense<0.000000e+00> : vector<8x8xf32>
    %103 = tpu.matmul %76, %102, %cst_88 {dimension_numbers = #tpu.dot_dimension_numbers<[1], [0], [0], [1], [0, 0, 1, 1], [], []>} : vector<8x96xf32>, vector<96x8xf32>, vector<8x8xf32> -> vector<8x8xf32>
    %104 = arith.mulf %101, %101 : vector<96x80xf32>
    %cst_89 = arith.constant dense<0.000000e+00> : vector<96x8xf32>
    %105 = tpu.matmul %104, %78, %cst_89 {dimension_numbers = #tpu.dot_dimension_numbers<[1], [0], [0], [1], [0, 0, 1, 1], [], []>} : vector<96x80xf32>, vector<80x8xf32>, vector<96x8xf32> -> vector<96x8xf32>
    %cst_90 = arith.constant dense<0.000000e+00> : vector<8x8xf32>
    %106 = tpu.matmul %76, %105, %cst_90 {dimension_numbers = #tpu.dot_dimension_numbers<[1], [0], [0], [1], [0, 0, 1, 1], [], []>} : vector<8x96xf32>, vector<96x8xf32>, vector<8x8xf32> -> vector<8x8xf32>
    %cst_91 = arith.constant 0.00999999977 : f32
    %107 = vector.broadcast %cst_91 : f32 to vector<8x8xf32>
    %108 = arith.mulf %103, %107 : vector<8x8xf32>
    %cst_92 = arith.constant 0.00999999977 : f32
    %109 = vector.broadcast %cst_92 : f32 to vector<8x8xf32>
    %110 = arith.mulf %106, %109 : vector<8x8xf32>
    %111 = arith.mulf %108, %108 : vector<8x8xf32>
    %112 = arith.subf %110, %111 : vector<8x8xf32>
    %cst_93 = arith.constant 0.000000e+00 : f32
    %113 = vector.broadcast %cst_93 : f32 to vector<8x8xf32>
    %114 = arith.maximumf %112, %113 : vector<8x8xf32>
    %cst_94 = arith.constant 9.99999974E-6 : f32
    %115 = vector.broadcast %cst_94 : f32 to vector<8x8xf32>
    %116 = arith.addf %114, %115 : vector<8x8xf32>
    %117 = math.rsqrt %116 : vector<8x8xf32>
    %118 = vector.extract_strided_slice %75 {offsets = [1, 0], sizes = [1, 8], strides = [1, 1]} : vector<3x80xf32> to vector<1x8xf32>
    %119 = vector.broadcast %118 : vector<1x8xf32> to vector<8x8xf32>
    %120 = arith.mulf %117, %119 : vector<8x8xf32>
    %121 = vector.extract_strided_slice %75 {offsets = [2, 0], sizes = [1, 8], strides = [1, 1]} : vector<3x80xf32> to vector<1x8xf32>
    %122 = arith.mulf %108, %120 : vector<8x8xf32>
    %123 = vector.broadcast %121 : vector<1x8xf32> to vector<8x8xf32>
    %124 = arith.subf %123, %122 : vector<8x8xf32>
    %cst_95 = arith.constant dense<0.000000e+00> : vector<96x8xf32>
    %125 = tpu.matmul %77, %120, %cst_95 {dimension_numbers = #tpu.dot_dimension_numbers<[1], [0], [0], [1], [0, 0, 1, 1], [], []>} : vector<96x8xf32>, vector<8x8xf32>, vector<96x8xf32> -> vector<96x8xf32>
    %cst_96 = arith.constant dense<0.000000e+00> : vector<96x80xf32>
    %126 = tpu.matmul %125, %79, %cst_96 {dimension_numbers = #tpu.dot_dimension_numbers<[1], [0], [0], [1], [0, 0, 1, 1], [], []>} : vector<96x8xf32>, vector<8x80xf32>, vector<96x80xf32> -> vector<96x80xf32>
    %cst_97 = arith.constant dense<0.000000e+00> : vector<96x8xf32>
    %127 = tpu.matmul %77, %124, %cst_97 {dimension_numbers = #tpu.dot_dimension_numbers<[1], [0], [0], [1], [0, 0, 1, 1], [], []>} : vector<96x8xf32>, vector<8x8xf32>, vector<96x8xf32> -> vector<96x8xf32>
    %cst_98 = arith.constant dense<0.000000e+00> : vector<96x80xf32>
    %128 = tpu.matmul %127, %79, %cst_98 {dimension_numbers = #tpu.dot_dimension_numbers<[1], [0], [0], [1], [0, 0, 1, 1], [], []>} : vector<96x8xf32>, vector<8x80xf32>, vector<96x80xf32> -> vector<96x80xf32>
    %129 = arith.mulf %101, %126 : vector<96x80xf32>
    %130 = arith.addf %129, %128 : vector<96x80xf32>
    %cst_99 = arith.constant 0.000000e+00 : f32
    %131 = vector.broadcast %cst_99 : f32 to vector<96x80xf32>
    %132 = arith.maximumf %130, %131 : vector<96x80xf32>
    %133 = arith.truncf %132 : vector<96x80xf32> to vector<96x80xbf16>
    %c0_100 = arith.constant 0 : index
    %c0_101 = arith.constant 0 : index
    %c0_102 = arith.constant 0 : index
    %134 = vector.load %arg16[%c0_100, %c0_101, %c0_102] : memref<2x80x40xbf16, #tpu.memory_space<vmem>>, vector<1x80x40xbf16>
    %135 = vector.shape_cast %134 : vector<1x80x40xbf16> to vector<80x40xbf16>
    %cst_103 = arith.constant dense<0.000000e+00> : vector<96x40xf32>
    %136 = tpu.matmul %133, %135, %cst_103 {dimension_numbers = #tpu.dot_dimension_numbers<[1], [0], [0], [1], [0, 0, 1, 1], [], []>} : vector<96x80xbf16>, vector<80x40xbf16>, vector<96x40xf32> -> vector<96x40xf32>
    %c1_104 = arith.constant 1 : index
    %c0_105 = arith.constant 0 : index
    %c0_106 = arith.constant 0 : index
    %137 = vector.load %arg16[%c1_104, %c0_105, %c0_106] : memref<2x80x40xbf16, #tpu.memory_space<vmem>>, vector<1x80x40xbf16>
    %138 = vector.shape_cast %137 : vector<1x80x40xbf16> to vector<80x40xbf16>
    %cst_107 = arith.constant dense<0.000000e+00> : vector<96x40xf32>
    %139 = tpu.matmul %133, %138, %cst_107 {dimension_numbers = #tpu.dot_dimension_numbers<[1], [0], [0], [1], [0, 0, 1, 1], [], []>} : vector<96x80xbf16>, vector<80x40xbf16>, vector<96x40xf32> -> vector<96x40xf32>
    %140 = arith.maximumf %136, %139 : vector<96x40xf32>
    %141 = arith.truncf %140 : vector<96x40xf32> to vector<96x40xbf16>
    %c0_108 = arith.constant 0 : index
    %c0_109 = arith.constant 0 : index
    %c0_110 = arith.constant 0 : index
    %142 = vector.load %arg17[%c0_108, %c0_109, %c0_110] : memref<2x40x96xbf16, #tpu.memory_space<vmem>>, vector<1x40x96xbf16>
    %143 = vector.shape_cast %142 : vector<1x40x96xbf16> to vector<40x96xbf16>
    %cst_111 = arith.constant dense<0.000000e+00> : vector<40x40xf32>
    %144 = tpu.matmul %143, %141, %cst_111 {dimension_numbers = #tpu.dot_dimension_numbers<[1], [0], [0], [1], [0, 0, 1, 1], [], []>} : vector<40x96xbf16>, vector<96x40xbf16>, vector<40x40xf32> -> vector<40x40xf32>
    %c1_112 = arith.constant 1 : index
    %c0_113 = arith.constant 0 : index
    %c0_114 = arith.constant 0 : index
    %145 = vector.load %arg17[%c1_112, %c0_113, %c0_114] : memref<2x40x96xbf16, #tpu.memory_space<vmem>>, vector<1x40x96xbf16>
    %146 = vector.shape_cast %145 : vector<1x40x96xbf16> to vector<40x96xbf16>
    %cst_115 = arith.constant dense<0.000000e+00> : vector<40x40xf32>
    %147 = tpu.matmul %146, %141, %cst_115 {dimension_numbers = #tpu.dot_dimension_numbers<[1], [0], [0], [1], [0, 0, 1, 1], [], []>} : vector<40x96xbf16>, vector<96x40xbf16>, vector<40x40xf32> -> vector<40x40xf32>
    %148 = arith.maximumf %144, %147 : vector<40x40xf32>
    %c0_116 = arith.constant 0 : index
    %c0_117 = arith.constant 0 : index
    %149 = vector.load %arg19[%c0_116, %c0_117] : memref<3x24xf32, #tpu.memory_space<vmem>>, vector<3x24xf32>
    %c0_118 = arith.constant 0 : index
    %c0_119 = arith.constant 0 : index
    %150 = vector.load %arg20[%c0_118, %c0_119] : memref<8x40xf32, #tpu.memory_space<vmem>>, vector<8x40xf32>
    %c0_120 = arith.constant 0 : index
    %c0_121 = arith.constant 0 : index
    %151 = vector.load %arg21[%c0_120, %c0_121] : memref<40x8xf32, #tpu.memory_space<vmem>>, vector<40x8xf32>
    %c0_122 = arith.constant 0 : index
    %c0_123 = arith.constant 0 : index
    %152 = vector.load %arg22[%c0_122, %c0_123] : memref<24x8xf32, #tpu.memory_space<vmem>>, vector<24x8xf32>
    %c0_124 = arith.constant 0 : index
    %c0_125 = arith.constant 0 : index
    %153 = vector.load %arg23[%c0_124, %c0_125] : memref<8x24xf32, #tpu.memory_space<vmem>>, vector<8x24xf32>
    %c0_126 = arith.constant 0 : index
    %c0_127 = arith.constant 0 : index
    %154 = vector.load %arg28[%c0_126, %c0_127] : memref<216x96xf32, #tpu.memory_space<vmem>>, vector<40x40xf32>
    tpu.vector_store %arg28[%c0_126, %c0_127], %148 {strides = array<i32>} : memref<216x96xf32, #tpu.memory_space<vmem>>, vector<40x40xf32>,
    %cst_128 = arith.constant 0.000000e+00 : f32
    %155 = vector.broadcast %cst_128 : f32 to vector<8x40xf32>
    %c40 = arith.constant 40 : index
    %c0_129 = arith.constant 0 : index
    %156 = vector.load %arg28[%c40, %c0_129] : memref<216x96xf32, #tpu.memory_space<vmem>>, vector<8x40xf32>
    tpu.vector_store %arg28[%c40, %c0_129], %155 {strides = array<i32>} : memref<216x96xf32, #tpu.memory_space<vmem>>, vector<8x40xf32>,
    %157 = arith.truncf %148 : vector<40x40xf32> to vector<40x40xbf16>
    %c0_130 = arith.constant 0 : index
    %c0_131 = arith.constant 0 : index
    %c0_132 = arith.constant 0 : index
    %158 = vector.load %arg18[%c0_130, %c0_131, %c0_132] : memref<3x40x24xbf16, #tpu.memory_space<vmem>>, vector<1x40x24xbf16>
    %159 = vector.shape_cast %158 : vector<1x40x24xbf16> to vector<40x24xbf16>
    %cst_133 = arith.constant dense<0.000000e+00> : vector<40x24xf32>
    %160 = tpu.matmul %157, %159, %cst_133 {dimension_numbers = #tpu.dot_dimension_numbers<[1], [0], [0], [1], [0, 0, 1, 1], [], []>} : vector<40x40xbf16>, vector<40x24xbf16>, vector<40x24xf32> -> vector<40x24xf32>
    %c1_134 = arith.constant 1 : index
    %c0_135 = arith.constant 0 : index
    %161 = vector.load %arg28[%c1_134, %c0_135] : memref<216x96xf32, #tpu.memory_space<vmem>>, vector<40x40xf32>
    %162 = arith.truncf %161 : vector<40x40xf32> to vector<40x40xbf16>
    %c1_136 = arith.constant 1 : index
    %c0_137 = arith.constant 0 : index
    %c0_138 = arith.constant 0 : index
    %163 = vector.load %arg18[%c1_136, %c0_137, %c0_138] : memref<3x40x24xbf16, #tpu.memory_space<vmem>>, vector<1x40x24xbf16>
    %164 = vector.shape_cast %163 : vector<1x40x24xbf16> to vector<40x24xbf16>
    %cst_139 = arith.constant dense<0.000000e+00> : vector<40x24xf32>
    %165 = tpu.matmul %162, %164, %cst_139 {dimension_numbers = #tpu.dot_dimension_numbers<[1], [0], [0], [1], [0, 0, 1, 1], [], []>} : vector<40x40xbf16>, vector<40x24xbf16>, vector<40x24xf32> -> vector<40x24xf32>
    %166 = arith.addf %160, %165 : vector<40x24xf32>
    %c2_140 = arith.constant 2 : index
    %c0_141 = arith.constant 0 : index
    %167 = vector.load %arg28[%c2_140, %c0_141] : memref<216x96xf32, #tpu.memory_space<vmem>>, vector<40x40xf32>
    %168 = arith.truncf %167 : vector<40x40xf32> to vector<40x40xbf16>
    %c2_142 = arith.constant 2 : index
    %c0_143 = arith.constant 0 : index
    %c0_144 = arith.constant 0 : index
    %169 = vector.load %arg18[%c2_142, %c0_143, %c0_144] : memref<3x40x24xbf16, #tpu.memory_space<vmem>>, vector<1x40x24xbf16>
    %170 = vector.shape_cast %169 : vector<1x40x24xbf16> to vector<40x24xbf16>
    %cst_145 = arith.constant dense<0.000000e+00> : vector<40x24xf32>
    %171 = tpu.matmul %168, %170, %cst_145 {dimension_numbers = #tpu.dot_dimension_numbers<[1], [0], [0], [1], [0, 0, 1, 1], [], []>} : vector<40x40xbf16>, vector<40x24xbf16>, vector<40x24xf32> -> vector<40x24xf32>
    %172 = arith.addf %166, %171 : vector<40x24xf32>
    %173 = vector.extract_strided_slice %149 {offsets = [0, 0], sizes = [1, 24], strides = [1, 1]} : vector<3x24xf32> to vector<1x24xf32>
    %174 = vector.broadcast %173 : vector<1x24xf32> to vector<40x24xf32>
    %175 = arith.addf %172, %174 : vector<40x24xf32>
    %cst_146 = arith.constant dense<0.000000e+00> : vector<40x8xf32>
    %176 = tpu.matmul %175, %152, %cst_146 {dimension_numbers = #tpu.dot_dimension_numbers<[1], [0], [0], [1], [0, 0, 1, 1], [], []>} : vector<40x24xf32>, vector<24x8xf32>, vector<40x8xf32> -> vector<40x8xf32>
    %cst_147 = arith.constant dense<0.000000e+00> : vector<8x8xf32>
    %177 = tpu.matmul %150, %176, %cst_147 {dimension_numbers = #tpu.dot_dimension_numbers<[1], [0], [0], [1], [0, 0, 1, 1], [], []>} : vector<8x40xf32>, vector<40x8xf32>, vector<8x8xf32> -> vector<8x8xf32>
    %178 = arith.mulf %175, %175 : vector<40x24xf32>
    %cst_148 = arith.constant dense<0.000000e+00> : vector<40x8xf32>
    %179 = tpu.matmul %178, %152, %cst_148 {dimension_numbers = #tpu.dot_dimension_numbers<[1], [0], [0], [1], [0, 0, 1, 1], [], []>} : vector<40x24xf32>, vector<24x8xf32>, vector<40x8xf32> -> vector<40x8xf32>
    %cst_149 = arith.constant dense<0.000000e+00> : vector<8x8xf32>
    %180 = tpu.matmul %150, %179, %cst_149 {dimension_numbers = #tpu.dot_dimension_numbers<[1], [0], [0], [1], [0, 0, 1, 1], [], []>} : vector<8x40xf32>, vector<40x8xf32>, vector<8x8xf32> -> vector<8x8xf32>
    %cst_150 = arith.constant 0.111111112 : f32
    %181 = vector.broadcast %cst_150 : f32 to vector<8x8xf32>
    %182 = arith.mulf %177, %181 : vector<8x8xf32>
    %cst_151 = arith.constant 0.111111112 : f32
    %183 = vector.broadcast %cst_151 : f32 to vector<8x8xf32>
    %184 = arith.mulf %180, %183 : vector<8x8xf32>
    %185 = arith.mulf %182, %182 : vector<8x8xf32>
    %186 = arith.subf %184, %185 : vector<8x8xf32>
    %cst_152 = arith.constant 0.000000e+00 : f32
    %187 = vector.broadcast %cst_152 : f32 to vector<8x8xf32>
    %188 = arith.maximumf %186, %187 : vector<8x8xf32>
    %cst_153 = arith.constant 9.99999974E-6 : f32
    %189 = vector.broadcast %cst_153 : f32 to vector<8x8xf32>
    %190 = arith.addf %188, %189 : vector<8x8xf32>
    %191 = math.rsqrt %190 : vector<8x8xf32>
    %192 = vector.extract_strided_slice %149 {offsets = [1, 0], sizes = [1, 8], strides = [1, 1]} : vector<3x24xf32> to vector<1x8xf32>
    %193 = vector.broadcast %192 : vector<1x8xf32> to vector<8x8xf32>
    %194 = arith.mulf %191, %193 : vector<8x8xf32>
    %195 = vector.extract_strided_slice %149 {offsets = [2, 0], sizes = [1, 8], strides = [1, 1]} : vector<3x24xf32> to vector<1x8xf32>
    %196 = arith.mulf %182, %194 : vector<8x8xf32>
    %197 = vector.broadcast %195 : vector<1x8xf32> to vector<8x8xf32>
    %198 = arith.subf %197, %196 : vector<8x8xf32>
    %cst_154 = arith.constant dense<0.000000e+00> : vector<40x8xf32>
    %199 = tpu.matmul %151, %194, %cst_154 {dimension_numbers = #tpu.dot_dimension_numbers<[1], [0], [0], [1], [0, 0, 1, 1], [], []>} : vector<40x8xf32>, vector<8x8xf32>, vector<40x8xf32> -> vector<40x8xf32>
    %cst_155 = arith.constant dense<0.000000e+00> : vector<40x24xf32>
    %200 = tpu.matmul %199, %153, %cst_155 {dimension_numbers = #tpu.dot_dimension_numbers<[1], [0], [0], [1], [0, 0, 1, 1], [], []>} : vector<40x8xf32>, vector<8x24xf32>, vector<40x24xf32> -> vector<40x24xf32>
    %cst_156 = arith.constant dense<0.000000e+00> : vector<40x8xf32>
    %201 = tpu.matmul %151, %198, %cst_156 {dimension_numbers = #tpu.dot_dimension_numbers<[1], [0], [0], [1], [0, 0, 1, 1], [], []>} : vector<40x8xf32>, vector<8x8xf32>, vector<40x8xf32> -> vector<40x8xf32>
    %cst_157 = arith.constant dense<0.000000e+00> : vector<40x24xf32>
    %202 = tpu.matmul %201, %153, %cst_157 {dimension_numbers = #tpu.dot_dimension_numbers<[1], [0], [0], [1], [0, 0, 1, 1], [], []>} : vector<40x8xf32>, vector<8x24xf32>, vector<40x24xf32> -> vector<40x24xf32>
    %203 = arith.mulf %175, %200 : vector<40x24xf32>
    %204 = arith.addf %203, %202 : vector<40x24xf32>
    %cst_158 = arith.constant 0.000000e+00 : f32
    %205 = vector.broadcast %cst_158 : f32 to vector<40x24xf32>
    %206 = arith.maximumf %204, %205 : vector<40x24xf32>
    %c0_159 = arith.constant 0 : index
    %c0_160 = arith.constant 0 : index
    %207 = vector.load %arg26[%c0_159, %c0_160] : memref<1x16xf32, #tpu.memory_space<vmem>>, vector<1x16xf32>
    %c0_161 = arith.constant 0 : index
    %c0_162 = arith.constant 0 : index
    %c0_163 = arith.constant 0 : index
    %208 = vector.load %arg24[%c0_161, %c0_162, %c0_163] : memref<3x8x40xf32, #tpu.memory_space<vmem>>, vector<1x8x40xf32>
    %209 = vector.shape_cast %208 : vector<1x8x40xf32> to vector<8x40xf32>
    %cst_164 = arith.constant dense<0.000000e+00> : vector<8x24xf32>
    %210 = tpu.matmul %209, %206, %cst_164 {dimension_numbers = #tpu.dot_dimension_numbers<[1], [0], [0], [1], [0, 0, 1, 1], [], []>} : vector<8x40xf32>, vector<40x24xf32>, vector<8x24xf32> -> vector<8x24xf32>
    %c0_165 = arith.constant 0 : index
    %c0_166 = arith.constant 0 : index
    %c0_167 = arith.constant 0 : index
    %211 = vector.load %arg25[%c0_165, %c0_166, %c0_167] : memref<3x24x16xf32, #tpu.memory_space<vmem>>, vector<1x24x16xf32>
    %212 = vector.shape_cast %211 : vector<1x24x16xf32> to vector<24x16xf32>
    %cst_168 = arith.constant dense<0.000000e+00> : vector<8x16xf32>
    %213 = tpu.matmul %210, %212, %cst_168 {dimension_numbers = #tpu.dot_dimension_numbers<[1], [0], [0], [1], [0, 0, 1, 1], [], []>} : vector<8x24xf32>, vector<24x16xf32>, vector<8x16xf32> -> vector<8x16xf32>
    %c1_169 = arith.constant 1 : index
    %c0_170 = arith.constant 0 : index
    %c0_171 = arith.constant 0 : index
    %214 = vector.load %arg24[%c1_169, %c0_170, %c0_171] : memref<3x8x40xf32, #tpu.memory_space<vmem>>, vector<1x8x40xf32>
    %215 = vector.shape_cast %214 : vector<1x8x40xf32> to vector<8x40xf32>
    %cst_172 = arith.constant dense<0.000000e+00> : vector<8x24xf32>
    %216 = tpu.matmul %215, %206, %cst_172 {dimension_numbers = #tpu.dot_dimension_numbers<[1], [0], [0], [1], [0, 0, 1, 1], [], []>} : vector<8x40xf32>, vector<40x24xf32>, vector<8x24xf32> -> vector<8x24xf32>
    %c1_173 = arith.constant 1 : index
    %c0_174 = arith.constant 0 : index
    %c0_175 = arith.constant 0 : index
    %217 = vector.load %arg25[%c1_173, %c0_174, %c0_175] : memref<3x24x16xf32, #tpu.memory_space<vmem>>, vector<1x24x16xf32>
    %218 = vector.shape_cast %217 : vector<1x24x16xf32> to vector<24x16xf32>
    %cst_176 = arith.constant dense<0.000000e+00> : vector<8x16xf32>
    %219 = tpu.matmul %216, %218, %cst_176 {dimension_numbers = #tpu.dot_dimension_numbers<[1], [0], [0], [1], [0, 0, 1, 1], [], []>} : vector<8x24xf32>, vector<24x16xf32>, vector<8x16xf32> -> vector<8x16xf32>
    %220 = arith.addf %213, %219 : vector<8x16xf32>
    %c2_177 = arith.constant 2 : index
    %c0_178 = arith.constant 0 : index
    %c0_179 = arith.constant 0 : index
    %221 = vector.load %arg24[%c2_177, %c0_178, %c0_179] : memref<3x8x40xf32, #tpu.memory_space<vmem>>, vector<1x8x40xf32>
    %222 = vector.shape_cast %221 : vector<1x8x40xf32> to vector<8x40xf32>
    %cst_180 = arith.constant dense<0.000000e+00> : vector<8x24xf32>
    %223 = tpu.matmul %222, %206, %cst_180 {dimension_numbers = #tpu.dot_dimension_numbers<[1], [0], [0], [1], [0, 0, 1, 1], [], []>} : vector<8x40xf32>, vector<40x24xf32>, vector<8x24xf32> -> vector<8x24xf32>
    %c2_181 = arith.constant 2 : index
    %c0_182 = arith.constant 0 : index
    %c0_183 = arith.constant 0 : index
    %224 = vector.load %arg25[%c2_181, %c0_182, %c0_183] : memref<3x24x16xf32, #tpu.memory_space<vmem>>, vector<1x24x16xf32>
    %225 = vector.shape_cast %224 : vector<1x24x16xf32> to vector<24x16xf32>
    %cst_184 = arith.constant dense<0.000000e+00> : vector<8x16xf32>
    %226 = tpu.matmul %223, %225, %cst_184 {dimension_numbers = #tpu.dot_dimension_numbers<[1], [0], [0], [1], [0, 0, 1, 1], [], []>} : vector<8x24xf32>, vector<24x16xf32>, vector<8x16xf32> -> vector<8x16xf32>
    %227 = arith.addf %220, %226 : vector<8x16xf32>
    %228 = vector.broadcast %207 : vector<1x16xf32> to vector<8x16xf32>
    %229 = arith.addf %227, %228 : vector<8x16xf32>
    %cst_185 = arith.constant 0.000000e+00 : f32
    %230 = vector.broadcast %cst_185 : f32 to vector<8x16xf32>
    %231 = arith.subf %230, %229 : vector<8x16xf32>
    %232 = math.exp %231 : vector<8x16xf32>
    %cst_186 = arith.constant 1.000000e+00 : f32
    %233 = vector.broadcast %cst_186 : f32 to vector<8x16xf32>
    %234 = arith.addf %233, %232 : vector<8x16xf32>
    %cst_187 = arith.constant 1.000000e+00 : f32
    %235 = vector.broadcast %cst_187 : f32 to vector<8x16xf32>
    %236 = arith.divf %235, %234 : vector<8x16xf32>
    %c0_188 = arith.constant 0 : index
    %c0_189 = arith.constant 0 : index
    %237 = vector.load %arg27[%c0_188, %c0_189] : memref<8x16xf32, #tpu.memory_space<vmem>>, vector<8x16xf32>
    tpu.vector_store %arg27[%c0_188, %c0_189], %236 {strides = array<i32>} : memref<8x16xf32, #tpu.memory_space<vmem>>, vector<8x16xf32>,
    return
  }
  func.func @transform_0(%arg0: i32) -> (i32, i32) {
    %c0_i32 = arith.constant 0 : i32
    %c0_i32_0 = arith.constant 0 : i32
    return %arg0, %c0_i32 : i32, i32
  }
  func.func @transform_1(%arg0: i32) -> (i32, i32, i32) {
    %c0_i32 = arith.constant 0 : i32
    %c0_i32_0 = arith.constant 0 : i32
    %c0_i32_1 = arith.constant 0 : i32
    %c0_i32_2 = arith.constant 0 : i32
    return %c0_i32, %c0_i32_0, %c0_i32_1 : i32, i32, i32
  }
  func.func @transform_2(%arg0: i32) -> (i32, i32) {
    %c0_i32 = arith.constant 0 : i32
    %c0_i32_0 = arith.constant 0 : i32
    %c0_i32_1 = arith.constant 0 : i32
    return %c0_i32, %c0_i32_0 : i32, i32
  }
  func.func @transform_3(%arg0: i32) -> (i32, i32) {
    %c0_i32 = arith.constant 0 : i32
    %c0_i32_0 = arith.constant 0 : i32
    %c0_i32_1 = arith.constant 0 : i32
    return %c0_i32, %c0_i32_0 : i32, i32
  }
  func.func @transform_4(%arg0: i32) -> (i32, i32) {
    %c0_i32 = arith.constant 0 : i32
    %c0_i32_0 = arith.constant 0 : i32
    %c0_i32_1 = arith.constant 0 : i32
    return %c0_i32, %c0_i32_0 : i32, i32
  }
  func.func @transform_5(%arg0: i32) -> (i32, i32) {
    %c0_i32 = arith.constant 0 : i32
    %c0_i32_0 = arith.constant 0 : i32
    %c0_i32_1 = arith.constant 0 : i32
    return %c0_i32, %c0_i32_0 : i32, i32
  }
  func.func @transform_6(%arg0: i32) -> (i32, i32) {
    %c0_i32 = arith.constant 0 : i32
    %c0_i32_0 = arith.constant 0 : i32
    %c0_i32_1 = arith.constant 0 : i32
    return %c0_i32, %c0_i32_0 : i32, i32
  }
  func.func @transform_7(%arg0: i32) -> (i32, i32, i32) {
    %c0_i32 = arith.constant 0 : i32
    %c0_i32_0 = arith.constant 0 : i32
    %c0_i32_1 = arith.constant 0 : i32
    %c0_i32_2 = arith.constant 0 : i32
    return %c0_i32, %c0_i32_0, %c0_i32_1 : i32, i32, i32
  }
  func.func @transform_8(%arg0: i32) -> (i32, i32, i32) {
    %c0_i32 = arith.constant 0 : i32
    %c0_i32_0 = arith.constant 0 : i32
    %c0_i32_1 = arith.constant 0 : i32
    %c0_i32_2 = arith.constant 0 : i32
    return %c0_i32, %c0_i32_0, %c0_i32_1 : i32, i32, i32
  }
  func.func @transform_9(%arg0: i32) -> (i32, i32, i32) {
    %c0_i32 = arith.constant 0 : i32
    %c0_i32_0 = arith.constant 0 : i32
    %c0_i32_1 = arith.constant 0 : i32
    %c0_i32_2 = arith.constant 0 : i32
    return %c0_i32, %c0_i32_0, %c0_i32_1 : i32, i32, i32
  }
  func.func @transform_10(%arg0: i32) -> (i32, i32) {
    %c0_i32 = arith.constant 0 : i32
    %c0_i32_0 = arith.constant 0 : i32
    %c0_i32_1 = arith.constant 0 : i32
    return %c0_i32, %c0_i32_0 : i32, i32
  }
  func.func @transform_11(%arg0: i32) -> (i32, i32) {
    %c0_i32 = arith.constant 0 : i32
    %c0_i32_0 = arith.constant 0 : i32
    %c0_i32_1 = arith.constant 0 : i32
    return %c0_i32, %c0_i32_0 : i32, i32
  }
  func.func @transform_12(%arg0: i32) -> (i32, i32) {
    %c0_i32 = arith.constant 0 : i32
    %c0_i32_0 = arith.constant 0 : i32
    %c0_i32_1 = arith.constant 0 : i32
    return %c0_i32, %c0_i32_0 : i32, i32
  }
  func.func @transform_13(%arg0: i32) -> (i32, i32) {
    %c0_i32 = arith.constant 0 : i32
    %c0_i32_0 = arith.constant 0 : i32
    %c0_i32_1 = arith.constant 0 : i32
    return %c0_i32, %c0_i32_0 : i32, i32
  }
  func.func @transform_14(%arg0: i32) -> (i32, i32) {
    %c0_i32 = arith.constant 0 : i32
    %c0_i32_0 = arith.constant 0 : i32
    %c0_i32_1 = arith.constant 0 : i32
    return %c0_i32, %c0_i32_0 : i32, i32
  }
  func.func @transform_15(%arg0: i32) -> (i32, i32, i32) {
    %c0_i32 = arith.constant 0 : i32
    %c0_i32_0 = arith.constant 0 : i32
    %c0_i32_1 = arith.constant 0 : i32
    %c0_i32_2 = arith.constant 0 : i32
    return %c0_i32, %c0_i32_0, %c0_i32_1 : i32, i32, i32
  }
  func.func @transform_16(%arg0: i32) -> (i32, i32, i32) {
    %c0_i32 = arith.constant 0 : i32
    %c0_i32_0 = arith.constant 0 : i32
    %c0_i32_1 = arith.constant 0 : i32
    %c0_i32_2 = arith.constant 0 : i32
    return %c0_i32, %c0_i32_0, %c0_i32_1 : i32, i32, i32
  }
  func.func @transform_17(%arg0: i32) -> (i32, i32, i32) {
    %c0_i32 = arith.constant 0 : i32
    %c0_i32_0 = arith.constant 0 : i32
    %c0_i32_1 = arith.constant 0 : i32
    %c0_i32_2 = arith.constant 0 : i32
    return %c0_i32, %c0_i32_0, %c0_i32_1 : i32, i32, i32
  }
  func.func @transform_18(%arg0: i32) -> (i32, i32) {
    %c0_i32 = arith.constant 0 : i32
    %c0_i32_0 = arith.constant 0 : i32
    %c0_i32_1 = arith.constant 0 : i32
    return %c0_i32, %c0_i32_0 : i32, i32
  }
  func.func @transform_19(%arg0: i32) -> (i32, i32) {
    %c0_i32 = arith.constant 0 : i32
    %c0_i32_0 = arith.constant 0 : i32
    %c0_i32_1 = arith.constant 0 : i32
    return %c0_i32, %c0_i32_0 : i32, i32
  }
  func.func @transform_20(%arg0: i32) -> (i32, i32) {
    %c0_i32 = arith.constant 0 : i32
    %c0_i32_0 = arith.constant 0 : i32
    %c0_i32_1 = arith.constant 0 : i32
    return %c0_i32, %c0_i32_0 : i32, i32
  }
  func.func @transform_21(%arg0: i32) -> (i32, i32) {
    %c0_i32 = arith.constant 0 : i32
    %c0_i32_0 = arith.constant 0 : i32
    %c0_i32_1 = arith.constant 0 : i32
    return %c0_i32, %c0_i32_0 : i32, i32
  }
  func.func @transform_22(%arg0: i32) -> (i32, i32) {
    %c0_i32 = arith.constant 0 : i32
    %c0_i32_0 = arith.constant 0 : i32
    %c0_i32_1 = arith.constant 0 : i32
    return %c0_i32, %c0_i32_0 : i32, i32
  }
  func.func @transform_23(%arg0: i32) -> (i32, i32, i32) {
    %c0_i32 = arith.constant 0 : i32
    %c0_i32_0 = arith.constant 0 : i32
    %c0_i32_1 = arith.constant 0 : i32
    %c0_i32_2 = arith.constant 0 : i32
    return %c0_i32, %c0_i32_0, %c0_i32_1 : i32, i32, i32
  }
  func.func @transform_24(%arg0: i32) -> (i32, i32, i32) {
    %c0_i32 = arith.constant 0 : i32
    %c0_i32_0 = arith.constant 0 : i32
    %c0_i32_1 = arith.constant 0 : i32
    %c0_i32_2 = arith.constant 0 : i32
    return %c0_i32, %c0_i32_0, %c0_i32_1 : i32, i32, i32
  }
  func.func @transform_25(%arg0: i32) -> (i32, i32) {
    %c0_i32 = arith.constant 0 : i32
    %c0_i32_0 = arith.constant 0 : i32
    %c0_i32_1 = arith.constant 0 : i32
    return %c0_i32, %c0_i32_0 : i32, i32
  }
  func.func @transform_26(%arg0: i32) -> (i32, i32) {
    %c0_i32 = arith.constant 0 : i32
    %c0_i32_0 = arith.constant 0 : i32
    return %arg0, %c0_i32 : i32, i32
  }
}

</mosaic_0001>

<llo_original>
// kernel: tpu_custom_call.1
$region0: #{tpu_custom_call.1}
  #allocation0 [shape = 'u32[]', space=smem, size = 0x4, offset = 0x4, fixed_abs, tag = 'smem constant byte address 0x4 - core index']
  #allocation1 [shape = 'u32[144,128]{1,0:T(1,128)}', space=vmem, size = 0x12000, scoped, tag = 'internal scratch']
  #allocation2 [shape = 'f32[216,96]{1,0:T(8,128)}', space=vmem, size = 0x1b000, scoped, tag = 'scratch operand']
  %s0 = inlined_call_operand.vmem [shape: f32[208,26], index: 0, kind: input, shape index: {}]
  %s1 = inlined_call_operand.vmem [shape: bf16[3,26,192], index: 1, kind: input, shape index: {}]
  %s2 = inlined_call_operand.vmem [shape: f32[3,192], index: 2, kind: input, shape index: {}]
  %s3 = inlined_call_operand.vmem [shape: f32[8,208], index: 3, kind: input, shape index: {}]
  %s4 = inlined_call_operand.vmem [shape: f32[208,8], index: 4, kind: input, shape index: {}]
  %s5 = inlined_call_operand.vmem [shape: f32[192,8], index: 5, kind: input, shape index: {}]
  %s6 = inlined_call_operand.vmem [shape: f32[8,192], index: 6, kind: input, shape index: {}]
  %s7 = inlined_call_operand.vmem [shape: bf16[2,192,96], index: 7, kind: input, shape index: {}]
  %s8 = inlined_call_operand.vmem [shape: bf16[2,96,208], index: 8, kind: input, shape index: {}]
  %s9 = inlined_call_operand.vmem [shape: bf16[3,96,80], index: 9, kind: input, shape index: {}]
  %s10 = inlined_call_operand.vmem [shape: f32[3,80], index: 10, kind: input, shape index: {}]
  %s11 = inlined_call_operand.vmem [shape: f32[8,96], index: 11, kind: input, shape index: {}]
  %s12 = inlined_call_operand.vmem [shape: f32[96,8], index: 12, kind: input, shape index: {}]
  %s13 = inlined_call_operand.vmem [shape: f32[80,8], index: 13, kind: input, shape index: {}]
  %s14 = inlined_call_operand.vmem [shape: f32[8,80], index: 14, kind: input, shape index: {}]
  %s15 = inlined_call_operand.vmem [shape: bf16[2,80,40], index: 15, kind: input, shape index: {}]
  %s16 = inlined_call_operand.vmem [shape: bf16[2,40,96], index: 16, kind: input, shape index: {}]
  %s17 = inlined_call_operand.vmem [shape: bf16[3,40,24], index: 17, kind: input, shape index: {}]
  %s18 = inlined_call_operand.vmem [shape: f32[3,24], index: 18, kind: input, shape index: {}]
  %s19 = inlined_call_operand.vmem [shape: f32[8,40], index: 19, kind: input, shape index: {}]
  %s20 = inlined_call_operand.vmem [shape: f32[40,8], index: 20, kind: input, shape index: {}]
  %s21 = inlined_call_operand.vmem [shape: f32[24,8], index: 21, kind: input, shape index: {}]
  %s22 = inlined_call_operand.vmem [shape: f32[8,24], index: 22, kind: input, shape index: {}]
  %s23 = inlined_call_operand.vmem [shape: f32[3,8,40], index: 23, kind: input, shape index: {}]
  %s24 = inlined_call_operand.vmem [shape: f32[3,24,16], index: 24, kind: input, shape index: {}]
  %s25 = inlined_call_operand.vmem [shape: f32[1,16], index: 25, kind: input, shape index: {}]
  %s26 = inlined_call_operand.hbm [shape: f32[8,16], index: 26, kind: output, shape index: {}]
  %s27 = sld [smem:[#allocation0]]
  $region114: #{tpu_custom_call.1} parent=0
    _
  %s29 = ssub.s32 1, %s27
  %s30 = scalar_select 0, %s29, %s27
  $region1: #{tpu_custom_call.1} parent=0
    #allocation3 [shape = 'u8[4096]{0}', space=vmem, size = 0x1000, scoped, tag = 'output window, operand 0, single buffered']
    #allocation4 [shape = 's32[1]{0}', space=sflag, size = 0x4, scoped, tag = 'scoped memory for tpu_custom_call.1']
    %31 = vsyncpa [#allocation4], 0
    // Predicated region
    $region2: #{tpu_custom_call.1} parent=1 // pred_check
      _
    $region3: #{tpu_custom_call.1} parent=1 // pred_check_branch
      %33 = sbr.rel (0) target = $region5
    $region4: #{tpu_custom_call.1} parent=1 // pred_region
      _
    $region5: #{tpu_custom_call.1} parent=1 // pred_fallthru
      _
    // Predicated region
    $region6: #{tpu_custom_call.1} parent=1 // pred_check
      _
    $region7: #{tpu_custom_call.1} parent=1 // pred_check_branch
      %35 = sbr.rel (0) target = $region9
    $region8: #{tpu_custom_call.1} parent=1 // pred_region
      _
    $region9: #{tpu_custom_call.1} parent=1 // pred_fallthru
      _
    // Predicated region
    $region10: #{tpu_custom_call.1} parent=1 // pred_check
      _
    $region11: #{tpu_custom_call.1} parent=1 // pred_check_branch
      %37 = sbr.rel (0) target = $region13
    $region12: #{tpu_custom_call.1} parent=1 // pred_region
      _
    $region13: #{tpu_custom_call.1} parent=1 // pred_fallthru
      _
    // Predicated region
    $region14: #{tpu_custom_call.1} parent=1 // pred_check
      _
    $region15: #{tpu_custom_call.1} parent=1 // pred_check_branch
      %39 = sbr.rel (0) target = $region17
    $region16: #{tpu_custom_call.1} parent=1 // pred_region
      _
    $region17: #{tpu_custom_call.1} parent=1 // pred_fallthru
      _
    // Predicated region
    $region18: #{tpu_custom_call.1} parent=1 // pred_check
      _
    $region19: #{tpu_custom_call.1} parent=1 // pred_check_branch
      %41 = sbr.rel (0) target = $region21
    $region20: #{tpu_custom_call.1} parent=1 // pred_region
      _
    $region21: #{tpu_custom_call.1} parent=1 // pred_fallthru
      _
    // Predicated region
    $region22: #{tpu_custom_call.1} parent=1 // pred_check
      _
    $region23: #{tpu_custom_call.1} parent=1 // pred_check_branch
      %43 = sbr.rel (0) target = $region25
    $region24: #{tpu_custom_call.1} parent=1 // pred_region
      _
    $region25: #{tpu_custom_call.1} parent=1 // pred_fallthru
      _
    // Predicated region
    $region26: #{tpu_custom_call.1} parent=1 // pred_check
      _
    $region27: #{tpu_custom_call.1} parent=1 // pred_check_branch
      %45 = sbr.rel (0) target = $region29
    $region28: #{tpu_custom_call.1} parent=1 // pred_region
      _
    $region29: #{tpu_custom_call.1} parent=1 // pred_fallthru
      _
    // Predicated region
    $region30: #{tpu_custom_call.1} parent=1 // pred_check
      _
    $region31: #{tpu_custom_call.1} parent=1 // pred_check_branch
      %47 = sbr.rel (0) target = $region33
    $region32: #{tpu_custom_call.1} parent=1 // pred_region
      _
    $region33: #{tpu_custom_call.1} parent=1 // pred_fallthru
      _
    // Predicated region
    $region34: #{tpu_custom_call.1} parent=1 // pred_check
      _
    $region35: #{tpu_custom_call.1} parent=1 // pred_check_branch
      %49 = sbr.rel (0) target = $region37
    $region36: #{tpu_custom_call.1} parent=1 // pred_region
      _
    $region37: #{tpu_custom_call.1} parent=1 // pred_fallthru
      _
    // Predicated region
    $region38: #{tpu_custom_call.1} parent=1 // pred_check
      _
    $region39: #{tpu_custom_call.1} parent=1 // pred_check_branch
      %51 = sbr.rel (0) target = $region41
    $region40: #{tpu_custom_call.1} parent=1 // pred_region
      _
    $region41: #{tpu_custom_call.1} parent=1 // pred_fallthru
      _
    // Predicated region
    $region42: #{tpu_custom_call.1} parent=1 // pred_check
      _
    $region43: #{tpu_custom_call.1} parent=1 // pred_check_branch
      %53 = sbr.rel (0) target = $region45
    $region44: #{tpu_custom_call.1} parent=1 // pred_region
      _
    $region45: #{tpu_custom_call.1} parent=1 // pred_fallthru
      _
    // Predicated region
    $region46: #{tpu_custom_call.1} parent=1 // pred_check
      _
    $region47: #{tpu_custom_call.1} parent=1 // pred_check_branch
      %55 = sbr.rel (0) target = $region49
    $region48: #{tpu_custom_call.1} parent=1 // pred_region
      _
    $region49: #{tpu_custom_call.1} parent=1 // pred_fallthru
      _
    // Predicated region
    $region50: #{tpu_custom_call.1} parent=1 // pred_check
      _
    $region51: #{tpu_custom_call.1} parent=1 // pred_check_branch
      %57 = sbr.rel (0) target = $region53
    $region52: #{tpu_custom_call.1} parent=1 // pred_region
      _
    $region53: #{tpu_custom_call.1} parent=1 // pred_fallthru
      _
    // Predicated region
    $region54: #{tpu_custom_call.1} parent=1 // pred_check
      _
    $region55: #{tpu_custom_call.1} parent=1 // pred_check_branch
      %59 = sbr.rel (0) target = $region57
    $region56: #{tpu_custom_call.1} parent=1 // pred_region
      _
    $region57: #{tpu_custom_call.1} parent=1 // pred_fallthru
      _
    // Predicated region
    $region58: #{tpu_custom_call.1} parent=1 // pred_check
      _
    $region59: #{tpu_custom_call.1} parent=1 // pred_check_branch
      %61 = sbr.rel (0) target = $region61
    $region60: #{tpu_custom_call.1} parent=1 // pred_region
      _
    $region61: #{tpu_custom_call.1} parent=1 // pred_fallthru
      _
    // Predicated region
    $region62: #{tpu_custom_call.1} parent=1 // pred_check
      _
    $region63: #{tpu_custom_call.1} parent=1 // pred_check_branch
      %63 = sbr.rel (0) target = $region65
    $region64: #{tpu_custom_call.1} parent=1 // pred_region
      _
    $region65: #{tpu_custom_call.1} parent=1 // pred_fallthru
      _
    // Predicated region
    $region66: #{tpu_custom_call.1} parent=1 // pred_check
      _
    $region67: #{tpu_custom_call.1} parent=1 // pred_check_branch
      %65 = sbr.rel (0) target = $region69
    $region68: #{tpu_custom_call.1} parent=1 // pred_region
      _
    $region69: #{tpu_custom_call.1} parent=1 // pred_fallthru
      _
    // Predicated region
    $region70: #{tpu_custom_call.1} parent=1 // pred_check
      _
    $region71: #{tpu_custom_call.1} parent=1 // pred_check_branch
      %67 = sbr.rel (0) target = $region73
    $region72: #{tpu_custom_call.1} parent=1 // pred_region
      _
    $region73: #{tpu_custom_call.1} parent=1 // pred_fallthru
      _
    // Predicated region
    $region74: #{tpu_custom_call.1} parent=1 // pred_check
      _
    $region75: #{tpu_custom_call.1} parent=1 // pred_check_branch
      %69 = sbr.rel (0) target = $region77
    $region76: #{tpu_custom_call.1} parent=1 // pred_region
      _
    $region77: #{tpu_custom_call.1} parent=1 // pred_fallthru
      _
    // Predicated region
    $region78: #{tpu_custom_call.1} parent=1 // pred_check
      _
    $region79: #{tpu_custom_call.1} parent=1 // pred_check_branch
      %71 = sbr.rel (0) target = $region81
    $region80: #{tpu_custom_call.1} parent=1 // pred_region
      _
    $region81: #{tpu_custom_call.1} parent=1 // pred_fallthru
      _
    // Predicated region
    $region82: #{tpu_custom_call.1} parent=1 // pred_check
      _
    $region83: #{tpu_custom_call.1} parent=1 // pred_check_branch
      %73 = sbr.rel (0) target = $region85
    $region84: #{tpu_custom_call.1} parent=1 // pred_region
      _
    $region85: #{tpu_custom_call.1} parent=1 // pred_fallthru
      _
    // Predicated region
    $region86: #{tpu_custom_call.1} parent=1 // pred_check
      _
    $region87: #{tpu_custom_call.1} parent=1 // pred_check_branch
      %75 = sbr.rel (0) target = $region89
    $region88: #{tpu_custom_call.1} parent=1 // pred_region
      _
    $region89: #{tpu_custom_call.1} parent=1 // pred_fallthru
      _
    // Predicated region
    $region90: #{tpu_custom_call.1} parent=1 // pred_check
      _
    $region91: #{tpu_custom_call.1} parent=1 // pred_check_branch
      %77 = sbr.rel (0) target = $region93
    $region92: #{tpu_custom_call.1} parent=1 // pred_region
      _
    $region93: #{tpu_custom_call.1} parent=1 // pred_fallthru
      _
    // Predicated region
    $region94: #{tpu_custom_call.1} parent=1 // pred_check
      _
    $region95: #{tpu_custom_call.1} parent=1 // pred_check_branch
      %79 = sbr.rel (0) target = $region97
    $region96: #{tpu_custom_call.1} parent=1 // pred_region
      _
    $region97: #{tpu_custom_call.1} parent=1 // pred_fallthru
      _
    // Predicated region
    $region98: #{tpu_custom_call.1} parent=1 // pred_check
      _
    $region99: #{tpu_custom_call.1} parent=1 // pred_check_branch
      %81 = sbr.rel (0) target = $region101
    $region100: #{tpu_custom_call.1} parent=1 // pred_region
      _
    $region101: #{tpu_custom_call.1} parent=1 // pred_fallthru
      _
    // Predicated region
    $region102: #{tpu_custom_call.1} parent=1 // pred_check
      _
    $region103: #{tpu_custom_call.1} parent=1 // pred_check_branch
      %83 = sbr.rel (0) target = $region105
    $region104: #{tpu_custom_call.1} parent=1 // pred_region
      _
    $region105: #{tpu_custom_call.1} parent=1 // pred_fallthru
      _
    %v85 = vld [vmem:[%s0] sm:$0xff]
    %v86 = vld [vmem:[%s0 + $0x8] sm:$0xff]
    %v87 = vld [vmem:[%s0 + $0x10] sm:$0xff]
    %v88 = vld [vmem:[%s0 + $0x18] sm:$0xff]
    %v89 = vld [vmem:[%s0 + $0x20] sm:$0xff]
    %v90 = vld [vmem:[%s0 + $0x28] sm:$0xff]
    %v91 = vld [vmem:[%s0 + $0x30] sm:$0xff]
    %v92 = vld [vmem:[%s0 + $0x38] sm:$0xff]
    %v93 = vld [vmem:[%s0 + $0x40] sm:$0xff]
    %v94 = vld [vmem:[%s0 + $0x48] sm:$0xff]
    %v95 = vld [vmem:[%s0 + $0x50] sm:$0xff]
    %v96 = vld [vmem:[%s0 + $0x58] sm:$0xff]
    %v97 = vld [vmem:[%s0 + $0x60] sm:$0xff]
    %v98 = vld [vmem:[%s0 + $0x68] sm:$0xff]
    %v99 = vld [vmem:[%s0 + $0x70] sm:$0xff]
    %v100 = vld [vmem:[%s0 + $0x78] sm:$0xff]
    %v101 = vld [vmem:[%s0 + $0x80] sm:$0xff]
    %v102 = vld [vmem:[%s0 + $0x88] sm:$0xff]
    %v103 = vld [vmem:[%s0 + $0x90] sm:$0xff]
    %v104 = vld [vmem:[%s0 + $0x98] sm:$0xff]
    %v105 = vld [vmem:[%s0 + $0xa0] sm:$0xff]
    %v106 = vld [vmem:[%s0 + $0xa8] sm:$0xff]
    %v107 = vld [vmem:[%s0 + $0xb0] sm:$0xff]
    %v108 = vld [vmem:[%s0 + $0xb8] sm:$0xff]
    %v109 = vld [vmem:[%s0 + $0xc0] sm:$0xff]
    %v110 = vld [vmem:[%s0 + $0xc8] sm:$0xff]
    %v111 = vld [vmem:[%s2] sm:$0x77]
    %v112 = vld [vmem:[%s3] sm:$0xff]
    %v113 = vld [vmem:[%s3 + $0x8] sm:$0xff]
    %v114 = vld [vmem:[%s4] sm:$0xff]
    %v115 = vld [vmem:[%s4 + $0x8] sm:$0xff]
    %v116 = vld [vmem:[%s4 + $0x10] sm:$0xff]
    %v117 = vld [vmem:[%s4 + $0x18] sm:$0xff]
    %v118 = vld [vmem:[%s4 + $0x20] sm:$0xff]
    %v119 = vld [vmem:[%s4 + $0x28] sm:$0xff]
    %v120 = vld [vmem:[%s4 + $0x30] sm:$0xff]
    %v121 = vld [vmem:[%s4 + $0x38] sm:$0xff]
    %v122 = vld [vmem:[%s4 + $0x40] sm:$0xff]
    %v123 = vld [vmem:[%s4 + $0x48] sm:$0xff]
    %v124 = vld [vmem:[%s4 + $0x50] sm:$0xff]
    %v125 = vld [vmem:[%s4 + $0x58] sm:$0xff]
    %v126 = vld [vmem:[%s4 + $0x60] sm:$0xff]
    %v127 = vld [vmem:[%s4 + $0x68] sm:$0xff]
    %v128 = vld [vmem:[%s4 + $0x70] sm:$0xff]
    %v129 = vld [vmem:[%s4 + $0x78] sm:$0xff]
    %v130 = vld [vmem:[%s4 + $0x80] sm:$0xff]
    %v131 = vld [vmem:[%s4 + $0x88] sm:$0xff]
    %v132 = vld [vmem:[%s4 + $0x90] sm:$0xff]
    %v133 = vld [vmem:[%s4 + $0x98] sm:$0xff]
    %v134 = vld [vmem:[%s4 + $0xa0] sm:$0xff]
    %v135 = vld [vmem:[%s4 + $0xa8] sm:$0xff]
    %v136 = vld [vmem:[%s4 + $0xb0] sm:$0xff]
    %v137 = vld [vmem:[%s4 + $0xb8] sm:$0xff]
    %v138 = vld [vmem:[%s4 + $0xc0] sm:$0xff]
    %v139 = vld [vmem:[%s4 + $0xc8] sm:$0xff]
    %v140 = vld [vmem:[%s5] sm:$0xff]
    %v141 = vld [vmem:[%s5 + $0x8] sm:$0xff]
    %v142 = vld [vmem:[%s5 + $0x10] sm:$0xff]
    %v143 = vld [vmem:[%s5 + $0x18] sm:$0xff]
    %v144 = vld [vmem:[%s5 + $0x20] sm:$0xff]
    %v145 = vld [vmem:[%s5 + $0x28] sm:$0xff]
    %v146 = vld [vmem:[%s5 + $0x30] sm:$0xff]
    %v147 = vld [vmem:[%s5 + $0x38] sm:$0xff]
    %v148 = vld [vmem:[%s5 + $0x40] sm:$0xff]
    %v149 = vld [vmem:[%s5 + $0x48] sm:$0xff]
    %v150 = vld [vmem:[%s5 + $0x50] sm:$0xff]
    %v151 = vld [vmem:[%s5 + $0x58] sm:$0xff]
    %v152 = vld [vmem:[%s5 + $0x60] sm:$0xff]
    %v153 = vld [vmem:[%s5 + $0x68] sm:$0xff]
    %v154 = vld [vmem:[%s5 + $0x70] sm:$0xff]
    %v155 = vld [vmem:[%s5 + $0x78] sm:$0xff]
    %v156 = vld [vmem:[%s5 + $0x80] sm:$0xff]
    %v157 = vld [vmem:[%s5 + $0x88] sm:$0xff]
    %v158 = vld [vmem:[%s5 + $0x90] sm:$0xff]
    %v159 = vld [vmem:[%s5 + $0x98] sm:$0xff]
    %v160 = vld [vmem:[%s5 + $0xa0] sm:$0xff]
    %v161 = vld [vmem:[%s5 + $0xa8] sm:$0xff]
    %v162 = vld [vmem:[%s5 + $0xb0] sm:$0xff]
    %v163 = vld [vmem:[%s5 + $0xb8] sm:$0xff]
    %v164 = vld [vmem:[%s6] sm:$0xff]
    %v165 = vld [vmem:[%s6 + $0x8] sm:$0xff]
    %vm166 = vcmask 211968
    %167 = vst.msk [vmem:[#allocation2] sm:$0xff] %vm166, %v85
    %168 = vst.msk [vmem:[#allocation2 + $0x8] sm:$0xff] %vm166, %v86
    %169 = vst.msk [vmem:[#allocation2 + $0x10] sm:$0xff] %vm166, %v87
    %170 = vst.msk [vmem:[#allocation2 + $0x18] sm:$0xff] %vm166, %v88
    %171 = vst.msk [vmem:[#allocation2 + $0x20] sm:$0xff] %vm166, %v89
    %172 = vst.msk [vmem:[#allocation2 + $0x28] sm:$0xff] %vm166, %v90
    %173 = vst.msk [vmem:[#allocation2 + $0x30] sm:$0xff] %vm166, %v91
    %174 = vst.msk [vmem:[#allocation2 + $0x38] sm:$0xff] %vm166, %v92
    %175 = vst.msk [vmem:[#allocation2 + $0x40] sm:$0xff] %vm166, %v93
    %176 = vst.msk [vmem:[#allocation2 + $0x48] sm:$0xff] %vm166, %v94
    %177 = vst.msk [vmem:[#allocation2 + $0x50] sm:$0xff] %vm166, %v95
    %178 = vst.msk [vmem:[#allocation2 + $0x58] sm:$0xff] %vm166, %v96
    %179 = vst.msk [vmem:[#allocation2 + $0x60] sm:$0xff] %vm166, %v97
    %180 = vst.msk [vmem:[#allocation2 + $0x68] sm:$0xff] %vm166, %v98
    %181 = vst.msk [vmem:[#allocation2 + $0x70] sm:$0xff] %vm166, %v99
    %182 = vst.msk [vmem:[#allocation2 + $0x78] sm:$0xff] %vm166, %v100
    %183 = vst.msk [vmem:[#allocation2 + $0x80] sm:$0xff] %vm166, %v101
    %184 = vst.msk [vmem:[#allocation2 + $0x88] sm:$0xff] %vm166, %v102
    %185 = vst.msk [vmem:[#allocation2 + $0x90] sm:$0xff] %vm166, %v103
    %186 = vst.msk [vmem:[#allocation2 + $0x98] sm:$0xff] %vm166, %v104
    %187 = vst.msk [vmem:[#allocation2 + $0xa0] sm:$0xff] %vm166, %v105
    %188 = vst.msk [vmem:[#allocation2 + $0xa8] sm:$0xff] %vm166, %v106
    %189 = vst.msk [vmem:[#allocation2 + $0xb0] sm:$0xff] %vm166, %v107
    %190 = vst.msk [vmem:[#allocation2 + $0xb8] sm:$0xff] %vm166, %v108
    %191 = vst.msk [vmem:[#allocation2 + $0xc0] sm:$0xff] %vm166, %v109
    %192 = vst.msk [vmem:[#allocation2 + $0xc8] sm:$0xff] %vm166, %v110
    %193 = vst.msk [vmem:[#allocation2 + $0xd0] sm:$0xff] %vm166, 0.0
    %v194 = vpack.c.bf16 %v86, %v85
    %v195 = vpack.c.bf16 %v88, %v87
    %v196 = vpack.c.bf16 %v90, %v89
    %v197 = vpack.c.bf16 %v92, %v91
    %v198 = vpack.c.bf16 %v94, %v93
    %v199 = vpack.c.bf16 %v96, %v95
    %v200 = vpack.c.bf16 %v98, %v97
    %v201 = vpack.c.bf16 %v100, %v99
    %v202 = vpack.c.bf16 %v102, %v101
    %v203 = vpack.c.bf16 %v104, %v103
    %v204 = vpack.c.bf16 %v106, %v105
    %v205 = vpack.c.bf16 %v108, %v107
    %v206 = vpack.c.bf16 %v110, %v109
    %v207 = vld [vmem:[%s1] sm:$0xff]
    %v208 = vld [vmem:[%s1 + $0x8] sm:$0xff]
    %v209 = vld [vmem:[%s1 + $0x10] sm:$0xff]
    %v210 = vld [vmem:[%s1 + $0x18] sm:$0x11]
    %v211 = vld [vmem:[#allocation2 + $0x1] sm:$0xff]
    %v212 = vld [vmem:[#allocation2 + $0x9] sm:$0xff]
    %v213 = vld [vmem:[#allocation2 + $0x11] sm:$0xff]
    %v214 = vld [vmem:[#allocation2 + $0x19] sm:$0xff]
    %v215 = vld [vmem:[#allocation2 + $0x21] sm:$0xff]
    %v216 = vld [vmem:[#allocation2 + $0x29] sm:$0xff]
    %v217 = vld [vmem:[#allocation2 + $0x31] sm:$0xff]
    %v218 = vld [vmem:[#allocation2 + $0x39] sm:$0xff]
    %v219 = vld [vmem:[#allocation2 + $0x41] sm:$0xff]
    %v220 = vld [vmem:[#allocation2 + $0x49] sm:$0xff]
    %v221 = vld [vmem:[#allocation2 + $0x51] sm:$0xff]
    %v222 = vld [vmem:[#allocation2 + $0x59] sm:$0xff]
    %v223 = vld [vmem:[#allocation2 + $0x61] sm:$0xff]
    %v224 = vld [vmem:[#allocation2 + $0x69] sm:$0xff]
    %v225 = vld [vmem:[#allocation2 + $0x71] sm:$0xff]
    %v226 = vld [vmem:[#allocation2 + $0x79] sm:$0xff]
    %v227 = vld [vmem:[#allocation2 + $0x81] sm:$0xff]
    %v228 = vld [vmem:[#allocation2 + $0x89] sm:$0xff]
    %v229 = vld [vmem:[#allocation2 + $0x91] sm:$0xff]
    %v230 = vld [vmem:[#allocation2 + $0x99] sm:$0xff]
    %v231 = vld [vmem:[#allocation2 + $0xa1] sm:$0xff]
    %v232 = vld [vmem:[#allocation2 + $0xa9] sm:$0xff]
    %v233 = vld [vmem:[#allocation2 + $0xb1] sm:$0xff]
    %v234 = vld [vmem:[#allocation2 + $0xb9] sm:$0xff]
    %v235 = vld [vmem:[#allocation2 + $0xc1] sm:$0xff]
    %v236 = vld [vmem:[#allocation2 + $0xc9] sm:$0xff]
    %v237 = vpack.c.bf16 %v212, %v211
    %v238 = vpack.c.bf16 %v214, %v213
    %v239 = vpack.c.bf16 %v216, %v215
    %v240 = vpack.c.bf16 %v218, %v217
    %v241 = vpack.c.bf16 %v220, %v219
    %v242 = vpack.c.bf16 %v222, %v221
    %v243 = vpack.c.bf16 %v224, %v223
    %v244 = vpack.c.bf16 %v226, %v225
    %v245 = vpack.c.bf16 %v228, %v227
    %v246 = vpack.c.bf16 %v230, %v229
    %v247 = vpack.c.bf16 %v232, %v231
    %v248 = vpack.c.bf16 %v234, %v233
    %v249 = vpack.c.bf16 %v236, %v235
    %s250 = scalar_lea.vmem %s1, 32
    %v251 = vld [vmem:[%s250] sm:$0xff]
    %v252 = vld [vmem:[%s250 + $0x8] sm:$0xff]
    %v253 = vld [vmem:[%s250 + $0x10] sm:$0xff]
    %v254 = vld [vmem:[%s250 + $0x18] sm:$0x11]
    %v259 = vunpack.c.l.b16 %v251
    %v260 = vunpack.c.h.b16 %v251
    %v261 = vunpack.c.l.b16 %v252
    %v262 = vunpack.c.h.b16 %v252
    %v263 = vunpack.c.l.b16 %v253
    %v264 = vunpack.c.h.b16 %v253
    %v265 = vunpack.c.l.b16 %v254
    %v266 = vunpack.c.h.b16 %v254
    %v267 = vpack.c.b16 %v261, %v259
    %v268 = vpack.c.b16 %v262, %v260
    %v269 = vpack.c.b16 %v265, %v263
    %v270 = vpack.c.b16 %v266, %v264
    %v274 = vsel %vm166, %v237, 0
    %v277 = vsel %vm166, %v238, 0
    %v280 = vsel %vm166, %v239, 0
    %v283 = vsel %vm166, %v240, 0
    %v286 = vsel %vm166, %v241, 0
    %v289 = vsel %vm166, %v242, 0
    %v292 = vsel %vm166, %v243, 0
    %v295 = vsel %vm166, %v244, 0
    %v298 = vsel %vm166, %v245, 0
    %v301 = vsel %vm166, %v246, 0
    %v304 = vsel %vm166, %v247, 0
    %v307 = vsel %vm166, %v248, 0
    %v310 = vsel %vm166, %v249, 0
    %vm312 = vcmask 1044480
    %v314 = vsel %vm312, %v269, 0
    %v317 = vsel %vm312, %v270, 0
    %319 = vmatprep.subr.bf16.mxu0 %v268
    %320 = vmatpush1.bf16.msra.mxu0 %v267
    %321 = vmatprep.subr.bf16.mxu0 %v317
    %322 = vmatpush1.bf16.msra.mxu0 %v314
    %323 = vmatprep.subr.bf16.mxu0 0
    %324 = vmatpush1.bf16.msra.mxu0 0
    %325 = vmatprep.subr.bf16.mxu0 0
    %326 = vmatpush1.bf16.msra.mxu0 0
    %327 = vmatprep.subr.bf16.mxu0 0
    %328 = vmatpush1.bf16.msra.mxu0 0
    %329 = vmatprep.subr.bf16.mxu0 0
    %330 = vmatpush1.bf16.msra.mxu0 0
    %331 = vmatprep.subr.bf16.mxu0 0
    %332 = vmatpush1.bf16.msra.mxu0 0
    %333 = vmatprep.subr.bf16.mxu0 0
    %334 = vmatpush1.bf16.msra.mxu0 0
    %335 = vmatprep.subr.bf16.mxu0 0
    %336 = vmatpush1.bf16.msra.mxu0 0
    %337 = vmatprep.subr.bf16.mxu0 0
    %338 = vmatpush1.bf16.msra.mxu0 0
    %339 = vmatprep.subr.bf16.mxu0 0
    %340 = vmatpush1.bf16.msra.mxu0 0
    %341 = vmatprep.subr.bf16.mxu0 0
    %342 = vmatpush1.bf16.msra.mxu0 0
    %343 = vmatprep.subr.bf16.mxu0 0
    %344 = vmatpush1.bf16.msra.mxu0 0
    %345 = vmatprep.subr.bf16.mxu0 0
    %346 = vmatpush1.bf16.msra.mxu0 0
    %347 = vmatprep.subr.bf16.mxu0 0
    %348 = vmatpush1.bf16.msra.mxu0 0
    %349 = vmatprep.subr.bf16.mxu0 0
    %350 = vmatpush1.bf16.msra.mxu0 0
    %351 = vmatprep.mubr.bf16.mxu0 0
    %352 = vmatmul.mubr.bf16.gmra.mrb[0].mxu0 %v274
    %v353 = vpop.f32.mrb[0].mxu0
    %v354 = vadd.f32 0.0, %v353
    %v355 = vpop.f32.mrb[0].mxu0
    %v356 = vadd.f32 0.0, %v355
    %v357 = vpop.f32.mrb[0].mxu0
    %v358 = vadd.f32 0.0, %v357
    %v359 = vpop.f32.mrb[0].mxu0
    %v360 = vadd.f32 0.0, %v359
    %361 = vmatprep.mubr.bf16.mxu0 0
    %362 = vmatmul.mubr.bf16.gmra.mrb[0].mxu0 %v277
    %v363 = vpop.f32.mrb[0].mxu0
    %v364 = vadd.f32 0.0, %v363
    %v365 = vpop.f32.mrb[0].mxu0
    %v366 = vadd.f32 0.0, %v365
    %v367 = vpop.f32.mrb[0].mxu0
    %v368 = vadd.f32 0.0, %v367
    %v369 = vpop.f32.mrb[0].mxu0
    %v370 = vadd.f32 0.0, %v369
    %371 = vmatprep.mubr.bf16.mxu0 0
    %372 = vmatmul.mubr.bf16.gmra.mrb[0].mxu0 %v280
    %v373 = vpop.f32.mrb[0].mxu0
    %v374 = vadd.f32 0.0, %v373
    %v375 = vpop.f32.mrb[0].mxu0
    %v376 = vadd.f32 0.0, %v375
    %v377 = vpop.f32.mrb[0].mxu0
    %v378 = vadd.f32 0.0, %v377
    %v379 = vpop.f32.mrb[0].mxu0
    %v380 = vadd.f32 0.0, %v379
    %381 = vmatprep.mubr.bf16.mxu0 0
    %382 = vmatmul.mubr.bf16.gmra.mrb[0].mxu0 %v283
    %v383 = vpop.f32.mrb[0].mxu0
    %v384 = vadd.f32 0.0, %v383
    %v385 = vpop.f32.mrb[0].mxu0
    %v386 = vadd.f32 0.0, %v385
    %v387 = vpop.f32.mrb[0].mxu0
    %v388 = vadd.f32 0.0, %v387
    %v389 = vpop.f32.mrb[0].mxu0
    %v390 = vadd.f32 0.0, %v389
    %391 = vmatprep.mubr.bf16.mxu0 0
    %392 = vmatmul.mubr.bf16.gmra.mrb[0].mxu0 %v286
    %v393 = vpop.f32.mrb[0].mxu0
    %v394 = vadd.f32 0.0, %v393
    %v395 = vpop.f32.mrb[0].mxu0
    %v396 = vadd.f32 0.0, %v395
    %v397 = vpop.f32.mrb[0].mxu0
    %v398 = vadd.f32 0.0, %v397
    %v399 = vpop.f32.mrb[0].mxu0
    %v400 = vadd.f32 0.0, %v399
    %401 = vmatprep.mubr.bf16.mxu0 0
    %402 = vmatmul.mubr.bf16.gmra.mrb[0].mxu0 %v289
    %v403 = vpop.f32.mrb[0].mxu0
    %v404 = vadd.f32 0.0, %v403
    %v405 = vpop.f32.mrb[0].mxu0
    %v406 = vadd.f32 0.0, %v405
    %v407 = vpop.f32.mrb[0].mxu0
    %v408 = vadd.f32 0.0, %v407
    %v409 = vpop.f32.mrb[0].mxu0
    %v410 = vadd.f32 0.0, %v409
    %411 = vmatprep.mubr.bf16.mxu0 0
    %412 = vmatmul.mubr.bf16.gmra.mrb[0].mxu0 %v292
    %v413 = vpop.f32.mrb[0].mxu0
    %v414 = vadd.f32 0.0, %v413
    %v415 = vpop.f32.mrb[0].mxu0
    %v416 = vadd.f32 0.0, %v415
    %v417 = vpop.f32.mrb[0].mxu0
    %v418 = vadd.f32 0.0, %v417
    %v419 = vpop.f32.mrb[0].mxu0
    %v420 = vadd.f32 0.0, %v419
    %421 = vmatprep.mubr.bf16.mxu0 0
    %422 = vmatmul.mubr.bf16.gmra.mrb[0].mxu0 %v295
    %v423 = vpop.f32.mrb[0].mxu0
    %v424 = vadd.f32 0.0, %v423
    %v425 = vpop.f32.mrb[0].mxu0
    %v426 = vadd.f32 0.0, %v425
    %v427 = vpop.f32.mrb[0].mxu0
    %v428 = vadd.f32 0.0, %v427
    %v429 = vpop.f32.mrb[0].mxu0
    %v430 = vadd.f32 0.0, %v429
    %431 = vmatprep.mubr.bf16.mxu0 0
    %432 = vmatmul.mubr.bf16.gmra.mrb[0].mxu0 %v298
    %v433 = vpop.f32.mrb[0].mxu0
    %v434 = vadd.f32 0.0, %v433
    %v435 = vpop.f32.mrb[0].mxu0
    %v436 = vadd.f32 0.0, %v435
    %v437 = vpop.f32.mrb[0].mxu0
    %v438 = vadd.f32 0.0, %v437
    %v439 = vpop.f32.mrb[0].mxu0
    %v440 = vadd.f32 0.0, %v439
    %441 = vmatprep.mubr.bf16.mxu0 0
    %442 = vmatmul.mubr.bf16.gmra.mrb[0].mxu0 %v301
    %v443 = vpop.f32.mrb[0].mxu0
    %v444 = vadd.f32 0.0, %v443
    %v445 = vpop.f32.mrb[0].mxu0
    %v446 = vadd.f32 0.0, %v445
    %v447 = vpop.f32.mrb[0].mxu0
    %v448 = vadd.f32 0.0, %v447
    %v449 = vpop.f32.mrb[0].mxu0
    %v450 = vadd.f32 0.0, %v449
    %451 = vmatprep.mubr.bf16.mxu0 0
    %452 = vmatmul.mubr.bf16.gmra.mrb[0].mxu0 %v304
    %v453 = vpop.f32.mrb[0].mxu0
    %v454 = vadd.f32 0.0, %v453
    %v455 = vpop.f32.mrb[0].mxu0
    %v456 = vadd.f32 0.0, %v455
    %v457 = vpop.f32.mrb[0].mxu0
    %v458 = vadd.f32 0.0, %v457
    %v459 = vpop.f32.mrb[0].mxu0
    %v460 = vadd.f32 0.0, %v459
    %461 = vmatprep.mubr.bf16.mxu0 0
    %462 = vmatmul.mubr.bf16.gmra.mrb[0].mxu0 %v307
    %v463 = vpop.f32.mrb[0].mxu0
    %v464 = vadd.f32 0.0, %v463
    %v465 = vpop.f32.mrb[0].mxu0
    %v466 = vadd.f32 0.0, %v465
    %v467 = vpop.f32.mrb[0].mxu0
    %v468 = vadd.f32 0.0, %v467
    %v469 = vpop.f32.mrb[0].mxu0
    %v470 = vadd.f32 0.0, %v469
    %471 = vmatprep.mubr.bf16.mxu0 0
    %472 = vmatmul.mubr.bf16.gmra.mrb[0].mxu0 %v310
    %v473 = vpop.f32.mrb[0].mxu0
    %v474 = vadd.f32 0.0, %v473
    %v475 = vpop.f32.mrb[0].mxu0
    %v476 = vadd.f32 0.0, %v475
    %v477 = vpop.f32.mrb[0].mxu0
    %v478 = vadd.f32 0.0, %v477
    %v479 = vpop.f32.mrb[0].mxu0
    %v480 = vadd.f32 0.0, %v479
    %481 = vdwg.mxu0
    %v486 = vunpack.c.l.b16 %v207
    %v487 = vunpack.c.h.b16 %v207
    %v488 = vunpack.c.l.b16 %v208
    %v489 = vunpack.c.h.b16 %v208
    %v490 = vunpack.c.l.b16 %v209
    %v491 = vunpack.c.h.b16 %v209
    %v492 = vunpack.c.l.b16 %v210
    %v493 = vunpack.c.h.b16 %v210
    %v494 = vpack.c.b16 %v488, %v486
    %v495 = vpack.c.b16 %v489, %v487
    %v496 = vpack.c.b16 %v492, %v490
    %v497 = vpack.c.b16 %v493, %v491
    %v501 = vsel %vm166, %v194, 0
    %v504 = vsel %vm166, %v195, 0
    %v507 = vsel %vm166, %v196, 0
    %v510 = vsel %vm166, %v197, 0
    %v513 = vsel %vm166, %v198, 0
    %v516 = vsel %vm166, %v199, 0
    %v519 = vsel %vm166, %v200, 0
    %v522 = vsel %vm166, %v201, 0
    %v525 = vsel %vm166, %v202, 0
    %v528 = vsel %vm166, %v203, 0
    %v531 = vsel %vm166, %v204, 0
    %v534 = vsel %vm166, %v205, 0
    %v537 = vsel %vm166, %v206, 0
    %v540 = vsel %vm312, %v496, 0
    %v543 = vsel %vm312, %v497, 0
    %545 = vmatprep.subr.bf16.mxu0 %v495
    %546 = vmatpush1.bf16.msra.mxu0 %v494
    %547 = vmatprep.subr.bf16.mxu0 %v543
    %548 = vmatpush1.bf16.msra.mxu0 %v540
    %549 = vmatprep.subr.bf16.mxu0 0
    %550 = vmatpush1.bf16.msra.mxu0 0
    %551 = vmatprep.subr.bf16.mxu0 0
    %552 = vmatpush1.bf16.msra.mxu0 0
    %553 = vmatprep.subr.bf16.mxu0 0
    %554 = vmatpush1.bf16.msra.mxu0 0
    %555 = vmatprep.subr.bf16.mxu0 0
    %556 = vmatpush1.bf16.msra.mxu0 0
    %557 = vmatprep.subr.bf16.mxu0 0
    %558 = vmatpush1.bf16.msra.mxu0 0
    %559 = vmatprep.subr.bf16.mxu0 0
    %560 = vmatpush1.bf16.msra.mxu0 0
    %561 = vmatprep.subr.bf16.mxu0 0
    %562 = vmatpush1.bf16.msra.mxu0 0
    %563 = vmatprep.subr.bf16.mxu0 0
    %564 = vmatpush1.bf16.msra.mxu0 0
    %565 = vmatprep.subr.bf16.mxu0 0
    %566 = vmatpush1.bf16.msra.mxu0 0
    %567 = vmatprep.subr.bf16.mxu0 0
    %568 = vmatpush1.bf16.msra.mxu0 0
    %569 = vmatprep.subr.bf16.mxu0 0
    %570 = vmatpush1.bf16.msra.mxu0 0
    %571 = vmatprep.subr.bf16.mxu0 0
    %572 = vmatpush1.bf16.msra.mxu0 0
    %573 = vmatprep.subr.bf16.mxu0 0
    %574 = vmatpush1.bf16.msra.mxu0 0
    %575 = vmatprep.subr.bf16.mxu0 0
    %576 = vmatpush1.bf16.msra.mxu0 0
    %577 = vmatprep.mubr.bf16.mxu0 0
    %578 = vmatmul.mubr.bf16.gmra.mrb[0].mxu0 %v501
    %v579 = vpop.f32.mrb[0].mxu0
    %v580 = vadd.f32 %v354, %v579
    %v581 = vpop.f32.mrb[0].mxu0
    %v582 = vadd.f32 %v356, %v581
    %v583 = vpop.f32.mrb[0].mxu0
    %v584 = vadd.f32 %v358, %v583
    %v585 = vpop.f32.mrb[0].mxu0
    %v586 = vadd.f32 %v360, %v585
    %587 = vmatprep.mubr.bf16.mxu0 0
    %588 = vmatmul.mubr.bf16.gmra.mrb[0].mxu0 %v504
    %v589 = vpop.f32.mrb[0].mxu0
    %v590 = vadd.f32 %v364, %v589
    %v591 = vpop.f32.mrb[0].mxu0
    %v592 = vadd.f32 %v366, %v591
    %v593 = vpop.f32.mrb[0].mxu0
    %v594 = vadd.f32 %v368, %v593
    %v595 = vpop.f32.mrb[0].mxu0
    %v596 = vadd.f32 %v370, %v595
    %597 = vmatprep.mubr.bf16.mxu0 0
    %598 = vmatmul.mubr.bf16.gmra.mrb[0].mxu0 %v507
    %v599 = vpop.f32.mrb[0].mxu0
    %v600 = vadd.f32 %v374, %v599
    %v601 = vpop.f32.mrb[0].mxu0
    %v602 = vadd.f32 %v376, %v601
    %v603 = vpop.f32.mrb[0].mxu0
    %v604 = vadd.f32 %v378, %v603
    %v605 = vpop.f32.mrb[0].mxu0
    %v606 = vadd.f32 %v380, %v605
    %607 = vmatprep.mubr.bf16.mxu0 0
    %608 = vmatmul.mubr.bf16.gmra.mrb[0].mxu0 %v510
    %v609 = vpop.f32.mrb[0].mxu0
    %v610 = vadd.f32 %v384, %v609
    %v611 = vpop.f32.mrb[0].mxu0
    %v612 = vadd.f32 %v386, %v611
    %v613 = vpop.f32.mrb[0].mxu0
    %v614 = vadd.f32 %v388, %v613
    %v615 = vpop.f32.mrb[0].mxu0
    %v616 = vadd.f32 %v390, %v615
    %617 = vmatprep.mubr.bf16.mxu0 0
    %618 = vmatmul.mubr.bf16.gmra.mrb[0].mxu0 %v513
    %v619 = vpop.f32.mrb[0].mxu0
    %v620 = vadd.f32 %v394, %v619
    %v621 = vpop.f32.mrb[0].mxu0
    %v622 = vadd.f32 %v396, %v621
    %v623 = vpop.f32.mrb[0].mxu0
    %v624 = vadd.f32 %v398, %v623
    %v625 = vpop.f32.mrb[0].mxu0
    %v626 = vadd.f32 %v400, %v625
    %627 = vmatprep.mubr.bf16.mxu0 0
    %628 = vmatmul.mubr.bf16.gmra.mrb[0].mxu0 %v516
    %v629 = vpop.f32.mrb[0].mxu0
    %v630 = vadd.f32 %v404, %v629
    %v631 = vpop.f32.mrb[0].mxu0
    %v632 = vadd.f32 %v406, %v631
    %v633 = vpop.f32.mrb[0].mxu0
    %v634 = vadd.f32 %v408, %v633
    %v635 = vpop.f32.mrb[0].mxu0
    %v636 = vadd.f32 %v410, %v635
    %637 = vmatprep.mubr.bf16.mxu0 0
    %638 = vmatmul.mubr.bf16.gmra.mrb[0].mxu0 %v519
    %v639 = vpop.f32.mrb[0].mxu0
    %v640 = vadd.f32 %v414, %v639
    %v641 = vpop.f32.mrb[0].mxu0
    %v642 = vadd.f32 %v416, %v641
    %v643 = vpop.f32.mrb[0].mxu0
    %v644 = vadd.f32 %v418, %v643
    %v645 = vpop.f32.mrb[0].mxu0
    %v646 = vadd.f32 %v420, %v645
    %647 = vmatprep.mubr.bf16.mxu0 0
    %648 = vmatmul.mubr.bf16.gmra.mrb[0].mxu0 %v522
    %v649 = vpop.f32.mrb[0].mxu0
    %v650 = vadd.f32 %v424, %v649
    %v651 = vpop.f32.mrb[0].mxu0
    %v652 = vadd.f32 %v426, %v651
    %v653 = vpop.f32.mrb[0].mxu0
    %v654 = vadd.f32 %v428, %v653
    %v655 = vpop.f32.mrb[0].mxu0
    %v656 = vadd.f32 %v430, %v655
    %657 = vmatprep.mubr.bf16.mxu0 0
    %658 = vmatmul.mubr.bf16.gmra.mrb[0].mxu0 %v525
    %v659 = vpop.f32.mrb[0].mxu0
    %v660 = vadd.f32 %v434, %v659
    %v661 = vpop.f32.mrb[0].mxu0
    %v662 = vadd.f32 %v436, %v661
    %v663 = vpop.f32.mrb[0].mxu0
    %v664 = vadd.f32 %v438, %v663
    %v665 = vpop.f32.mrb[0].mxu0
    %v666 = vadd.f32 %v440, %v665
    %667 = vmatprep.mubr.bf16.mxu0 0
    %668 = vmatmul.mubr.bf16.gmra.mrb[0].mxu0 %v528
    %v669 = vpop.f32.mrb[0].mxu0
    %v670 = vadd.f32 %v444, %v669
    %v671 = vpop.f32.mrb[0].mxu0
    %v672 = vadd.f32 %v446, %v671
    %v673 = vpop.f32.mrb[0].mxu0
    %v674 = vadd.f32 %v448, %v673
    %v675 = vpop.f32.mrb[0].mxu0
    %v676 = vadd.f32 %v450, %v675
    %677 = vmatprep.mubr.bf16.mxu0 0
    %678 = vmatmul.mubr.bf16.gmra.mrb[0].mxu0 %v531
    %v679 = vpop.f32.mrb[0].mxu0
    %v680 = vadd.f32 %v454, %v679
    %v681 = vpop.f32.mrb[0].mxu0
    %v682 = vadd.f32 %v456, %v681
    %v683 = vpop.f32.mrb[0].mxu0
    %v684 = vadd.f32 %v458, %v683
    %v685 = vpop.f32.mrb[0].mxu0
    %v686 = vadd.f32 %v460, %v685
    %687 = vmatprep.mubr.bf16.mxu0 0
    %688 = vmatmul.mubr.bf16.gmra.mrb[0].mxu0 %v534
    %v689 = vpop.f32.mrb[0].mxu0
    %v690 = vadd.f32 %v464, %v689
    %v691 = vpop.f32.mrb[0].mxu0
    %v692 = vadd.f32 %v466, %v691
    %v693 = vpop.f32.mrb[0].mxu0
    %v694 = vadd.f32 %v468, %v693
    %v695 = vpop.f32.mrb[0].mxu0
    %v696 = vadd.f32 %v470, %v695
    %697 = vmatprep.mubr.bf16.mxu0 0
    %698 = vmatmul.mubr.bf16.gmra.mrb[0].mxu0 %v537
    %v699 = vpop.f32.mrb[0].mxu0
    %v700 = vadd.f32 %v474, %v699
    %v701 = vpop.f32.mrb[0].mxu0
    %v702 = vadd.f32 %v476, %v701
    %v703 = vpop.f32.mrb[0].mxu0
    %v704 = vadd.f32 %v478, %v703
    %v705 = vpop.f32.mrb[0].mxu0
    %v706 = vadd.f32 %v480, %v705
    %707 = vdwg.mxu0
    %v708 = vld [vmem:[#allocation2 + $0x2] sm:$0xff]
    %v709 = vld [vmem:[#allocation2 + $0xa] sm:$0xff]
    %v710 = vld [vmem:[#allocation2 + $0x12] sm:$0xff]
    %v711 = vld [vmem:[#allocation2 + $0x1a] sm:$0xff]
    %v712 = vld [vmem:[#allocation2 + $0x22] sm:$0xff]
    %v713 = vld [vmem:[#allocation2 + $0x2a] sm:$0xff]
    %v714 = vld [vmem:[#allocation2 + $0x32] sm:$0xff]
    %v715 = vld [vmem:[#allocation2 + $0x3a] sm:$0xff]
    %v716 = vld [vmem:[#allocation2 + $0x42] sm:$0xff]
    %v717 = vld [vmem:[#allocation2 + $0x4a] sm:$0xff]
    %v718 = vld [vmem:[#allocation2 + $0x52] sm:$0xff]
    %v719 = vld [vmem:[#allocation2 + $0x5a] sm:$0xff]
    %v720 = vld [vmem:[#allocation2 + $0x62] sm:$0xff]
    %v721 = vld [vmem:[#allocation2 + $0x6a] sm:$0xff]
    %v722 = vld [vmem:[#allocation2 + $0x72] sm:$0xff]
    %v723 = vld [vmem:[#allocation2 + $0x7a] sm:$0xff]
    %v724 = vld [vmem:[#allocation2 + $0x82] sm:$0xff]
    %v725 = vld [vmem:[#allocation2 + $0x8a] sm:$0xff]
    %v726 = vld [vmem:[#allocation2 + $0x92] sm:$0xff]
    %v727 = vld [vmem:[#allocation2 + $0x9a] sm:$0xff]
    %v728 = vld [vmem:[#allocation2 + $0xa2] sm:$0xff]
    %v729 = vld [vmem:[#allocation2 + $0xaa] sm:$0xff]
    %v730 = vld [vmem:[#allocation2 + $0xb2] sm:$0xff]
    %v731 = vld [vmem:[#allocation2 + $0xba] sm:$0xff]
    %v732 = vld [vmem:[#allocation2 + $0xc2] sm:$0xff]
    %v733 = vld [vmem:[#allocation2 + $0xca] sm:$0xff]
    %v734 = vpack.c.bf16 %v709, %v708
    %v735 = vpack.c.bf16 %v711, %v710
    %v736 = vpack.c.bf16 %v713, %v712
    %v737 = vpack.c.bf16 %v715, %v714
    %v738 = vpack.c.bf16 %v717, %v716
    %v739 = vpack.c.bf16 %v719, %v718
    %v740 = vpack.c.bf16 %v721, %v720
    %v741 = vpack.c.bf16 %v723, %v722
    %v742 = vpack.c.bf16 %v725, %v724
    %v743 = vpack.c.bf16 %v727, %v726
    %v744 = vpack.c.bf16 %v729, %v728
    %v745 = vpack.c.bf16 %v731, %v730
    %v746 = vpack.c.bf16 %v733, %v732
    %s747 = scalar_lea.vmem %s1, 64
    %v748 = vld [vmem:[%s747] sm:$0xff]
    %v749 = vld [vmem:[%s747 + $0x8] sm:$0xff]
    %v750 = vld [vmem:[%s747 + $0x10] sm:$0xff]
    %v751 = vld [vmem:[%s747 + $0x18] sm:$0x11]
    %v756 = vunpack.c.l.b16 %v748
    %v757 = vunpack.c.h.b16 %v748
    %v758 = vunpack.c.l.b16 %v749
    %v759 = vunpack.c.h.b16 %v749
    %v760 = vunpack.c.l.b16 %v750
    %v761 = vunpack.c.h.b16 %v750
    %v762 = vunpack.c.l.b16 %v751
    %v763 = vunpack.c.h.b16 %v751
    %v764 = vpack.c.b16 %v758, %v756
    %v765 = vpack.c.b16 %v759, %v757
    %v766 = vpack.c.b16 %v762, %v760
    %v767 = vpack.c.b16 %v763, %v761
    %v771 = vsel %vm166, %v734, 0
    %v774 = vsel %vm166, %v735, 0
    %v777 = vsel %vm166, %v736, 0
    %v780 = vsel %vm166, %v737, 0
    %v783 = vsel %vm166, %v738, 0
    %v786 = vsel %vm166, %v739, 0
    %v789 = vsel %vm166, %v740, 0
    %v792 = vsel %vm166, %v741, 0
    %v795 = vsel %vm166, %v742, 0
    %v798 = vsel %vm166, %v743, 0
    %v801 = vsel %vm166, %v744, 0
    %v804 = vsel %vm166, %v745, 0
    %v807 = vsel %vm166, %v746, 0
    %v810 = vsel %vm312, %v766, 0
    %v813 = vsel %vm312, %v767, 0
    %815 = vmatprep.subr.bf16.mxu0 %v765
    %816 = vmatpush1.bf16.msra.mxu0 %v764
    %817 = vmatprep.subr.bf16.mxu0 %v813
    %818 = vmatpush1.bf16.msra.mxu0 %v810
    %819 = vmatprep.subr.bf16.mxu0 0
    %820 = vmatpush1.bf16.msra.mxu0 0
    %821 = vmatprep.subr.bf16.mxu0 0
    %822 = vmatpush1.bf16.msra.mxu0 0
    %823 = vmatprep.subr.bf16.mxu0 0
    %824 = vmatpush1.bf16.msra.mxu0 0
    %825 = vmatprep.subr.bf16.mxu0 0
    %826 = vmatpush1.bf16.msra.mxu0 0
    %827 = vmatprep.subr.bf16.mxu0 0
    %828 = vmatpush1.bf16.msra.mxu0 0
    %829 = vmatprep.subr.bf16.mxu0 0
    %830 = vmatpush1.bf16.msra.mxu0 0
    %831 = vmatprep.subr.bf16.mxu0 0
    %832 = vmatpush1.bf16.msra.mxu0 0
    %833 = vmatprep.subr.bf16.mxu0 0
    %834 = vmatpush1.bf16.msra.mxu0 0
    %835 = vmatprep.subr.bf16.mxu0 0
    %836 = vmatpush1.bf16.msra.mxu0 0
    %837 = vmatprep.subr.bf16.mxu0 0
    %838 = vmatpush1.bf16.msra.mxu0 0
    %839 = vmatprep.subr.bf16.mxu0 0
    %840 = vmatpush1.bf16.msra.mxu0 0
    %841 = vmatprep.subr.bf16.mxu0 0
    %842 = vmatpush1.bf16.msra.mxu0 0
    %843 = vmatprep.subr.bf16.mxu0 0
    %844 = vmatpush1.bf16.msra.mxu0 0
    %845 = vmatprep.subr.bf16.mxu0 0
    %846 = vmatpush1.bf16.msra.mxu0 0
    %847 = vmatprep.mubr.bf16.mxu0 0
    %848 = vmatmul.mubr.bf16.gmra.mrb[0].mxu0 %v771
    %v849 = vpop.f32.mrb[0].mxu0
    %v850 = vadd.f32 0.0, %v849
    %v851 = vpop.f32.mrb[0].mxu0
    %v852 = vadd.f32 0.0, %v851
    %v853 = vpop.f32.mrb[0].mxu0
    %v854 = vadd.f32 0.0, %v853
    %v855 = vpop.f32.mrb[0].mxu0
    %v856 = vadd.f32 0.0, %v855
    %857 = vmatprep.mubr.bf16.mxu0 0
    %858 = vmatmul.mubr.bf16.gmra.mrb[0].mxu0 %v774
    %v859 = vpop.f32.mrb[0].mxu0
    %v860 = vadd.f32 0.0, %v859
    %v861 = vpop.f32.mrb[0].mxu0
    %v862 = vadd.f32 0.0, %v861
    %v863 = vpop.f32.mrb[0].mxu0
    %v864 = vadd.f32 0.0, %v863
    %v865 = vpop.f32.mrb[0].mxu0
    %v866 = vadd.f32 0.0, %v865
    %867 = vmatprep.mubr.bf16.mxu0 0
    %868 = vmatmul.mubr.bf16.gmra.mrb[0].mxu0 %v777
    %v869 = vpop.f32.mrb[0].mxu0
    %v870 = vadd.f32 0.0, %v869
    %v871 = vpop.f32.mrb[0].mxu0
    %v872 = vadd.f32 0.0, %v871
    %v873 = vpop.f32.mrb[0].mxu0
    %v874 = vadd.f32 0.0, %v873
    %v875 = vpop.f32.mrb[0].mxu0
    %v876 = vadd.f32 0.0, %v875
    %877 = vmatprep.mubr.bf16.mxu0 0
    %878 = vmatmul.mubr.bf16.gmra.mrb[0].mxu0 %v780
    %v879 = vpop.f32.mrb[0].mxu0
    %v880 = vadd.f32 0.0, %v879
    %v881 = vpop.f32.mrb[0].mxu0
    %v882 = vadd.f32 0.0, %v881
    %v883 = vpop.f32.mrb[0].mxu0
    %v884 = vadd.f32 0.0, %v883
    %v885 = vpop.f32.mrb[0].mxu0
    %v886 = vadd.f32 0.0, %v885
    %887 = vmatprep.mubr.bf16.mxu0 0
    %888 = vmatmul.mubr.bf16.gmra.mrb[0].mxu0 %v783
    %v889 = vpop.f32.mrb[0].mxu0
    %v890 = vadd.f32 0.0, %v889
    %v891 = vpop.f32.mrb[0].mxu0
    %v892 = vadd.f32 0.0, %v891
    %v893 = vpop.f32.mrb[0].mxu0
    %v894 = vadd.f32 0.0, %v893
    %v895 = vpop.f32.mrb[0].mxu0
    %v896 = vadd.f32 0.0, %v895
    %897 = vmatprep.mubr.bf16.mxu0 0
    %898 = vmatmul.mubr.bf16.gmra.mrb[0].mxu0 %v786
    %v899 = vpop.f32.mrb[0].mxu0
    %v900 = vadd.f32 0.0, %v899
    %v901 = vpop.f32.mrb[0].mxu0
    %v902 = vadd.f32 0.0, %v901
    %v903 = vpop.f32.mrb[0].mxu0
    %v904 = vadd.f32 0.0, %v903
    %v905 = vpop.f32.mrb[0].mxu0
    %v906 = vadd.f32 0.0, %v905
    %907 = vmatprep.mubr.bf16.mxu0 0
    %908 = vmatmul.mubr.bf16.gmra.mrb[0].mxu0 %v789
    %v909 = vpop.f32.mrb[0].mxu0
    %v910 = vadd.f32 0.0, %v909
    %v911 = vpop.f32.mrb[0].mxu0
    %v912 = vadd.f32 0.0, %v911
    %v913 = vpop.f32.mrb[0].mxu0
    %v914 = vadd.f32 0.0, %v913
    %v915 = vpop.f32.mrb[0].mxu0
    %v916 = vadd.f32 0.0, %v915
    %917 = vmatprep.mubr.bf16.mxu0 0
    %918 = vmatmul.mubr.bf16.gmra.mrb[0].mxu0 %v792
    %v919 = vpop.f32.mrb[0].mxu0
    %v920 = vadd.f32 0.0, %v919
    %v921 = vpop.f32.mrb[0].mxu0
    %v922 = vadd.f32 0.0, %v921
    %v923 = vpop.f32.mrb[0].mxu0
    %v924 = vadd.f32 0.0, %v923
    %v925 = vpop.f32.mrb[0].mxu0
    %v926 = vadd.f32 0.0, %v925
    %927 = vmatprep.mubr.bf16.mxu0 0
    %928 = vmatmul.mubr.bf16.gmra.mrb[0].mxu0 %v795
    %v929 = vpop.f32.mrb[0].mxu0
    %v930 = vadd.f32 0.0, %v929
    %v931 = vpop.f32.mrb[0].mxu0
    %v932 = vadd.f32 0.0, %v931
    %v933 = vpop.f32.mrb[0].mxu0
    %v934 = vadd.f32 0.0, %v933
    %v935 = vpop.f32.mrb[0].mxu0
    %v936 = vadd.f32 0.0, %v935
    %937 = vmatprep.mubr.bf16.mxu0 0
    %938 = vmatmul.mubr.bf16.gmra.mrb[0].mxu0 %v798
    %v939 = vpop.f32.mrb[0].mxu0
    %v940 = vadd.f32 0.0, %v939
    %v941 = vpop.f32.mrb[0].mxu0
    %v942 = vadd.f32 0.0, %v941
    %v943 = vpop.f32.mrb[0].mxu0
    %v944 = vadd.f32 0.0, %v943
    %v945 = vpop.f32.mrb[0].mxu0
    %v946 = vadd.f32 0.0, %v945
    %947 = vmatprep.mubr.bf16.mxu0 0
    %948 = vmatmul.mubr.bf16.gmra.mrb[0].mxu0 %v801
    %v949 = vpop.f32.mrb[0].mxu0
    %v950 = vadd.f32 0.0, %v949
    %v951 = vpop.f32.mrb[0].mxu0
    %v952 = vadd.f32 0.0, %v951
    %v953 = vpop.f32.mrb[0].mxu0
    %v954 = vadd.f32 0.0, %v953
    %v955 = vpop.f32.mrb[0].mxu0
    %v956 = vadd.f32 0.0, %v955
    %957 = vmatprep.mubr.bf16.mxu0 0
    %958 = vmatmul.mubr.bf16.gmra.mrb[0].mxu0 %v804
    %v959 = vpop.f32.mrb[0].mxu0
    %v960 = vadd.f32 0.0, %v959
    %v961 = vpop.f32.mrb[0].mxu0
    %v962 = vadd.f32 0.0, %v961
    %v963 = vpop.f32.mrb[0].mxu0
    %v964 = vadd.f32 0.0, %v963
    %v965 = vpop.f32.mrb[0].mxu0
    %v966 = vadd.f32 0.0, %v965
    %967 = vmatprep.mubr.bf16.mxu0 0
    %968 = vmatmul.mubr.bf16.gmra.mrb[0].mxu0 %v807
    %v969 = vpop.f32.mrb[0].mxu0
    %v970 = vadd.f32 0.0, %v969
    %v971 = vpop.f32.mrb[0].mxu0
    %v972 = vadd.f32 0.0, %v971
    %v973 = vpop.f32.mrb[0].mxu0
    %v974 = vadd.f32 0.0, %v973
    %v975 = vpop.f32.mrb[0].mxu0
    %v976 = vadd.f32 0.0, %v975
    %977 = vdwg.mxu0
    %v978 = vadd.f32 %v580, %v850
    %v979 = vadd.f32 %v582, %v852
    %v980 = vadd.f32 %v584, %v854
    %v981 = vadd.f32 %v586, %v856
    %v982 = vadd.f32 %v590, %v860
    %v983 = vadd.f32 %v592, %v862
    %v984 = vadd.f32 %v594, %v864
    %v985 = vadd.f32 %v596, %v866
    %v986 = vadd.f32 %v600, %v870
    %v987 = vadd.f32 %v602, %v872
    %v988 = vadd.f32 %v604, %v874
    %v989 = vadd.f32 %v606, %v876
    %v990 = vadd.f32 %v610, %v880
    %v991 = vadd.f32 %v612, %v882
    %v992 = vadd.f32 %v614, %v884
    %v993 = vadd.f32 %v616, %v886
    %v994 = vadd.f32 %v620, %v890
    %v995 = vadd.f32 %v622, %v892
    %v996 = vadd.f32 %v624, %v894
    %v997 = vadd.f32 %v626, %v896
    %v998 = vadd.f32 %v630, %v900
    %v999 = vadd.f32 %v632, %v902
    %v1000 = vadd.f32 %v634, %v904
    %v1001 = vadd.f32 %v636, %v906
    %v1002 = vadd.f32 %v640, %v910
    %v1003 = vadd.f32 %v642, %v912
    %v1004 = vadd.f32 %v644, %v914
    %v1005 = vadd.f32 %v646, %v916
    %v1006 = vadd.f32 %v650, %v920
    %v1007 = vadd.f32 %v652, %v922
    %v1008 = vadd.f32 %v654, %v924
    %v1009 = vadd.f32 %v656, %v926
    %v1010 = vadd.f32 %v660, %v930
    %v1011 = vadd.f32 %v662, %v932
    %v1012 = vadd.f32 %v664, %v934
    %v1013 = vadd.f32 %v666, %v936
    %v1014 = vadd.f32 %v670, %v940
    %v1015 = vadd.f32 %v672, %v942
    %v1016 = vadd.f32 %v674, %v944
    %v1017 = vadd.f32 %v676, %v946
    %v1018 = vadd.f32 %v680, %v950
    %v1019 = vadd.f32 %v682, %v952
    %v1020 = vadd.f32 %v684, %v954
    %v1021 = vadd.f32 %v686, %v956
    %v1022 = vadd.f32 %v690, %v960
    %v1023 = vadd.f32 %v692, %v962
    %v1024 = vadd.f32 %v694, %v964
    %v1025 = vadd.f32 %v696, %v966
    %v1026 = vadd.f32 %v700, %v970
    %v1027 = vadd.f32 %v702, %v972
    %v1028 = vadd.f32 %v704, %v974
    %v1029 = vadd.f32 %v706, %v976
    %v1031 = vlaneseq
    %v1032 = vshrl.u32 %v1031, 7
    %v1033 = vsub.s32 0, %v1032
    %v1034 = vrot.slane %v111, %v1033
    %v1035 = vlaneseq
    %v1036 = vshrl.u32 %v1035, 7
    %v1037 = vsub.s32 4, %v1036
    %v1038 = vrot.slane %v111, %v1037
    %v1041 = vlaneseq
    %v1042 = vshrl.u32 %v1041, 7
    %v1043 = vsub.s32 0, %v1042
    %v1044 = vrot.slane %v1034, %v1043
    %v1045 = vlaneseq
    %v1046 = vshrl.u32 %v1045, 7
    %v1047 = vsub.s32 0, %v1046
    %v1048 = vrot.slane %v1038, %v1047
    %v1049 = vadd.f32 %v978, %v1044
    %v1050 = vadd.f32 %v979, %v1048
    %v1051 = vadd.f32 %v980, %v1044
    %v1052 = vadd.f32 %v981, %v1048
    %v1053 = vadd.f32 %v982, %v1044
    %v1054 = vadd.f32 %v983, %v1048
    %v1055 = vadd.f32 %v984, %v1044
    %v1056 = vadd.f32 %v985, %v1048
    %v1057 = vadd.f32 %v986, %v1044
    %v1058 = vadd.f32 %v987, %v1048
    %v1059 = vadd.f32 %v988, %v1044
    %v1060 = vadd.f32 %v989, %v1048
    %v1061 = vadd.f32 %v990, %v1044
    %v1062 = vadd.f32 %v991, %v1048
    %v1063 = vadd.f32 %v992, %v1044
    %v1064 = vadd.f32 %v993, %v1048
    %v1065 = vadd.f32 %v994, %v1044
    %v1066 = vadd.f32 %v995, %v1048
    %v1067 = vadd.f32 %v996, %v1044
    %v1068 = vadd.f32 %v997, %v1048
    %v1069 = vadd.f32 %v998, %v1044
    %v1070 = vadd.f32 %v999, %v1048
    %v1071 = vadd.f32 %v1000, %v1044
    %v1072 = vadd.f32 %v1001, %v1048
    %v1073 = vadd.f32 %v1002, %v1044
    %v1074 = vadd.f32 %v1003, %v1048
    %v1075 = vadd.f32 %v1004, %v1044
    %v1076 = vadd.f32 %v1005, %v1048
    %v1077 = vadd.f32 %v1006, %v1044
    %v1078 = vadd.f32 %v1007, %v1048
    %v1079 = vadd.f32 %v1008, %v1044
    %v1080 = vadd.f32 %v1009, %v1048
    %v1081 = vadd.f32 %v1010, %v1044
    %v1082 = vadd.f32 %v1011, %v1048
    %v1083 = vadd.f32 %v1012, %v1044
    %v1084 = vadd.f32 %v1013, %v1048
    %v1085 = vadd.f32 %v1014, %v1044
    %v1086 = vadd.f32 %v1015, %v1048
    %v1087 = vadd.f32 %v1016, %v1044
    %v1088 = vadd.f32 %v1017, %v1048
    %v1089 = vadd.f32 %v1018, %v1044
    %v1090 = vadd.f32 %v1019, %v1048
    %v1091 = vadd.f32 %v1020, %v1044
    %v1092 = vadd.f32 %v1021, %v1048
    %v1093 = vadd.f32 %v1022, %v1044
    %v1094 = vadd.f32 %v1023, %v1048
    %v1095 = vadd.f32 %v1024, %v1044
    %v1096 = vadd.f32 %v1025, %v1048
    %v1097 = vadd.f32 %v1026, %v1044
    %v1098 = vadd.f32 %v1027, %v1048
    %v1099 = vadd.f32 %v1028, %v1044
    %v1100 = vadd.f32 %v1029, %v1048
    %vm1101 = vcmask 523264
    %v1103 = vsel %vm1101, %v1050, 0
    %v1106 = vsel %vm1101, %v1052, 0
    %v1109 = vsel %vm1101, %v1054, 0
    %v1112 = vsel %vm1101, %v1056, 0
    %v1115 = vsel %vm1101, %v1058, 0
    %v1118 = vsel %vm1101, %v1060, 0
    %v1121 = vsel %vm1101, %v1062, 0
    %v1124 = vsel %vm1101, %v1064, 0
    %v1127 = vsel %vm1101, %v1066, 0
    %v1130 = vsel %vm1101, %v1068, 0
    %v1133 = vsel %vm1101, %v1070, 0
    %v1136 = vsel %vm1101, %v1072, 0
    %v1139 = vsel %vm1101, %v1074, 0
    %v1142 = vsel %vm1101, %v1076, 0
    %v1145 = vsel %vm1101, %v1078, 0
    %v1148 = vsel %vm1101, %v1080, 0
    %v1151 = vsel %vm1101, %v1082, 0
    %v1154 = vsel %vm1101, %v1084, 0
    %v1157 = vsel %vm1101, %v1086, 0
    %v1160 = vsel %vm1101, %v1088, 0
    %v1163 = vsel %vm1101, %v1090, 0
    %v1166 = vsel %vm1101, %v1092, 0
    %v1169 = vsel %vm1101, %v1094, 0
    %v1172 = vsel %vm1101, %v1096, 0
    %v1175 = vsel %vm1101, %v1098, 0
    %v1178 = vsel %vm1101, %v1100, 0
    %1180 = vmatprep.subr.mxu0 0.0
    %1181 = vmatpush1.msra.mxu0 %v140
    %1182 = vmatprep.subr.mxu0 0.0
    %1183 = vmatpush1.msra.mxu0 %v141
    %1184 = vmatprep.subr.mxu0 0.0
    %1185 = vmatpush1.msra.mxu0 %v142
    %1186 = vmatprep.subr.mxu0 0.0
    %1187 = vmatpush1.msra.mxu0 %v143
    %1188 = vmatprep.subr.mxu0 0.0
    %1189 = vmatpush1.msra.mxu0 %v144
    %1190 = vmatprep.subr.mxu0 0.0
    %1191 = vmatpush1.msra.mxu0 %v145
    %1192 = vmatprep.subr.mxu0 0.0
    %1193 = vmatpush1.msra.mxu0 %v146
    %1194 = vmatprep.subr.mxu0 0.0
    %1195 = vmatpush1.msra.mxu0 %v147
    %1196 = vmatprep.subr.mxu0 0.0
    %1197 = vmatpush1.msra.mxu0 %v148
    %1198 = vmatprep.subr.mxu0 0.0
    %1199 = vmatpush1.msra.mxu0 %v149
    %1200 = vmatprep.subr.mxu0 0.0
    %1201 = vmatpush1.msra.mxu0 %v150
    %1202 = vmatprep.subr.mxu0 0.0
    %1203 = vmatpush1.msra.mxu0 %v151
    %1204 = vmatprep.subr.mxu0 0.0
    %1205 = vmatpush1.msra.mxu0 %v152
    %1206 = vmatprep.subr.mxu0 0.0
    %1207 = vmatpush1.msra.mxu0 %v153
    %1208 = vmatprep.subr.mxu0 0.0
    %1209 = vmatpush1.msra.mxu0 %v154
    %1210 = vmatprep.subr.mxu0 0.0
    %1211 = vmatpush1.msra.mxu0 %v155
    %1212 = vmatprep.subr.mxu0 0.0
    %1213 = vmatpush1.msra.mxu0 %v156
    %1214 = vmatprep.subr.mxu0 0.0
    %1215 = vmatpush1.msra.mxu0 %v157
    %1216 = vmatprep.subr.mxu0 0.0
    %1217 = vmatpush1.msra.mxu0 %v158
    %1218 = vmatprep.subr.mxu0 0.0
    %1219 = vmatpush1.msra.mxu0 %v159
    %1220 = vmatprep.subr.mxu0 0.0
    %1221 = vmatpush1.msra.mxu0 %v160
    %1222 = vmatprep.subr.mxu0 0.0
    %1223 = vmatpush1.msra.mxu0 %v161
    %1224 = vmatprep.subr.mxu0 0.0
    %1225 = vmatpush1.msra.mxu0 %v162
    %1226 = vmatprep.subr.mxu0 0.0
    %1227 = vmatpush1.msra.mxu0 %v163
    %1228 = vmatprep.subr.mxu0 0.0
    %1229 = vmatpush1.msra.mxu0 0.0
    %1230 = vmatprep.subr.mxu0 0.0
    %1231 = vmatpush1.msra.mxu0 0.0
    %1232 = vmatprep.subr.mxu0 0.0
    %1233 = vmatpush1.msra.mxu0 0.0
    %1234 = vmatprep.subr.mxu0 0.0
    %1235 = vmatpush1.msra.mxu0 0.0
    %1236 = vmatprep.subr.mxu0 0.0
    %1237 = vmatpush1.msra.mxu0 0.0
    %1238 = vmatprep.subr.mxu0 0.0
    %1239 = vmatpush1.msra.mxu0 0.0
    %1240 = vmatprep.subr.mxu0 0.0
    %1241 = vmatpush1.msra.mxu0 0.0
    %1242 = vmatprep.subr.mxu0 0.0
    %1243 = vmatpush1.msra.mxu0 0.0
    %1244 = vmatprep.mubr.f32.mxu0 %v1103
    %1245 = vmatmul.mubr.f32.gmra.mrb[0].mxu0 %v1049
    %v1246 = vpop.f32.mrb[0].mxu0
    %v1247 = vadd.f32 0.0, %v1246
    %v1248 = vpop.f32.mrb[0].mxu0
    %1249 = vmatprep.mubr.f32.mxu0 %v1106
    %1250 = vmatmul.mubr.f32.gmra.mrb[0].mxu0 %v1051
    %v1251 = vpop.f32.mrb[0].mxu0
    %v1252 = vadd.f32 0.0, %v1251
    %v1253 = vpop.f32.mrb[0].mxu0
    %1254 = vmatprep.mubr.f32.mxu0 %v1109
    %1255 = vmatmul.mubr.f32.gmra.mrb[0].mxu0 %v1053
    %v1256 = vpop.f32.mrb[0].mxu0
    %v1257 = vadd.f32 0.0, %v1256
    %v1258 = vpop.f32.mrb[0].mxu0
    %1259 = vmatprep.mubr.f32.mxu0 %v1112
    %1260 = vmatmul.mubr.f32.gmra.mrb[0].mxu0 %v1055
    %v1261 = vpop.f32.mrb[0].mxu0
    %v1262 = vadd.f32 0.0, %v1261
    %v1263 = vpop.f32.mrb[0].mxu0
    %1264 = vmatprep.mubr.f32.mxu0 %v1115
    %1265 = vmatmul.mubr.f32.gmra.mrb[0].mxu0 %v1057
    %v1266 = vpop.f32.mrb[0].mxu0
    %v1267 = vadd.f32 0.0, %v1266
    %v1268 = vpop.f32.mrb[0].mxu0
    %1269 = vmatprep.mubr.f32.mxu0 %v1118
    %1270 = vmatmul.mubr.f32.gmra.mrb[0].mxu0 %v1059
    %v1271 = vpop.f32.mrb[0].mxu0
    %v1272 = vadd.f32 0.0, %v1271
    %v1273 = vpop.f32.mrb[0].mxu0
    %1274 = vmatprep.mubr.f32.mxu0 %v1121
    %1275 = vmatmul.mubr.f32.gmra.mrb[0].mxu0 %v1061
    %v1276 = vpop.f32.mrb[0].mxu0
    %v1277 = vadd.f32 0.0, %v1276
    %v1278 = vpop.f32.mrb[0].mxu0
    %1279 = vmatprep.mubr.f32.mxu0 %v1124
    %1280 = vmatmul.mubr.f32.gmra.mrb[0].mxu0 %v1063
    %v1281 = vpop.f32.mrb[0].mxu0
    %v1282 = vadd.f32 0.0, %v1281
    %v1283 = vpop.f32.mrb[0].mxu0
    %1284 = vmatprep.mubr.f32.mxu0 %v1127
    %1285 = vmatmul.mubr.f32.gmra.mrb[0].mxu0 %v1065
    %v1286 = vpop.f32.mrb[0].mxu0
    %v1287 = vadd.f32 0.0, %v1286
    %v1288 = vpop.f32.mrb[0].mxu0
    %1289 = vmatprep.mubr.f32.mxu0 %v1130
    %1290 = vmatmul.mubr.f32.gmra.mrb[0].mxu0 %v1067
    %v1291 = vpop.f32.mrb[0].mxu0
    %v1292 = vadd.f32 0.0, %v1291
    %v1293 = vpop.f32.mrb[0].mxu0
    %1294 = vmatprep.mubr.f32.mxu0 %v1133
    %1295 = vmatmul.mubr.f32.gmra.mrb[0].mxu0 %v1069
    %v1296 = vpop.f32.mrb[0].mxu0
    %v1297 = vadd.f32 0.0, %v1296
    %v1298 = vpop.f32.mrb[0].mxu0
    %1299 = vmatprep.mubr.f32.mxu0 %v1136
    %1300 = vmatmul.mubr.f32.gmra.mrb[0].mxu0 %v1071
    %v1301 = vpop.f32.mrb[0].mxu0
    %v1302 = vadd.f32 0.0, %v1301
    %v1303 = vpop.f32.mrb[0].mxu0
    %1304 = vmatprep.mubr.f32.mxu0 %v1139
    %1305 = vmatmul.mubr.f32.gmra.mrb[0].mxu0 %v1073
    %v1306 = vpop.f32.mrb[0].mxu0
    %v1307 = vadd.f32 0.0, %v1306
    %v1308 = vpop.f32.mrb[0].mxu0
    %1309 = vmatprep.mubr.f32.mxu0 %v1142
    %1310 = vmatmul.mubr.f32.gmra.mrb[0].mxu0 %v1075
    %v1311 = vpop.f32.mrb[0].mxu0
    %v1312 = vadd.f32 0.0, %v1311
    %v1313 = vpop.f32.mrb[0].mxu0
    %1314 = vmatprep.mubr.f32.mxu0 %v1145
    %1315 = vmatmul.mubr.f32.gmra.mrb[0].mxu0 %v1077
    %v1316 = vpop.f32.mrb[0].mxu0
    %v1317 = vadd.f32 0.0, %v1316
    %v1318 = vpop.f32.mrb[0].mxu0
    %1319 = vmatprep.mubr.f32.mxu0 %v1148
    %1320 = vmatmul.mubr.f32.gmra.mrb[0].mxu0 %v1079
    %v1321 = vpop.f32.mrb[0].mxu0
    %v1322 = vadd.f32 0.0, %v1321
    %v1323 = vpop.f32.mrb[0].mxu0
    %1324 = vmatprep.mubr.f32.mxu0 %v1151
    %1325 = vmatmul.mubr.f32.gmra.mrb[0].mxu0 %v1081
    %v1326 = vpop.f32.mrb[0].mxu0
    %v1327 = vadd.f32 0.0, %v1326
    %v1328 = vpop.f32.mrb[0].mxu0
    %1329 = vmatprep.mubr.f32.mxu0 %v1154
    %1330 = vmatmul.mubr.f32.gmra.mrb[0].mxu0 %v1083
    %v1331 = vpop.f32.mrb[0].mxu0
    %v1332 = vadd.f32 0.0, %v1331
    %v1333 = vpop.f32.mrb[0].mxu0
    %1334 = vmatprep.mubr.f32.mxu0 %v1157
    %1335 = vmatmul.mubr.f32.gmra.mrb[0].mxu0 %v1085
    %v1336 = vpop.f32.mrb[0].mxu0
    %v1337 = vadd.f32 0.0, %v1336
    %v1338 = vpop.f32.mrb[0].mxu0
    %1339 = vmatprep.mubr.f32.mxu0 %v1160
    %1340 = vmatmul.mubr.f32.gmra.mrb[0].mxu0 %v1087
    %v1341 = vpop.f32.mrb[0].mxu0
    %v1342 = vadd.f32 0.0, %v1341
    %v1343 = vpop.f32.mrb[0].mxu0
    %1344 = vmatprep.mubr.f32.mxu0 %v1163
    %1345 = vmatmul.mubr.f32.gmra.mrb[0].mxu0 %v1089
    %v1346 = vpop.f32.mrb[0].mxu0
    %v1347 = vadd.f32 0.0, %v1346
    %v1348 = vpop.f32.mrb[0].mxu0
    %1349 = vmatprep.mubr.f32.mxu0 %v1166
    %1350 = vmatmul.mubr.f32.gmra.mrb[0].mxu0 %v1091
    %v1351 = vpop.f32.mrb[0].mxu0
    %v1352 = vadd.f32 0.0, %v1351
    %v1353 = vpop.f32.mrb[0].mxu0
    %1354 = vmatprep.mubr.f32.mxu0 %v1169
    %1355 = vmatmul.mubr.f32.gmra.mrb[0].mxu0 %v1093
    %v1356 = vpop.f32.mrb[0].mxu0
    %v1357 = vadd.f32 0.0, %v1356
    %v1358 = vpop.f32.mrb[0].mxu0
    %1359 = vmatprep.mubr.f32.mxu0 %v1172
    %1360 = vmatmul.mubr.f32.gmra.mrb[0].mxu0 %v1095
    %v1361 = vpop.f32.mrb[0].mxu0
    %v1362 = vadd.f32 0.0, %v1361
    %v1363 = vpop.f32.mrb[0].mxu0
    %1364 = vmatprep.mubr.f32.mxu0 %v1175
    %1365 = vmatmul.mubr.f32.gmra.mrb[0].mxu0 %v1097
    %v1366 = vpop.f32.mrb[0].mxu0
    %v1367 = vadd.f32 0.0, %v1366
    %v1368 = vpop.f32.mrb[0].mxu0
    %1369 = vmatprep.mubr.f32.mxu0 %v1178
    %1370 = vmatmul.mubr.f32.gmra.mrb[0].mxu0 %v1099
    %v1371 = vpop.f32.mrb[0].mxu0
    %v1372 = vadd.f32 0.0, %v1371
    %v1373 = vpop.f32.mrb[0].mxu0
    %1374 = vdwg.mxu0
    %vm1375 = vcmask 654336
    %v1377 = vsel %vm1375, %v113, 0
    %1379 = vmatprep.subr.mxu0 0.0
    %1380 = vmatpush1.msra.mxu0 %v1247
    %1381 = vmatprep.subr.mxu0 0.0
    %1382 = vmatpush1.msra.mxu0 %v1252
    %1383 = vmatprep.subr.mxu0 0.0
    %1384 = vmatpush1.msra.mxu0 %v1257
    %1385 = vmatprep.subr.mxu0 0.0
    %1386 = vmatpush1.msra.mxu0 %v1262
    %1387 = vmatprep.subr.mxu0 0.0
    %1388 = vmatpush1.msra.mxu0 %v1267
    %1389 = vmatprep.subr.mxu0 0.0
    %1390 = vmatpush1.msra.mxu0 %v1272
    %1391 = vmatprep.subr.mxu0 0.0
    %1392 = vmatpush1.msra.mxu0 %v1277
    %1393 = vmatprep.subr.mxu0 0.0
    %1394 = vmatpush1.msra.mxu0 %v1282
    %1395 = vmatprep.subr.mxu0 0.0
    %1396 = vmatpush1.msra.mxu0 %v1287
    %1397 = vmatprep.subr.mxu0 0.0
    %1398 = vmatpush1.msra.mxu0 %v1292
    %1399 = vmatprep.subr.mxu0 0.0
    %1400 = vmatpush1.msra.mxu0 %v1297
    %1401 = vmatprep.subr.mxu0 0.0
    %1402 = vmatpush1.msra.mxu0 %v1302
    %1403 = vmatprep.subr.mxu0 0.0
    %1404 = vmatpush1.msra.mxu0 %v1307
    %1405 = vmatprep.subr.mxu0 0.0
    %1406 = vmatpush1.msra.mxu0 %v1312
    %1407 = vmatprep.subr.mxu0 0.0
    %1408 = vmatpush1.msra.mxu0 %v1317
    %1409 = vmatprep.subr.mxu0 0.0
    %1410 = vmatpush1.msra.mxu0 %v1322
    %1411 = vmatprep.subr.mxu0 0.0
    %1412 = vmatpush1.msra.mxu0 %v1327
    %1413 = vmatprep.subr.mxu0 0.0
    %1414 = vmatpush1.msra.mxu0 %v1332
    %1415 = vmatprep.subr.mxu0 0.0
    %1416 = vmatpush1.msra.mxu0 %v1337
    %1417 = vmatprep.subr.mxu0 0.0
    %1418 = vmatpush1.msra.mxu0 %v1342
    %1419 = vmatprep.subr.mxu0 0.0
    %1420 = vmatpush1.msra.mxu0 %v1347
    %1421 = vmatprep.subr.mxu0 0.0
    %1422 = vmatpush1.msra.mxu0 %v1352
    %1423 = vmatprep.subr.mxu0 0.0
    %1424 = vmatpush1.msra.mxu0 %v1357
    %1425 = vmatprep.subr.mxu0 0.0
    %1426 = vmatpush1.msra.mxu0 %v1362
    %1427 = vmatprep.subr.mxu0 0.0
    %1428 = vmatpush1.msra.mxu0 %v1367
    %1429 = vmatprep.subr.mxu0 0.0
    %1430 = vmatpush1.msra.mxu0 %v1372
    %1431 = vmatprep.subr.mxu0 0.0
    %1432 = vmatpush1.msra.mxu0 0.0
    %1433 = vmatprep.subr.mxu0 0.0
    %1434 = vmatpush1.msra.mxu0 0.0
    %1435 = vmatprep.subr.mxu0 0.0
    %1436 = vmatpush1.msra.mxu0 0.0
    %1437 = vmatprep.subr.mxu0 0.0
    %1438 = vmatpush1.msra.mxu0 0.0
    %1439 = vmatprep.subr.mxu0 0.0
    %1440 = vmatpush1.msra.mxu0 0.0
    %1441 = vmatprep.subr.mxu0 0.0
    %1442 = vmatpush1.msra.mxu0 0.0
    %1443 = vmatprep.mubr.f32.mxu0 %v1377
    %1444 = vmatmul.mubr.f32.gmra.mrb[0].mxu0 %v112
    %v1445 = vpop.f32.mrb[0].mxu0
    %v1446 = vadd.f32 0.0, %v1445
    %v1447 = vpop.f32.mrb[0].mxu0
    %1448 = vdwg.mxu0
    %v1449 = vmul.f32 %v1049, %v1049
    %v1450 = vmul.f32 %v1050, %v1050
    %v1451 = vmul.f32 %v1051, %v1051
    %v1452 = vmul.f32 %v1052, %v1052
    %v1453 = vmul.f32 %v1053, %v1053
    %v1454 = vmul.f32 %v1054, %v1054
    %v1455 = vmul.f32 %v1055, %v1055
    %v1456 = vmul.f32 %v1056, %v1056
    %v1457 = vmul.f32 %v1057, %v1057
    %v1458 = vmul.f32 %v1058, %v1058
    %v1459 = vmul.f32 %v1059, %v1059
    %v1460 = vmul.f32 %v1060, %v1060
    %v1461 = vmul.f32 %v1061, %v1061
    %v1462 = vmul.f32 %v1062, %v1062
    %v1463 = vmul.f32 %v1063, %v1063
    %v1464 = vmul.f32 %v1064, %v1064
    %v1465 = vmul.f32 %v1065, %v1065
    %v1466 = vmul.f32 %v1066, %v1066
    %v1467 = vmul.f32 %v1067, %v1067
    %v1468 = vmul.f32 %v1068, %v1068
    %v1469 = vmul.f32 %v1069, %v1069
    %v1470 = vmul.f32 %v1070, %v1070
    %v1471 = vmul.f32 %v1071, %v1071
    %v1472 = vmul.f32 %v1072, %v1072
    %v1473 = vmul.f32 %v1073, %v1073
    %v1474 = vmul.f32 %v1074, %v1074
    %v1475 = vmul.f32 %v1075, %v1075
    %v1476 = vmul.f32 %v1076, %v1076
    %v1477 = vmul.f32 %v1077, %v1077
    %v1478 = vmul.f32 %v1078, %v1078
    %v1479 = vmul.f32 %v1079, %v1079
    %v1480 = vmul.f32 %v1080, %v1080
    %v1481 = vmul.f32 %v1081, %v1081
    %v1482 = vmul.f32 %v1082, %v1082
    %v1483 = vmul.f32 %v1083, %v1083
    %v1484 = vmul.f32 %v1084, %v1084
    %v1485 = vmul.f32 %v1085, %v1085
    %v1486 = vmul.f32 %v1086, %v1086
    %v1487 = vmul.f32 %v1087, %v1087
    %v1488 = vmul.f32 %v1088, %v1088
    %v1489 = vmul.f32 %v1089, %v1089
    %v1490 = vmul.f32 %v1090, %v1090
    %v1491 = vmul.f32 %v1091, %v1091
    %v1492 = vmul.f32 %v1092, %v1092
    %v1493 = vmul.f32 %v1093, %v1093
    %v1494 = vmul.f32 %v1094, %v1094
    %v1495 = vmul.f32 %v1095, %v1095
    %v1496 = vmul.f32 %v1096, %v1096
    %v1497 = vmul.f32 %v1097, %v1097
    %v1498 = vmul.f32 %v1098, %v1098
    %v1499 = vmul.f32 %v1099, %v1099
    %v1500 = vmul.f32 %v1100, %v1100
    %v1502 = vsel %vm1101, %v1450, 0
    %v1505 = vsel %vm1101, %v1452, 0
    %v1508 = vsel %vm1101, %v1454, 0
    %v1511 = vsel %vm1101, %v1456, 0
    %v1514 = vsel %vm1101, %v1458, 0
    %v1517 = vsel %vm1101, %v1460, 0
    %v1520 = vsel %vm1101, %v1462, 0
    %v1523 = vsel %vm1101, %v1464, 0
    %v1526 = vsel %vm1101, %v1466, 0
    %v1529 = vsel %vm1101, %v1468, 0
    %v1532 = vsel %vm1101, %v1470, 0
    %v1535 = vsel %vm1101, %v1472, 0
    %v1538 = vsel %vm1101, %v1474, 0
    %v1541 = vsel %vm1101, %v1476, 0
    %v1544 = vsel %vm1101, %v1478, 0
    %v1547 = vsel %vm1101, %v1480, 0
    %v1550 = vsel %vm1101, %v1482, 0
    %v1553 = vsel %vm1101, %v1484, 0
    %v1556 = vsel %vm1101, %v1486, 0
    %v1559 = vsel %vm1101, %v1488, 0
    %v1562 = vsel %vm1101, %v1490, 0
    %v1565 = vsel %vm1101, %v1492, 0
    %v1568 = vsel %vm1101, %v1494, 0
    %v1571 = vsel %vm1101, %v1496, 0
    %v1574 = vsel %vm1101, %v1498, 0
    %v1577 = vsel %vm1101, %v1500, 0
    %1579 = vmatprep.subr.mxu0 0.0
    %1580 = vmatpush1.msra.mxu0 %v140
    %1581 = vmatprep.subr.mxu0 0.0
    %1582 = vmatpush1.msra.mxu0 %v141
    %1583 = vmatprep.subr.mxu0 0.0
    %1584 = vmatpush1.msra.mxu0 %v142
    %1585 = vmatprep.subr.mxu0 0.0
    %1586 = vmatpush1.msra.mxu0 %v143
    %1587 = vmatprep.subr.mxu0 0.0
    %1588 = vmatpush1.msra.mxu0 %v144
    %1589 = vmatprep.subr.mxu0 0.0
    %1590 = vmatpush1.msra.mxu0 %v145
    %1591 = vmatprep.subr.mxu0 0.0
    %1592 = vmatpush1.msra.mxu0 %v146
    %1593 = vmatprep.subr.mxu0 0.0
    %1594 = vmatpush1.msra.mxu0 %v147
    %1595 = vmatprep.subr.mxu0 0.0
    %1596 = vmatpush1.msra.mxu0 %v148
    %1597 = vmatprep.subr.mxu0 0.0
    %1598 = vmatpush1.msra.mxu0 %v149
    %1599 = vmatprep.subr.mxu0 0.0
    %1600 = vmatpush1.msra.mxu0 %v150
    %1601 = vmatprep.subr.mxu0 0.0
    %1602 = vmatpush1.msra.mxu0 %v151
    %1603 = vmatprep.subr.mxu0 0.0
    %1604 = vmatpush1.msra.mxu0 %v152
    %1605 = vmatprep.subr.mxu0 0.0
    %1606 = vmatpush1.msra.mxu0 %v153
    %1607 = vmatprep.subr.mxu0 0.0
    %1608 = vmatpush1.msra.mxu0 %v154
    %1609 = vmatprep.subr.mxu0 0.0
    %1610 = vmatpush1.msra.mxu0 %v155
    %1611 = vmatprep.subr.mxu0 0.0
    %1612 = vmatpush1.msra.mxu0 %v156
    %1613 = vmatprep.subr.mxu0 0.0
    %1614 = vmatpush1.msra.mxu0 %v157
    %1615 = vmatprep.subr.mxu0 0.0
    %1616 = vmatpush1.msra.mxu0 %v158
    %1617 = vmatprep.subr.mxu0 0.0
    %1618 = vmatpush1.msra.mxu0 %v159
    %1619 = vmatprep.subr.mxu0 0.0
    %1620 = vmatpush1.msra.mxu0 %v160
    %1621 = vmatprep.subr.mxu0 0.0
    %1622 = vmatpush1.msra.mxu0 %v161
    %1623 = vmatprep.subr.mxu0 0.0
    %1624 = vmatpush1.msra.mxu0 %v162
    %1625 = vmatprep.subr.mxu0 0.0
    %1626 = vmatpush1.msra.mxu0 %v163
    %1627 = vmatprep.subr.mxu0 0.0
    %1628 = vmatpush1.msra.mxu0 0.0
    %1629 = vmatprep.subr.mxu0 0.0
    %1630 = vmatpush1.msra.mxu0 0.0
    %1631 = vmatprep.subr.mxu0 0.0
    %1632 = vmatpush1.msra.mxu0 0.0
    %1633 = vmatprep.subr.mxu0 0.0
    %1634 = vmatpush1.msra.mxu0 0.0
    %1635 = vmatprep.subr.mxu0 0.0
    %1636 = vmatpush1.msra.mxu0 0.0
    %1637 = vmatprep.subr.mxu0 0.0
    %1638 = vmatpush1.msra.mxu0 0.0
    %1639 = vmatprep.subr.mxu0 0.0
    %1640 = vmatpush1.msra.mxu0 0.0
    %1641 = vmatprep.subr.mxu0 0.0
    %1642 = vmatpush1.msra.mxu0 0.0
    %1643 = vmatprep.mubr.f32.mxu0 %v1502
    %1644 = vmatmul.mubr.f32.gmra.mrb[0].mxu0 %v1449
    %v1645 = vpop.f32.mrb[0].mxu0
    %v1646 = vadd.f32 0.0, %v1645
    %v1647 = vpop.f32.mrb[0].mxu0
    %1648 = vmatprep.mubr.f32.mxu0 %v1505
    %1649 = vmatmul.mubr.f32.gmra.mrb[0].mxu0 %v1451
    %v1650 = vpop.f32.mrb[0].mxu0
    %v1651 = vadd.f32 0.0, %v1650
    %v1652 = vpop.f32.mrb[0].mxu0
    %1653 = vmatprep.mubr.f32.mxu0 %v1508
    %1654 = vmatmul.mubr.f32.gmra.mrb[0].mxu0 %v1453
    %v1655 = vpop.f32.mrb[0].mxu0
    %v1656 = vadd.f32 0.0, %v1655
    %v1657 = vpop.f32.mrb[0].mxu0
    %1658 = vmatprep.mubr.f32.mxu0 %v1511
    %1659 = vmatmul.mubr.f32.gmra.mrb[0].mxu0 %v1455
    %v1660 = vpop.f32.mrb[0].mxu0
    %v1661 = vadd.f32 0.0, %v1660
    %v1662 = vpop.f32.mrb[0].mxu0
    %1663 = vmatprep.mubr.f32.mxu0 %v1514
    %1664 = vmatmul.mubr.f32.gmra.mrb[0].mxu0 %v1457
    %v1665 = vpop.f32.mrb[0].mxu0
    %v1666 = vadd.f32 0.0, %v1665
    %v1667 = vpop.f32.mrb[0].mxu0
    %1668 = vmatprep.mubr.f32.mxu0 %v1517
    %1669 = vmatmul.mubr.f32.gmra.mrb[0].mxu0 %v1459
    %v1670 = vpop.f32.mrb[0].mxu0
    %v1671 = vadd.f32 0.0, %v1670
    %v1672 = vpop.f32.mrb[0].mxu0
    %1673 = vmatprep.mubr.f32.mxu0 %v1520
    %1674 = vmatmul.mubr.f32.gmra.mrb[0].mxu0 %v1461
    %v1675 = vpop.f32.mrb[0].mxu0
    %v1676 = vadd.f32 0.0, %v1675
    %v1677 = vpop.f32.mrb[0].mxu0
    %1678 = vmatprep.mubr.f32.mxu0 %v1523
    %1679 = vmatmul.mubr.f32.gmra.mrb[0].mxu0 %v1463
    %v1680 = vpop.f32.mrb[0].mxu0
    %v1681 = vadd.f32 0.0, %v1680
    %v1682 = vpop.f32.mrb[0].mxu0
    %1683 = vmatprep.mubr.f32.mxu0 %v1526
    %1684 = vmatmul.mubr.f32.gmra.mrb[0].mxu0 %v1465
    %v1685 = vpop.f32.mrb[0].mxu0
    %v1686 = vadd.f32 0.0, %v1685
    %v1687 = vpop.f32.mrb[0].mxu0
    %1688 = vmatprep.mubr.f32.mxu0 %v1529
    %1689 = vmatmul.mubr.f32.gmra.mrb[0].mxu0 %v1467
    %v1690 = vpop.f32.mrb[0].mxu0
    %v1691 = vadd.f32 0.0, %v1690
    %v1692 = vpop.f32.mrb[0].mxu0
    %1693 = vmatprep.mubr.f32.mxu0 %v1532
    %1694 = vmatmul.mubr.f32.gmra.mrb[0].mxu0 %v1469
    %v1695 = vpop.f32.mrb[0].mxu0
    %v1696 = vadd.f32 0.0, %v1695
    %v1697 = vpop.f32.mrb[0].mxu0
    %1698 = vmatprep.mubr.f32.mxu0 %v1535
    %1699 = vmatmul.mubr.f32.gmra.mrb[0].mxu0 %v1471
    %v1700 = vpop.f32.mrb[0].mxu0
    %v1701 = vadd.f32 0.0, %v1700
    %v1702 = vpop.f32.mrb[0].mxu0
    %1703 = vmatprep.mubr.f32.mxu0 %v1538
    %1704 = vmatmul.mubr.f32.gmra.mrb[0].mxu0 %v1473
    %v1705 = vpop.f32.mrb[0].mxu0
    %v1706 = vadd.f32 0.0, %v1705
    %v1707 = vpop.f32.mrb[0].mxu0
    %1708 = vmatprep.mubr.f32.mxu0 %v1541
    %1709 = vmatmul.mubr.f32.gmra.mrb[0].mxu0 %v1475
    %v1710 = vpop.f32.mrb[0].mxu0
    %v1711 = vadd.f32 0.0, %v1710
    %v1712 = vpop.f32.mrb[0].mxu0
    %1713 = vmatprep.mubr.f32.mxu0 %v1544
    %1714 = vmatmul.mubr.f32.gmra.mrb[0].mxu0 %v1477
    %v1715 = vpop.f32.mrb[0].mxu0
    %v1716 = vadd.f32 0.0, %v1715
    %v1717 = vpop.f32.mrb[0].mxu0
    %1718 = vmatprep.mubr.f32.mxu0 %v1547
    %1719 = vmatmul.mubr.f32.gmra.mrb[0].mxu0 %v1479
    %v1720 = vpop.f32.mrb[0].mxu0
    %v1721 = vadd.f32 0.0, %v1720
    %v1722 = vpop.f32.mrb[0].mxu0
    %1723 = vmatprep.mubr.f32.mxu0 %v1550
    %1724 = vmatmul.mubr.f32.gmra.mrb[0].mxu0 %v1481
    %v1725 = vpop.f32.mrb[0].mxu0
    %v1726 = vadd.f32 0.0, %v1725
    %v1727 = vpop.f32.mrb[0].mxu0
    %1728 = vmatprep.mubr.f32.mxu0 %v1553
    %1729 = vmatmul.mubr.f32.gmra.mrb[0].mxu0 %v1483
    %v1730 = vpop.f32.mrb[0].mxu0
    %v1731 = vadd.f32 0.0, %v1730
    %v1732 = vpop.f32.mrb[0].mxu0
    %1733 = vmatprep.mubr.f32.mxu0 %v1556
    %1734 = vmatmul.mubr.f32.gmra.mrb[0].mxu0 %v1485
    %v1735 = vpop.f32.mrb[0].mxu0
    %v1736 = vadd.f32 0.0, %v1735
    %v1737 = vpop.f32.mrb[0].mxu0
    %1738 = vmatprep.mubr.f32.mxu0 %v1559
    %1739 = vmatmul.mubr.f32.gmra.mrb[0].mxu0 %v1487
    %v1740 = vpop.f32.mrb[0].mxu0
    %v1741 = vadd.f32 0.0, %v1740
    %v1742 = vpop.f32.mrb[0].mxu0
    %1743 = vmatprep.mubr.f32.mxu0 %v1562
    %1744 = vmatmul.mubr.f32.gmra.mrb[0].mxu0 %v1489
    %v1745 = vpop.f32.mrb[0].mxu0
    %v1746 = vadd.f32 0.0, %v1745
    %v1747 = vpop.f32.mrb[0].mxu0
    %1748 = vmatprep.mubr.f32.mxu0 %v1565
    %1749 = vmatmul.mubr.f32.gmra.mrb[0].mxu0 %v1491
    %v1750 = vpop.f32.mrb[0].mxu0
    %v1751 = vadd.f32 0.0, %v1750
    %v1752 = vpop.f32.mrb[0].mxu0
    %1753 = vmatprep.mubr.f32.mxu0 %v1568
    %1754 = vmatmul.mubr.f32.gmra.mrb[0].mxu0 %v1493
    %v1755 = vpop.f32.mrb[0].mxu0
    %v1756 = vadd.f32 0.0, %v1755
    %v1757 = vpop.f32.mrb[0].mxu0
    %1758 = vmatprep.mubr.f32.mxu0 %v1571
    %1759 = vmatmul.mubr.f32.gmra.mrb[0].mxu0 %v1495
    %v1760 = vpop.f32.mrb[0].mxu0
    %v1761 = vadd.f32 0.0, %v1760
    %v1762 = vpop.f32.mrb[0].mxu0
    %1763 = vmatprep.mubr.f32.mxu0 %v1574
    %1764 = vmatmul.mubr.f32.gmra.mrb[0].mxu0 %v1497
    %v1765 = vpop.f32.mrb[0].mxu0
    %v1766 = vadd.f32 0.0, %v1765
    %v1767 = vpop.f32.mrb[0].mxu0
    %1768 = vmatprep.mubr.f32.mxu0 %v1577
    %1769 = vmatmul.mubr.f32.gmra.mrb[0].mxu0 %v1499
    %v1770 = vpop.f32.mrb[0].mxu0
    %v1771 = vadd.f32 0.0, %v1770
    %v1772 = vpop.f32.mrb[0].mxu0
    %1773 = vdwg.mxu0
    %1774 = vmatprep.subr.mxu0 0.0
    %1775 = vmatpush1.msra.mxu0 %v1646
    %1776 = vmatprep.subr.mxu0 0.0
    %1777 = vmatpush1.msra.mxu0 %v1651
    %1778 = vmatprep.subr.mxu0 0.0
    %1779 = vmatpush1.msra.mxu0 %v1656
    %1780 = vmatprep.subr.mxu0 0.0
    %1781 = vmatpush1.msra.mxu0 %v1661
    %1782 = vmatprep.subr.mxu0 0.0
    %1783 = vmatpush1.msra.mxu0 %v1666
    %1784 = vmatprep.subr.mxu0 0.0
    %1785 = vmatpush1.msra.mxu0 %v1671
    %1786 = vmatprep.subr.mxu0 0.0
    %1787 = vmatpush1.msra.mxu0 %v1676
    %1788 = vmatprep.subr.mxu0 0.0
    %1789 = vmatpush1.msra.mxu0 %v1681
    %1790 = vmatprep.subr.mxu0 0.0
    %1791 = vmatpush1.msra.mxu0 %v1686
    %1792 = vmatprep.subr.mxu0 0.0
    %1793 = vmatpush1.msra.mxu0 %v1691
    %1794 = vmatprep.subr.mxu0 0.0
    %1795 = vmatpush1.msra.mxu0 %v1696
    %1796 = vmatprep.subr.mxu0 0.0
    %1797 = vmatpush1.msra.mxu0 %v1701
    %1798 = vmatprep.subr.mxu0 0.0
    %1799 = vmatpush1.msra.mxu0 %v1706
    %1800 = vmatprep.subr.mxu0 0.0
    %1801 = vmatpush1.msra.mxu0 %v1711
    %1802 = vmatprep.subr.mxu0 0.0
    %1803 = vmatpush1.msra.mxu0 %v1716
    %1804 = vmatprep.subr.mxu0 0.0
    %1805 = vmatpush1.msra.mxu0 %v1721
    %1806 = vmatprep.subr.mxu0 0.0
    %1807 = vmatpush1.msra.mxu0 %v1726
    %1808 = vmatprep.subr.mxu0 0.0
    %1809 = vmatpush1.msra.mxu0 %v1731
    %1810 = vmatprep.subr.mxu0 0.0
    %1811 = vmatpush1.msra.mxu0 %v1736
    %1812 = vmatprep.subr.mxu0 0.0
    %1813 = vmatpush1.msra.mxu0 %v1741
    %1814 = vmatprep.subr.mxu0 0.0
    %1815 = vmatpush1.msra.mxu0 %v1746
    %1816 = vmatprep.subr.mxu0 0.0
    %1817 = vmatpush1.msra.mxu0 %v1751
    %1818 = vmatprep.subr.mxu0 0.0
    %1819 = vmatpush1.msra.mxu0 %v1756
    %1820 = vmatprep.subr.mxu0 0.0
    %1821 = vmatpush1.msra.mxu0 %v1761
    %1822 = vmatprep.subr.mxu0 0.0
    %1823 = vmatpush1.msra.mxu0 %v1766
    %1824 = vmatprep.subr.mxu0 0.0
    %1825 = vmatpush1.msra.mxu0 %v1771
    %1826 = vmatprep.subr.mxu0 0.0
    %1827 = vmatpush1.msra.mxu0 0.0
    %1828 = vmatprep.subr.mxu0 0.0
    %1829 = vmatpush1.msra.mxu0 0.0
    %1830 = vmatprep.subr.mxu0 0.0
    %1831 = vmatpush1.msra.mxu0 0.0
    %1832 = vmatprep.subr.mxu0 0.0
    %1833 = vmatpush1.msra.mxu0 0.0
    %1834 = vmatprep.subr.mxu0 0.0
    %1835 = vmatpush1.msra.mxu0 0.0
    %1836 = vmatprep.subr.mxu0 0.0
    %1837 = vmatpush1.msra.mxu0 0.0
    %1838 = vmatprep.mubr.f32.mxu0 %v1377
    %1839 = vmatmul.mubr.f32.gmra.mrb[0].mxu0 %v112
    %v1840 = vpop.f32.mrb[0].mxu0
    %v1841 = vadd.f32 0.0, %v1840
    %v1842 = vpop.f32.mrb[0].mxu0
    %1843 = vdwg.mxu0
    %v1844 = vmul.f32 %v1446, 0.0017361111
    %v1845 = vmul.f32 %v1841, 0.0017361111
    %v1846 = vmul.f32 %v1844, %v1844
    %v1847 = vsub.f32 %v1845, %v1846
    %v1848 = vmax.f32 %v1847, 0.0
    %v1849 = vadd.f32 %v1848, 1e-05
    %v1850 = vrsqrt.pop %v1849
    %v1851 = vlaneseq
    %v1852 = vshrl.u32 %v1851, 7
    %v1853 = vsub.s32 1, %v1852
    %v1854 = vrot.slane %v111, %v1853
    %v1855 = vmul.f32 %v1850, %v1854
    %v1856 = vmul.f32 %v1844, %v1855
    %v1857 = vlaneseq
    %v1858 = vshrl.u32 %v1857, 7
    %v1859 = vsub.s32 2, %v1858
    %v1860 = vrot.slane %v111, %v1859
    %v1861 = vsub.f32 %v1860, %v1856
    %vm1862 = vcmask 64512
    %v1864 = vsel %vm1862, %v114, 0
    %v1867 = vsel %vm1862, %v115, 0
    %v1870 = vsel %vm1862, %v116, 0
    %v1873 = vsel %vm1862, %v117, 0
    %v1876 = vsel %vm1862, %v118, 0
    %v1879 = vsel %vm1862, %v119, 0
    %v1882 = vsel %vm1862, %v120, 0
    %v1885 = vsel %vm1862, %v121, 0
    %v1888 = vsel %vm1862, %v122, 0
    %v1891 = vsel %vm1862, %v123, 0
    %v1894 = vsel %vm1862, %v124, 0
    %v1897 = vsel %vm1862, %v125, 0
    %v1900 = vsel %vm1862, %v126, 0
    %v1903 = vsel %vm1862, %v127, 0
    %v1906 = vsel %vm1862, %v128, 0
    %v1909 = vsel %vm1862, %v129, 0
    %v1912 = vsel %vm1862, %v130, 0
    %v1915 = vsel %vm1862, %v131, 0
    %v1918 = vsel %vm1862, %v132, 0
    %v1921 = vsel %vm1862, %v133, 0
    %v1924 = vsel %vm1862, %v134, 0
    %v1927 = vsel %vm1862, %v135, 0
    %v1930 = vsel %vm1862, %v136, 0
    %v1933 = vsel %vm1862, %v137, 0
    %v1936 = vsel %vm1862, %v138, 0
    %v1939 = vsel %vm1862, %v139, 0
    %1941 = vmatprep.subr.mxu0 0.0
    %1942 = vmatpush1.msra.mxu0 %v1855
    %1943 = vmatprep.subr.mxu0 0.0
    %1944 = vmatpush1.msra.mxu0 0.0
    %1945 = vmatprep.subr.mxu0 0.0
    %1946 = vmatpush1.msra.mxu0 0.0
    %1947 = vmatprep.subr.mxu0 0.0
    %1948 = vmatpush1.msra.mxu0 0.0
    %1949 = vmatprep.subr.mxu0 0.0
    %1950 = vmatpush1.msra.mxu0 0.0
    %1951 = vmatprep.subr.mxu0 0.0
    %1952 = vmatpush1.msra.mxu0 0.0
    %1953 = vmatprep.subr.mxu0 0.0
    %1954 = vmatpush1.msra.mxu0 0.0
    %1955 = vmatprep.subr.mxu0 0.0
    %1956 = vmatpush1.msra.mxu0 0.0
    %1957 = vmatprep.subr.mxu0 0.0
    %1958 = vmatpush1.msra.mxu0 0.0
    %1959 = vmatprep.subr.mxu0 0.0
    %1960 = vmatpush1.msra.mxu0 0.0
    %1961 = vmatprep.subr.mxu0 0.0
    %1962 = vmatpush1.msra.mxu0 0.0
    %1963 = vmatprep.subr.mxu0 0.0
    %1964 = vmatpush1.msra.mxu0 0.0
    %1965 = vmatprep.subr.mxu0 0.0
    %1966 = vmatpush1.msra.mxu0 0.0
    %1967 = vmatprep.subr.mxu0 0.0
    %1968 = vmatpush1.msra.mxu0 0.0
    %1969 = vmatprep.subr.mxu0 0.0
    %1970 = vmatpush1.msra.mxu0 0.0
    %1971 = vmatprep.subr.mxu0 0.0
    %1972 = vmatpush1.msra.mxu0 0.0
    %1973 = vmatprep.subr.mxu0 0.0
    %1974 = vmatpush1.msra.mxu0 0.0
    %1975 = vmatprep.subr.mxu0 0.0
    %1976 = vmatpush1.msra.mxu0 0.0
    %1977 = vmatprep.subr.mxu0 0.0
    %1978 = vmatpush1.msra.mxu0 0.0
    %1979 = vmatprep.subr.mxu0 0.0
    %1980 = vmatpush1.msra.mxu0 0.0
    %1981 = vmatprep.subr.mxu0 0.0
    %1982 = vmatpush1.msra.mxu0 0.0
    %1983 = vmatprep.subr.mxu0 0.0
    %1984 = vmatpush1.msra.mxu0 0.0
    %1985 = vmatprep.subr.mxu0 0.0
    %1986 = vmatpush1.msra.mxu0 0.0
    %1987 = vmatprep.subr.mxu0 0.0
    %1988 = vmatpush1.msra.mxu0 0.0
    %1989 = vmatprep.subr.mxu0 0.0
    %1990 = vmatpush1.msra.mxu0 0.0
    %1991 = vmatprep.subr.mxu0 0.0
    %1992 = vmatpush1.msra.mxu0 0.0
    %1993 = vmatprep.subr.mxu0 0.0
    %1994 = vmatpush1.msra.mxu0 0.0
    %1995 = vmatprep.subr.mxu0 0.0
    %1996 = vmatpush1.msra.mxu0 0.0
    %1997 = vmatprep.subr.mxu0 0.0
    %1998 = vmatpush1.msra.mxu0 0.0
    %1999 = vmatprep.subr.mxu0 0.0
    %2000 = vmatpush1.msra.mxu0 0.0
    %2001 = vmatprep.subr.mxu0 0.0
    %2002 = vmatpush1.msra.mxu0 0.0
    %2003 = vmatprep.subr.mxu0 0.0
    %2004 = vmatpush1.msra.mxu0 0.0
    %2005 = vmatprep.mubr.f32.mxu0 0.0
    %2006 = vmatmul.mubr.f32.gmra.mrb[0].mxu0 %v1864
    %v2007 = vpop.f32.mrb[0].mxu0
    %v2008 = vadd.f32 0.0, %v2007
    %v2009 = vpop.f32.mrb[0].mxu0
    %2010 = vmatprep.mubr.f32.mxu0 0.0
    %2011 = vmatmul.mubr.f32.gmra.mrb[0].mxu0 %v1867
    %v2012 = vpop.f32.mrb[0].mxu0
    %v2013 = vadd.f32 0.0, %v2012
    %v2014 = vpop.f32.mrb[0].mxu0
    %2015 = vmatprep.mubr.f32.mxu0 0.0
    %2016 = vmatmul.mubr.f32.gmra.mrb[0].mxu0 %v1870
    %v2017 = vpop.f32.mrb[0].mxu0
    %v2018 = vadd.f32 0.0, %v2017
    %v2019 = vpop.f32.mrb[0].mxu0
    %2020 = vmatprep.mubr.f32.mxu0 0.0
    %2021 = vmatmul.mubr.f32.gmra.mrb[0].mxu0 %v1873
    %v2022 = vpop.f32.mrb[0].mxu0
    %v2023 = vadd.f32 0.0, %v2022
    %v2024 = vpop.f32.mrb[0].mxu0
    %2025 = vmatprep.mubr.f32.mxu0 0.0
    %2026 = vmatmul.mubr.f32.gmra.mrb[0].mxu0 %v1876
    %v2027 = vpop.f32.mrb[0].mxu0
    %v2028 = vadd.f32 0.0, %v2027
    %v2029 = vpop.f32.mrb[0].mxu0
    %2030 = vmatprep.mubr.f32.mxu0 0.0
    %2031 = vmatmul.mubr.f32.gmra.mrb[0].mxu0 %v1879
    %v2032 = vpop.f32.mrb[0].mxu0
    %v2033 = vadd.f32 0.0, %v2032
    %v2034 = vpop.f32.mrb[0].mxu0
    %2035 = vmatprep.mubr.f32.mxu0 0.0
    %2036 = vmatmul.mubr.f32.gmra.mrb[0].mxu0 %v1882
    %v2037 = vpop.f32.mrb[0].mxu0
    %v2038 = vadd.f32 0.0, %v2037
    %v2039 = vpop.f32.mrb[0].mxu0
    %2040 = vmatprep.mubr.f32.mxu0 0.0
    %2041 = vmatmul.mubr.f32.gmra.mrb[0].mxu0 %v1885
    %v2042 = vpop.f32.mrb[0].mxu0
    %v2043 = vadd.f32 0.0, %v2042
    %v2044 = vpop.f32.mrb[0].mxu0
    %2045 = vmatprep.mubr.f32.mxu0 0.0
    %2046 = vmatmul.mubr.f32.gmra.mrb[0].mxu0 %v1888
    %v2047 = vpop.f32.mrb[0].mxu0
    %v2048 = vadd.f32 0.0, %v2047
    %v2049 = vpop.f32.mrb[0].mxu0
    %2050 = vmatprep.mubr.f32.mxu0 0.0
    %2051 = vmatmul.mubr.f32.gmra.mrb[0].mxu0 %v1891
    %v2052 = vpop.f32.mrb[0].mxu0
    %v2053 = vadd.f32 0.0, %v2052
    %v2054 = vpop.f32.mrb[0].mxu0
    %2055 = vmatprep.mubr.f32.mxu0 0.0
    %2056 = vmatmul.mubr.f32.gmra.mrb[0].mxu0 %v1894
    %v2057 = vpop.f32.mrb[0].mxu0
    %v2058 = vadd.f32 0.0, %v2057
    %v2059 = vpop.f32.mrb[0].mxu0
    %2060 = vmatprep.mubr.f32.mxu0 0.0
    %2061 = vmatmul.mubr.f32.gmra.mrb[0].mxu0 %v1897
    %v2062 = vpop.f32.mrb[0].mxu0
    %v2063 = vadd.f32 0.0, %v2062
    %v2064 = vpop.f32.mrb[0].mxu0
    %2065 = vmatprep.mubr.f32.mxu0 0.0
    %2066 = vmatmul.mubr.f32.gmra.mrb[0].mxu0 %v1900
    %v2067 = vpop.f32.mrb[0].mxu0
    %v2068 = vadd.f32 0.0, %v2067
    %v2069 = vpop.f32.mrb[0].mxu0
    %2070 = vmatprep.mubr.f32.mxu0 0.0
    %2071 = vmatmul.mubr.f32.gmra.mrb[0].mxu0 %v1903
    %v2072 = vpop.f32.mrb[0].mxu0
    %v2073 = vadd.f32 0.0, %v2072
    %v2074 = vpop.f32.mrb[0].mxu0
    %2075 = vmatprep.mubr.f32.mxu0 0.0
    %2076 = vmatmul.mubr.f32.gmra.mrb[0].mxu0 %v1906
    %v2077 = vpop.f32.mrb[0].mxu0
    %v2078 = vadd.f32 0.0, %v2077
    %v2079 = vpop.f32.mrb[0].mxu0
    %2080 = vmatprep.mubr.f32.mxu0 0.0
    %2081 = vmatmul.mubr.f32.gmra.mrb[0].mxu0 %v1909
    %v2082 = vpop.f32.mrb[0].mxu0
    %v2083 = vadd.f32 0.0, %v2082
    %v2084 = vpop.f32.mrb[0].mxu0
    %2085 = vmatprep.mubr.f32.mxu0 0.0
    %2086 = vmatmul.mubr.f32.gmra.mrb[0].mxu0 %v1912
    %v2087 = vpop.f32.mrb[0].mxu0
    %v2088 = vadd.f32 0.0, %v2087
    %v2089 = vpop.f32.mrb[0].mxu0
    %2090 = vmatprep.mubr.f32.mxu0 0.0
    %2091 = vmatmul.mubr.f32.gmra.mrb[0].mxu0 %v1915
    %v2092 = vpop.f32.mrb[0].mxu0
    %v2093 = vadd.f32 0.0, %v2092
    %v2094 = vpop.f32.mrb[0].mxu0
    %2095 = vmatprep.mubr.f32.mxu0 0.0
    %2096 = vmatmul.mubr.f32.gmra.mrb[0].mxu0 %v1918
    %v2097 = vpop.f32.mrb[0].mxu0
    %v2098 = vadd.f32 0.0, %v2097
    %v2099 = vpop.f32.mrb[0].mxu0
    %2100 = vmatprep.mubr.f32.mxu0 0.0
    %2101 = vmatmul.mubr.f32.gmra.mrb[0].mxu0 %v1921
    %v2102 = vpop.f32.mrb[0].mxu0
    %v2103 = vadd.f32 0.0, %v2102
    %v2104 = vpop.f32.mrb[0].mxu0
    %2105 = vmatprep.mubr.f32.mxu0 0.0
    %2106 = vmatmul.mubr.f32.gmra.mrb[0].mxu0 %v1924
    %v2107 = vpop.f32.mrb[0].mxu0
    %v2108 = vadd.f32 0.0, %v2107
    %v2109 = vpop.f32.mrb[0].mxu0
    %2110 = vmatprep.mubr.f32.mxu0 0.0
    %2111 = vmatmul.mubr.f32.gmra.mrb[0].mxu0 %v1927
    %v2112 = vpop.f32.mrb[0].mxu0
    %v2113 = vadd.f32 0.0, %v2112
    %v2114 = vpop.f32.mrb[0].mxu0
    %2115 = vmatprep.mubr.f32.mxu0 0.0
    %2116 = vmatmul.mubr.f32.gmra.mrb[0].mxu0 %v1930
    %v2117 = vpop.f32.mrb[0].mxu0
    %v2118 = vadd.f32 0.0, %v2117
    %v2119 = vpop.f32.mrb[0].mxu0
    %2120 = vmatprep.mubr.f32.mxu0 0.0
    %2121 = vmatmul.mubr.f32.gmra.mrb[0].mxu0 %v1933
    %v2122 = vpop.f32.mrb[0].mxu0
    %v2123 = vadd.f32 0.0, %v2122
    %v2124 = vpop.f32.mrb[0].mxu0
    %2125 = vmatprep.mubr.f32.mxu0 0.0
    %2126 = vmatmul.mubr.f32.gmra.mrb[0].mxu0 %v1936
    %v2127 = vpop.f32.mrb[0].mxu0
    %v2128 = vadd.f32 0.0, %v2127
    %v2129 = vpop.f32.mrb[0].mxu0
    %2130 = vmatprep.mubr.f32.mxu0 0.0
    %2131 = vmatmul.mubr.f32.gmra.mrb[0].mxu0 %v1939
    %v2132 = vpop.f32.mrb[0].mxu0
    %v2133 = vadd.f32 0.0, %v2132
    %v2134 = vpop.f32.mrb[0].mxu0
    %2135 = vdwg.mxu0
    %v2137 = vsel %vm1862, %v2008, 0
    %v2140 = vsel %vm1862, %v2013, 0
    %v2143 = vsel %vm1862, %v2018, 0
    %v2146 = vsel %vm1862, %v2023, 0
    %v2149 = vsel %vm1862, %v2028, 0
    %v2152 = vsel %vm1862, %v2033, 0
    %v2155 = vsel %vm1862, %v2038, 0
    %v2158 = vsel %vm1862, %v2043, 0
    %v2161 = vsel %vm1862, %v2048, 0
    %v2164 = vsel %vm1862, %v2053, 0
    %v2167 = vsel %vm1862, %v2058, 0
    %v2170 = vsel %vm1862, %v2063, 0
    %v2173 = vsel %vm1862, %v2068, 0
    %v2176 = vsel %vm1862, %v2073, 0
    %v2179 = vsel %vm1862, %v2078, 0
    %v2182 = vsel %vm1862, %v2083, 0
    %v2185 = vsel %vm1862, %v2088, 0
    %v2188 = vsel %vm1862, %v2093, 0
    %v2191 = vsel %vm1862, %v2098, 0
    %v2194 = vsel %vm1862, %v2103, 0
    %v2197 = vsel %vm1862, %v2108, 0
    %v2200 = vsel %vm1862, %v2113, 0
    %v2203 = vsel %vm1862, %v2118, 0
    %v2206 = vsel %vm1862, %v2123, 0
    %v2209 = vsel %vm1862, %v2128, 0
    %v2212 = vsel %vm1862, %v2133, 0
    %2214 = vmatprep.subr.mxu0 %v165
    %2215 = vmatpush1.msra.mxu0 %v164
    %2216 = vmatprep.subr.mxu0 0.0
    %2217 = vmatpush1.msra.mxu0 0.0
    %2218 = vmatprep.subr.mxu0 0.0
    %2219 = vmatpush1.msra.mxu0 0.0
    %2220 = vmatprep.subr.mxu0 0.0
    %2221 = vmatpush1.msra.mxu0 0.0
    %2222 = vmatprep.subr.mxu0 0.0
    %2223 = vmatpush1.msra.mxu0 0.0
    %2224 = vmatprep.subr.mxu0 0.0
    %2225 = vmatpush1.msra.mxu0 0.0
    %2226 = vmatprep.subr.mxu0 0.0
    %2227 = vmatpush1.msra.mxu0 0.0
    %2228 = vmatprep.subr.mxu0 0.0
    %2229 = vmatpush1.msra.mxu0 0.0
    %2230 = vmatprep.subr.mxu0 0.0
    %2231 = vmatpush1.msra.mxu0 0.0
    %2232 = vmatprep.subr.mxu0 0.0
    %2233 = vmatpush1.msra.mxu0 0.0
    %2234 = vmatprep.subr.mxu0 0.0
    %2235 = vmatpush1.msra.mxu0 0.0
    %2236 = vmatprep.subr.mxu0 0.0
    %2237 = vmatpush1.msra.mxu0 0.0
    %2238 = vmatprep.subr.mxu0 0.0
    %2239 = vmatpush1.msra.mxu0 0.0
    %2240 = vmatprep.subr.mxu0 0.0
    %2241 = vmatpush1.msra.mxu0 0.0
    %2242 = vmatprep.subr.mxu0 0.0
    %2243 = vmatpush1.msra.mxu0 0.0
    %2244 = vmatprep.subr.mxu0 0.0
    %2245 = vmatpush1.msra.mxu0 0.0
    %2246 = vmatprep.subr.mxu0 0.0
    %2247 = vmatpush1.msra.mxu0 0.0
    %2248 = vmatprep.subr.mxu0 0.0
    %2249 = vmatpush1.msra.mxu0 0.0
    %2250 = vmatprep.subr.mxu0 0.0
    %2251 = vmatpush1.msra.mxu0 0.0
    %2252 = vmatprep.subr.mxu0 0.0
    %2253 = vmatpush1.msra.mxu0 0.0
    %2254 = vmatprep.subr.mxu0 0.0
    %2255 = vmatpush1.msra.mxu0 0.0
    %2256 = vmatprep.subr.mxu0 0.0
    %2257 = vmatpush1.msra.mxu0 0.0
    %2258 = vmatprep.subr.mxu0 0.0
    %2259 = vmatpush1.msra.mxu0 0.0
    %2260 = vmatprep.subr.mxu0 0.0
    %2261 = vmatpush1.msra.mxu0 0.0
    %2262 = vmatprep.subr.mxu0 0.0
    %2263 = vmatpush1.msra.mxu0 0.0
    %2264 = vmatprep.subr.mxu0 0.0
    %2265 = vmatpush1.msra.mxu0 0.0
    %2266 = vmatprep.subr.mxu0 0.0
    %2267 = vmatpush1.msra.mxu0 0.0
    %2268 = vmatprep.subr.mxu0 0.0
    %2269 = vmatpush1.msra.mxu0 0.0
    %2270 = vmatprep.subr.mxu0 0.0
    %2271 = vmatpush1.msra.mxu0 0.0
    %2272 = vmatprep.subr.mxu0 0.0
    %2273 = vmatpush1.msra.mxu0 0.0
    %2274 = vmatprep.subr.mxu0 0.0
    %2275 = vmatpush1.msra.mxu0 0.0
    %2276 = vmatprep.subr.mxu0 0.0
    %2277 = vmatpush1.msra.mxu0 0.0
    %2278 = vmatprep.mubr.f32.mxu0 0.0
    %2279 = vmatmul.mubr.f32.gmra.mrb[0].mxu0 %v2137
    %v2280 = vpop.f32.mrb[0].mxu0
    %v2281 = vadd.f32 0.0, %v2280
    %v2282 = vpop.f32.mrb[0].mxu0
    %v2283 = vadd.f32 0.0, %v2282
    %2284 = vmatprep.mubr.f32.mxu0 0.0
    %2285 = vmatmul.mubr.f32.gmra.mrb[0].mxu0 %v2140
    %v2286 = vpop.f32.mrb[0].mxu0
    %v2287 = vadd.f32 0.0, %v2286
    %v2288 = vpop.f32.mrb[0].mxu0
    %v2289 = vadd.f32 0.0, %v2288
    %2290 = vmatprep.mubr.f32.mxu0 0.0
    %2291 = vmatmul.mubr.f32.gmra.mrb[0].mxu0 %v2143
    %v2292 = vpop.f32.mrb[0].mxu0
    %v2293 = vadd.f32 0.0, %v2292
    %v2294 = vpop.f32.mrb[0].mxu0
    %v2295 = vadd.f32 0.0, %v2294
    %2296 = vmatprep.mubr.f32.mxu0 0.0
    %2297 = vmatmul.mubr.f32.gmra.mrb[0].mxu0 %v2146
    %v2298 = vpop.f32.mrb[0].mxu0
    %v2299 = vadd.f32 0.0, %v2298
    %v2300 = vpop.f32.mrb[0].mxu0
    %v2301 = vadd.f32 0.0, %v2300
    %2302 = vmatprep.mubr.f32.mxu0 0.0
    %2303 = vmatmul.mubr.f32.gmra.mrb[0].mxu0 %v2149
    %v2304 = vpop.f32.mrb[0].mxu0
    %v2305 = vadd.f32 0.0, %v2304
    %v2306 = vpop.f32.mrb[0].mxu0
    %v2307 = vadd.f32 0.0, %v2306
    %2308 = vmatprep.mubr.f32.mxu0 0.0
    %2309 = vmatmul.mubr.f32.gmra.mrb[0].mxu0 %v2152
    %v2310 = vpop.f32.mrb[0].mxu0
    %v2311 = vadd.f32 0.0, %v2310
    %v2312 = vpop.f32.mrb[0].mxu0
    %v2313 = vadd.f32 0.0, %v2312
    %2314 = vmatprep.mubr.f32.mxu0 0.0
    %2315 = vmatmul.mubr.f32.gmra.mrb[0].mxu0 %v2155
    %v2316 = vpop.f32.mrb[0].mxu0
    %v2317 = vadd.f32 0.0, %v2316
    %v2318 = vpop.f32.mrb[0].mxu0
    %v2319 = vadd.f32 0.0, %v2318
    %2320 = vmatprep.mubr.f32.mxu0 0.0
    %2321 = vmatmul.mubr.f32.gmra.mrb[0].mxu0 %v2158
    %v2322 = vpop.f32.mrb[0].mxu0
    %v2323 = vadd.f32 0.0, %v2322
    %v2324 = vpop.f32.mrb[0].mxu0
    %v2325 = vadd.f32 0.0, %v2324
    %2326 = vmatprep.mubr.f32.mxu0 0.0
    %2327 = vmatmul.mubr.f32.gmra.mrb[0].mxu0 %v2161
    %v2328 = vpop.f32.mrb[0].mxu0
    %v2329 = vadd.f32 0.0, %v2328
    %v2330 = vpop.f32.mrb[0].mxu0
    %v2331 = vadd.f32 0.0, %v2330
    %2332 = vmatprep.mubr.f32.mxu0 0.0
    %2333 = vmatmul.mubr.f32.gmra.mrb[0].mxu0 %v2164
    %v2334 = vpop.f32.mrb[0].mxu0
    %v2335 = vadd.f32 0.0, %v2334
    %v2336 = vpop.f32.mrb[0].mxu0
    %v2337 = vadd.f32 0.0, %v2336
    %2338 = vmatprep.mubr.f32.mxu0 0.0
    %2339 = vmatmul.mubr.f32.gmra.mrb[0].mxu0 %v2167
    %v2340 = vpop.f32.mrb[0].mxu0
    %v2341 = vadd.f32 0.0, %v2340
    %v2342 = vpop.f32.mrb[0].mxu0
    %v2343 = vadd.f32 0.0, %v2342
    %2344 = vmatprep.mubr.f32.mxu0 0.0
    %2345 = vmatmul.mubr.f32.gmra.mrb[0].mxu0 %v2170
    %v2346 = vpop.f32.mrb[0].mxu0
    %v2347 = vadd.f32 0.0, %v2346
    %v2348 = vpop.f32.mrb[0].mxu0
    %v2349 = vadd.f32 0.0, %v2348
    %2350 = vmatprep.mubr.f32.mxu0 0.0
    %2351 = vmatmul.mubr.f32.gmra.mrb[0].mxu0 %v2173
    %v2352 = vpop.f32.mrb[0].mxu0
    %v2353 = vadd.f32 0.0, %v2352
    %v2354 = vpop.f32.mrb[0].mxu0
    %v2355 = vadd.f32 0.0, %v2354
    %2356 = vmatprep.mubr.f32.mxu0 0.0
    %2357 = vmatmul.mubr.f32.gmra.mrb[0].mxu0 %v2176
    %v2358 = vpop.f32.mrb[0].mxu0
    %v2359 = vadd.f32 0.0, %v2358
    %v2360 = vpop.f32.mrb[0].mxu0
    %v2361 = vadd.f32 0.0, %v2360
    %2362 = vmatprep.mubr.f32.mxu0 0.0
    %2363 = vmatmul.mubr.f32.gmra.mrb[0].mxu0 %v2179
    %v2364 = vpop.f32.mrb[0].mxu0
    %v2365 = vadd.f32 0.0, %v2364
    %v2366 = vpop.f32.mrb[0].mxu0
    %v2367 = vadd.f32 0.0, %v2366
    %2368 = vmatprep.mubr.f32.mxu0 0.0
    %2369 = vmatmul.mubr.f32.gmra.mrb[0].mxu0 %v2182
    %v2370 = vpop.f32.mrb[0].mxu0
    %v2371 = vadd.f32 0.0, %v2370
    %v2372 = vpop.f32.mrb[0].mxu0
    %v2373 = vadd.f32 0.0, %v2372
    %2374 = vmatprep.mubr.f32.mxu0 0.0
    %2375 = vmatmul.mubr.f32.gmra.mrb[0].mxu0 %v2185
    %v2376 = vpop.f32.mrb[0].mxu0
    %v2377 = vadd.f32 0.0, %v2376
    %v2378 = vpop.f32.mrb[0].mxu0
    %v2379 = vadd.f32 0.0, %v2378
    %2380 = vmatprep.mubr.f32.mxu0 0.0
    %2381 = vmatmul.mubr.f32.gmra.mrb[0].mxu0 %v2188
    %v2382 = vpop.f32.mrb[0].mxu0
    %v2383 = vadd.f32 0.0, %v2382
    %v2384 = vpop.f32.mrb[0].mxu0
    %v2385 = vadd.f32 0.0, %v2384
    %2386 = vmatprep.mubr.f32.mxu0 0.0
    %2387 = vmatmul.mubr.f32.gmra.mrb[0].mxu0 %v2191
    %v2388 = vpop.f32.mrb[0].mxu0
    %v2389 = vadd.f32 0.0, %v2388
    %v2390 = vpop.f32.mrb[0].mxu0
    %v2391 = vadd.f32 0.0, %v2390
    %2392 = vmatprep.mubr.f32.mxu0 0.0
    %2393 = vmatmul.mubr.f32.gmra.mrb[0].mxu0 %v2194
    %v2394 = vpop.f32.mrb[0].mxu0
    %v2395 = vadd.f32 0.0, %v2394
    %v2396 = vpop.f32.mrb[0].mxu0
    %v2397 = vadd.f32 0.0, %v2396
    %2398 = vmatprep.mubr.f32.mxu0 0.0
    %2399 = vmatmul.mubr.f32.gmra.mrb[0].mxu0 %v2197
    %v2400 = vpop.f32.mrb[0].mxu0
    %v2401 = vadd.f32 0.0, %v2400
    %v2402 = vpop.f32.mrb[0].mxu0
    %v2403 = vadd.f32 0.0, %v2402
    %2404 = vmatprep.mubr.f32.mxu0 0.0
    %2405 = vmatmul.mubr.f32.gmra.mrb[0].mxu0 %v2200
    %v2406 = vpop.f32.mrb[0].mxu0
    %v2407 = vadd.f32 0.0, %v2406
    %v2408 = vpop.f32.mrb[0].mxu0
    %v2409 = vadd.f32 0.0, %v2408
    %2410 = vmatprep.mubr.f32.mxu0 0.0
    %2411 = vmatmul.mubr.f32.gmra.mrb[0].mxu0 %v2203
    %v2412 = vpop.f32.mrb[0].mxu0
    %v2413 = vadd.f32 0.0, %v2412
    %v2414 = vpop.f32.mrb[0].mxu0
    %v2415 = vadd.f32 0.0, %v2414
    %2416 = vmatprep.mubr.f32.mxu0 0.0
    %2417 = vmatmul.mubr.f32.gmra.mrb[0].mxu0 %v2206
    %v2418 = vpop.f32.mrb[0].mxu0
    %v2419 = vadd.f32 0.0, %v2418
    %v2420 = vpop.f32.mrb[0].mxu0
    %v2421 = vadd.f32 0.0, %v2420
    %2422 = vmatprep.mubr.f32.mxu0 0.0
    %2423 = vmatmul.mubr.f32.gmra.mrb[0].mxu0 %v2209
    %v2424 = vpop.f32.mrb[0].mxu0
    %v2425 = vadd.f32 0.0, %v2424
    %v2426 = vpop.f32.mrb[0].mxu0
    %v2427 = vadd.f32 0.0, %v2426
    %2428 = vmatprep.mubr.f32.mxu0 0.0
    %2429 = vmatmul.mubr.f32.gmra.mrb[0].mxu0 %v2212
    %v2430 = vpop.f32.mrb[0].mxu0
    %v2431 = vadd.f32 0.0, %v2430
    %v2432 = vpop.f32.mrb[0].mxu0
    %v2433 = vadd.f32 0.0, %v2432
    %2434 = vdwg.mxu0
    %2435 = vmatprep.subr.mxu0 0.0
    %2436 = vmatpush1.msra.mxu0 %v1861
    %2437 = vmatprep.subr.mxu0 0.0
    %2438 = vmatpush1.msra.mxu0 0.0
    %2439 = vmatprep.subr.mxu0 0.0
    %2440 = vmatpush1.msra.mxu0 0.0
    %2441 = vmatprep.subr.mxu0 0.0
    %2442 = vmatpush1.msra.mxu0 0.0
    %2443 = vmatprep.subr.mxu0 0.0
    %2444 = vmatpush1.msra.mxu0 0.0
    %2445 = vmatprep.subr.mxu0 0.0
    %2446 = vmatpush1.msra.mxu0 0.0
    %2447 = vmatprep.subr.mxu0 0.0
    %2448 = vmatpush1.msra.mxu0 0.0
    %2449 = vmatprep.subr.mxu0 0.0
    %2450 = vmatpush1.msra.mxu0 0.0
    %2451 = vmatprep.subr.mxu0 0.0
    %2452 = vmatpush1.msra.mxu0 0.0
    %2453 = vmatprep.subr.mxu0 0.0
    %2454 = vmatpush1.msra.mxu0 0.0
    %2455 = vmatprep.subr.mxu0 0.0
    %2456 = vmatpush1.msra.mxu0 0.0
    %2457 = vmatprep.subr.mxu0 0.0
    %2458 = vmatpush1.msra.mxu0 0.0
    %2459 = vmatprep.subr.mxu0 0.0
    %2460 = vmatpush1.msra.mxu0 0.0
    %2461 = vmatprep.subr.mxu0 0.0
    %2462 = vmatpush1.msra.mxu0 0.0
    %2463 = vmatprep.subr.mxu0 0.0
    %2464 = vmatpush1.msra.mxu0 0.0
    %2465 = vmatprep.subr.mxu0 0.0
    %2466 = vmatpush1.msra.mxu0 0.0
    %2467 = vmatprep.subr.mxu0 0.0
    %2468 = vmatpush1.msra.mxu0 0.0
    %2469 = vmatprep.subr.mxu0 0.0
    %2470 = vmatpush1.msra.mxu0 0.0
    %2471 = vmatprep.subr.mxu0 0.0
    %2472 = vmatpush1.msra.mxu0 0.0
    %2473 = vmatprep.subr.mxu0 0.0
    %2474 = vmatpush1.msra.mxu0 0.0
    %2475 = vmatprep.subr.mxu0 0.0
    %2476 = vmatpush1.msra.mxu0 0.0
    %2477 = vmatprep.subr.mxu0 0.0
    %2478 = vmatpush1.msra.mxu0 0.0
    %2479 = vmatprep.subr.mxu0 0.0
    %2480 = vmatpush1.msra.mxu0 0.0
    %2481 = vmatprep.subr.mxu0 0.0
    %2482 = vmatpush1.msra.mxu0 0.0
    %2483 = vmatprep.subr.mxu0 0.0
    %2484 = vmatpush1.msra.mxu0 0.0
    %2485 = vmatprep.subr.mxu0 0.0
    %2486 = vmatpush1.msra.mxu0 0.0
    %2487 = vmatprep.subr.mxu0 0.0
    %2488 = vmatpush1.msra.mxu0 0.0
    %2489 = vmatprep.subr.mxu0 0.0
    %2490 = vmatpush1.msra.mxu0 0.0
    %2491 = vmatprep.subr.mxu0 0.0
    %2492 = vmatpush1.msra.mxu0 0.0
    %2493 = vmatprep.subr.mxu0 0.0
    %2494 = vmatpush1.msra.mxu0 0.0
    %2495 = vmatprep.subr.mxu0 0.0
    %2496 = vmatpush1.msra.mxu0 0.0
    %2497 = vmatprep.subr.mxu0 0.0
    %2498 = vmatpush1.msra.mxu0 0.0
    %2499 = vmatprep.mubr.f32.mxu0 0.0
    %2500 = vmatmul.mubr.f32.gmra.mrb[0].mxu0 %v1864
    %v2501 = vpop.f32.mrb[0].mxu0
    %v2502 = vadd.f32 0.0, %v2501
    %v2503 = vpop.f32.mrb[0].mxu0
    %2504 = vmatprep.mubr.f32.mxu0 0.0
    %2505 = vmatmul.mubr.f32.gmra.mrb[0].mxu0 %v1867
    %v2506 = vpop.f32.mrb[0].mxu0
    %v2507 = vadd.f32 0.0, %v2506
    %v2508 = vpop.f32.mrb[0].mxu0
    %2509 = vmatprep.mubr.f32.mxu0 0.0
    %2510 = vmatmul.mubr.f32.gmra.mrb[0].mxu0 %v1870
    %v2511 = vpop.f32.mrb[0].mxu0
    %v2512 = vadd.f32 0.0, %v2511
    %v2513 = vpop.f32.mrb[0].mxu0
    %2514 = vmatprep.mubr.f32.mxu0 0.0
    %2515 = vmatmul.mubr.f32.gmra.mrb[0].mxu0 %v1873
    %v2516 = vpop.f32.mrb[0].mxu0
    %v2517 = vadd.f32 0.0, %v2516
    %v2518 = vpop.f32.mrb[0].mxu0
    %2519 = vmatprep.mubr.f32.mxu0 0.0
    %2520 = vmatmul.mubr.f32.gmra.mrb[0].mxu0 %v1876
    %v2521 = vpop.f32.mrb[0].mxu0
    %v2522 = vadd.f32 0.0, %v2521
    %v2523 = vpop.f32.mrb[0].mxu0
    %2524 = vmatprep.mubr.f32.mxu0 0.0
    %2525 = vmatmul.mubr.f32.gmra.mrb[0].mxu0 %v1879
    %v2526 = vpop.f32.mrb[0].mxu0
    %v2527 = vadd.f32 0.0, %v2526
    %v2528 = vpop.f32.mrb[0].mxu0
    %2529 = vmatprep.mubr.f32.mxu0 0.0
    %2530 = vmatmul.mubr.f32.gmra.mrb[0].mxu0 %v1882
    %v2531 = vpop.f32.mrb[0].mxu0
    %v2532 = vadd.f32 0.0, %v2531
    %v2533 = vpop.f32.mrb[0].mxu0
    %2534 = vmatprep.mubr.f32.mxu0 0.0
    %2535 = vmatmul.mubr.f32.gmra.mrb[0].mxu0 %v1885
    %v2536 = vpop.f32.mrb[0].mxu0
    %v2537 = vadd.f32 0.0, %v2536
    %v2538 = vpop.f32.mrb[0].mxu0
    %2539 = vmatprep.mubr.f32.mxu0 0.0
    %2540 = vmatmul.mubr.f32.gmra.mrb[0].mxu0 %v1888
    %v2541 = vpop.f32.mrb[0].mxu0
    %v2542 = vadd.f32 0.0, %v2541
    %v2543 = vpop.f32.mrb[0].mxu0
    %2544 = vmatprep.mubr.f32.mxu0 0.0
    %2545 = vmatmul.mubr.f32.gmra.mrb[0].mxu0 %v1891
    %v2546 = vpop.f32.mrb[0].mxu0
    %v2547 = vadd.f32 0.0, %v2546
    %v2548 = vpop.f32.mrb[0].mxu0
    %2549 = vmatprep.mubr.f32.mxu0 0.0
    %2550 = vmatmul.mubr.f32.gmra.mrb[0].mxu0 %v1894
    %v2551 = vpop.f32.mrb[0].mxu0
    %v2552 = vadd.f32 0.0, %v2551
    %v2553 = vpop.f32.mrb[0].mxu0
    %2554 = vmatprep.mubr.f32.mxu0 0.0
    %2555 = vmatmul.mubr.f32.gmra.mrb[0].mxu0 %v1897
    %v2556 = vpop.f32.mrb[0].mxu0
    %v2557 = vadd.f32 0.0, %v2556
    %v2558 = vpop.f32.mrb[0].mxu0
    %2559 = vmatprep.mubr.f32.mxu0 0.0
    %2560 = vmatmul.mubr.f32.gmra.mrb[0].mxu0 %v1900
    %v2561 = vpop.f32.mrb[0].mxu0
    %v2562 = vadd.f32 0.0, %v2561
    %v2563 = vpop.f32.mrb[0].mxu0
    %2564 = vmatprep.mubr.f32.mxu0 0.0
    %2565 = vmatmul.mubr.f32.gmra.mrb[0].mxu0 %v1903
    %v2566 = vpop.f32.mrb[0].mxu0
    %v2567 = vadd.f32 0.0, %v2566
    %v2568 = vpop.f32.mrb[0].mxu0
    %2569 = vmatprep.mubr.f32.mxu0 0.0
    %2570 = vmatmul.mubr.f32.gmra.mrb[0].mxu0 %v1906
    %v2571 = vpop.f32.mrb[0].mxu0
    %v2572 = vadd.f32 0.0, %v2571
    %v2573 = vpop.f32.mrb[0].mxu0
    %2574 = vmatprep.mubr.f32.mxu0 0.0
    %2575 = vmatmul.mubr.f32.gmra.mrb[0].mxu0 %v1909
    %v2576 = vpop.f32.mrb[0].mxu0
    %v2577 = vadd.f32 0.0, %v2576
    %v2578 = vpop.f32.mrb[0].mxu0
    %2579 = vmatprep.mubr.f32.mxu0 0.0
    %2580 = vmatmul.mubr.f32.gmra.mrb[0].mxu0 %v1912
    %v2581 = vpop.f32.mrb[0].mxu0
    %v2582 = vadd.f32 0.0, %v2581
    %v2583 = vpop.f32.mrb[0].mxu0
    %2584 = vmatprep.mubr.f32.mxu0 0.0
    %2585 = vmatmul.mubr.f32.gmra.mrb[0].mxu0 %v1915
    %v2586 = vpop.f32.mrb[0].mxu0
    %v2587 = vadd.f32 0.0, %v2586
    %v2588 = vpop.f32.mrb[0].mxu0
    %2589 = vmatprep.mubr.f32.mxu0 0.0
    %2590 = vmatmul.mubr.f32.gmra.mrb[0].mxu0 %v1918
    %v2591 = vpop.f32.mrb[0].mxu0
    %v2592 = vadd.f32 0.0, %v2591
    %v2593 = vpop.f32.mrb[0].mxu0
    %2594 = vmatprep.mubr.f32.mxu0 0.0
    %2595 = vmatmul.mubr.f32.gmra.mrb[0].mxu0 %v1921
    %v2596 = vpop.f32.mrb[0].mxu0
    %v2597 = vadd.f32 0.0, %v2596
    %v2598 = vpop.f32.mrb[0].mxu0
    %2599 = vmatprep.mubr.f32.mxu0 0.0
    %2600 = vmatmul.mubr.f32.gmra.mrb[0].mxu0 %v1924
    %v2601 = vpop.f32.mrb[0].mxu0
    %v2602 = vadd.f32 0.0, %v2601
    %v2603 = vpop.f32.mrb[0].mxu0
    %2604 = vmatprep.mubr.f32.mxu0 0.0
    %2605 = vmatmul.mubr.f32.gmra.mrb[0].mxu0 %v1927
    %v2606 = vpop.f32.mrb[0].mxu0
    %v2607 = vadd.f32 0.0, %v2606
    %v2608 = vpop.f32.mrb[0].mxu0
    %2609 = vmatprep.mubr.f32.mxu0 0.0
    %2610 = vmatmul.mubr.f32.gmra.mrb[0].mxu0 %v1930
    %v2611 = vpop.f32.mrb[0].mxu0
    %v2612 = vadd.f32 0.0, %v2611
    %v2613 = vpop.f32.mrb[0].mxu0
    %2614 = vmatprep.mubr.f32.mxu0 0.0
    %2615 = vmatmul.mubr.f32.gmra.mrb[0].mxu0 %v1933
    %v2616 = vpop.f32.mrb[0].mxu0
    %v2617 = vadd.f32 0.0, %v2616
    %v2618 = vpop.f32.mrb[0].mxu0
    %2619 = vmatprep.mubr.f32.mxu0 0.0
    %2620 = vmatmul.mubr.f32.gmra.mrb[0].mxu0 %v1936
    %v2621 = vpop.f32.mrb[0].mxu0
    %v2622 = vadd.f32 0.0, %v2621
    %v2623 = vpop.f32.mrb[0].mxu0
    %2624 = vmatprep.mubr.f32.mxu0 0.0
    %2625 = vmatmul.mubr.f32.gmra.mrb[0].mxu0 %v1939
    %v2626 = vpop.f32.mrb[0].mxu0
    %v2627 = vadd.f32 0.0, %v2626
    %v2628 = vpop.f32.mrb[0].mxu0
    %2629 = vdwg.mxu0
    %v2631 = vsel %vm1862, %v2502, 0
    %v2634 = vsel %vm1862, %v2507, 0
    %v2637 = vsel %vm1862, %v2512, 0
    %v2640 = vsel %vm1862, %v2517, 0
    %v2643 = vsel %vm1862, %v2522, 0
    %v2646 = vsel %vm1862, %v2527, 0
    %v2649 = vsel %vm1862, %v2532, 0
    %v2652 = vsel %vm1862, %v2537, 0
    %v2655 = vsel %vm1862, %v2542, 0
    %v2658 = vsel %vm1862, %v2547, 0
    %v2661 = vsel %vm1862, %v2552, 0
    %v2664 = vsel %vm1862, %v2557, 0
    %v2667 = vsel %vm1862, %v2562, 0
    %v2670 = vsel %vm1862, %v2567, 0
    %v2673 = vsel %vm1862, %v2572, 0
    %v2676 = vsel %vm1862, %v2577, 0
    %v2679 = vsel %vm1862, %v2582, 0
    %v2682 = vsel %vm1862, %v2587, 0
    %v2685 = vsel %vm1862, %v2592, 0
    %v2688 = vsel %vm1862, %v2597, 0
    %v2691 = vsel %vm1862, %v2602, 0
    %v2694 = vsel %vm1862, %v2607, 0
    %v2697 = vsel %vm1862, %v2612, 0
    %v2700 = vsel %vm1862, %v2617, 0
    %v2703 = vsel %vm1862, %v2622, 0
    %v2706 = vsel %vm1862, %v2627, 0
    %2708 = vmatprep.subr.mxu0 %v165
    %2709 = vmatpush1.msra.mxu0 %v164
    %2710 = vmatprep.subr.mxu0 0.0
    %2711 = vmatpush1.msra.mxu0 0.0
    %2712 = vmatprep.subr.mxu0 0.0
    %2713 = vmatpush1.msra.mxu0 0.0
    %2714 = vmatprep.subr.mxu0 0.0
    %2715 = vmatpush1.msra.mxu0 0.0
    %2716 = vmatprep.subr.mxu0 0.0
    %2717 = vmatpush1.msra.mxu0 0.0
    %2718 = vmatprep.subr.mxu0 0.0
    %2719 = vmatpush1.msra.mxu0 0.0
    %2720 = vmatprep.subr.mxu0 0.0
    %2721 = vmatpush1.msra.mxu0 0.0
    %2722 = vmatprep.subr.mxu0 0.0
    %2723 = vmatpush1.msra.mxu0 0.0
    %2724 = vmatprep.subr.mxu0 0.0
    %2725 = vmatpush1.msra.mxu0 0.0
    %2726 = vmatprep.subr.mxu0 0.0
    %2727 = vmatpush1.msra.mxu0 0.0
    %2728 = vmatprep.subr.mxu0 0.0
    %2729 = vmatpush1.msra.mxu0 0.0
    %2730 = vmatprep.subr.mxu0 0.0
    %2731 = vmatpush1.msra.mxu0 0.0
    %2732 = vmatprep.subr.mxu0 0.0
    %2733 = vmatpush1.msra.mxu0 0.0
    %2734 = vmatprep.subr.mxu0 0.0
    %2735 = vmatpush1.msra.mxu0 0.0
    %2736 = vmatprep.subr.mxu0 0.0
    %2737 = vmatpush1.msra.mxu0 0.0
    %2738 = vmatprep.subr.mxu0 0.0
    %2739 = vmatpush1.msra.mxu0 0.0
    %2740 = vmatprep.subr.mxu0 0.0
    %2741 = vmatpush1.msra.mxu0 0.0
    %2742 = vmatprep.subr.mxu0 0.0
    %2743 = vmatpush1.msra.mxu0 0.0
    %2744 = vmatprep.subr.mxu0 0.0
    %2745 = vmatpush1.msra.mxu0 0.0
    %2746 = vmatprep.subr.mxu0 0.0
    %2747 = vmatpush1.msra.mxu0 0.0
    %2748 = vmatprep.subr.mxu0 0.0
    %2749 = vmatpush1.msra.mxu0 0.0
    %2750 = vmatprep.subr.mxu0 0.0
    %2751 = vmatpush1.msra.mxu0 0.0
    %2752 = vmatprep.subr.mxu0 0.0
    %2753 = vmatpush1.msra.mxu0 0.0
    %2754 = vmatprep.subr.mxu0 0.0
    %2755 = vmatpush1.msra.mxu0 0.0
    %2756 = vmatprep.subr.mxu0 0.0
    %2757 = vmatpush1.msra.mxu0 0.0
    %2758 = vmatprep.subr.mxu0 0.0
    %2759 = vmatpush1.msra.mxu0 0.0
    %2760 = vmatprep.subr.mxu0 0.0
    %2761 = vmatpush1.msra.mxu0 0.0
    %2762 = vmatprep.subr.mxu0 0.0
    %2763 = vmatpush1.msra.mxu0 0.0
    %2764 = vmatprep.subr.mxu0 0.0
    %2765 = vmatpush1.msra.mxu0 0.0
    %2766 = vmatprep.subr.mxu0 0.0
    %2767 = vmatpush1.msra.mxu0 0.0
    %2768 = vmatprep.subr.mxu0 0.0
    %2769 = vmatpush1.msra.mxu0 0.0
    %2770 = vmatprep.subr.mxu0 0.0
    %2771 = vmatpush1.msra.mxu0 0.0
    %2772 = vmatprep.mubr.f32.mxu0 0.0
    %2773 = vmatmul.mubr.f32.gmra.mrb[0].mxu0 %v2631
    %v2774 = vpop.f32.mrb[0].mxu0
    %v2775 = vadd.f32 0.0, %v2774
    %v2776 = vpop.f32.mrb[0].mxu0
    %v2777 = vadd.f32 0.0, %v2776
    %2778 = vmatprep.mubr.f32.mxu0 0.0
    %2779 = vmatmul.mubr.f32.gmra.mrb[0].mxu0 %v2634
    %v2780 = vpop.f32.mrb[0].mxu0
    %v2781 = vadd.f32 0.0, %v2780
    %v2782 = vpop.f32.mrb[0].mxu0
    %v2783 = vadd.f32 0.0, %v2782
    %2784 = vmatprep.mubr.f32.mxu0 0.0
    %2785 = vmatmul.mubr.f32.gmra.mrb[0].mxu0 %v2637
    %v2786 = vpop.f32.mrb[0].mxu0
    %v2787 = vadd.f32 0.0, %v2786
    %v2788 = vpop.f32.mrb[0].mxu0
    %v2789 = vadd.f32 0.0, %v2788
    %2790 = vmatprep.mubr.f32.mxu0 0.0
    %2791 = vmatmul.mubr.f32.gmra.mrb[0].mxu0 %v2640
    %v2792 = vpop.f32.mrb[0].mxu0
    %v2793 = vadd.f32 0.0, %v2792
    %v2794 = vpop.f32.mrb[0].mxu0
    %v2795 = vadd.f32 0.0, %v2794
    %2796 = vmatprep.mubr.f32.mxu0 0.0
    %2797 = vmatmul.mubr.f32.gmra.mrb[0].mxu0 %v2643
    %v2798 = vpop.f32.mrb[0].mxu0
    %v2799 = vadd.f32 0.0, %v2798
    %v2800 = vpop.f32.mrb[0].mxu0
    %v2801 = vadd.f32 0.0, %v2800
    %2802 = vmatprep.mubr.f32.mxu0 0.0
    %2803 = vmatmul.mubr.f32.gmra.mrb[0].mxu0 %v2646
    %v2804 = vpop.f32.mrb[0].mxu0
    %v2805 = vadd.f32 0.0, %v2804
    %v2806 = vpop.f32.mrb[0].mxu0
    %v2807 = vadd.f32 0.0, %v2806
    %2808 = vmatprep.mubr.f32.mxu0 0.0
    %2809 = vmatmul.mubr.f32.gmra.mrb[0].mxu0 %v2649
    %v2810 = vpop.f32.mrb[0].mxu0
    %v2811 = vadd.f32 0.0, %v2810
    %v2812 = vpop.f32.mrb[0].mxu0
    %v2813 = vadd.f32 0.0, %v2812
    %2814 = vmatprep.mubr.f32.mxu0 0.0
    %2815 = vmatmul.mubr.f32.gmra.mrb[0].mxu0 %v2652
    %v2816 = vpop.f32.mrb[0].mxu0
    %v2817 = vadd.f32 0.0, %v2816
    %v2818 = vpop.f32.mrb[0].mxu0
    %v2819 = vadd.f32 0.0, %v2818
    %2820 = vmatprep.mubr.f32.mxu0 0.0
    %2821 = vmatmul.mubr.f32.gmra.mrb[0].mxu0 %v2655
    %v2822 = vpop.f32.mrb[0].mxu0
    %v2823 = vadd.f32 0.0, %v2822
    %v2824 = vpop.f32.mrb[0].mxu0
    %v2825 = vadd.f32 0.0, %v2824
    %2826 = vmatprep.mubr.f32.mxu0 0.0
    %2827 = vmatmul.mubr.f32.gmra.mrb[0].mxu0 %v2658
    %v2828 = vpop.f32.mrb[0].mxu0
    %v2829 = vadd.f32 0.0, %v2828
    %v2830 = vpop.f32.mrb[0].mxu0
    %v2831 = vadd.f32 0.0, %v2830
    %2832 = vmatprep.mubr.f32.mxu0 0.0
    %2833 = vmatmul.mubr.f32.gmra.mrb[0].mxu0 %v2661
    %v2834 = vpop.f32.mrb[0].mxu0
    %v2835 = vadd.f32 0.0, %v2834
    %v2836 = vpop.f32.mrb[0].mxu0
    %v2837 = vadd.f32 0.0, %v2836
    %2838 = vmatprep.mubr.f32.mxu0 0.0
    %2839 = vmatmul.mubr.f32.gmra.mrb[0].mxu0 %v2664
    %v2840 = vpop.f32.mrb[0].mxu0
    %v2841 = vadd.f32 0.0, %v2840
    %v2842 = vpop.f32.mrb[0].mxu0
    %v2843 = vadd.f32 0.0, %v2842
    %2844 = vmatprep.mubr.f32.mxu0 0.0
    %2845 = vmatmul.mubr.f32.gmra.mrb[0].mxu0 %v2667
    %v2846 = vpop.f32.mrb[0].mxu0
    %v2847 = vadd.f32 0.0, %v2846
    %v2848 = vpop.f32.mrb[0].mxu0
    %v2849 = vadd.f32 0.0, %v2848
    %2850 = vmatprep.mubr.f32.mxu0 0.0
    %2851 = vmatmul.mubr.f32.gmra.mrb[0].mxu0 %v2670
    %v2852 = vpop.f32.mrb[0].mxu0
    %v2853 = vadd.f32 0.0, %v2852
    %v2854 = vpop.f32.mrb[0].mxu0
    %v2855 = vadd.f32 0.0, %v2854
    %2856 = vmatprep.mubr.f32.mxu0 0.0
    %2857 = vmatmul.mubr.f32.gmra.mrb[0].mxu0 %v2673
    %v2858 = vpop.f32.mrb[0].mxu0
    %v2859 = vadd.f32 0.0, %v2858
    %v2860 = vpop.f32.mrb[0].mxu0
    %v2861 = vadd.f32 0.0, %v2860
    %2862 = vmatprep.mubr.f32.mxu0 0.0
    %2863 = vmatmul.mubr.f32.gmra.mrb[0].mxu0 %v2676
    %v2864 = vpop.f32.mrb[0].mxu0
    %v2865 = vadd.f32 0.0, %v2864
    %v2866 = vpop.f32.mrb[0].mxu0
    %v2867 = vadd.f32 0.0, %v2866
    %2868 = vmatprep.mubr.f32.mxu0 0.0
    %2869 = vmatmul.mubr.f32.gmra.mrb[0].mxu0 %v2679
    %v2870 = vpop.f32.mrb[0].mxu0
    %v2871 = vadd.f32 0.0, %v2870
    %v2872 = vpop.f32.mrb[0].mxu0
    %v2873 = vadd.f32 0.0, %v2872
    %2874 = vmatprep.mubr.f32.mxu0 0.0
    %2875 = vmatmul.mubr.f32.gmra.mrb[0].mxu0 %v2682
    %v2876 = vpop.f32.mrb[0].mxu0
    %v2877 = vadd.f32 0.0, %v2876
    %v2878 = vpop.f32.mrb[0].mxu0
    %v2879 = vadd.f32 0.0, %v2878
    %2880 = vmatprep.mubr.f32.mxu0 0.0
    %2881 = vmatmul.mubr.f32.gmra.mrb[0].mxu0 %v2685
    %v2882 = vpop.f32.mrb[0].mxu0
    %v2883 = vadd.f32 0.0, %v2882
    %v2884 = vpop.f32.mrb[0].mxu0
    %v2885 = vadd.f32 0.0, %v2884
    %2886 = vmatprep.mubr.f32.mxu0 0.0
    %2887 = vmatmul.mubr.f32.gmra.mrb[0].mxu0 %v2688
    %v2888 = vpop.f32.mrb[0].mxu0
    %v2889 = vadd.f32 0.0, %v2888
    %v2890 = vpop.f32.mrb[0].mxu0
    %v2891 = vadd.f32 0.0, %v2890
    %2892 = vmatprep.mubr.f32.mxu0 0.0
    %2893 = vmatmul.mubr.f32.gmra.mrb[0].mxu0 %v2691
    %v2894 = vpop.f32.mrb[0].mxu0
    %v2895 = vadd.f32 0.0, %v2894
    %v2896 = vpop.f32.mrb[0].mxu0
    %v2897 = vadd.f32 0.0, %v2896
    %2898 = vmatprep.mubr.f32.mxu0 0.0
    %2899 = vmatmul.mubr.f32.gmra.mrb[0].mxu0 %v2694
    %v2900 = vpop.f32.mrb[0].mxu0
    %v2901 = vadd.f32 0.0, %v2900
    %v2902 = vpop.f32.mrb[0].mxu0
    %v2903 = vadd.f32 0.0, %v2902
    %2904 = vmatprep.mubr.f32.mxu0 0.0
    %2905 = vmatmul.mubr.f32.gmra.mrb[0].mxu0 %v2697
    %v2906 = vpop.f32.mrb[0].mxu0
    %v2907 = vadd.f32 0.0, %v2906
    %v2908 = vpop.f32.mrb[0].mxu0
    %v2909 = vadd.f32 0.0, %v2908
    %2910 = vmatprep.mubr.f32.mxu0 0.0
    %2911 = vmatmul.mubr.f32.gmra.mrb[0].mxu0 %v2700
    %v2912 = vpop.f32.mrb[0].mxu0
    %v2913 = vadd.f32 0.0, %v2912
    %v2914 = vpop.f32.mrb[0].mxu0
    %v2915 = vadd.f32 0.0, %v2914
    %2916 = vmatprep.mubr.f32.mxu0 0.0
    %2917 = vmatmul.mubr.f32.gmra.mrb[0].mxu0 %v2703
    %v2918 = vpop.f32.mrb[0].mxu0
    %v2919 = vadd.f32 0.0, %v2918
    %v2920 = vpop.f32.mrb[0].mxu0
    %v2921 = vadd.f32 0.0, %v2920
    %2922 = vmatprep.mubr.f32.mxu0 0.0
    %2923 = vmatmul.mubr.f32.gmra.mrb[0].mxu0 %v2706
    %v2924 = vpop.f32.mrb[0].mxu0
    %v2925 = vadd.f32 0.0, %v2924
    %v2926 = vpop.f32.mrb[0].mxu0
    %v2927 = vadd.f32 0.0, %v2926
    %2928 = vdwg.mxu0
    %v2929 = vmul.f32 %v1049, %v2281
    %v2930 = vmul.f32 %v1050, %v2283
    %v2931 = vmul.f32 %v1051, %v2287
    %v2932 = vmul.f32 %v1052, %v2289
    %v2933 = vmul.f32 %v1053, %v2293
    %v2934 = vmul.f32 %v1054, %v2295
    %v2935 = vmul.f32 %v1055, %v2299
    %v2936 = vmul.f32 %v1056, %v2301
    %v2937 = vmul.f32 %v1057, %v2305
    %v2938 = vmul.f32 %v1058, %v2307
    %v2939 = vmul.f32 %v1059, %v2311
    %v2940 = vmul.f32 %v1060, %v2313
    %v2941 = vmul.f32 %v1061, %v2317
    %v2942 = vmul.f32 %v1062, %v2319
    %v2943 = vmul.f32 %v1063, %v2323
    %v2944 = vmul.f32 %v1064, %v2325
    %v2945 = vmul.f32 %v1065, %v2329
    %v2946 = vmul.f32 %v1066, %v2331
    %v2947 = vmul.f32 %v1067, %v2335
    %v2948 = vmul.f32 %v1068, %v2337
    %v2949 = vmul.f32 %v1069, %v2341
    %v2950 = vmul.f32 %v1070, %v2343
    %v2951 = vmul.f32 %v1071, %v2347
    %v2952 = vmul.f32 %v1072, %v2349
    %v2953 = vmul.f32 %v1073, %v2353
    %v2954 = vmul.f32 %v1074, %v2355
    %v2955 = vmul.f32 %v1075, %v2359
    %v2956 = vmul.f32 %v1076, %v2361
    %v2957 = vmul.f32 %v1077, %v2365
    %v2958 = vmul.f32 %v1078, %v2367
    %v2959 = vmul.f32 %v1079, %v2371
    %v2960 = vmul.f32 %v1080, %v2373
    %v2961 = vmul.f32 %v1081, %v2377
    %v2962 = vmul.f32 %v1082, %v2379
    %v2963 = vmul.f32 %v1083, %v2383
    %v2964 = vmul.f32 %v1084, %v2385
    %v2965 = vmul.f32 %v1085, %v2389
    %v2966 = vmul.f32 %v1086, %v2391
    %v2967 = vmul.f32 %v1087, %v2395
    %v2968 = vmul.f32 %v1088, %v2397
    %v2969 = vmul.f32 %v1089, %v2401
    %v2970 = vmul.f32 %v1090, %v2403
    %v2971 = vmul.f32 %v1091, %v2407
    %v2972 = vmul.f32 %v1092, %v2409
    %v2973 = vmul.f32 %v1093, %v2413
    %v2974 = vmul.f32 %v1094, %v2415
    %v2975 = vmul.f32 %v1095, %v2419
    %v2976 = vmul.f32 %v1096, %v2421
    %v2977 = vmul.f32 %v1097, %v2425
    %v2978 = vmul.f32 %v1098, %v2427
    %v2979 = vmul.f32 %v1099, %v2431
    %v2980 = vmul.f32 %v1100, %v2433
    %v2981 = vadd.f32 %v2929, %v2775
    %v2982 = vadd.f32 %v2930, %v2777
    %v2983 = vadd.f32 %v2931, %v2781
    %v2984 = vadd.f32 %v2932, %v2783
    %v2985 = vadd.f32 %v2933, %v2787
    %v2986 = vadd.f32 %v2934, %v2789
    %v2987 = vadd.f32 %v2935, %v2793
    %v2988 = vadd.f32 %v2936, %v2795
    %v2989 = vadd.f32 %v2937, %v2799
    %v2990 = vadd.f32 %v2938, %v2801
    %v2991 = vadd.f32 %v2939, %v2805
    %v2992 = vadd.f32 %v2940, %v2807
    %v2993 = vadd.f32 %v2941, %v2811
    %v2994 = vadd.f32 %v2942, %v2813
    %v2995 = vadd.f32 %v2943, %v2817
    %v2996 = vadd.f32 %v2944, %v2819
    %v2997 = vadd.f32 %v2945, %v2823
    %v2998 = vadd.f32 %v2946, %v2825
    %v2999 = vadd.f32 %v2947, %v2829
    %v3000 = vadd.f32 %v2948, %v2831
    %v3001 = vadd.f32 %v2949, %v2835
    %v3002 = vadd.f32 %v2950, %v2837
    %v3003 = vadd.f32 %v2951, %v2841
    %v3004 = vadd.f32 %v2952, %v2843
    %v3005 = vadd.f32 %v2953, %v2847
    %v3006 = vadd.f32 %v2954, %v2849
    %v3007 = vadd.f32 %v2955, %v2853
    %v3008 = vadd.f32 %v2956, %v2855
    %v3009 = vadd.f32 %v2957, %v2859
    %v3010 = vadd.f32 %v2958, %v2861
    %v3011 = vadd.f32 %v2959, %v2865
    %v3012 = vadd.f32 %v2960, %v2867
    %v3013 = vadd.f32 %v2961, %v2871
    %v3014 = vadd.f32 %v2962, %v2873
    %v3015 = vadd.f32 %v2963, %v2877
    %v3016 = vadd.f32 %v2964, %v2879
    %v3017 = vadd.f32 %v2965, %v2883
    %v3018 = vadd.f32 %v2966, %v2885
    %v3019 = vadd.f32 %v2967, %v2889
    %v3020 = vadd.f32 %v2968, %v2891
    %v3021 = vadd.f32 %v2969, %v2895
    %v3022 = vadd.f32 %v2970, %v2897
    %v3023 = vadd.f32 %v2971, %v2901
    %v3024 = vadd.f32 %v2972, %v2903
    %v3025 = vadd.f32 %v2973, %v2907
    %v3026 = vadd.f32 %v2974, %v2909
    %v3027 = vadd.f32 %v2975, %v2913
    %v3028 = vadd.f32 %v2976, %v2915
    %v3029 = vadd.f32 %v2977, %v2919
    %v3030 = vadd.f32 %v2978, %v2921
    %v3031 = vadd.f32 %v2979, %v2925
    %v3032 = vadd.f32 %v2980, %v2927
    %v3033 = vmax.f32 %v2981, 0.0
    %v3034 = vmax.f32 %v2982, 0.0
    %v3035 = vmax.f32 %v2983, 0.0
    %v3036 = vmax.f32 %v2984, 0.0
    %v3037 = vmax.f32 %v2985, 0.0
    %v3038 = vmax.f32 %v2986, 0.0
    %v3039 = vmax.f32 %v2987, 0.0
    %v3040 = vmax.f32 %v2988, 0.0
    %v3041 = vmax.f32 %v2989, 0.0
    %v3042 = vmax.f32 %v2990, 0.0
    %v3043 = vmax.f32 %v2991, 0.0
    %v3044 = vmax.f32 %v2992, 0.0
    %v3045 = vmax.f32 %v2993, 0.0
    %v3046 = vmax.f32 %v2994, 0.0
    %v3047 = vmax.f32 %v2995, 0.0
    %v3048 = vmax.f32 %v2996, 0.0
    %v3049 = vmax.f32 %v2997, 0.0
    %v3050 = vmax.f32 %v2998, 0.0
    %v3051 = vmax.f32 %v2999, 0.0
    %v3052 = vmax.f32 %v3000, 0.0
    %v3053 = vmax.f32 %v3001, 0.0
    %v3054 = vmax.f32 %v3002, 0.0
    %v3055 = vmax.f32 %v3003, 0.0
    %v3056 = vmax.f32 %v3004, 0.0
    %v3057 = vmax.f32 %v3005, 0.0
    %v3058 = vmax.f32 %v3006, 0.0
    %v3059 = vmax.f32 %v3007, 0.0
    %v3060 = vmax.f32 %v3008, 0.0
    %v3061 = vmax.f32 %v3009, 0.0
    %v3062 = vmax.f32 %v3010, 0.0
    %v3063 = vmax.f32 %v3011, 0.0
    %v3064 = vmax.f32 %v3012, 0.0
    %v3065 = vmax.f32 %v3013, 0.0
    %v3066 = vmax.f32 %v3014, 0.0
    %v3067 = vmax.f32 %v3015, 0.0
    %v3068 = vmax.f32 %v3016, 0.0
    %v3069 = vmax.f32 %v3017, 0.0
    %v3070 = vmax.f32 %v3018, 0.0
    %v3071 = vmax.f32 %v3019, 0.0
    %v3072 = vmax.f32 %v3020, 0.0
    %v3073 = vmax.f32 %v3021, 0.0
    %v3074 = vmax.f32 %v3022, 0.0
    %v3075 = vmax.f32 %v3023, 0.0
    %v3076 = vmax.f32 %v3024, 0.0
    %v3077 = vmax.f32 %v3025, 0.0
    %v3078 = vmax.f32 %v3026, 0.0
    %v3079 = vmax.f32 %v3027, 0.0
    %v3080 = vmax.f32 %v3028, 0.0
    %v3081 = vmax.f32 %v3029, 0.0
    %v3082 = vmax.f32 %v3030, 0.0
    %v3083 = vmax.f32 %v3031, 0.0
    %v3084 = vmax.f32 %v3032, 0.0
    %v3085 = vpack.c.bf16 %v3035, %v3033
    %v3086 = vpack.c.bf16 %v3036, %v3034
    %v3087 = vpack.c.bf16 %v3039, %v3037
    %v3088 = vpack.c.bf16 %v3040, %v3038
    %v3089 = vpack.c.bf16 %v3043, %v3041
    %v3090 = vpack.c.bf16 %v3044, %v3042
    %v3091 = vpack.c.bf16 %v3047, %v3045
    %v3092 = vpack.c.bf16 %v3048, %v3046
    %v3093 = vpack.c.bf16 %v3051, %v3049
    %v3094 = vpack.c.bf16 %v3052, %v3050
    %v3095 = vpack.c.bf16 %v3055, %v3053
    %v3096 = vpack.c.bf16 %v3056, %v3054
    %v3097 = vpack.c.bf16 %v3059, %v3057
    %v3098 = vpack.c.bf16 %v3060, %v3058
    %v3099 = vpack.c.bf16 %v3063, %v3061
    %v3100 = vpack.c.bf16 %v3064, %v3062
    %v3101 = vpack.c.bf16 %v3067, %v3065
    %v3102 = vpack.c.bf16 %v3068, %v3066
    %v3103 = vpack.c.bf16 %v3071, %v3069
    %v3104 = vpack.c.bf16 %v3072, %v3070
    %v3105 = vpack.c.bf16 %v3075, %v3073
    %v3106 = vpack.c.bf16 %v3076, %v3074
    %v3107 = vpack.c.bf16 %v3079, %v3077
    %v3108 = vpack.c.bf16 %v3080, %v3078
    %v3109 = vpack.c.bf16 %v3083, %v3081
    %v3110 = vpack.c.bf16 %v3084, %v3082
    %v3111 = vld [vmem:[%s7] sm:$0xf]
    %v3112 = vld [vmem:[%s7 + $0x4] sm:$0xf]
    %v3113 = vld [vmem:[%s7 + $0x8] sm:$0xf]
    %v3114 = vld [vmem:[%s7 + $0xc] sm:$0xf]
    %v3115 = vld [vmem:[%s7 + $0x10] sm:$0xf]
    %v3116 = vld [vmem:[%s7 + $0x14] sm:$0xf]
    %v3117 = vld [vmem:[%s7 + $0x18] sm:$0xf]
    %v3118 = vld [vmem:[%s7 + $0x1c] sm:$0xf]
    %v3119 = vld [vmem:[%s7 + $0x20] sm:$0xf]
    %v3120 = vld [vmem:[%s7 + $0x24] sm:$0xf]
    %v3121 = vld [vmem:[%s7 + $0x28] sm:$0xf]
    %v3122 = vld [vmem:[%s7 + $0x2c] sm:$0xf]
    %v3123 = vld [vmem:[%s7 + $0x30] sm:$0xf]
    %v3124 = vld [vmem:[%s7 + $0x34] sm:$0xf]
    %v3125 = vld [vmem:[%s7 + $0x38] sm:$0xf]
    %v3126 = vld [vmem:[%s7 + $0x3c] sm:$0xf]
    %v3127 = vld [vmem:[%s7 + $0x40] sm:$0xf]
    %v3128 = vld [vmem:[%s7 + $0x44] sm:$0xf]
    %v3129 = vld [vmem:[%s7 + $0x48] sm:$0xf]
    %v3130 = vld [vmem:[%s7 + $0x4c] sm:$0xf]
    %v3131 = vld [vmem:[%s7 + $0x50] sm:$0xf]
    %v3132 = vld [vmem:[%s7 + $0x54] sm:$0xf]
    %v3133 = vld [vmem:[%s7 + $0x58] sm:$0xf]
    %v3134 = vld [vmem:[%s7 + $0x5c] sm:$0xf]
    %v3159 = vunpack.c.l.b16 %v3111
    %v3160 = vunpack.c.l.b16 %v3112
    %v3161 = vunpack.c.l.b16 %v3113
    %v3162 = vunpack.c.l.b16 %v3114
    %v3163 = vunpack.c.l.b16 %v3115
    %v3164 = vunpack.c.l.b16 %v3116
    %v3165 = vunpack.c.l.b16 %v3117
    %v3166 = vunpack.c.l.b16 %v3118
    %v3167 = vunpack.c.l.b16 %v3119
    %v3168 = vunpack.c.l.b16 %v3120
    %v3169 = vunpack.c.l.b16 %v3121
    %v3170 = vunpack.c.l.b16 %v3122
    %v3171 = vunpack.c.l.b16 %v3123
    %v3172 = vunpack.c.l.b16 %v3124
    %v3173 = vunpack.c.l.b16 %v3125
    %v3174 = vunpack.c.l.b16 %v3126
    %v3175 = vunpack.c.l.b16 %v3127
    %v3176 = vunpack.c.l.b16 %v3128
    %v3177 = vunpack.c.l.b16 %v3129
    %v3178 = vunpack.c.l.b16 %v3130
    %v3179 = vunpack.c.l.b16 %v3131
    %v3180 = vunpack.c.l.b16 %v3132
    %v3181 = vunpack.c.l.b16 %v3133
    %v3182 = vunpack.c.l.b16 %v3134
    %v3183 = vpack.c.b16 %v3160, %v3159
    %v3184 = vpack.c.b16 %v3162, %v3161
    %v3185 = vpack.c.b16 %v3164, %v3163
    %v3186 = vpack.c.b16 %v3166, %v3165
    %v3187 = vpack.c.b16 %v3168, %v3167
    %v3188 = vpack.c.b16 %v3170, %v3169
    %v3189 = vpack.c.b16 %v3172, %v3171
    %v3190 = vpack.c.b16 %v3174, %v3173
    %v3191 = vpack.c.b16 %v3176, %v3175
    %v3192 = vpack.c.b16 %v3178, %v3177
    %v3193 = vpack.c.b16 %v3180, %v3179
    %v3194 = vpack.c.b16 %v3182, %v3181
    %v3208 = vsel %vm1101, %v3086, 0
    %v3211 = vsel %vm1101, %v3088, 0
    %v3214 = vsel %vm1101, %v3090, 0
    %v3217 = vsel %vm1101, %v3092, 0
    %v3220 = vsel %vm1101, %v3094, 0
    %v3223 = vsel %vm1101, %v3096, 0
    %v3226 = vsel %vm1101, %v3098, 0
    %v3229 = vsel %vm1101, %v3100, 0
    %v3232 = vsel %vm1101, %v3102, 0
    %v3235 = vsel %vm1101, %v3104, 0
    %v3238 = vsel %vm1101, %v3106, 0
    %v3241 = vsel %vm1101, %v3108, 0
    %v3244 = vsel %vm1101, %v3110, 0
    %3246 = vmatprep.subr.bf16.mxu0 0
    %3247 = vmatpush1.bf16.msra.mxu0 %v3183
    %3248 = vmatprep.subr.bf16.mxu0 0
    %3249 = vmatpush1.bf16.msra.mxu0 %v3184
    %3250 = vmatprep.subr.bf16.mxu0 0
    %3251 = vmatpush1.bf16.msra.mxu0 %v3185
    %3252 = vmatprep.subr.bf16.mxu0 0
    %3253 = vmatpush1.bf16.msra.mxu0 %v3186
    %3254 = vmatprep.subr.bf16.mxu0 0
    %3255 = vmatpush1.bf16.msra.mxu0 %v3187
    %3256 = vmatprep.subr.bf16.mxu0 0
    %3257 = vmatpush1.bf16.msra.mxu0 %v3188
    %3258 = vmatprep.subr.bf16.mxu0 0
    %3259 = vmatpush1.bf16.msra.mxu0 %v3189
    %3260 = vmatprep.subr.bf16.mxu0 0
    %3261 = vmatpush1.bf16.msra.mxu0 %v3190
    %3262 = vmatprep.subr.bf16.mxu0 0
    %3263 = vmatpush1.bf16.msra.mxu0 %v3191
    %3264 = vmatprep.subr.bf16.mxu0 0
    %3265 = vmatpush1.bf16.msra.mxu0 %v3192
    %3266 = vmatprep.subr.bf16.mxu0 0
    %3267 = vmatpush1.bf16.msra.mxu0 %v3193
    %3268 = vmatprep.subr.bf16.mxu0 0
    %3269 = vmatpush1.bf16.msra.mxu0 %v3194
    %3270 = vmatprep.subr.bf16.mxu0 0
    %3271 = vmatpush1.bf16.msra.mxu0 0
    %3272 = vmatprep.subr.bf16.mxu0 0
    %3273 = vmatpush1.bf16.msra.mxu0 0
    %3274 = vmatprep.subr.bf16.mxu0 0
    %3275 = vmatpush1.bf16.msra.mxu0 0
    %3276 = vmatprep.subr.bf16.mxu0 0
    %3277 = vmatpush1.bf16.msra.mxu0 0
    %3278 = vmatprep.mubr.bf16.mxu0 %v3208
    %3279 = vmatmul.mubr.bf16.gmra.mrb[0].mxu0 %v3085
    %v3280 = vpop.f32.mrb[0].mxu0
    %v3281 = vadd.f32 0.0, %v3280
    %v3282 = vpop.f32.mrb[0].mxu0
    %v3283 = vpop.f32.mrb[0].mxu0
    %v3284 = vadd.f32 0.0, %v3283
    %v3285 = vpop.f32.mrb[0].mxu0
    %3286 = vmatprep.mubr.bf16.mxu0 %v3211
    %3287 = vmatmul.mubr.bf16.gmra.mrb[0].mxu0 %v3087
    %v3288 = vpop.f32.mrb[0].mxu0
    %v3289 = vadd.f32 0.0, %v3288
    %v3290 = vpop.f32.mrb[0].mxu0
    %v3291 = vpop.f32.mrb[0].mxu0
    %v3292 = vadd.f32 0.0, %v3291
    %v3293 = vpop.f32.mrb[0].mxu0
    %3294 = vmatprep.mubr.bf16.mxu0 %v3214
    %3295 = vmatmul.mubr.bf16.gmra.mrb[0].mxu0 %v3089
    %v3296 = vpop.f32.mrb[0].mxu0
    %v3297 = vadd.f32 0.0, %v3296
    %v3298 = vpop.f32.mrb[0].mxu0
    %v3299 = vpop.f32.mrb[0].mxu0
    %v3300 = vadd.f32 0.0, %v3299
    %v3301 = vpop.f32.mrb[0].mxu0
    %3302 = vmatprep.mubr.bf16.mxu0 %v3217
    %3303 = vmatmul.mubr.bf16.gmra.mrb[0].mxu0 %v3091
    %v3304 = vpop.f32.mrb[0].mxu0
    %v3305 = vadd.f32 0.0, %v3304
    %v3306 = vpop.f32.mrb[0].mxu0
    %v3307 = vpop.f32.mrb[0].mxu0
    %v3308 = vadd.f32 0.0, %v3307
    %v3309 = vpop.f32.mrb[0].mxu0
    %3310 = vmatprep.mubr.bf16.mxu0 %v3220
    %3311 = vmatmul.mubr.bf16.gmra.mrb[0].mxu0 %v3093
    %v3312 = vpop.f32.mrb[0].mxu0
    %v3313 = vadd.f32 0.0, %v3312
    %v3314 = vpop.f32.mrb[0].mxu0
    %v3315 = vpop.f32.mrb[0].mxu0
    %v3316 = vadd.f32 0.0, %v3315
    %v3317 = vpop.f32.mrb[0].mxu0
    %3318 = vmatprep.mubr.bf16.mxu0 %v3223
    %3319 = vmatmul.mubr.bf16.gmra.mrb[0].mxu0 %v3095
    %v3320 = vpop.f32.mrb[0].mxu0
    %v3321 = vadd.f32 0.0, %v3320
    %v3322 = vpop.f32.mrb[0].mxu0
    %v3323 = vpop.f32.mrb[0].mxu0
    %v3324 = vadd.f32 0.0, %v3323
    %v3325 = vpop.f32.mrb[0].mxu0
    %3326 = vmatprep.mubr.bf16.mxu0 %v3226
    %3327 = vmatmul.mubr.bf16.gmra.mrb[0].mxu0 %v3097
    %v3328 = vpop.f32.mrb[0].mxu0
    %v3329 = vadd.f32 0.0, %v3328
    %v3330 = vpop.f32.mrb[0].mxu0
    %v3331 = vpop.f32.mrb[0].mxu0
    %v3332 = vadd.f32 0.0, %v3331
    %v3333 = vpop.f32.mrb[0].mxu0
    %3334 = vmatprep.mubr.bf16.mxu0 %v3229
    %3335 = vmatmul.mubr.bf16.gmra.mrb[0].mxu0 %v3099
    %v3336 = vpop.f32.mrb[0].mxu0
    %v3337 = vadd.f32 0.0, %v3336
    %v3338 = vpop.f32.mrb[0].mxu0
    %v3339 = vpop.f32.mrb[0].mxu0
    %v3340 = vadd.f32 0.0, %v3339
    %v3341 = vpop.f32.mrb[0].mxu0
    %3342 = vmatprep.mubr.bf16.mxu0 %v3232
    %3343 = vmatmul.mubr.bf16.gmra.mrb[0].mxu0 %v3101
    %v3344 = vpop.f32.mrb[0].mxu0
    %v3345 = vadd.f32 0.0, %v3344
    %v3346 = vpop.f32.mrb[0].mxu0
    %v3347 = vpop.f32.mrb[0].mxu0
    %v3348 = vadd.f32 0.0, %v3347
    %v3349 = vpop.f32.mrb[0].mxu0
    %3350 = vmatprep.mubr.bf16.mxu0 %v3235
    %3351 = vmatmul.mubr.bf16.gmra.mrb[0].mxu0 %v3103
    %v3352 = vpop.f32.mrb[0].mxu0
    %v3353 = vadd.f32 0.0, %v3352
    %v3354 = vpop.f32.mrb[0].mxu0
    %v3355 = vpop.f32.mrb[0].mxu0
    %v3356 = vadd.f32 0.0, %v3355
    %v3357 = vpop.f32.mrb[0].mxu0
    %3358 = vmatprep.mubr.bf16.mxu0 %v3238
    %3359 = vmatmul.mubr.bf16.gmra.mrb[0].mxu0 %v3105
    %v3360 = vpop.f32.mrb[0].mxu0
    %v3361 = vadd.f32 0.0, %v3360
    %v3362 = vpop.f32.mrb[0].mxu0
    %v3363 = vpop.f32.mrb[0].mxu0
    %v3364 = vadd.f32 0.0, %v3363
    %v3365 = vpop.f32.mrb[0].mxu0
    %3366 = vmatprep.mubr.bf16.mxu0 %v3241
    %3367 = vmatmul.mubr.bf16.gmra.mrb[0].mxu0 %v3107
    %v3368 = vpop.f32.mrb[0].mxu0
    %v3369 = vadd.f32 0.0, %v3368
    %v3370 = vpop.f32.mrb[0].mxu0
    %v3371 = vpop.f32.mrb[0].mxu0
    %v3372 = vadd.f32 0.0, %v3371
    %v3373 = vpop.f32.mrb[0].mxu0
    %3374 = vmatprep.mubr.bf16.mxu0 %v3244
    %3375 = vmatmul.mubr.bf16.gmra.mrb[0].mxu0 %v3109
    %v3376 = vpop.f32.mrb[0].mxu0
    %v3377 = vadd.f32 0.0, %v3376
    %v3378 = vpop.f32.mrb[0].mxu0
    %v3379 = vpop.f32.mrb[0].mxu0
    %v3380 = vadd.f32 0.0, %v3379
    %v3381 = vpop.f32.mrb[0].mxu0
    %3382 = vdwg.mxu0
    %s3383 = scalar_lea.vmem %s7, 96
    %v3384 = vld [vmem:[%s3383] sm:$0xf]
    %v3385 = vld [vmem:[%s3383 + $0x4] sm:$0xf]
    %v3386 = vld [vmem:[%s3383 + $0x8] sm:$0xf]
    %v3387 = vld [vmem:[%s3383 + $0xc] sm:$0xf]
    %v3388 = vld [vmem:[%s3383 + $0x10] sm:$0xf]
    %v3389 = vld [vmem:[%s3383 + $0x14] sm:$0xf]
    %v3390 = vld [vmem:[%s3383 + $0x18] sm:$0xf]
    %v3391 = vld [vmem:[%s3383 + $0x1c] sm:$0xf]
    %v3392 = vld [vmem:[%s3383 + $0x20] sm:$0xf]
    %v3393 = vld [vmem:[%s3383 + $0x24] sm:$0xf]
    %v3394 = vld [vmem:[%s3383 + $0x28] sm:$0xf]
    %v3395 = vld [vmem:[%s3383 + $0x2c] sm:$0xf]
    %v3396 = vld [vmem:[%s3383 + $0x30] sm:$0xf]
    %v3397 = vld [vmem:[%s3383 + $0x34] sm:$0xf]
    %v3398 = vld [vmem:[%s3383 + $0x38] sm:$0xf]
    %v3399 = vld [vmem:[%s3383 + $0x3c] sm:$0xf]
    %v3400 = vld [vmem:[%s3383 + $0x40] sm:$0xf]
    %v3401 = vld [vmem:[%s3383 + $0x44] sm:$0xf]
    %v3402 = vld [vmem:[%s3383 + $0x48] sm:$0xf]
    %v3403 = vld [vmem:[%s3383 + $0x4c] sm:$0xf]
    %v3404 = vld [vmem:[%s3383 + $0x50] sm:$0xf]
    %v3405 = vld [vmem:[%s3383 + $0x54] sm:$0xf]
    %v3406 = vld [vmem:[%s3383 + $0x58] sm:$0xf]
    %v3407 = vld [vmem:[%s3383 + $0x5c] sm:$0xf]
    %v3432 = vunpack.c.l.b16 %v3384
    %v3433 = vunpack.c.l.b16 %v3385
    %v3434 = vunpack.c.l.b16 %v3386
    %v3435 = vunpack.c.l.b16 %v3387
    %v3436 = vunpack.c.l.b16 %v3388
    %v3437 = vunpack.c.l.b16 %v3389
    %v3438 = vunpack.c.l.b16 %v3390
    %v3439 = vunpack.c.l.b16 %v3391
    %v3440 = vunpack.c.l.b16 %v3392
    %v3441 = vunpack.c.l.b16 %v3393
    %v3442 = vunpack.c.l.b16 %v3394
    %v3443 = vunpack.c.l.b16 %v3395
    %v3444 = vunpack.c.l.b16 %v3396
    %v3445 = vunpack.c.l.b16 %v3397
    %v3446 = vunpack.c.l.b16 %v3398
    %v3447 = vunpack.c.l.b16 %v3399
    %v3448 = vunpack.c.l.b16 %v3400
    %v3449 = vunpack.c.l.b16 %v3401
    %v3450 = vunpack.c.l.b16 %v3402
    %v3451 = vunpack.c.l.b16 %v3403
    %v3452 = vunpack.c.l.b16 %v3404
    %v3453 = vunpack.c.l.b16 %v3405
    %v3454 = vunpack.c.l.b16 %v3406
    %v3455 = vunpack.c.l.b16 %v3407
    %v3456 = vpack.c.b16 %v3433, %v3432
    %v3457 = vpack.c.b16 %v3435, %v3434
    %v3458 = vpack.c.b16 %v3437, %v3436
    %v3459 = vpack.c.b16 %v3439, %v3438
    %v3460 = vpack.c.b16 %v3441, %v3440
    %v3461 = vpack.c.b16 %v3443, %v3442
    %v3462 = vpack.c.b16 %v3445, %v3444
    %v3463 = vpack.c.b16 %v3447, %v3446
    %v3464 = vpack.c.b16 %v3449, %v3448
    %v3465 = vpack.c.b16 %v3451, %v3450
    %v3466 = vpack.c.b16 %v3453, %v3452
    %v3467 = vpack.c.b16 %v3455, %v3454
    %3480 = vmatprep.subr.bf16.mxu0 0
    %3481 = vmatpush1.bf16.msra.mxu0 %v3456
    %3482 = vmatprep.subr.bf16.mxu0 0
    %3483 = vmatpush1.bf16.msra.mxu0 %v3457
    %3484 = vmatprep.subr.bf16.mxu0 0
    %3485 = vmatpush1.bf16.msra.mxu0 %v3458
    %3486 = vmatprep.subr.bf16.mxu0 0
    %3487 = vmatpush1.bf16.msra.mxu0 %v3459
    %3488 = vmatprep.subr.bf16.mxu0 0
    %3489 = vmatpush1.bf16.msra.mxu0 %v3460
    %3490 = vmatprep.subr.bf16.mxu0 0
    %3491 = vmatpush1.bf16.msra.mxu0 %v3461
    %3492 = vmatprep.subr.bf16.mxu0 0
    %3493 = vmatpush1.bf16.msra.mxu0 %v3462
    %3494 = vmatprep.subr.bf16.mxu0 0
    %3495 = vmatpush1.bf16.msra.mxu0 %v3463
    %3496 = vmatprep.subr.bf16.mxu0 0
    %3497 = vmatpush1.bf16.msra.mxu0 %v3464
    %3498 = vmatprep.subr.bf16.mxu0 0
    %3499 = vmatpush1.bf16.msra.mxu0 %v3465
    %3500 = vmatprep.subr.bf16.mxu0 0
    %3501 = vmatpush1.bf16.msra.mxu0 %v3466
    %3502 = vmatprep.subr.bf16.mxu0 0
    %3503 = vmatpush1.bf16.msra.mxu0 %v3467
    %3504 = vmatprep.subr.bf16.mxu0 0
    %3505 = vmatpush1.bf16.msra.mxu0 0
    %3506 = vmatprep.subr.bf16.mxu0 0
    %3507 = vmatpush1.bf16.msra.mxu0 0
    %3508 = vmatprep.subr.bf16.mxu0 0
    %3509 = vmatpush1.bf16.msra.mxu0 0
    %3510 = vmatprep.subr.bf16.mxu0 0
    %3511 = vmatpush1.bf16.msra.mxu0 0
    %3512 = vmatprep.mubr.bf16.mxu0 %v3208
    %3513 = vmatmul.mubr.bf16.gmra.mrb[0].mxu0 %v3085
    %v3514 = vpop.f32.mrb[0].mxu0
    %v3515 = vadd.f32 0.0, %v3514
    %v3516 = vpop.f32.mrb[0].mxu0
    %v3517 = vpop.f32.mrb[0].mxu0
    %v3518 = vadd.f32 0.0, %v3517
    %v3519 = vpop.f32.mrb[0].mxu0
    %3520 = vmatprep.mubr.bf16.mxu0 %v3211
    %3521 = vmatmul.mubr.bf16.gmra.mrb[0].mxu0 %v3087
    %v3522 = vpop.f32.mrb[0].mxu0
    %v3523 = vadd.f32 0.0, %v3522
    %v3524 = vpop.f32.mrb[0].mxu0
    %v3525 = vpop.f32.mrb[0].mxu0
    %v3526 = vadd.f32 0.0, %v3525
    %v3527 = vpop.f32.mrb[0].mxu0
    %3528 = vmatprep.mubr.bf16.mxu0 %v3214
    %3529 = vmatmul.mubr.bf16.gmra.mrb[0].mxu0 %v3089
    %v3530 = vpop.f32.mrb[0].mxu0
    %v3531 = vadd.f32 0.0, %v3530
    %v3532 = vpop.f32.mrb[0].mxu0
    %v3533 = vpop.f32.mrb[0].mxu0
    %v3534 = vadd.f32 0.0, %v3533
    %v3535 = vpop.f32.mrb[0].mxu0
    %3536 = vmatprep.mubr.bf16.mxu0 %v3217
    %3537 = vmatmul.mubr.bf16.gmra.mrb[0].mxu0 %v3091
    %v3538 = vpop.f32.mrb[0].mxu0
    %v3539 = vadd.f32 0.0, %v3538
    %v3540 = vpop.f32.mrb[0].mxu0
    %v3541 = vpop.f32.mrb[0].mxu0
    %v3542 = vadd.f32 0.0, %v3541
    %v3543 = vpop.f32.mrb[0].mxu0
    %3544 = vmatprep.mubr.bf16.mxu0 %v3220
    %3545 = vmatmul.mubr.bf16.gmra.mrb[0].mxu0 %v3093
    %v3546 = vpop.f32.mrb[0].mxu0
    %v3547 = vadd.f32 0.0, %v3546
    %v3548 = vpop.f32.mrb[0].mxu0
    %v3549 = vpop.f32.mrb[0].mxu0
    %v3550 = vadd.f32 0.0, %v3549
    %v3551 = vpop.f32.mrb[0].mxu0
    %3552 = vmatprep.mubr.bf16.mxu0 %v3223
    %3553 = vmatmul.mubr.bf16.gmra.mrb[0].mxu0 %v3095
    %v3554 = vpop.f32.mrb[0].mxu0
    %v3555 = vadd.f32 0.0, %v3554
    %v3556 = vpop.f32.mrb[0].mxu0
    %v3557 = vpop.f32.mrb[0].mxu0
    %v3558 = vadd.f32 0.0, %v3557
    %v3559 = vpop.f32.mrb[0].mxu0
    %3560 = vmatprep.mubr.bf16.mxu0 %v3226
    %3561 = vmatmul.mubr.bf16.gmra.mrb[0].mxu0 %v3097
    %v3562 = vpop.f32.mrb[0].mxu0
    %v3563 = vadd.f32 0.0, %v3562
    %v3564 = vpop.f32.mrb[0].mxu0
    %v3565 = vpop.f32.mrb[0].mxu0
    %v3566 = vadd.f32 0.0, %v3565
    %v3567 = vpop.f32.mrb[0].mxu0
    %3568 = vmatprep.mubr.bf16.mxu0 %v3229
    %3569 = vmatmul.mubr.bf16.gmra.mrb[0].mxu0 %v3099
    %v3570 = vpop.f32.mrb[0].mxu0
    %v3571 = vadd.f32 0.0, %v3570
    %v3572 = vpop.f32.mrb[0].mxu0
    %v3573 = vpop.f32.mrb[0].mxu0
    %v3574 = vadd.f32 0.0, %v3573
    %v3575 = vpop.f32.mrb[0].mxu0
    %3576 = vmatprep.mubr.bf16.mxu0 %v3232
    %3577 = vmatmul.mubr.bf16.gmra.mrb[0].mxu0 %v3101
    %v3578 = vpop.f32.mrb[0].mxu0
    %v3579 = vadd.f32 0.0, %v3578
    %v3580 = vpop.f32.mrb[0].mxu0
    %v3581 = vpop.f32.mrb[0].mxu0
    %v3582 = vadd.f32 0.0, %v3581
    %v3583 = vpop.f32.mrb[0].mxu0
    %3584 = vmatprep.mubr.bf16.mxu0 %v3235
    %3585 = vmatmul.mubr.bf16.gmra.mrb[0].mxu0 %v3103
    %v3586 = vpop.f32.mrb[0].mxu0
    %v3587 = vadd.f32 0.0, %v3586
    %v3588 = vpop.f32.mrb[0].mxu0
    %v3589 = vpop.f32.mrb[0].mxu0
    %v3590 = vadd.f32 0.0, %v3589
    %v3591 = vpop.f32.mrb[0].mxu0
    %3592 = vmatprep.mubr.bf16.mxu0 %v3238
    %3593 = vmatmul.mubr.bf16.gmra.mrb[0].mxu0 %v3105
    %v3594 = vpop.f32.mrb[0].mxu0
    %v3595 = vadd.f32 0.0, %v3594
    %v3596 = vpop.f32.mrb[0].mxu0
    %v3597 = vpop.f32.mrb[0].mxu0
    %v3598 = vadd.f32 0.0, %v3597
    %v3599 = vpop.f32.mrb[0].mxu0
    %3600 = vmatprep.mubr.bf16.mxu0 %v3241
    %3601 = vmatmul.mubr.bf16.gmra.mrb[0].mxu0 %v3107
    %v3602 = vpop.f32.mrb[0].mxu0
    %v3603 = vadd.f32 0.0, %v3602
    %v3604 = vpop.f32.mrb[0].mxu0
    %v3605 = vpop.f32.mrb[0].mxu0
    %v3606 = vadd.f32 0.0, %v3605
    %v3607 = vpop.f32.mrb[0].mxu0
    %3608 = vmatprep.mubr.bf16.mxu0 %v3244
    %3609 = vmatmul.mubr.bf16.gmra.mrb[0].mxu0 %v3109
    %v3610 = vpop.f32.mrb[0].mxu0
    %v3611 = vadd.f32 0.0, %v3610
    %v3612 = vpop.f32.mrb[0].mxu0
    %v3613 = vpop.f32.mrb[0].mxu0
    %v3614 = vadd.f32 0.0, %v3613
    %v3615 = vpop.f32.mrb[0].mxu0
    %3616 = vdwg.mxu0
    %v3617 = vmax.f32 %v3281, %v3515
    %v3618 = vmax.f32 %v3284, %v3518
    %v3619 = vmax.f32 %v3289, %v3523
    %v3620 = vmax.f32 %v3292, %v3526
    %v3621 = vmax.f32 %v3297, %v3531
    %v3622 = vmax.f32 %v3300, %v3534
    %v3623 = vmax.f32 %v3305, %v3539
    %v3624 = vmax.f32 %v3308, %v3542
    %v3625 = vmax.f32 %v3313, %v3547
    %v3626 = vmax.f32 %v3316, %v3550
    %v3627 = vmax.f32 %v3321, %v3555
    %v3628 = vmax.f32 %v3324, %v3558
    %v3629 = vmax.f32 %v3329, %v3563
    %v3630 = vmax.f32 %v3332, %v3566
    %v3631 = vmax.f32 %v3337, %v3571
    %v3632 = vmax.f32 %v3340, %v3574
    %v3633 = vmax.f32 %v3345, %v3579
    %v3634 = vmax.f32 %v3348, %v3582
    %v3635 = vmax.f32 %v3353, %v3587
    %v3636 = vmax.f32 %v3356, %v3590
    %v3637 = vmax.f32 %v3361, %v3595
    %v3638 = vmax.f32 %v3364, %v3598
    %v3639 = vmax.f32 %v3369, %v3603
    %v3640 = vmax.f32 %v3372, %v3606
    %v3641 = vmax.f32 %v3377, %v3611
    %v3642 = vmax.f32 %v3380, %v3614
    %v3643 = vpack.c.bf16 %v3618, %v3617
    %v3644 = vpack.c.bf16 %v3620, %v3619
    %v3645 = vpack.c.bf16 %v3622, %v3621
    %v3646 = vpack.c.bf16 %v3624, %v3623
    %v3647 = vpack.c.bf16 %v3626, %v3625
    %v3648 = vpack.c.bf16 %v3628, %v3627
    %v3649 = vpack.c.bf16 %v3630, %v3629
    %v3650 = vpack.c.bf16 %v3632, %v3631
    %v3651 = vpack.c.bf16 %v3634, %v3633
    %v3652 = vpack.c.bf16 %v3636, %v3635
    %v3653 = vpack.c.bf16 %v3638, %v3637
    %v3654 = vpack.c.bf16 %v3640, %v3639
    %v3655 = vpack.c.bf16 %v3642, %v3641
    %v3656 = vld [vmem:[%s8] sm:$0xff]
    %v3657 = vld [vmem:[%s8 + $0x8] sm:$0xff]
    %v3658 = vld [vmem:[%s8 + $0x10] sm:$0xff]
    %v3659 = vld [vmem:[%s8 + $0x18] sm:$0xff]
    %v3660 = vld [vmem:[%s8 + $0x20] sm:$0xff]
    %v3661 = vld [vmem:[%s8 + $0x28] sm:$0xff]
    %v3662 = vld [vmem:[%s8 + $0x30] sm:$0xff]
    %v3663 = vld [vmem:[%s8 + $0x38] sm:$0xff]
    %v3664 = vld [vmem:[%s8 + $0x40] sm:$0xff]
    %v3665 = vld [vmem:[%s8 + $0x48] sm:$0xff]
    %v3666 = vld [vmem:[%s8 + $0x50] sm:$0xff]
    %v3667 = vld [vmem:[%s8 + $0x58] sm:$0xff]
    %v3680 = vunpack.c.l.b16 %v3656
    %v3681 = vunpack.c.h.b16 %v3656
    %v3682 = vunpack.c.l.b16 %v3657
    %v3683 = vunpack.c.h.b16 %v3657
    %v3684 = vunpack.c.l.b16 %v3658
    %v3685 = vunpack.c.h.b16 %v3658
    %v3686 = vunpack.c.l.b16 %v3659
    %v3687 = vunpack.c.h.b16 %v3659
    %v3688 = vunpack.c.l.b16 %v3660
    %v3689 = vunpack.c.h.b16 %v3660
    %v3690 = vunpack.c.l.b16 %v3661
    %v3691 = vunpack.c.h.b16 %v3661
    %v3692 = vunpack.c.l.b16 %v3662
    %v3693 = vunpack.c.h.b16 %v3662
    %v3694 = vunpack.c.l.b16 %v3663
    %v3695 = vunpack.c.h.b16 %v3663
    %v3696 = vunpack.c.l.b16 %v3664
    %v3697 = vunpack.c.h.b16 %v3664
    %v3698 = vunpack.c.l.b16 %v3665
    %v3699 = vunpack.c.h.b16 %v3665
    %v3700 = vunpack.c.l.b16 %v3666
    %v3701 = vunpack.c.h.b16 %v3666
    %v3702 = vunpack.c.l.b16 %v3667
    %v3703 = vunpack.c.h.b16 %v3667
    %v3704 = vpack.c.b16 %v3682, %v3680
    %v3705 = vpack.c.b16 %v3683, %v3681
    %v3706 = vpack.c.b16 %v3686, %v3684
    %v3707 = vpack.c.b16 %v3687, %v3685
    %v3708 = vpack.c.b16 %v3690, %v3688
    %v3709 = vpack.c.b16 %v3691, %v3689
    %v3710 = vpack.c.b16 %v3694, %v3692
    %v3711 = vpack.c.b16 %v3695, %v3693
    %v3712 = vpack.c.b16 %v3698, %v3696
    %v3713 = vpack.c.b16 %v3699, %v3697
    %v3714 = vpack.c.b16 %v3702, %v3700
    %v3715 = vpack.c.b16 %v3703, %v3701
    %v3723 = vsel %vm1375, %v3705, 0
    %v3726 = vsel %vm1375, %v3707, 0
    %v3729 = vsel %vm1375, %v3709, 0
    %v3732 = vsel %vm1375, %v3711, 0
    %v3735 = vsel %vm1375, %v3713, 0
    %v3738 = vsel %vm1375, %v3715, 0
    %3740 = vmatprep.subr.bf16.mxu0 0
    %3741 = vmatpush1.bf16.msra.mxu0 %v3643
    %3742 = vmatprep.subr.bf16.mxu0 0
    %3743 = vmatpush1.bf16.msra.mxu0 %v3644
    %3744 = vmatprep.subr.bf16.mxu0 0
    %3745 = vmatpush1.bf16.msra.mxu0 %v3645
    %3746 = vmatprep.subr.bf16.mxu0 0
    %3747 = vmatpush1.bf16.msra.mxu0 %v3646
    %3748 = vmatprep.subr.bf16.mxu0 0
    %3749 = vmatpush1.bf16.msra.mxu0 %v3647
    %3750 = vmatprep.subr.bf16.mxu0 0
    %3751 = vmatpush1.bf16.msra.mxu0 %v3648
    %3752 = vmatprep.subr.bf16.mxu0 0
    %3753 = vmatpush1.bf16.msra.mxu0 %v3649
    %3754 = vmatprep.subr.bf16.mxu0 0
    %3755 = vmatpush1.bf16.msra.mxu0 %v3650
    %3756 = vmatprep.subr.bf16.mxu0 0
    %3757 = vmatpush1.bf16.msra.mxu0 %v3651
    %3758 = vmatprep.subr.bf16.mxu0 0
    %3759 = vmatpush1.bf16.msra.mxu0 %v3652
    %3760 = vmatprep.subr.bf16.mxu0 0
    %3761 = vmatpush1.bf16.msra.mxu0 %v3653
    %3762 = vmatprep.subr.bf16.mxu0 0
    %3763 = vmatpush1.bf16.msra.mxu0 %v3654
    %3764 = vmatprep.subr.bf16.mxu0 0
    %3765 = vmatpush1.bf16.msra.mxu0 %v3655
    %3766 = vmatprep.subr.bf16.mxu0 0
    %3767 = vmatpush1.bf16.msra.mxu0 0
    %3768 = vmatprep.subr.bf16.mxu0 0
    %3769 = vmatpush1.bf16.msra.mxu0 0
    %3770 = vmatprep.subr.bf16.mxu0 0
    %3771 = vmatpush1.bf16.msra.mxu0 0
    %3772 = vmatprep.mubr.bf16.mxu0 %v3723
    %3773 = vmatmul.mubr.bf16.gmra.mrb[0].mxu0 %v3704
    %v3774 = vpop.f32.mrb[0].mxu0
    %v3775 = vadd.f32 0.0, %v3774
    %v3776 = vpop.f32.mrb[0].mxu0
    %v3777 = vpop.f32.mrb[0].mxu0
    %v3778 = vadd.f32 0.0, %v3777
    %v3779 = vpop.f32.mrb[0].mxu0
    %3780 = vmatprep.mubr.bf16.mxu0 %v3726
    %3781 = vmatmul.mubr.bf16.gmra.mrb[0].mxu0 %v3706
    %v3782 = vpop.f32.mrb[0].mxu0
    %v3783 = vadd.f32 0.0, %v3782
    %v3784 = vpop.f32.mrb[0].mxu0
    %v3785 = vpop.f32.mrb[0].mxu0
    %v3786 = vadd.f32 0.0, %v3785
    %v3787 = vpop.f32.mrb[0].mxu0
    %3788 = vmatprep.mubr.bf16.mxu0 %v3729
    %3789 = vmatmul.mubr.bf16.gmra.mrb[0].mxu0 %v3708
    %v3790 = vpop.f32.mrb[0].mxu0
    %v3791 = vadd.f32 0.0, %v3790
    %v3792 = vpop.f32.mrb[0].mxu0
    %v3793 = vpop.f32.mrb[0].mxu0
    %v3794 = vadd.f32 0.0, %v3793
    %v3795 = vpop.f32.mrb[0].mxu0
    %3796 = vmatprep.mubr.bf16.mxu0 %v3732
    %3797 = vmatmul.mubr.bf16.gmra.mrb[0].mxu0 %v3710
    %v3798 = vpop.f32.mrb[0].mxu0
    %v3799 = vadd.f32 0.0, %v3798
    %v3800 = vpop.f32.mrb[0].mxu0
    %v3801 = vpop.f32.mrb[0].mxu0
    %v3802 = vadd.f32 0.0, %v3801
    %v3803 = vpop.f32.mrb[0].mxu0
    %3804 = vmatprep.mubr.bf16.mxu0 %v3735
    %3805 = vmatmul.mubr.bf16.gmra.mrb[0].mxu0 %v3712
    %v3806 = vpop.f32.mrb[0].mxu0
    %v3807 = vadd.f32 0.0, %v3806
    %v3808 = vpop.f32.mrb[0].mxu0
    %v3809 = vpop.f32.mrb[0].mxu0
    %v3810 = vadd.f32 0.0, %v3809
    %v3811 = vpop.f32.mrb[0].mxu0
    %3812 = vmatprep.mubr.bf16.mxu0 %v3738
    %3813 = vmatmul.mubr.bf16.gmra.mrb[0].mxu0 %v3714
    %v3814 = vpop.f32.mrb[0].mxu0
    %v3815 = vadd.f32 0.0, %v3814
    %v3816 = vpop.f32.mrb[0].mxu0
    %v3817 = vpop.f32.mrb[0].mxu0
    %v3818 = vadd.f32 0.0, %v3817
    %v3819 = vpop.f32.mrb[0].mxu0
    %3820 = vdwg.mxu0
    %s3821 = scalar_lea.vmem %s8, 96
    %v3822 = vld [vmem:[%s3821] sm:$0xff]
    %v3823 = vld [vmem:[%s3821 + $0x8] sm:$0xff]
    %v3824 = vld [vmem:[%s3821 + $0x10] sm:$0xff]
    %v3825 = vld [vmem:[%s3821 + $0x18] sm:$0xff]
    %v3826 = vld [vmem:[%s3821 + $0x20] sm:$0xff]
    %v3827 = vld [vmem:[%s3821 + $0x28] sm:$0xff]
    %v3828 = vld [vmem:[%s3821 + $0x30] sm:$0xff]
    %v3829 = vld [vmem:[%s3821 + $0x38] sm:$0xff]
    %v3830 = vld [vmem:[%s3821 + $0x40] sm:$0xff]
    %v3831 = vld [vmem:[%s3821 + $0x48] sm:$0xff]
    %v3832 = vld [vmem:[%s3821 + $0x50] sm:$0xff]
    %v3833 = vld [vmem:[%s3821 + $0x58] sm:$0xff]
    %v3846 = vunpack.c.l.b16 %v3822
    %v3847 = vunpack.c.h.b16 %v3822
    %v3848 = vunpack.c.l.b16 %v3823
    %v3849 = vunpack.c.h.b16 %v3823
    %v3850 = vunpack.c.l.b16 %v3824
    %v3851 = vunpack.c.h.b16 %v3824
    %v3852 = vunpack.c.l.b16 %v3825
    %v3853 = vunpack.c.h.b16 %v3825
    %v3854 = vunpack.c.l.b16 %v3826
    %v3855 = vunpack.c.h.b16 %v3826
    %v3856 = vunpack.c.l.b16 %v3827
    %v3857 = vunpack.c.h.b16 %v3827
    %v3858 = vunpack.c.l.b16 %v3828
    %v3859 = vunpack.c.h.b16 %v3828
    %v3860 = vunpack.c.l.b16 %v3829
    %v3861 = vunpack.c.h.b16 %v3829
    %v3862 = vunpack.c.l.b16 %v3830
    %v3863 = vunpack.c.h.b16 %v3830
    %v3864 = vunpack.c.l.b16 %v3831
    %v3865 = vunpack.c.h.b16 %v3831
    %v3866 = vunpack.c.l.b16 %v3832
    %v3867 = vunpack.c.h.b16 %v3832
    %v3868 = vunpack.c.l.b16 %v3833
    %v3869 = vunpack.c.h.b16 %v3833
    %v3870 = vpack.c.b16 %v3848, %v3846
    %v3871 = vpack.c.b16 %v3849, %v3847
    %v3872 = vpack.c.b16 %v3852, %v3850
    %v3873 = vpack.c.b16 %v3853, %v3851
    %v3874 = vpack.c.b16 %v3856, %v3854
    %v3875 = vpack.c.b16 %v3857, %v3855
    %v3876 = vpack.c.b16 %v3860, %v3858
    %v3877 = vpack.c.b16 %v3861, %v3859
    %v3878 = vpack.c.b16 %v3864, %v3862
    %v3879 = vpack.c.b16 %v3865, %v3863
    %v3880 = vpack.c.b16 %v3868, %v3866
    %v3881 = vpack.c.b16 %v3869, %v3867
    %v3889 = vsel %vm1375, %v3871, 0
    %v3892 = vsel %vm1375, %v3873, 0
    %v3895 = vsel %vm1375, %v3875, 0
    %v3898 = vsel %vm1375, %v3877, 0
    %v3901 = vsel %vm1375, %v3879, 0
    %v3904 = vsel %vm1375, %v3881, 0
    %3906 = vmatprep.subr.bf16.mxu0 0
    %3907 = vmatpush1.bf16.msra.mxu0 %v3643
    %3908 = vmatprep.subr.bf16.mxu0 0
    %3909 = vmatpush1.bf16.msra.mxu0 %v3644
    %3910 = vmatprep.subr.bf16.mxu0 0
    %3911 = vmatpush1.bf16.msra.mxu0 %v3645
    %3912 = vmatprep.subr.bf16.mxu0 0
    %3913 = vmatpush1.bf16.msra.mxu0 %v3646
    %3914 = vmatprep.subr.bf16.mxu0 0
    %3915 = vmatpush1.bf16.msra.mxu0 %v3647
    %3916 = vmatprep.subr.bf16.mxu0 0
    %3917 = vmatpush1.bf16.msra.mxu0 %v3648
    %3918 = vmatprep.subr.bf16.mxu0 0
    %3919 = vmatpush1.bf16.msra.mxu0 %v3649
    %3920 = vmatprep.subr.bf16.mxu0 0
    %3921 = vmatpush1.bf16.msra.mxu0 %v3650
    %3922 = vmatprep.subr.bf16.mxu0 0
    %3923 = vmatpush1.bf16.msra.mxu0 %v3651
    %3924 = vmatprep.subr.bf16.mxu0 0
    %3925 = vmatpush1.bf16.msra.mxu0 %v3652
    %3926 = vmatprep.subr.bf16.mxu0 0
    %3927 = vmatpush1.bf16.msra.mxu0 %v3653
    %3928 = vmatprep.subr.bf16.mxu0 0
    %3929 = vmatpush1.bf16.msra.mxu0 %v3654
    %3930 = vmatprep.subr.bf16.mxu0 0
    %3931 = vmatpush1.bf16.msra.mxu0 %v3655
    %3932 = vmatprep.subr.bf16.mxu0 0
    %3933 = vmatpush1.bf16.msra.mxu0 0
    %3934 = vmatprep.subr.bf16.mxu0 0
    %3935 = vmatpush1.bf16.msra.mxu0 0
    %3936 = vmatprep.subr.bf16.mxu0 0
    %3937 = vmatpush1.bf16.msra.mxu0 0
    %3938 = vmatprep.mubr.bf16.mxu0 %v3889
    %3939 = vmatmul.mubr.bf16.gmra.mrb[0].mxu0 %v3870
    %v3940 = vpop.f32.mrb[0].mxu0
    %v3941 = vadd.f32 0.0, %v3940
    %v3942 = vpop.f32.mrb[0].mxu0
    %v3943 = vpop.f32.mrb[0].mxu0
    %v3944 = vadd.f32 0.0, %v3943
    %v3945 = vpop.f32.mrb[0].mxu0
    %3946 = vmatprep.mubr.bf16.mxu0 %v3892
    %3947 = vmatmul.mubr.bf16.gmra.mrb[0].mxu0 %v3872
    %v3948 = vpop.f32.mrb[0].mxu0
    %v3949 = vadd.f32 0.0, %v3948
    %v3950 = vpop.f32.mrb[0].mxu0
    %v3951 = vpop.f32.mrb[0].mxu0
    %v3952 = vadd.f32 0.0, %v3951
    %v3953 = vpop.f32.mrb[0].mxu0
    %3954 = vmatprep.mubr.bf16.mxu0 %v3895
    %3955 = vmatmul.mubr.bf16.gmra.mrb[0].mxu0 %v3874
    %v3956 = vpop.f32.mrb[0].mxu0
    %v3957 = vadd.f32 0.0, %v3956
    %v3958 = vpop.f32.mrb[0].mxu0
    %v3959 = vpop.f32.mrb[0].mxu0
    %v3960 = vadd.f32 0.0, %v3959
    %v3961 = vpop.f32.mrb[0].mxu0
    %3962 = vmatprep.mubr.bf16.mxu0 %v3898
    %3963 = vmatmul.mubr.bf16.gmra.mrb[0].mxu0 %v3876
    %v3964 = vpop.f32.mrb[0].mxu0
    %v3965 = vadd.f32 0.0, %v3964
    %v3966 = vpop.f32.mrb[0].mxu0
    %v3967 = vpop.f32.mrb[0].mxu0
    %v3968 = vadd.f32 0.0, %v3967
    %v3969 = vpop.f32.mrb[0].mxu0
    %3970 = vmatprep.mubr.bf16.mxu0 %v3901
    %3971 = vmatmul.mubr.bf16.gmra.mrb[0].mxu0 %v3878
    %v3972 = vpop.f32.mrb[0].mxu0
    %v3973 = vadd.f32 0.0, %v3972
    %v3974 = vpop.f32.mrb[0].mxu0
    %v3975 = vpop.f32.mrb[0].mxu0
    %v3976 = vadd.f32 0.0, %v3975
    %v3977 = vpop.f32.mrb[0].mxu0
    %3978 = vmatprep.mubr.bf16.mxu0 %v3904
    %3979 = vmatmul.mubr.bf16.gmra.mrb[0].mxu0 %v3880
    %v3980 = vpop.f32.mrb[0].mxu0
    %v3981 = vadd.f32 0.0, %v3980
    %v3982 = vpop.f32.mrb[0].mxu0
    %v3983 = vpop.f32.mrb[0].mxu0
    %v3984 = vadd.f32 0.0, %v3983
    %v3985 = vpop.f32.mrb[0].mxu0
    %3986 = vdwg.mxu0
    %v3987 = vmax.f32 %v3775, %v3941
    %v3988 = vmax.f32 %v3778, %v3944
    %v3989 = vmax.f32 %v3783, %v3949
    %v3990 = vmax.f32 %v3786, %v3952
    %v3991 = vmax.f32 %v3791, %v3957
    %v3992 = vmax.f32 %v3794, %v3960
    %v3993 = vmax.f32 %v3799, %v3965
    %v3994 = vmax.f32 %v3802, %v3968
    %v3995 = vmax.f32 %v3807, %v3973
    %v3996 = vmax.f32 %v3810, %v3976
    %v3997 = vmax.f32 %v3815, %v3981
    %v3998 = vmax.f32 %v3818, %v3984
    %v3999 = vld [vmem:[%s10] sm:$0x7]
    %v4000 = vld [vmem:[%s11] sm:$0xff]
    %v4001 = vld [vmem:[%s12] sm:$0xff]
    %v4002 = vld [vmem:[%s12 + $0x8] sm:$0xff]
    %v4003 = vld [vmem:[%s12 + $0x10] sm:$0xff]
    %v4004 = vld [vmem:[%s12 + $0x18] sm:$0xff]
    %v4005 = vld [vmem:[%s12 + $0x20] sm:$0xff]
    %v4006 = vld [vmem:[%s12 + $0x28] sm:$0xff]
    %v4007 = vld [vmem:[%s12 + $0x30] sm:$0xff]
    %v4008 = vld [vmem:[%s12 + $0x38] sm:$0xff]
    %v4009 = vld [vmem:[%s12 + $0x40] sm:$0xff]
    %v4010 = vld [vmem:[%s12 + $0x48] sm:$0xff]
    %v4011 = vld [vmem:[%s12 + $0x50] sm:$0xff]
    %v4012 = vld [vmem:[%s12 + $0x58] sm:$0xff]
    %v4013 = vld [vmem:[%s13] sm:$0xff]
    %v4014 = vld [vmem:[%s13 + $0x8] sm:$0xff]
    %v4015 = vld [vmem:[%s13 + $0x10] sm:$0xff]
    %v4016 = vld [vmem:[%s13 + $0x18] sm:$0xff]
    %v4017 = vld [vmem:[%s13 + $0x20] sm:$0xff]
    %v4018 = vld [vmem:[%s13 + $0x28] sm:$0xff]
    %v4019 = vld [vmem:[%s13 + $0x30] sm:$0xff]
    %v4020 = vld [vmem:[%s13 + $0x38] sm:$0xff]
    %v4021 = vld [vmem:[%s13 + $0x40] sm:$0xff]
    %v4022 = vld [vmem:[%s13 + $0x48] sm:$0xff]
    %v4023 = vld [vmem:[%s14] sm:$0xff]
    %vm4024 = vcmask 785408
    %4025 = vst.msk [vmem:[#allocation2] sm:$0xff] %vm4024, %v3987
    %4026 = vst.msk [vmem:[#allocation2 + $0x8] sm:$0xff] %vm4024, %v3988
    %4027 = vst.msk [vmem:[#allocation2 + $0x10] sm:$0xff] %vm4024, %v3989
    %4028 = vst.msk [vmem:[#allocation2 + $0x18] sm:$0xff] %vm4024, %v3990
    %4029 = vst.msk [vmem:[#allocation2 + $0x20] sm:$0xff] %vm4024, %v3991
    %4030 = vst.msk [vmem:[#allocation2 + $0x28] sm:$0xff] %vm4024, %v3992
    %4031 = vst.msk [vmem:[#allocation2 + $0x30] sm:$0xff] %vm4024, %v3993
    %4032 = vst.msk [vmem:[#allocation2 + $0x38] sm:$0xff] %vm4024, %v3994
    %4033 = vst.msk [vmem:[#allocation2 + $0x40] sm:$0xff] %vm4024, %v3995
    %4034 = vst.msk [vmem:[#allocation2 + $0x48] sm:$0xff] %vm4024, %v3996
    %4035 = vst.msk [vmem:[#allocation2 + $0x50] sm:$0xff] %vm4024, %v3997
    %4036 = vst.msk [vmem:[#allocation2 + $0x58] sm:$0xff] %vm4024, %v3998
    %4037 = vst.msk [vmem:[#allocation2 + $0x60] sm:$0xff] %vm4024, 0.0
    %v4038 = vpack.c.bf16 %v3988, %v3987
    %v4039 = vpack.c.bf16 %v3990, %v3989
    %v4040 = vpack.c.bf16 %v3992, %v3991
    %v4041 = vpack.c.bf16 %v3994, %v3993
    %v4042 = vpack.c.bf16 %v3996, %v3995
    %v4043 = vpack.c.bf16 %v3998, %v3997
    %v4044 = vld [vmem:[%s9] sm:$0xf]
    %v4045 = vld [vmem:[%s9 + $0x4] sm:$0xf]
    %v4046 = vld [vmem:[%s9 + $0x8] sm:$0xf]
    %v4047 = vld [vmem:[%s9 + $0xc] sm:$0xf]
    %v4048 = vld [vmem:[%s9 + $0x10] sm:$0xf]
    %v4049 = vld [vmem:[%s9 + $0x14] sm:$0xf]
    %v4050 = vld [vmem:[%s9 + $0x18] sm:$0xf]
    %v4051 = vld [vmem:[%s9 + $0x1c] sm:$0xf]
    %v4052 = vld [vmem:[%s9 + $0x20] sm:$0xf]
    %v4053 = vld [vmem:[%s9 + $0x24] sm:$0xf]
    %v4054 = vld [vmem:[%s9 + $0x28] sm:$0xf]
    %v4055 = vld [vmem:[%s9 + $0x2c] sm:$0xf]
    %v4056 = vld [vmem:[#allocation2 + $0x1] sm:$0xff]
    %v4057 = vld [vmem:[#allocation2 + $0x9] sm:$0xff]
    %v4058 = vld [vmem:[#allocation2 + $0x11] sm:$0xff]
    %v4059 = vld [vmem:[#allocation2 + $0x19] sm:$0xff]
    %v4060 = vld [vmem:[#allocation2 + $0x21] sm:$0xff]
    %v4061 = vld [vmem:[#allocation2 + $0x29] sm:$0xff]
    %v4062 = vld [vmem:[#allocation2 + $0x31] sm:$0xff]
    %v4063 = vld [vmem:[#allocation2 + $0x39] sm:$0xff]
    %v4064 = vld [vmem:[#allocation2 + $0x41] sm:$0xff]
    %v4065 = vld [vmem:[#allocation2 + $0x49] sm:$0xff]
    %v4066 = vld [vmem:[#allocation2 + $0x51] sm:$0xff]
    %v4067 = vld [vmem:[#allocation2 + $0x59] sm:$0xff]
    %v4068 = vpack.c.bf16 %v4057, %v4056
    %v4069 = vpack.c.bf16 %v4059, %v4058
    %v4070 = vpack.c.bf16 %v4061, %v4060
    %v4071 = vpack.c.bf16 %v4063, %v4062
    %v4072 = vpack.c.bf16 %v4065, %v4064
    %v4073 = vpack.c.bf16 %v4067, %v4066
    %s4074 = scalar_lea.vmem %s9, 48
    %v4075 = vld [vmem:[%s4074] sm:$0xf]
    %v4076 = vld [vmem:[%s4074 + $0x4] sm:$0xf]
    %v4077 = vld [vmem:[%s4074 + $0x8] sm:$0xf]
    %v4078 = vld [vmem:[%s4074 + $0xc] sm:$0xf]
    %v4079 = vld [vmem:[%s4074 + $0x10] sm:$0xf]
    %v4080 = vld [vmem:[%s4074 + $0x14] sm:$0xf]
    %v4081 = vld [vmem:[%s4074 + $0x18] sm:$0xf]
    %v4082 = vld [vmem:[%s4074 + $0x1c] sm:$0xf]
    %v4083 = vld [vmem:[%s4074 + $0x20] sm:$0xf]
    %v4084 = vld [vmem:[%s4074 + $0x24] sm:$0xf]
    %v4085 = vld [vmem:[%s4074 + $0x28] sm:$0xf]
    %v4086 = vld [vmem:[%s4074 + $0x2c] sm:$0xf]
    %v4099 = vunpack.c.l.b16 %v4075
    %v4100 = vunpack.c.l.b16 %v4076
    %v4101 = vunpack.c.l.b16 %v4077
    %v4102 = vunpack.c.l.b16 %v4078
    %v4103 = vunpack.c.l.b16 %v4079
    %v4104 = vunpack.c.l.b16 %v4080
    %v4105 = vunpack.c.l.b16 %v4081
    %v4106 = vunpack.c.l.b16 %v4082
    %v4107 = vunpack.c.l.b16 %v4083
    %v4108 = vunpack.c.l.b16 %v4084
    %v4109 = vunpack.c.l.b16 %v4085
    %v4110 = vunpack.c.l.b16 %v4086
    %v4111 = vpack.c.b16 %v4100, %v4099
    %v4112 = vpack.c.b16 %v4102, %v4101
    %v4113 = vpack.c.b16 %v4104, %v4103
    %v4114 = vpack.c.b16 %v4106, %v4105
    %v4115 = vpack.c.b16 %v4108, %v4107
    %v4116 = vpack.c.b16 %v4110, %v4109
    %v4124 = vsel %vm4024, %v4068, 0
    %v4127 = vsel %vm4024, %v4069, 0
    %v4130 = vsel %vm4024, %v4070, 0
    %v4133 = vsel %vm4024, %v4071, 0
    %v4136 = vsel %vm4024, %v4072, 0
    %v4139 = vsel %vm4024, %v4073, 0
    %4141 = vmatprep.subr.bf16.mxu0 0
    %4142 = vmatpush1.bf16.msra.mxu0 %v4111
    %4143 = vmatprep.subr.bf16.mxu0 0
    %4144 = vmatpush1.bf16.msra.mxu0 %v4112
    %4145 = vmatprep.subr.bf16.mxu0 0
    %4146 = vmatpush1.bf16.msra.mxu0 %v4113
    %4147 = vmatprep.subr.bf16.mxu0 0
    %4148 = vmatpush1.bf16.msra.mxu0 %v4114
    %4149 = vmatprep.subr.bf16.mxu0 0
    %4150 = vmatpush1.bf16.msra.mxu0 %v4115
    %4151 = vmatprep.subr.bf16.mxu0 0
    %4152 = vmatpush1.bf16.msra.mxu0 %v4116
    %4153 = vmatprep.subr.bf16.mxu0 0
    %4154 = vmatpush1.bf16.msra.mxu0 0
    %4155 = vmatprep.subr.bf16.mxu0 0
    %4156 = vmatpush1.bf16.msra.mxu0 0
    %4157 = vmatprep.subr.bf16.mxu0 0
    %4158 = vmatpush1.bf16.msra.mxu0 0
    %4159 = vmatprep.subr.bf16.mxu0 0
    %4160 = vmatpush1.bf16.msra.mxu0 0
    %4161 = vmatprep.subr.bf16.mxu0 0
    %4162 = vmatpush1.bf16.msra.mxu0 0
    %4163 = vmatprep.subr.bf16.mxu0 0
    %4164 = vmatpush1.bf16.msra.mxu0 0
    %4165 = vmatprep.subr.bf16.mxu0 0
    %4166 = vmatpush1.bf16.msra.mxu0 0
    %4167 = vmatprep.subr.bf16.mxu0 0
    %4168 = vmatpush1.bf16.msra.mxu0 0
    %4169 = vmatprep.subr.bf16.mxu0 0
    %4170 = vmatpush1.bf16.msra.mxu0 0
    %4171 = vmatprep.subr.bf16.mxu0 0
    %4172 = vmatpush1.bf16.msra.mxu0 0
    %4173 = vmatprep.mubr.bf16.mxu0 0
    %4174 = vmatmul.mubr.bf16.gmra.mrb[0].mxu0 %v4124
    %v4175 = vpop.f32.mrb[0].mxu0
    %v4176 = vadd.f32 0.0, %v4175
    %v4177 = vpop.f32.mrb[0].mxu0
    %v4178 = vpop.f32.mrb[0].mxu0
    %v4179 = vadd.f32 0.0, %v4178
    %v4180 = vpop.f32.mrb[0].mxu0
    %4181 = vmatprep.mubr.bf16.mxu0 0
    %4182 = vmatmul.mubr.bf16.gmra.mrb[0].mxu0 %v4127
    %v4183 = vpop.f32.mrb[0].mxu0
    %v4184 = vadd.f32 0.0, %v4183
    %v4185 = vpop.f32.mrb[0].mxu0
    %v4186 = vpop.f32.mrb[0].mxu0
    %v4187 = vadd.f32 0.0, %v4186
    %v4188 = vpop.f32.mrb[0].mxu0
    %4189 = vmatprep.mubr.bf16.mxu0 0
    %4190 = vmatmul.mubr.bf16.gmra.mrb[0].mxu0 %v4130
    %v4191 = vpop.f32.mrb[0].mxu0
    %v4192 = vadd.f32 0.0, %v4191
    %v4193 = vpop.f32.mrb[0].mxu0
    %v4194 = vpop.f32.mrb[0].mxu0
    %v4195 = vadd.f32 0.0, %v4194
    %v4196 = vpop.f32.mrb[0].mxu0
    %4197 = vmatprep.mubr.bf16.mxu0 0
    %4198 = vmatmul.mubr.bf16.gmra.mrb[0].mxu0 %v4133
    %v4199 = vpop.f32.mrb[0].mxu0
    %v4200 = vadd.f32 0.0, %v4199
    %v4201 = vpop.f32.mrb[0].mxu0
    %v4202 = vpop.f32.mrb[0].mxu0
    %v4203 = vadd.f32 0.0, %v4202
    %v4204 = vpop.f32.mrb[0].mxu0
    %4205 = vmatprep.mubr.bf16.mxu0 0
    %4206 = vmatmul.mubr.bf16.gmra.mrb[0].mxu0 %v4136
    %v4207 = vpop.f32.mrb[0].mxu0
    %v4208 = vadd.f32 0.0, %v4207
    %v4209 = vpop.f32.mrb[0].mxu0
    %v4210 = vpop.f32.mrb[0].mxu0
    %v4211 = vadd.f32 0.0, %v4210
    %v4212 = vpop.f32.mrb[0].mxu0
    %4213 = vmatprep.mubr.bf16.mxu0 0
    %4214 = vmatmul.mubr.bf16.gmra.mrb[0].mxu0 %v4139
    %v4215 = vpop.f32.mrb[0].mxu0
    %v4216 = vadd.f32 0.0, %v4215
    %v4217 = vpop.f32.mrb[0].mxu0
    %v4218 = vpop.f32.mrb[0].mxu0
    %v4219 = vadd.f32 0.0, %v4218
    %v4220 = vpop.f32.mrb[0].mxu0
    %4221 = vdwg.mxu0
    %v4234 = vunpack.c.l.b16 %v4044
    %v4235 = vunpack.c.l.b16 %v4045
    %v4236 = vunpack.c.l.b16 %v4046
    %v4237 = vunpack.c.l.b16 %v4047
    %v4238 = vunpack.c.l.b16 %v4048
    %v4239 = vunpack.c.l.b16 %v4049
    %v4240 = vunpack.c.l.b16 %v4050
    %v4241 = vunpack.c.l.b16 %v4051
    %v4242 = vunpack.c.l.b16 %v4052
    %v4243 = vunpack.c.l.b16 %v4053
    %v4244 = vunpack.c.l.b16 %v4054
    %v4245 = vunpack.c.l.b16 %v4055
    %v4246 = vpack.c.b16 %v4235, %v4234
    %v4247 = vpack.c.b16 %v4237, %v4236
    %v4248 = vpack.c.b16 %v4239, %v4238
    %v4249 = vpack.c.b16 %v4241, %v4240
    %v4250 = vpack.c.b16 %v4243, %v4242
    %v4251 = vpack.c.b16 %v4245, %v4244
    %v4259 = vsel %vm4024, %v4038, 0
    %v4262 = vsel %vm4024, %v4039, 0
    %v4265 = vsel %vm4024, %v4040, 0
    %v4268 = vsel %vm4024, %v4041, 0
    %v4271 = vsel %vm4024, %v4042, 0
    %v4274 = vsel %vm4024, %v4043, 0
    %4276 = vmatprep.subr.bf16.mxu0 0
    %4277 = vmatpush1.bf16.msra.mxu0 %v4246
    %4278 = vmatprep.subr.bf16.mxu0 0
    %4279 = vmatpush1.bf16.msra.mxu0 %v4247
    %4280 = vmatprep.subr.bf16.mxu0 0
    %4281 = vmatpush1.bf16.msra.mxu0 %v4248
    %4282 = vmatprep.subr.bf16.mxu0 0
    %4283 = vmatpush1.bf16.msra.mxu0 %v4249
    %4284 = vmatprep.subr.bf16.mxu0 0
    %4285 = vmatpush1.bf16.msra.mxu0 %v4250
    %4286 = vmatprep.subr.bf16.mxu0 0
    %4287 = vmatpush1.bf16.msra.mxu0 %v4251
    %4288 = vmatprep.subr.bf16.mxu0 0
    %4289 = vmatpush1.bf16.msra.mxu0 0
    %4290 = vmatprep.subr.bf16.mxu0 0
    %4291 = vmatpush1.bf16.msra.mxu0 0
    %4292 = vmatprep.subr.bf16.mxu0 0
    %4293 = vmatpush1.bf16.msra.mxu0 0
    %4294 = vmatprep.subr.bf16.mxu0 0
    %4295 = vmatpush1.bf16.msra.mxu0 0
    %4296 = vmatprep.subr.bf16.mxu0 0
    %4297 = vmatpush1.bf16.msra.mxu0 0
    %4298 = vmatprep.subr.bf16.mxu0 0
    %4299 = vmatpush1.bf16.msra.mxu0 0
    %4300 = vmatprep.subr.bf16.mxu0 0
    %4301 = vmatpush1.bf16.msra.mxu0 0
    %4302 = vmatprep.subr.bf16.mxu0 0
    %4303 = vmatpush1.bf16.msra.mxu0 0
    %4304 = vmatprep.subr.bf16.mxu0 0
    %4305 = vmatpush1.bf16.msra.mxu0 0
    %4306 = vmatprep.subr.bf16.mxu0 0
    %4307 = vmatpush1.bf16.msra.mxu0 0
    %4308 = vmatprep.mubr.bf16.mxu0 0
    %4309 = vmatmul.mubr.bf16.gmra.mrb[0].mxu0 %v4259
    %v4310 = vpop.f32.mrb[0].mxu0
    %v4311 = vadd.f32 %v4176, %v4310
    %v4312 = vpop.f32.mrb[0].mxu0
    %v4313 = vpop.f32.mrb[0].mxu0
    %v4314 = vadd.f32 %v4179, %v4313
    %v4315 = vpop.f32.mrb[0].mxu0
    %4316 = vmatprep.mubr.bf16.mxu0 0
    %4317 = vmatmul.mubr.bf16.gmra.mrb[0].mxu0 %v4262
    %v4318 = vpop.f32.mrb[0].mxu0
    %v4319 = vadd.f32 %v4184, %v4318
    %v4320 = vpop.f32.mrb[0].mxu0
    %v4321 = vpop.f32.mrb[0].mxu0
    %v4322 = vadd.f32 %v4187, %v4321
    %v4323 = vpop.f32.mrb[0].mxu0
    %4324 = vmatprep.mubr.bf16.mxu0 0
    %4325 = vmatmul.mubr.bf16.gmra.mrb[0].mxu0 %v4265
    %v4326 = vpop.f32.mrb[0].mxu0
    %v4327 = vadd.f32 %v4192, %v4326
    %v4328 = vpop.f32.mrb[0].mxu0
    %v4329 = vpop.f32.mrb[0].mxu0
    %v4330 = vadd.f32 %v4195, %v4329
    %v4331 = vpop.f32.mrb[0].mxu0
    %4332 = vmatprep.mubr.bf16.mxu0 0
    %4333 = vmatmul.mubr.bf16.gmra.mrb[0].mxu0 %v4268
    %v4334 = vpop.f32.mrb[0].mxu0
    %v4335 = vadd.f32 %v4200, %v4334
    %v4336 = vpop.f32.mrb[0].mxu0
    %v4337 = vpop.f32.mrb[0].mxu0
    %v4338 = vadd.f32 %v4203, %v4337
    %v4339 = vpop.f32.mrb[0].mxu0
    %4340 = vmatprep.mubr.bf16.mxu0 0
    %4341 = vmatmul.mubr.bf16.gmra.mrb[0].mxu0 %v4271
    %v4342 = vpop.f32.mrb[0].mxu0
    %v4343 = vadd.f32 %v4208, %v4342
    %v4344 = vpop.f32.mrb[0].mxu0
    %v4345 = vpop.f32.mrb[0].mxu0
    %v4346 = vadd.f32 %v4211, %v4345
    %v4347 = vpop.f32.mrb[0].mxu0
    %4348 = vmatprep.mubr.bf16.mxu0 0
    %4349 = vmatmul.mubr.bf16.gmra.mrb[0].mxu0 %v4274
    %v4350 = vpop.f32.mrb[0].mxu0
    %v4351 = vadd.f32 %v4216, %v4350
    %v4352 = vpop.f32.mrb[0].mxu0
    %v4353 = vpop.f32.mrb[0].mxu0
    %v4354 = vadd.f32 %v4219, %v4353
    %v4355 = vpop.f32.mrb[0].mxu0
    %4356 = vdwg.mxu0
    %v4357 = vld [vmem:[#allocation2 + $0x2] sm:$0xff]
    %v4358 = vld [vmem:[#allocation2 + $0xa] sm:$0xff]
    %v4359 = vld [vmem:[#allocation2 + $0x12] sm:$0xff]
    %v4360 = vld [vmem:[#allocation2 + $0x1a] sm:$0xff]
    %v4361 = vld [vmem:[#allocation2 + $0x22] sm:$0xff]
    %v4362 = vld [vmem:[#allocation2 + $0x2a] sm:$0xff]
    %v4363 = vld [vmem:[#allocation2 + $0x32] sm:$0xff]
    %v4364 = vld [vmem:[#allocation2 + $0x3a] sm:$0xff]
    %v4365 = vld [vmem:[#allocation2 + $0x42] sm:$0xff]
    %v4366 = vld [vmem:[#allocation2 + $0x4a] sm:$0xff]
    %v4367 = vld [vmem:[#allocation2 + $0x52] sm:$0xff]
    %v4368 = vld [vmem:[#allocation2 + $0x5a] sm:$0xff]
    %v4369 = vpack.c.bf16 %v4358, %v4357
    %v4370 = vpack.c.bf16 %v4360, %v4359
    %v4371 = vpack.c.bf16 %v4362, %v4361
    %v4372 = vpack.c.bf16 %v4364, %v4363
    %v4373 = vpack.c.bf16 %v4366, %v4365
    %v4374 = vpack.c.bf16 %v4368, %v4367
    %s4375 = scalar_lea.vmem %s9, 96
    %v4376 = vld [vmem:[%s4375] sm:$0xf]
    %v4377 = vld [vmem:[%s4375 + $0x4] sm:$0xf]
    %v4378 = vld [vmem:[%s4375 + $0x8] sm:$0xf]
    %v4379 = vld [vmem:[%s4375 + $0xc] sm:$0xf]
    %v4380 = vld [vmem:[%s4375 + $0x10] sm:$0xf]
    %v4381 = vld [vmem:[%s4375 + $0x14] sm:$0xf]
    %v4382 = vld [vmem:[%s4375 + $0x18] sm:$0xf]
    %v4383 = vld [vmem:[%s4375 + $0x1c] sm:$0xf]
    %v4384 = vld [vmem:[%s4375 + $0x20] sm:$0xf]
    %v4385 = vld [vmem:[%s4375 + $0x24] sm:$0xf]
    %v4386 = vld [vmem:[%s4375 + $0x28] sm:$0xf]
    %v4387 = vld [vmem:[%s4375 + $0x2c] sm:$0xf]
    %v4400 = vunpack.c.l.b16 %v4376
    %v4401 = vunpack.c.l.b16 %v4377
    %v4402 = vunpack.c.l.b16 %v4378
    %v4403 = vunpack.c.l.b16 %v4379
    %v4404 = vunpack.c.l.b16 %v4380
    %v4405 = vunpack.c.l.b16 %v4381
    %v4406 = vunpack.c.l.b16 %v4382
    %v4407 = vunpack.c.l.b16 %v4383
    %v4408 = vunpack.c.l.b16 %v4384
    %v4409 = vunpack.c.l.b16 %v4385
    %v4410 = vunpack.c.l.b16 %v4386
    %v4411 = vunpack.c.l.b16 %v4387
    %v4412 = vpack.c.b16 %v4401, %v4400
    %v4413 = vpack.c.b16 %v4403, %v4402
    %v4414 = vpack.c.b16 %v4405, %v4404
    %v4415 = vpack.c.b16 %v4407, %v4406
    %v4416 = vpack.c.b16 %v4409, %v4408
    %v4417 = vpack.c.b16 %v4411, %v4410
    %v4425 = vsel %vm4024, %v4369, 0
    %v4428 = vsel %vm4024, %v4370, 0
    %v4431 = vsel %vm4024, %v4371, 0
    %v4434 = vsel %vm4024, %v4372, 0
    %v4437 = vsel %vm4024, %v4373, 0
    %v4440 = vsel %vm4024, %v4374, 0
    %4442 = vmatprep.subr.bf16.mxu0 0
    %4443 = vmatpush1.bf16.msra.mxu0 %v4412
    %4444 = vmatprep.subr.bf16.mxu0 0
    %4445 = vmatpush1.bf16.msra.mxu0 %v4413
    %4446 = vmatprep.subr.bf16.mxu0 0
    %4447 = vmatpush1.bf16.msra.mxu0 %v4414
    %4448 = vmatprep.subr.bf16.mxu0 0
    %4449 = vmatpush1.bf16.msra.mxu0 %v4415
    %4450 = vmatprep.subr.bf16.mxu0 0
    %4451 = vmatpush1.bf16.msra.mxu0 %v4416
    %4452 = vmatprep.subr.bf16.mxu0 0
    %4453 = vmatpush1.bf16.msra.mxu0 %v4417
    %4454 = vmatprep.subr.bf16.mxu0 0
    %4455 = vmatpush1.bf16.msra.mxu0 0
    %4456 = vmatprep.subr.bf16.mxu0 0
    %4457 = vmatpush1.bf16.msra.mxu0 0
    %4458 = vmatprep.subr.bf16.mxu0 0
    %4459 = vmatpush1.bf16.msra.mxu0 0
    %4460 = vmatprep.subr.bf16.mxu0 0
    %4461 = vmatpush1.bf16.msra.mxu0 0
    %4462 = vmatprep.subr.bf16.mxu0 0
    %4463 = vmatpush1.bf16.msra.mxu0 0
    %4464 = vmatprep.subr.bf16.mxu0 0
    %4465 = vmatpush1.bf16.msra.mxu0 0
    %4466 = vmatprep.subr.bf16.mxu0 0
    %4467 = vmatpush1.bf16.msra.mxu0 0
    %4468 = vmatprep.subr.bf16.mxu0 0
    %4469 = vmatpush1.bf16.msra.mxu0 0
    %4470 = vmatprep.subr.bf16.mxu0 0
    %4471 = vmatpush1.bf16.msra.mxu0 0
    %4472 = vmatprep.subr.bf16.mxu0 0
    %4473 = vmatpush1.bf16.msra.mxu0 0
    %4474 = vmatprep.mubr.bf16.mxu0 0
    %4475 = vmatmul.mubr.bf16.gmra.mrb[0].mxu0 %v4425
    %v4476 = vpop.f32.mrb[0].mxu0
    %v4477 = vadd.f32 0.0, %v4476
    %v4478 = vpop.f32.mrb[0].mxu0
    %v4479 = vpop.f32.mrb[0].mxu0
    %v4480 = vadd.f32 0.0, %v4479
    %v4481 = vpop.f32.mrb[0].mxu0
    %4482 = vmatprep.mubr.bf16.mxu0 0
    %4483 = vmatmul.mubr.bf16.gmra.mrb[0].mxu0 %v4428
    %v4484 = vpop.f32.mrb[0].mxu0
    %v4485 = vadd.f32 0.0, %v4484
    %v4486 = vpop.f32.mrb[0].mxu0
    %v4487 = vpop.f32.mrb[0].mxu0
    %v4488 = vadd.f32 0.0, %v4487
    %v4489 = vpop.f32.mrb[0].mxu0
    %4490 = vmatprep.mubr.bf16.mxu0 0
    %4491 = vmatmul.mubr.bf16.gmra.mrb[0].mxu0 %v4431
    %v4492 = vpop.f32.mrb[0].mxu0
    %v4493 = vadd.f32 0.0, %v4492
    %v4494 = vpop.f32.mrb[0].mxu0
    %v4495 = vpop.f32.mrb[0].mxu0
    %v4496 = vadd.f32 0.0, %v4495
    %v4497 = vpop.f32.mrb[0].mxu0
    %4498 = vmatprep.mubr.bf16.mxu0 0
    %4499 = vmatmul.mubr.bf16.gmra.mrb[0].mxu0 %v4434
    %v4500 = vpop.f32.mrb[0].mxu0
    %v4501 = vadd.f32 0.0, %v4500
    %v4502 = vpop.f32.mrb[0].mxu0
    %v4503 = vpop.f32.mrb[0].mxu0
    %v4504 = vadd.f32 0.0, %v4503
    %v4505 = vpop.f32.mrb[0].mxu0
    %4506 = vmatprep.mubr.bf16.mxu0 0
    %4507 = vmatmul.mubr.bf16.gmra.mrb[0].mxu0 %v4437
    %v4508 = vpop.f32.mrb[0].mxu0
    %v4509 = vadd.f32 0.0, %v4508
    %v4510 = vpop.f32.mrb[0].mxu0
    %v4511 = vpop.f32.mrb[0].mxu0
    %v4512 = vadd.f32 0.0, %v4511
    %v4513 = vpop.f32.mrb[0].mxu0
    %4514 = vmatprep.mubr.bf16.mxu0 0
    %4515 = vmatmul.mubr.bf16.gmra.mrb[0].mxu0 %v4440
    %v4516 = vpop.f32.mrb[0].mxu0
    %v4517 = vadd.f32 0.0, %v4516
    %v4518 = vpop.f32.mrb[0].mxu0
    %v4519 = vpop.f32.mrb[0].mxu0
    %v4520 = vadd.f32 0.0, %v4519
    %v4521 = vpop.f32.mrb[0].mxu0
    %4522 = vdwg.mxu0
    %v4523 = vadd.f32 %v4311, %v4477
    %v4524 = vadd.f32 %v4314, %v4480
    %v4525 = vadd.f32 %v4319, %v4485
    %v4526 = vadd.f32 %v4322, %v4488
    %v4527 = vadd.f32 %v4327, %v4493
    %v4528 = vadd.f32 %v4330, %v4496
    %v4529 = vadd.f32 %v4335, %v4501
    %v4530 = vadd.f32 %v4338, %v4504
    %v4531 = vadd.f32 %v4343, %v4509
    %v4532 = vadd.f32 %v4346, %v4512
    %v4533 = vadd.f32 %v4351, %v4517
    %v4534 = vadd.f32 %v4354, %v4520
    %v4535 = vlaneseq
    %v4536 = vshrl.u32 %v4535, 7
    %v4537 = vsub.s32 0, %v4536
    %v4538 = vrot.slane %v3999, %v4537
    %v4539 = vadd.f32 %v4523, %v4538
    %v4540 = vadd.f32 %v4524, %v4538
    %v4541 = vadd.f32 %v4525, %v4538
    %v4542 = vadd.f32 %v4526, %v4538
    %v4543 = vadd.f32 %v4527, %v4538
    %v4544 = vadd.f32 %v4528, %v4538
    %v4545 = vadd.f32 %v4529, %v4538
    %v4546 = vadd.f32 %v4530, %v4538
    %v4547 = vadd.f32 %v4531, %v4538
    %v4548 = vadd.f32 %v4532, %v4538
    %v4549 = vadd.f32 %v4533, %v4538
    %v4550 = vadd.f32 %v4534, %v4538
    %v4552 = vsel %vm1375, %v4539, 0
    %v4555 = vsel %vm1375, %v4540, 0
    %v4558 = vsel %vm1375, %v4541, 0
    %v4561 = vsel %vm1375, %v4542, 0
    %v4564 = vsel %vm1375, %v4543, 0
    %v4567 = vsel %vm1375, %v4544, 0
    %v4570 = vsel %vm1375, %v4545, 0
    %v4573 = vsel %vm1375, %v4546, 0
    %v4576 = vsel %vm1375, %v4547, 0
    %v4579 = vsel %vm1375, %v4548, 0
    %v4582 = vsel %vm1375, %v4549, 0
    %v4585 = vsel %vm1375, %v4550, 0
    %4587 = vmatprep.subr.mxu0 0.0
    %4588 = vmatpush1.msra.mxu0 %v4013
    %4589 = vmatprep.subr.mxu0 0.0
    %4590 = vmatpush1.msra.mxu0 %v4014
    %4591 = vmatprep.subr.mxu0 0.0
    %4592 = vmatpush1.msra.mxu0 %v4015
    %4593 = vmatprep.subr.mxu0 0.0
    %4594 = vmatpush1.msra.mxu0 %v4016
    %4595 = vmatprep.subr.mxu0 0.0
    %4596 = vmatpush1.msra.mxu0 %v4017
    %4597 = vmatprep.subr.mxu0 0.0
    %4598 = vmatpush1.msra.mxu0 %v4018
    %4599 = vmatprep.subr.mxu0 0.0
    %4600 = vmatpush1.msra.mxu0 %v4019
    %4601 = vmatprep.subr.mxu0 0.0
    %4602 = vmatpush1.msra.mxu0 %v4020
    %4603 = vmatprep.subr.mxu0 0.0
    %4604 = vmatpush1.msra.mxu0 %v4021
    %4605 = vmatprep.subr.mxu0 0.0
    %4606 = vmatpush1.msra.mxu0 %v4022
    %4607 = vmatprep.subr.mxu0 0.0
    %4608 = vmatpush1.msra.mxu0 0.0
    %4609 = vmatprep.subr.mxu0 0.0
    %4610 = vmatpush1.msra.mxu0 0.0
    %4611 = vmatprep.subr.mxu0 0.0
    %4612 = vmatpush1.msra.mxu0 0.0
    %4613 = vmatprep.subr.mxu0 0.0
    %4614 = vmatpush1.msra.mxu0 0.0
    %4615 = vmatprep.subr.mxu0 0.0
    %4616 = vmatpush1.msra.mxu0 0.0
    %4617 = vmatprep.subr.mxu0 0.0
    %4618 = vmatpush1.msra.mxu0 0.0
    %4619 = vmatprep.subr.mxu0 0.0
    %4620 = vmatpush1.msra.mxu0 0.0
    %4621 = vmatprep.subr.mxu0 0.0
    %4622 = vmatpush1.msra.mxu0 0.0
    %4623 = vmatprep.subr.mxu0 0.0
    %4624 = vmatpush1.msra.mxu0 0.0
    %4625 = vmatprep.subr.mxu0 0.0
    %4626 = vmatpush1.msra.mxu0 0.0
    %4627 = vmatprep.subr.mxu0 0.0
    %4628 = vmatpush1.msra.mxu0 0.0
    %4629 = vmatprep.subr.mxu0 0.0
    %4630 = vmatpush1.msra.mxu0 0.0
    %4631 = vmatprep.subr.mxu0 0.0
    %4632 = vmatpush1.msra.mxu0 0.0
    %4633 = vmatprep.subr.mxu0 0.0
    %4634 = vmatpush1.msra.mxu0 0.0
    %4635 = vmatprep.subr.mxu0 0.0
    %4636 = vmatpush1.msra.mxu0 0.0
    %4637 = vmatprep.subr.mxu0 0.0
    %4638 = vmatpush1.msra.mxu0 0.0
    %4639 = vmatprep.subr.mxu0 0.0
    %4640 = vmatpush1.msra.mxu0 0.0
    %4641 = vmatprep.subr.mxu0 0.0
    %4642 = vmatpush1.msra.mxu0 0.0
    %4643 = vmatprep.subr.mxu0 0.0
    %4644 = vmatpush1.msra.mxu0 0.0
    %4645 = vmatprep.subr.mxu0 0.0
    %4646 = vmatpush1.msra.mxu0 0.0
    %4647 = vmatprep.subr.mxu0 0.0
    %4648 = vmatpush1.msra.mxu0 0.0
    %4649 = vmatprep.subr.mxu0 0.0
    %4650 = vmatpush1.msra.mxu0 0.0
    %4651 = vmatprep.mubr.f32.mxu0 0.0
    %4652 = vmatmul.mubr.f32.gmra.mrb[0].mxu0 %v4552
    %v4653 = vpop.f32.mrb[0].mxu0
    %v4654 = vadd.f32 0.0, %v4653
    %v4655 = vpop.f32.mrb[0].mxu0
    %4656 = vmatprep.mubr.f32.mxu0 0.0
    %4657 = vmatmul.mubr.f32.gmra.mrb[0].mxu0 %v4555
    %v4658 = vpop.f32.mrb[0].mxu0
    %v4659 = vadd.f32 0.0, %v4658
    %v4660 = vpop.f32.mrb[0].mxu0
    %4661 = vmatprep.mubr.f32.mxu0 0.0
    %4662 = vmatmul.mubr.f32.gmra.mrb[0].mxu0 %v4558
    %v4663 = vpop.f32.mrb[0].mxu0
    %v4664 = vadd.f32 0.0, %v4663
    %v4665 = vpop.f32.mrb[0].mxu0
    %4666 = vmatprep.mubr.f32.mxu0 0.0
    %4667 = vmatmul.mubr.f32.gmra.mrb[0].mxu0 %v4561
    %v4668 = vpop.f32.mrb[0].mxu0
    %v4669 = vadd.f32 0.0, %v4668
    %v4670 = vpop.f32.mrb[0].mxu0
    %4671 = vmatprep.mubr.f32.mxu0 0.0
    %4672 = vmatmul.mubr.f32.gmra.mrb[0].mxu0 %v4564
    %v4673 = vpop.f32.mrb[0].mxu0
    %v4674 = vadd.f32 0.0, %v4673
    %v4675 = vpop.f32.mrb[0].mxu0
    %4676 = vmatprep.mubr.f32.mxu0 0.0
    %4677 = vmatmul.mubr.f32.gmra.mrb[0].mxu0 %v4567
    %v4678 = vpop.f32.mrb[0].mxu0
    %v4679 = vadd.f32 0.0, %v4678
    %v4680 = vpop.f32.mrb[0].mxu0
    %4681 = vmatprep.mubr.f32.mxu0 0.0
    %4682 = vmatmul.mubr.f32.gmra.mrb[0].mxu0 %v4570
    %v4683 = vpop.f32.mrb[0].mxu0
    %v4684 = vadd.f32 0.0, %v4683
    %v4685 = vpop.f32.mrb[0].mxu0
    %4686 = vmatprep.mubr.f32.mxu0 0.0
    %4687 = vmatmul.mubr.f32.gmra.mrb[0].mxu0 %v4573
    %v4688 = vpop.f32.mrb[0].mxu0
    %v4689 = vadd.f32 0.0, %v4688
    %v4690 = vpop.f32.mrb[0].mxu0
    %4691 = vmatprep.mubr.f32.mxu0 0.0
    %4692 = vmatmul.mubr.f32.gmra.mrb[0].mxu0 %v4576
    %v4693 = vpop.f32.mrb[0].mxu0
    %v4694 = vadd.f32 0.0, %v4693
    %v4695 = vpop.f32.mrb[0].mxu0
    %4696 = vmatprep.mubr.f32.mxu0 0.0
    %4697 = vmatmul.mubr.f32.gmra.mrb[0].mxu0 %v4579
    %v4698 = vpop.f32.mrb[0].mxu0
    %v4699 = vadd.f32 0.0, %v4698
    %v4700 = vpop.f32.mrb[0].mxu0
    %4701 = vmatprep.mubr.f32.mxu0 0.0
    %4702 = vmatmul.mubr.f32.gmra.mrb[0].mxu0 %v4582
    %v4703 = vpop.f32.mrb[0].mxu0
    %v4704 = vadd.f32 0.0, %v4703
    %v4705 = vpop.f32.mrb[0].mxu0
    %4706 = vmatprep.mubr.f32.mxu0 0.0
    %4707 = vmatmul.mubr.f32.gmra.mrb[0].mxu0 %v4585
    %v4708 = vpop.f32.mrb[0].mxu0
    %v4709 = vadd.f32 0.0, %v4708
    %v4710 = vpop.f32.mrb[0].mxu0
    %4711 = vdwg.mxu0
    %v4713 = vsel %vm4024, %v4000, 0
    %4715 = vmatprep.subr.mxu0 0.0
    %4716 = vmatpush1.msra.mxu0 %v4654
    %4717 = vmatprep.subr.mxu0 0.0
    %4718 = vmatpush1.msra.mxu0 %v4659
    %4719 = vmatprep.subr.mxu0 0.0
    %4720 = vmatpush1.msra.mxu0 %v4664
    %4721 = vmatprep.subr.mxu0 0.0
    %4722 = vmatpush1.msra.mxu0 %v4669
    %4723 = vmatprep.subr.mxu0 0.0
    %4724 = vmatpush1.msra.mxu0 %v4674
    %4725 = vmatprep.subr.mxu0 0.0
    %4726 = vmatpush1.msra.mxu0 %v4679
    %4727 = vmatprep.subr.mxu0 0.0
    %4728 = vmatpush1.msra.mxu0 %v4684
    %4729 = vmatprep.subr.mxu0 0.0
    %4730 = vmatpush1.msra.mxu0 %v4689
    %4731 = vmatprep.subr.mxu0 0.0
    %4732 = vmatpush1.msra.mxu0 %v4694
    %4733 = vmatprep.subr.mxu0 0.0
    %4734 = vmatpush1.msra.mxu0 %v4699
    %4735 = vmatprep.subr.mxu0 0.0
    %4736 = vmatpush1.msra.mxu0 %v4704
    %4737 = vmatprep.subr.mxu0 0.0
    %4738 = vmatpush1.msra.mxu0 %v4709
    %4739 = vmatprep.subr.mxu0 0.0
    %4740 = vmatpush1.msra.mxu0 0.0
    %4741 = vmatprep.subr.mxu0 0.0
    %4742 = vmatpush1.msra.mxu0 0.0
    %4743 = vmatprep.subr.mxu0 0.0
    %4744 = vmatpush1.msra.mxu0 0.0
    %4745 = vmatprep.subr.mxu0 0.0
    %4746 = vmatpush1.msra.mxu0 0.0
    %4747 = vmatprep.subr.mxu0 0.0
    %4748 = vmatpush1.msra.mxu0 0.0
    %4749 = vmatprep.subr.mxu0 0.0
    %4750 = vmatpush1.msra.mxu0 0.0
    %4751 = vmatprep.subr.mxu0 0.0
    %4752 = vmatpush1.msra.mxu0 0.0
    %4753 = vmatprep.subr.mxu0 0.0
    %4754 = vmatpush1.msra.mxu0 0.0
    %4755 = vmatprep.subr.mxu0 0.0
    %4756 = vmatpush1.msra.mxu0 0.0
    %4757 = vmatprep.subr.mxu0 0.0
    %4758 = vmatpush1.msra.mxu0 0.0
    %4759 = vmatprep.subr.mxu0 0.0
    %4760 = vmatpush1.msra.mxu0 0.0
    %4761 = vmatprep.subr.mxu0 0.0
    %4762 = vmatpush1.msra.mxu0 0.0
    %4763 = vmatprep.subr.mxu0 0.0
    %4764 = vmatpush1.msra.mxu0 0.0
    %4765 = vmatprep.subr.mxu0 0.0
    %4766 = vmatpush1.msra.mxu0 0.0
    %4767 = vmatprep.subr.mxu0 0.0
    %4768 = vmatpush1.msra.mxu0 0.0
    %4769 = vmatprep.subr.mxu0 0.0
    %4770 = vmatpush1.msra.mxu0 0.0
    %4771 = vmatprep.subr.mxu0 0.0
    %4772 = vmatpush1.msra.mxu0 0.0
    %4773 = vmatprep.subr.mxu0 0.0
    %4774 = vmatpush1.msra.mxu0 0.0
    %4775 = vmatprep.subr.mxu0 0.0
    %4776 = vmatpush1.msra.mxu0 0.0
    %4777 = vmatprep.subr.mxu0 0.0
    %4778 = vmatpush1.msra.mxu0 0.0
    %4779 = vmatprep.mubr.f32.mxu0 0.0
    %4780 = vmatmul.mubr.f32.gmra.mrb[0].mxu0 %v4713
    %v4781 = vpop.f32.mrb[0].mxu0
    %v4782 = vadd.f32 0.0, %v4781
    %v4783 = vpop.f32.mrb[0].mxu0
    %4784 = vdwg.mxu0
    %v4785 = vmul.f32 %v4539, %v4539
    %v4786 = vmul.f32 %v4540, %v4540
    %v4787 = vmul.f32 %v4541, %v4541
    %v4788 = vmul.f32 %v4542, %v4542
    %v4789 = vmul.f32 %v4543, %v4543
    %v4790 = vmul.f32 %v4544, %v4544
    %v4791 = vmul.f32 %v4545, %v4545
    %v4792 = vmul.f32 %v4546, %v4546
    %v4793 = vmul.f32 %v4547, %v4547
    %v4794 = vmul.f32 %v4548, %v4548
    %v4795 = vmul.f32 %v4549, %v4549
    %v4796 = vmul.f32 %v4550, %v4550
    %v4798 = vsel %vm1375, %v4785, 0
    %v4801 = vsel %vm1375, %v4786, 0
    %v4804 = vsel %vm1375, %v4787, 0
    %v4807 = vsel %vm1375, %v4788, 0
    %v4810 = vsel %vm1375, %v4789, 0
    %v4813 = vsel %vm1375, %v4790, 0
    %v4816 = vsel %vm1375, %v4791, 0
    %v4819 = vsel %vm1375, %v4792, 0
    %v4822 = vsel %vm1375, %v4793, 0
    %v4825 = vsel %vm1375, %v4794, 0
    %v4828 = vsel %vm1375, %v4795, 0
    %v4831 = vsel %vm1375, %v4796, 0
    %4833 = vmatprep.subr.mxu0 0.0
    %4834 = vmatpush1.msra.mxu0 %v4013
    %4835 = vmatprep.subr.mxu0 0.0
    %4836 = vmatpush1.msra.mxu0 %v4014
    %4837 = vmatprep.subr.mxu0 0.0
    %4838 = vmatpush1.msra.mxu0 %v4015
    %4839 = vmatprep.subr.mxu0 0.0
    %4840 = vmatpush1.msra.mxu0 %v4016
    %4841 = vmatprep.subr.mxu0 0.0
    %4842 = vmatpush1.msra.mxu0 %v4017
    %4843 = vmatprep.subr.mxu0 0.0
    %4844 = vmatpush1.msra.mxu0 %v4018
    %4845 = vmatprep.subr.mxu0 0.0
    %4846 = vmatpush1.msra.mxu0 %v4019
    %4847 = vmatprep.subr.mxu0 0.0
    %4848 = vmatpush1.msra.mxu0 %v4020
    %4849 = vmatprep.subr.mxu0 0.0
    %4850 = vmatpush1.msra.mxu0 %v4021
    %4851 = vmatprep.subr.mxu0 0.0
    %4852 = vmatpush1.msra.mxu0 %v4022
    %4853 = vmatprep.subr.mxu0 0.0
    %4854 = vmatpush1.msra.mxu0 0.0
    %4855 = vmatprep.subr.mxu0 0.0
    %4856 = vmatpush1.msra.mxu0 0.0
    %4857 = vmatprep.subr.mxu0 0.0
    %4858 = vmatpush1.msra.mxu0 0.0
    %4859 = vmatprep.subr.mxu0 0.0
    %4860 = vmatpush1.msra.mxu0 0.0
    %4861 = vmatprep.subr.mxu0 0.0
    %4862 = vmatpush1.msra.mxu0 0.0
    %4863 = vmatprep.subr.mxu0 0.0
    %4864 = vmatpush1.msra.mxu0 0.0
    %4865 = vmatprep.subr.mxu0 0.0
    %4866 = vmatpush1.msra.mxu0 0.0
    %4867 = vmatprep.subr.mxu0 0.0
    %4868 = vmatpush1.msra.mxu0 0.0
    %4869 = vmatprep.subr.mxu0 0.0
    %4870 = vmatpush1.msra.mxu0 0.0
    %4871 = vmatprep.subr.mxu0 0.0
    %4872 = vmatpush1.msra.mxu0 0.0
    %4873 = vmatprep.subr.mxu0 0.0
    %4874 = vmatpush1.msra.mxu0 0.0
    %4875 = vmatprep.subr.mxu0 0.0
    %4876 = vmatpush1.msra.mxu0 0.0
    %4877 = vmatprep.subr.mxu0 0.0
    %4878 = vmatpush1.msra.mxu0 0.0
    %4879 = vmatprep.subr.mxu0 0.0
    %4880 = vmatpush1.msra.mxu0 0.0
    %4881 = vmatprep.subr.mxu0 0.0
    %4882 = vmatpush1.msra.mxu0 0.0
    %4883 = vmatprep.subr.mxu0 0.0
    %4884 = vmatpush1.msra.mxu0 0.0
    %4885 = vmatprep.subr.mxu0 0.0
    %4886 = vmatpush1.msra.mxu0 0.0
    %4887 = vmatprep.subr.mxu0 0.0
    %4888 = vmatpush1.msra.mxu0 0.0
    %4889 = vmatprep.subr.mxu0 0.0
    %4890 = vmatpush1.msra.mxu0 0.0
    %4891 = vmatprep.subr.mxu0 0.0
    %4892 = vmatpush1.msra.mxu0 0.0
    %4893 = vmatprep.subr.mxu0 0.0
    %4894 = vmatpush1.msra.mxu0 0.0
    %4895 = vmatprep.subr.mxu0 0.0
    %4896 = vmatpush1.msra.mxu0 0.0
    %4897 = vmatprep.mubr.f32.mxu0 0.0
    %4898 = vmatmul.mubr.f32.gmra.mrb[0].mxu0 %v4798
    %v4899 = vpop.f32.mrb[0].mxu0
    %v4900 = vadd.f32 0.0, %v4899
    %v4901 = vpop.f32.mrb[0].mxu0
    %4902 = vmatprep.mubr.f32.mxu0 0.0
    %4903 = vmatmul.mubr.f32.gmra.mrb[0].mxu0 %v4801
    %v4904 = vpop.f32.mrb[0].mxu0
    %v4905 = vadd.f32 0.0, %v4904
    %v4906 = vpop.f32.mrb[0].mxu0
    %4907 = vmatprep.mubr.f32.mxu0 0.0
    %4908 = vmatmul.mubr.f32.gmra.mrb[0].mxu0 %v4804
    %v4909 = vpop.f32.mrb[0].mxu0
    %v4910 = vadd.f32 0.0, %v4909
    %v4911 = vpop.f32.mrb[0].mxu0
    %4912 = vmatprep.mubr.f32.mxu0 0.0
    %4913 = vmatmul.mubr.f32.gmra.mrb[0].mxu0 %v4807
    %v4914 = vpop.f32.mrb[0].mxu0
    %v4915 = vadd.f32 0.0, %v4914
    %v4916 = vpop.f32.mrb[0].mxu0
    %4917 = vmatprep.mubr.f32.mxu0 0.0
    %4918 = vmatmul.mubr.f32.gmra.mrb[0].mxu0 %v4810
    %v4919 = vpop.f32.mrb[0].mxu0
    %v4920 = vadd.f32 0.0, %v4919
    %v4921 = vpop.f32.mrb[0].mxu0
    %4922 = vmatprep.mubr.f32.mxu0 0.0
    %4923 = vmatmul.mubr.f32.gmra.mrb[0].mxu0 %v4813
    %v4924 = vpop.f32.mrb[0].mxu0
    %v4925 = vadd.f32 0.0, %v4924
    %v4926 = vpop.f32.mrb[0].mxu0
    %4927 = vmatprep.mubr.f32.mxu0 0.0
    %4928 = vmatmul.mubr.f32.gmra.mrb[0].mxu0 %v4816
    %v4929 = vpop.f32.mrb[0].mxu0
    %v4930 = vadd.f32 0.0, %v4929
    %v4931 = vpop.f32.mrb[0].mxu0
    %4932 = vmatprep.mubr.f32.mxu0 0.0
    %4933 = vmatmul.mubr.f32.gmra.mrb[0].mxu0 %v4819
    %v4934 = vpop.f32.mrb[0].mxu0
    %v4935 = vadd.f32 0.0, %v4934
    %v4936 = vpop.f32.mrb[0].mxu0
    %4937 = vmatprep.mubr.f32.mxu0 0.0
    %4938 = vmatmul.mubr.f32.gmra.mrb[0].mxu0 %v4822
    %v4939 = vpop.f32.mrb[0].mxu0
    %v4940 = vadd.f32 0.0, %v4939
    %v4941 = vpop.f32.mrb[0].mxu0
    %4942 = vmatprep.mubr.f32.mxu0 0.0
    %4943 = vmatmul.mubr.f32.gmra.mrb[0].mxu0 %v4825
    %v4944 = vpop.f32.mrb[0].mxu0
    %v4945 = vadd.f32 0.0, %v4944
    %v4946 = vpop.f32.mrb[0].mxu0
    %4947 = vmatprep.mubr.f32.mxu0 0.0
    %4948 = vmatmul.mubr.f32.gmra.mrb[0].mxu0 %v4828
    %v4949 = vpop.f32.mrb[0].mxu0
    %v4950 = vadd.f32 0.0, %v4949
    %v4951 = vpop.f32.mrb[0].mxu0
    %4952 = vmatprep.mubr.f32.mxu0 0.0
    %4953 = vmatmul.mubr.f32.gmra.mrb[0].mxu0 %v4831
    %v4954 = vpop.f32.mrb[0].mxu0
    %v4955 = vadd.f32 0.0, %v4954
    %v4956 = vpop.f32.mrb[0].mxu0
    %4957 = vdwg.mxu0
    %4958 = vmatprep.subr.mxu0 0.0
    %4959 = vmatpush1.msra.mxu0 %v4900
    %4960 = vmatprep.subr.mxu0 0.0
    %4961 = vmatpush1.msra.mxu0 %v4905
    %4962 = vmatprep.subr.mxu0 0.0
    %4963 = vmatpush1.msra.mxu0 %v4910
    %4964 = vmatprep.subr.mxu0 0.0
    %4965 = vmatpush1.msra.mxu0 %v4915
    %4966 = vmatprep.subr.mxu0 0.0
    %4967 = vmatpush1.msra.mxu0 %v4920
    %4968 = vmatprep.subr.mxu0 0.0
    %4969 = vmatpush1.msra.mxu0 %v4925
    %4970 = vmatprep.subr.mxu0 0.0
    %4971 = vmatpush1.msra.mxu0 %v4930
    %4972 = vmatprep.subr.mxu0 0.0
    %4973 = vmatpush1.msra.mxu0 %v4935
    %4974 = vmatprep.subr.mxu0 0.0
    %4975 = vmatpush1.msra.mxu0 %v4940
    %4976 = vmatprep.subr.mxu0 0.0
    %4977 = vmatpush1.msra.mxu0 %v4945
    %4978 = vmatprep.subr.mxu0 0.0
    %4979 = vmatpush1.msra.mxu0 %v4950
    %4980 = vmatprep.subr.mxu0 0.0
    %4981 = vmatpush1.msra.mxu0 %v4955
    %4982 = vmatprep.subr.mxu0 0.0
    %4983 = vmatpush1.msra.mxu0 0.0
    %4984 = vmatprep.subr.mxu0 0.0
    %4985 = vmatpush1.msra.mxu0 0.0
    %4986 = vmatprep.subr.mxu0 0.0
    %4987 = vmatpush1.msra.mxu0 0.0
    %4988 = vmatprep.subr.mxu0 0.0
    %4989 = vmatpush1.msra.mxu0 0.0
    %4990 = vmatprep.subr.mxu0 0.0
    %4991 = vmatpush1.msra.mxu0 0.0
    %4992 = vmatprep.subr.mxu0 0.0
    %4993 = vmatpush1.msra.mxu0 0.0
    %4994 = vmatprep.subr.mxu0 0.0
    %4995 = vmatpush1.msra.mxu0 0.0
    %4996 = vmatprep.subr.mxu0 0.0
    %4997 = vmatpush1.msra.mxu0 0.0
    %4998 = vmatprep.subr.mxu0 0.0
    %4999 = vmatpush1.msra.mxu0 0.0
    %5000 = vmatprep.subr.mxu0 0.0
    %5001 = vmatpush1.msra.mxu0 0.0
    %5002 = vmatprep.subr.mxu0 0.0
    %5003 = vmatpush1.msra.mxu0 0.0
    %5004 = vmatprep.subr.mxu0 0.0
    %5005 = vmatpush1.msra.mxu0 0.0
    %5006 = vmatprep.subr.mxu0 0.0
    %5007 = vmatpush1.msra.mxu0 0.0
    %5008 = vmatprep.subr.mxu0 0.0
    %5009 = vmatpush1.msra.mxu0 0.0
    %5010 = vmatprep.subr.mxu0 0.0
    %5011 = vmatpush1.msra.mxu0 0.0
    %5012 = vmatprep.subr.mxu0 0.0
    %5013 = vmatpush1.msra.mxu0 0.0
    %5014 = vmatprep.subr.mxu0 0.0
    %5015 = vmatpush1.msra.mxu0 0.0
    %5016 = vmatprep.subr.mxu0 0.0
    %5017 = vmatpush1.msra.mxu0 0.0
    %5018 = vmatprep.subr.mxu0 0.0
    %5019 = vmatpush1.msra.mxu0 0.0
    %5020 = vmatprep.subr.mxu0 0.0
    %5021 = vmatpush1.msra.mxu0 0.0
    %5022 = vmatprep.mubr.f32.mxu0 0.0
    %5023 = vmatmul.mubr.f32.gmra.mrb[0].mxu0 %v4713
    %v5024 = vpop.f32.mrb[0].mxu0
    %v5025 = vadd.f32 0.0, %v5024
    %v5026 = vpop.f32.mrb[0].mxu0
    %5027 = vdwg.mxu0
    %v5028 = vmul.f32 %v4782, 0.01
    %v5029 = vmul.f32 %v5025, 0.01
    %v5030 = vmul.f32 %v5028, %v5028
    %v5031 = vsub.f32 %v5029, %v5030
    %v5032 = vmax.f32 %v5031, 0.0
    %v5033 = vadd.f32 %v5032, 1e-05
    %v5034 = vrsqrt.pop %v5033
    %v5035 = vlaneseq
    %v5036 = vshrl.u32 %v5035, 7
    %v5037 = vsub.s32 1, %v5036
    %v5038 = vrot.slane %v3999, %v5037
    %v5039 = vmul.f32 %v5034, %v5038
    %v5040 = vmul.f32 %v5028, %v5039
    %v5041 = vlaneseq
    %v5042 = vshrl.u32 %v5041, 7
    %v5043 = vsub.s32 2, %v5042
    %v5044 = vrot.slane %v3999, %v5043
    %v5045 = vsub.f32 %v5044, %v5040
    %v5047 = vsel %vm1862, %v4001, 0
    %v5050 = vsel %vm1862, %v4002, 0
    %v5053 = vsel %vm1862, %v4003, 0
    %v5056 = vsel %vm1862, %v4004, 0
    %v5059 = vsel %vm1862, %v4005, 0
    %v5062 = vsel %vm1862, %v4006, 0
    %v5065 = vsel %vm1862, %v4007, 0
    %v5068 = vsel %vm1862, %v4008, 0
    %v5071 = vsel %vm1862, %v4009, 0
    %v5074 = vsel %vm1862, %v4010, 0
    %v5077 = vsel %vm1862, %v4011, 0
    %v5080 = vsel %vm1862, %v4012, 0
    %5082 = vmatprep.subr.mxu0 0.0
    %5083 = vmatpush1.msra.mxu0 %v5039
    %5084 = vmatprep.subr.mxu0 0.0
    %5085 = vmatpush1.msra.mxu0 0.0
    %5086 = vmatprep.subr.mxu0 0.0
    %5087 = vmatpush1.msra.mxu0 0.0
    %5088 = vmatprep.subr.mxu0 0.0
    %5089 = vmatpush1.msra.mxu0 0.0
    %5090 = vmatprep.subr.mxu0 0.0
    %5091 = vmatpush1.msra.mxu0 0.0
    %5092 = vmatprep.subr.mxu0 0.0
    %5093 = vmatpush1.msra.mxu0 0.0
    %5094 = vmatprep.subr.mxu0 0.0
    %5095 = vmatpush1.msra.mxu0 0.0
    %5096 = vmatprep.subr.mxu0 0.0
    %5097 = vmatpush1.msra.mxu0 0.0
    %5098 = vmatprep.subr.mxu0 0.0
    %5099 = vmatpush1.msra.mxu0 0.0
    %5100 = vmatprep.subr.mxu0 0.0
    %5101 = vmatpush1.msra.mxu0 0.0
    %5102 = vmatprep.subr.mxu0 0.0
    %5103 = vmatpush1.msra.mxu0 0.0
    %5104 = vmatprep.subr.mxu0 0.0
    %5105 = vmatpush1.msra.mxu0 0.0
    %5106 = vmatprep.subr.mxu0 0.0
    %5107 = vmatpush1.msra.mxu0 0.0
    %5108 = vmatprep.subr.mxu0 0.0
    %5109 = vmatpush1.msra.mxu0 0.0
    %5110 = vmatprep.subr.mxu0 0.0
    %5111 = vmatpush1.msra.mxu0 0.0
    %5112 = vmatprep.subr.mxu0 0.0
    %5113 = vmatpush1.msra.mxu0 0.0
    %5114 = vmatprep.subr.mxu0 0.0
    %5115 = vmatpush1.msra.mxu0 0.0
    %5116 = vmatprep.subr.mxu0 0.0
    %5117 = vmatpush1.msra.mxu0 0.0
    %5118 = vmatprep.subr.mxu0 0.0
    %5119 = vmatpush1.msra.mxu0 0.0
    %5120 = vmatprep.subr.mxu0 0.0
    %5121 = vmatpush1.msra.mxu0 0.0
    %5122 = vmatprep.subr.mxu0 0.0
    %5123 = vmatpush1.msra.mxu0 0.0
    %5124 = vmatprep.subr.mxu0 0.0
    %5125 = vmatpush1.msra.mxu0 0.0
    %5126 = vmatprep.subr.mxu0 0.0
    %5127 = vmatpush1.msra.mxu0 0.0
    %5128 = vmatprep.subr.mxu0 0.0
    %5129 = vmatpush1.msra.mxu0 0.0
    %5130 = vmatprep.subr.mxu0 0.0
    %5131 = vmatpush1.msra.mxu0 0.0
    %5132 = vmatprep.subr.mxu0 0.0
    %5133 = vmatpush1.msra.mxu0 0.0
    %5134 = vmatprep.subr.mxu0 0.0
    %5135 = vmatpush1.msra.mxu0 0.0
    %5136 = vmatprep.subr.mxu0 0.0
    %5137 = vmatpush1.msra.mxu0 0.0
    %5138 = vmatprep.subr.mxu0 0.0
    %5139 = vmatpush1.msra.mxu0 0.0
    %5140 = vmatprep.subr.mxu0 0.0
    %5141 = vmatpush1.msra.mxu0 0.0
    %5142 = vmatprep.subr.mxu0 0.0
    %5143 = vmatpush1.msra.mxu0 0.0
    %5144 = vmatprep.subr.mxu0 0.0
    %5145 = vmatpush1.msra.mxu0 0.0
    %5146 = vmatprep.mubr.f32.mxu0 0.0
    %5147 = vmatmul.mubr.f32.gmra.mrb[0].mxu0 %v5047
    %v5148 = vpop.f32.mrb[0].mxu0
    %v5149 = vadd.f32 0.0, %v5148
    %v5150 = vpop.f32.mrb[0].mxu0
    %5151 = vmatprep.mubr.f32.mxu0 0.0
    %5152 = vmatmul.mubr.f32.gmra.mrb[0].mxu0 %v5050
    %v5153 = vpop.f32.mrb[0].mxu0
    %v5154 = vadd.f32 0.0, %v5153
    %v5155 = vpop.f32.mrb[0].mxu0
    %5156 = vmatprep.mubr.f32.mxu0 0.0
    %5157 = vmatmul.mubr.f32.gmra.mrb[0].mxu0 %v5053
    %v5158 = vpop.f32.mrb[0].mxu0
    %v5159 = vadd.f32 0.0, %v5158
    %v5160 = vpop.f32.mrb[0].mxu0
    %5161 = vmatprep.mubr.f32.mxu0 0.0
    %5162 = vmatmul.mubr.f32.gmra.mrb[0].mxu0 %v5056
    %v5163 = vpop.f32.mrb[0].mxu0
    %v5164 = vadd.f32 0.0, %v5163
    %v5165 = vpop.f32.mrb[0].mxu0
    %5166 = vmatprep.mubr.f32.mxu0 0.0
    %5167 = vmatmul.mubr.f32.gmra.mrb[0].mxu0 %v5059
    %v5168 = vpop.f32.mrb[0].mxu0
    %v5169 = vadd.f32 0.0, %v5168
    %v5170 = vpop.f32.mrb[0].mxu0
    %5171 = vmatprep.mubr.f32.mxu0 0.0
    %5172 = vmatmul.mubr.f32.gmra.mrb[0].mxu0 %v5062
    %v5173 = vpop.f32.mrb[0].mxu0
    %v5174 = vadd.f32 0.0, %v5173
    %v5175 = vpop.f32.mrb[0].mxu0
    %5176 = vmatprep.mubr.f32.mxu0 0.0
    %5177 = vmatmul.mubr.f32.gmra.mrb[0].mxu0 %v5065
    %v5178 = vpop.f32.mrb[0].mxu0
    %v5179 = vadd.f32 0.0, %v5178
    %v5180 = vpop.f32.mrb[0].mxu0
    %5181 = vmatprep.mubr.f32.mxu0 0.0
    %5182 = vmatmul.mubr.f32.gmra.mrb[0].mxu0 %v5068
    %v5183 = vpop.f32.mrb[0].mxu0
    %v5184 = vadd.f32 0.0, %v5183
    %v5185 = vpop.f32.mrb[0].mxu0
    %5186 = vmatprep.mubr.f32.mxu0 0.0
    %5187 = vmatmul.mubr.f32.gmra.mrb[0].mxu0 %v5071
    %v5188 = vpop.f32.mrb[0].mxu0
    %v5189 = vadd.f32 0.0, %v5188
    %v5190 = vpop.f32.mrb[0].mxu0
    %5191 = vmatprep.mubr.f32.mxu0 0.0
    %5192 = vmatmul.mubr.f32.gmra.mrb[0].mxu0 %v5074
    %v5193 = vpop.f32.mrb[0].mxu0
    %v5194 = vadd.f32 0.0, %v5193
    %v5195 = vpop.f32.mrb[0].mxu0
    %5196 = vmatprep.mubr.f32.mxu0 0.0
    %5197 = vmatmul.mubr.f32.gmra.mrb[0].mxu0 %v5077
    %v5198 = vpop.f32.mrb[0].mxu0
    %v5199 = vadd.f32 0.0, %v5198
    %v5200 = vpop.f32.mrb[0].mxu0
    %5201 = vmatprep.mubr.f32.mxu0 0.0
    %5202 = vmatmul.mubr.f32.gmra.mrb[0].mxu0 %v5080
    %v5203 = vpop.f32.mrb[0].mxu0
    %v5204 = vadd.f32 0.0, %v5203
    %v5205 = vpop.f32.mrb[0].mxu0
    %5206 = vdwg.mxu0
    %v5208 = vsel %vm1862, %v5149, 0
    %v5211 = vsel %vm1862, %v5154, 0
    %v5214 = vsel %vm1862, %v5159, 0
    %v5217 = vsel %vm1862, %v5164, 0
    %v5220 = vsel %vm1862, %v5169, 0
    %v5223 = vsel %vm1862, %v5174, 0
    %v5226 = vsel %vm1862, %v5179, 0
    %v5229 = vsel %vm1862, %v5184, 0
    %v5232 = vsel %vm1862, %v5189, 0
    %v5235 = vsel %vm1862, %v5194, 0
    %v5238 = vsel %vm1862, %v5199, 0
    %v5241 = vsel %vm1862, %v5204, 0
    %5243 = vmatprep.subr.mxu0 0.0
    %5244 = vmatpush1.msra.mxu0 %v4023
    %5245 = vmatprep.subr.mxu0 0.0
    %5246 = vmatpush1.msra.mxu0 0.0
    %5247 = vmatprep.subr.mxu0 0.0
    %5248 = vmatpush1.msra.mxu0 0.0
    %5249 = vmatprep.subr.mxu0 0.0
    %5250 = vmatpush1.msra.mxu0 0.0
    %5251 = vmatprep.subr.mxu0 0.0
    %5252 = vmatpush1.msra.mxu0 0.0
    %5253 = vmatprep.subr.mxu0 0.0
    %5254 = vmatpush1.msra.mxu0 0.0
    %5255 = vmatprep.subr.mxu0 0.0
    %5256 = vmatpush1.msra.mxu0 0.0
    %5257 = vmatprep.subr.mxu0 0.0
    %5258 = vmatpush1.msra.mxu0 0.0
    %5259 = vmatprep.subr.mxu0 0.0
    %5260 = vmatpush1.msra.mxu0 0.0
    %5261 = vmatprep.subr.mxu0 0.0
    %5262 = vmatpush1.msra.mxu0 0.0
    %5263 = vmatprep.subr.mxu0 0.0
    %5264 = vmatpush1.msra.mxu0 0.0
    %5265 = vmatprep.subr.mxu0 0.0
    %5266 = vmatpush1.msra.mxu0 0.0
    %5267 = vmatprep.subr.mxu0 0.0
    %5268 = vmatpush1.msra.mxu0 0.0
    %5269 = vmatprep.subr.mxu0 0.0
    %5270 = vmatpush1.msra.mxu0 0.0
    %5271 = vmatprep.subr.mxu0 0.0
    %5272 = vmatpush1.msra.mxu0 0.0
    %5273 = vmatprep.subr.mxu0 0.0
    %5274 = vmatpush1.msra.mxu0 0.0
    %5275 = vmatprep.subr.mxu0 0.0
    %5276 = vmatpush1.msra.mxu0 0.0
    %5277 = vmatprep.subr.mxu0 0.0
    %5278 = vmatpush1.msra.mxu0 0.0
    %5279 = vmatprep.subr.mxu0 0.0
    %5280 = vmatpush1.msra.mxu0 0.0
    %5281 = vmatprep.subr.mxu0 0.0
    %5282 = vmatpush1.msra.mxu0 0.0
    %5283 = vmatprep.subr.mxu0 0.0
    %5284 = vmatpush1.msra.mxu0 0.0
    %5285 = vmatprep.subr.mxu0 0.0
    %5286 = vmatpush1.msra.mxu0 0.0
    %5287 = vmatprep.subr.mxu0 0.0
    %5288 = vmatpush1.msra.mxu0 0.0
    %5289 = vmatprep.subr.mxu0 0.0
    %5290 = vmatpush1.msra.mxu0 0.0
    %5291 = vmatprep.subr.mxu0 0.0
    %5292 = vmatpush1.msra.mxu0 0.0
    %5293 = vmatprep.subr.mxu0 0.0
    %5294 = vmatpush1.msra.mxu0 0.0
    %5295 = vmatprep.subr.mxu0 0.0
    %5296 = vmatpush1.msra.mxu0 0.0
    %5297 = vmatprep.subr.mxu0 0.0
    %5298 = vmatpush1.msra.mxu0 0.0
    %5299 = vmatprep.subr.mxu0 0.0
    %5300 = vmatpush1.msra.mxu0 0.0
    %5301 = vmatprep.subr.mxu0 0.0
    %5302 = vmatpush1.msra.mxu0 0.0
    %5303 = vmatprep.subr.mxu0 0.0
    %5304 = vmatpush1.msra.mxu0 0.0
    %5305 = vmatprep.subr.mxu0 0.0
    %5306 = vmatpush1.msra.mxu0 0.0
    %5307 = vmatprep.mubr.f32.mxu0 0.0
    %5308 = vmatmul.mubr.f32.gmra.mrb[0].mxu0 %v5208
    %v5309 = vpop.f32.mrb[0].mxu0
    %v5310 = vadd.f32 0.0, %v5309
    %v5311 = vpop.f32.mrb[0].mxu0
    %5312 = vmatprep.mubr.f32.mxu0 0.0
    %5313 = vmatmul.mubr.f32.gmra.mrb[0].mxu0 %v5211
    %v5314 = vpop.f32.mrb[0].mxu0
    %v5315 = vadd.f32 0.0, %v5314
    %v5316 = vpop.f32.mrb[0].mxu0
    %5317 = vmatprep.mubr.f32.mxu0 0.0
    %5318 = vmatmul.mubr.f32.gmra.mrb[0].mxu0 %v5214
    %v5319 = vpop.f32.mrb[0].mxu0
    %v5320 = vadd.f32 0.0, %v5319
    %v5321 = vpop.f32.mrb[0].mxu0
    %5322 = vmatprep.mubr.f32.mxu0 0.0
    %5323 = vmatmul.mubr.f32.gmra.mrb[0].mxu0 %v5217
    %v5324 = vpop.f32.mrb[0].mxu0
    %v5325 = vadd.f32 0.0, %v5324
    %v5326 = vpop.f32.mrb[0].mxu0
    %5327 = vmatprep.mubr.f32.mxu0 0.0
    %5328 = vmatmul.mubr.f32.gmra.mrb[0].mxu0 %v5220
    %v5329 = vpop.f32.mrb[0].mxu0
    %v5330 = vadd.f32 0.0, %v5329
    %v5331 = vpop.f32.mrb[0].mxu0
    %5332 = vmatprep.mubr.f32.mxu0 0.0
    %5333 = vmatmul.mubr.f32.gmra.mrb[0].mxu0 %v5223
    %v5334 = vpop.f32.mrb[0].mxu0
    %v5335 = vadd.f32 0.0, %v5334
    %v5336 = vpop.f32.mrb[0].mxu0
    %5337 = vmatprep.mubr.f32.mxu0 0.0
    %5338 = vmatmul.mubr.f32.gmra.mrb[0].mxu0 %v5226
    %v5339 = vpop.f32.mrb[0].mxu0
    %v5340 = vadd.f32 0.0, %v5339
    %v5341 = vpop.f32.mrb[0].mxu0
    %5342 = vmatprep.mubr.f32.mxu0 0.0
    %5343 = vmatmul.mubr.f32.gmra.mrb[0].mxu0 %v5229
    %v5344 = vpop.f32.mrb[0].mxu0
    %v5345 = vadd.f32 0.0, %v5344
    %v5346 = vpop.f32.mrb[0].mxu0
    %5347 = vmatprep.mubr.f32.mxu0 0.0
    %5348 = vmatmul.mubr.f32.gmra.mrb[0].mxu0 %v5232
    %v5349 = vpop.f32.mrb[0].mxu0
    %v5350 = vadd.f32 0.0, %v5349
    %v5351 = vpop.f32.mrb[0].mxu0
    %5352 = vmatprep.mubr.f32.mxu0 0.0
    %5353 = vmatmul.mubr.f32.gmra.mrb[0].mxu0 %v5235
    %v5354 = vpop.f32.mrb[0].mxu0
    %v5355 = vadd.f32 0.0, %v5354
    %v5356 = vpop.f32.mrb[0].mxu0
    %5357 = vmatprep.mubr.f32.mxu0 0.0
    %5358 = vmatmul.mubr.f32.gmra.mrb[0].mxu0 %v5238
    %v5359 = vpop.f32.mrb[0].mxu0
    %v5360 = vadd.f32 0.0, %v5359
    %v5361 = vpop.f32.mrb[0].mxu0
    %5362 = vmatprep.mubr.f32.mxu0 0.0
    %5363 = vmatmul.mubr.f32.gmra.mrb[0].mxu0 %v5241
    %v5364 = vpop.f32.mrb[0].mxu0
    %v5365 = vadd.f32 0.0, %v5364
    %v5366 = vpop.f32.mrb[0].mxu0
    %5367 = vdwg.mxu0
    %5368 = vmatprep.subr.mxu0 0.0
    %5369 = vmatpush1.msra.mxu0 %v5045
    %5370 = vmatprep.subr.mxu0 0.0
    %5371 = vmatpush1.msra.mxu0 0.0
    %5372 = vmatprep.subr.mxu0 0.0
    %5373 = vmatpush1.msra.mxu0 0.0
    %5374 = vmatprep.subr.mxu0 0.0
    %5375 = vmatpush1.msra.mxu0 0.0
    %5376 = vmatprep.subr.mxu0 0.0
    %5377 = vmatpush1.msra.mxu0 0.0
    %5378 = vmatprep.subr.mxu0 0.0
    %5379 = vmatpush1.msra.mxu0 0.0
    %5380 = vmatprep.subr.mxu0 0.0
    %5381 = vmatpush1.msra.mxu0 0.0
    %5382 = vmatprep.subr.mxu0 0.0
    %5383 = vmatpush1.msra.mxu0 0.0
    %5384 = vmatprep.subr.mxu0 0.0
    %5385 = vmatpush1.msra.mxu0 0.0
    %5386 = vmatprep.subr.mxu0 0.0
    %5387 = vmatpush1.msra.mxu0 0.0
    %5388 = vmatprep.subr.mxu0 0.0
    %5389 = vmatpush1.msra.mxu0 0.0
    %5390 = vmatprep.subr.mxu0 0.0
    %5391 = vmatpush1.msra.mxu0 0.0
    %5392 = vmatprep.subr.mxu0 0.0
    %5393 = vmatpush1.msra.mxu0 0.0
    %5394 = vmatprep.subr.mxu0 0.0
    %5395 = vmatpush1.msra.mxu0 0.0
    %5396 = vmatprep.subr.mxu0 0.0
    %5397 = vmatpush1.msra.mxu0 0.0
    %5398 = vmatprep.subr.mxu0 0.0
    %5399 = vmatpush1.msra.mxu0 0.0
    %5400 = vmatprep.subr.mxu0 0.0
    %5401 = vmatpush1.msra.mxu0 0.0
    %5402 = vmatprep.subr.mxu0 0.0
    %5403 = vmatpush1.msra.mxu0 0.0
    %5404 = vmatprep.subr.mxu0 0.0
    %5405 = vmatpush1.msra.mxu0 0.0
    %5406 = vmatprep.subr.mxu0 0.0
    %5407 = vmatpush1.msra.mxu0 0.0
    %5408 = vmatprep.subr.mxu0 0.0
    %5409 = vmatpush1.msra.mxu0 0.0
    %5410 = vmatprep.subr.mxu0 0.0
    %5411 = vmatpush1.msra.mxu0 0.0
    %5412 = vmatprep.subr.mxu0 0.0
    %5413 = vmatpush1.msra.mxu0 0.0
    %5414 = vmatprep.subr.mxu0 0.0
    %5415 = vmatpush1.msra.mxu0 0.0
    %5416 = vmatprep.subr.mxu0 0.0
    %5417 = vmatpush1.msra.mxu0 0.0
    %5418 = vmatprep.subr.mxu0 0.0
    %5419 = vmatpush1.msra.mxu0 0.0
    %5420 = vmatprep.subr.mxu0 0.0
    %5421 = vmatpush1.msra.mxu0 0.0
    %5422 = vmatprep.subr.mxu0 0.0
    %5423 = vmatpush1.msra.mxu0 0.0
    %5424 = vmatprep.subr.mxu0 0.0
    %5425 = vmatpush1.msra.mxu0 0.0
    %5426 = vmatprep.subr.mxu0 0.0
    %5427 = vmatpush1.msra.mxu0 0.0
    %5428 = vmatprep.subr.mxu0 0.0
    %5429 = vmatpush1.msra.mxu0 0.0
    %5430 = vmatprep.subr.mxu0 0.0
    %5431 = vmatpush1.msra.mxu0 0.0
    %5432 = vmatprep.mubr.f32.mxu0 0.0
    %5433 = vmatmul.mubr.f32.gmra.mrb[0].mxu0 %v5047
    %v5434 = vpop.f32.mrb[0].mxu0
    %v5435 = vadd.f32 0.0, %v5434
    %v5436 = vpop.f32.mrb[0].mxu0
    %5437 = vmatprep.mubr.f32.mxu0 0.0
    %5438 = vmatmul.mubr.f32.gmra.mrb[0].mxu0 %v5050
    %v5439 = vpop.f32.mrb[0].mxu0
    %v5440 = vadd.f32 0.0, %v5439
    %v5441 = vpop.f32.mrb[0].mxu0
    %5442 = vmatprep.mubr.f32.mxu0 0.0
    %5443 = vmatmul.mubr.f32.gmra.mrb[0].mxu0 %v5053
    %v5444 = vpop.f32.mrb[0].mxu0
    %v5445 = vadd.f32 0.0, %v5444
    %v5446 = vpop.f32.mrb[0].mxu0
    %5447 = vmatprep.mubr.f32.mxu0 0.0
    %5448 = vmatmul.mubr.f32.gmra.mrb[0].mxu0 %v5056
    %v5449 = vpop.f32.mrb[0].mxu0
    %v5450 = vadd.f32 0.0, %v5449
    %v5451 = vpop.f32.mrb[0].mxu0
    %5452 = vmatprep.mubr.f32.mxu0 0.0
    %5453 = vmatmul.mubr.f32.gmra.mrb[0].mxu0 %v5059
    %v5454 = vpop.f32.mrb[0].mxu0
    %v5455 = vadd.f32 0.0, %v5454
    %v5456 = vpop.f32.mrb[0].mxu0
    %5457 = vmatprep.mubr.f32.mxu0 0.0
    %5458 = vmatmul.mubr.f32.gmra.mrb[0].mxu0 %v5062
    %v5459 = vpop.f32.mrb[0].mxu0
    %v5460 = vadd.f32 0.0, %v5459
    %v5461 = vpop.f32.mrb[0].mxu0
    %5462 = vmatprep.mubr.f32.mxu0 0.0
    %5463 = vmatmul.mubr.f32.gmra.mrb[0].mxu0 %v5065
    %v5464 = vpop.f32.mrb[0].mxu0
    %v5465 = vadd.f32 0.0, %v5464
    %v5466 = vpop.f32.mrb[0].mxu0
    %5467 = vmatprep.mubr.f32.mxu0 0.0
    %5468 = vmatmul.mubr.f32.gmra.mrb[0].mxu0 %v5068
    %v5469 = vpop.f32.mrb[0].mxu0
    %v5470 = vadd.f32 0.0, %v5469
    %v5471 = vpop.f32.mrb[0].mxu0
    %5472 = vmatprep.mubr.f32.mxu0 0.0
    %5473 = vmatmul.mubr.f32.gmra.mrb[0].mxu0 %v5071
    %v5474 = vpop.f32.mrb[0].mxu0
    %v5475 = vadd.f32 0.0, %v5474
    %v5476 = vpop.f32.mrb[0].mxu0
    %5477 = vmatprep.mubr.f32.mxu0 0.0
    %5478 = vmatmul.mubr.f32.gmra.mrb[0].mxu0 %v5074
    %v5479 = vpop.f32.mrb[0].mxu0
    %v5480 = vadd.f32 0.0, %v5479
    %v5481 = vpop.f32.mrb[0].mxu0
    %5482 = vmatprep.mubr.f32.mxu0 0.0
    %5483 = vmatmul.mubr.f32.gmra.mrb[0].mxu0 %v5077
    %v5484 = vpop.f32.mrb[0].mxu0
    %v5485 = vadd.f32 0.0, %v5484
    %v5486 = vpop.f32.mrb[0].mxu0
    %5487 = vmatprep.mubr.f32.mxu0 0.0
    %5488 = vmatmul.mubr.f32.gmra.mrb[0].mxu0 %v5080
    %v5489 = vpop.f32.mrb[0].mxu0
    %v5490 = vadd.f32 0.0, %v5489
    %v5491 = vpop.f32.mrb[0].mxu0
    %5492 = vdwg.mxu0
    %v5494 = vsel %vm1862, %v5435, 0
    %v5497 = vsel %vm1862, %v5440, 0
    %v5500 = vsel %vm1862, %v5445, 0
    %v5503 = vsel %vm1862, %v5450, 0
    %v5506 = vsel %vm1862, %v5455, 0
    %v5509 = vsel %vm1862, %v5460, 0
    %v5512 = vsel %vm1862, %v5465, 0
    %v5515 = vsel %vm1862, %v5470, 0
    %v5518 = vsel %vm1862, %v5475, 0
    %v5521 = vsel %vm1862, %v5480, 0
    %v5524 = vsel %vm1862, %v5485, 0
    %v5527 = vsel %vm1862, %v5490, 0
    %5529 = vmatprep.subr.mxu0 0.0
    %5530 = vmatpush1.msra.mxu0 %v4023
    %5531 = vmatprep.subr.mxu0 0.0
    %5532 = vmatpush1.msra.mxu0 0.0
    %5533 = vmatprep.subr.mxu0 0.0
    %5534 = vmatpush1.msra.mxu0 0.0
    %5535 = vmatprep.subr.mxu0 0.0
    %5536 = vmatpush1.msra.mxu0 0.0
    %5537 = vmatprep.subr.mxu0 0.0
    %5538 = vmatpush1.msra.mxu0 0.0
    %5539 = vmatprep.subr.mxu0 0.0
    %5540 = vmatpush1.msra.mxu0 0.0
    %5541 = vmatprep.subr.mxu0 0.0
    %5542 = vmatpush1.msra.mxu0 0.0
    %5543 = vmatprep.subr.mxu0 0.0
    %5544 = vmatpush1.msra.mxu0 0.0
    %5545 = vmatprep.subr.mxu0 0.0
    %5546 = vmatpush1.msra.mxu0 0.0
    %5547 = vmatprep.subr.mxu0 0.0
    %5548 = vmatpush1.msra.mxu0 0.0
    %5549 = vmatprep.subr.mxu0 0.0
    %5550 = vmatpush1.msra.mxu0 0.0
    %5551 = vmatprep.subr.mxu0 0.0
    %5552 = vmatpush1.msra.mxu0 0.0
    %5553 = vmatprep.subr.mxu0 0.0
    %5554 = vmatpush1.msra.mxu0 0.0
    %5555 = vmatprep.subr.mxu0 0.0
    %5556 = vmatpush1.msra.mxu0 0.0
    %5557 = vmatprep.subr.mxu0 0.0
    %5558 = vmatpush1.msra.mxu0 0.0
    %5559 = vmatprep.subr.mxu0 0.0
    %5560 = vmatpush1.msra.mxu0 0.0
    %5561 = vmatprep.subr.mxu0 0.0
    %5562 = vmatpush1.msra.mxu0 0.0
    %5563 = vmatprep.subr.mxu0 0.0
    %5564 = vmatpush1.msra.mxu0 0.0
    %5565 = vmatprep.subr.mxu0 0.0
    %5566 = vmatpush1.msra.mxu0 0.0
    %5567 = vmatprep.subr.mxu0 0.0
    %5568 = vmatpush1.msra.mxu0 0.0
    %5569 = vmatprep.subr.mxu0 0.0
    %5570 = vmatpush1.msra.mxu0 0.0
    %5571 = vmatprep.subr.mxu0 0.0
    %5572 = vmatpush1.msra.mxu0 0.0
    %5573 = vmatprep.subr.mxu0 0.0
    %5574 = vmatpush1.msra.mxu0 0.0
    %5575 = vmatprep.subr.mxu0 0.0
    %5576 = vmatpush1.msra.mxu0 0.0
    %5577 = vmatprep.subr.mxu0 0.0
    %5578 = vmatpush1.msra.mxu0 0.0
    %5579 = vmatprep.subr.mxu0 0.0
    %5580 = vmatpush1.msra.mxu0 0.0
    %5581 = vmatprep.subr.mxu0 0.0
    %5582 = vmatpush1.msra.mxu0 0.0
    %5583 = vmatprep.subr.mxu0 0.0
    %5584 = vmatpush1.msra.mxu0 0.0
    %5585 = vmatprep.subr.mxu0 0.0
    %5586 = vmatpush1.msra.mxu0 0.0
    %5587 = vmatprep.subr.mxu0 0.0
    %5588 = vmatpush1.msra.mxu0 0.0
    %5589 = vmatprep.subr.mxu0 0.0
    %5590 = vmatpush1.msra.mxu0 0.0
    %5591 = vmatprep.subr.mxu0 0.0
    %5592 = vmatpush1.msra.mxu0 0.0
    %5593 = vmatprep.mubr.f32.mxu0 0.0
    %5594 = vmatmul.mubr.f32.gmra.mrb[0].mxu0 %v5494
    %v5595 = vpop.f32.mrb[0].mxu0
    %v5596 = vadd.f32 0.0, %v5595
    %v5597 = vpop.f32.mrb[0].mxu0
    %5598 = vmatprep.mubr.f32.mxu0 0.0
    %5599 = vmatmul.mubr.f32.gmra.mrb[0].mxu0 %v5497
    %v5600 = vpop.f32.mrb[0].mxu0
    %v5601 = vadd.f32 0.0, %v5600
    %v5602 = vpop.f32.mrb[0].mxu0
    %5603 = vmatprep.mubr.f32.mxu0 0.0
    %5604 = vmatmul.mubr.f32.gmra.mrb[0].mxu0 %v5500
    %v5605 = vpop.f32.mrb[0].mxu0
    %v5606 = vadd.f32 0.0, %v5605
    %v5607 = vpop.f32.mrb[0].mxu0
    %5608 = vmatprep.mubr.f32.mxu0 0.0
    %5609 = vmatmul.mubr.f32.gmra.mrb[0].mxu0 %v5503
    %v5610 = vpop.f32.mrb[0].mxu0
    %v5611 = vadd.f32 0.0, %v5610
    %v5612 = vpop.f32.mrb[0].mxu0
    %5613 = vmatprep.mubr.f32.mxu0 0.0
    %5614 = vmatmul.mubr.f32.gmra.mrb[0].mxu0 %v5506
    %v5615 = vpop.f32.mrb[0].mxu0
    %v5616 = vadd.f32 0.0, %v5615
    %v5617 = vpop.f32.mrb[0].mxu0
    %5618 = vmatprep.mubr.f32.mxu0 0.0
    %5619 = vmatmul.mubr.f32.gmra.mrb[0].mxu0 %v5509
    %v5620 = vpop.f32.mrb[0].mxu0
    %v5621 = vadd.f32 0.0, %v5620
    %v5622 = vpop.f32.mrb[0].mxu0
    %5623 = vmatprep.mubr.f32.mxu0 0.0
    %5624 = vmatmul.mubr.f32.gmra.mrb[0].mxu0 %v5512
    %v5625 = vpop.f32.mrb[0].mxu0
    %v5626 = vadd.f32 0.0, %v5625
    %v5627 = vpop.f32.mrb[0].mxu0
    %5628 = vmatprep.mubr.f32.mxu0 0.0
    %5629 = vmatmul.mubr.f32.gmra.mrb[0].mxu0 %v5515
    %v5630 = vpop.f32.mrb[0].mxu0
    %v5631 = vadd.f32 0.0, %v5630
    %v5632 = vpop.f32.mrb[0].mxu0
    %5633 = vmatprep.mubr.f32.mxu0 0.0
    %5634 = vmatmul.mubr.f32.gmra.mrb[0].mxu0 %v5518
    %v5635 = vpop.f32.mrb[0].mxu0
    %v5636 = vadd.f32 0.0, %v5635
    %v5637 = vpop.f32.mrb[0].mxu0
    %5638 = vmatprep.mubr.f32.mxu0 0.0
    %5639 = vmatmul.mubr.f32.gmra.mrb[0].mxu0 %v5521
    %v5640 = vpop.f32.mrb[0].mxu0
    %v5641 = vadd.f32 0.0, %v5640
    %v5642 = vpop.f32.mrb[0].mxu0
    %5643 = vmatprep.mubr.f32.mxu0 0.0
    %5644 = vmatmul.mubr.f32.gmra.mrb[0].mxu0 %v5524
    %v5645 = vpop.f32.mrb[0].mxu0
    %v5646 = vadd.f32 0.0, %v5645
    %v5647 = vpop.f32.mrb[0].mxu0
    %5648 = vmatprep.mubr.f32.mxu0 0.0
    %5649 = vmatmul.mubr.f32.gmra.mrb[0].mxu0 %v5527
    %v5650 = vpop.f32.mrb[0].mxu0
    %v5651 = vadd.f32 0.0, %v5650
    %v5652 = vpop.f32.mrb[0].mxu0
    %5653 = vdwg.mxu0
    %v5654 = vmul.f32 %v4539, %v5310
    %v5655 = vmul.f32 %v4540, %v5315
    %v5656 = vmul.f32 %v4541, %v5320
    %v5657 = vmul.f32 %v4542, %v5325
    %v5658 = vmul.f32 %v4543, %v5330
    %v5659 = vmul.f32 %v4544, %v5335
    %v5660 = vmul.f32 %v4545, %v5340
    %v5661 = vmul.f32 %v4546, %v5345
    %v5662 = vmul.f32 %v4547, %v5350
    %v5663 = vmul.f32 %v4548, %v5355
    %v5664 = vmul.f32 %v4549, %v5360
    %v5665 = vmul.f32 %v4550, %v5365
    %v5666 = vadd.f32 %v5654, %v5596
    %v5667 = vadd.f32 %v5655, %v5601
    %v5668 = vadd.f32 %v5656, %v5606
    %v5669 = vadd.f32 %v5657, %v5611
    %v5670 = vadd.f32 %v5658, %v5616
    %v5671 = vadd.f32 %v5659, %v5621
    %v5672 = vadd.f32 %v5660, %v5626
    %v5673 = vadd.f32 %v5661, %v5631
    %v5674 = vadd.f32 %v5662, %v5636
    %v5675 = vadd.f32 %v5663, %v5641
    %v5676 = vadd.f32 %v5664, %v5646
    %v5677 = vadd.f32 %v5665, %v5651
    %v5678 = vmax.f32 %v5666, 0.0
    %v5679 = vmax.f32 %v5667, 0.0
    %v5680 = vmax.f32 %v5668, 0.0
    %v5681 = vmax.f32 %v5669, 0.0
    %v5682 = vmax.f32 %v5670, 0.0
    %v5683 = vmax.f32 %v5671, 0.0
    %v5684 = vmax.f32 %v5672, 0.0
    %v5685 = vmax.f32 %v5673, 0.0
    %v5686 = vmax.f32 %v5674, 0.0
    %v5687 = vmax.f32 %v5675, 0.0
    %v5688 = vmax.f32 %v5676, 0.0
    %v5689 = vmax.f32 %v5677, 0.0
    %v5690 = vpack.c.bf16 %v5679, %v5678
    %v5691 = vpack.c.bf16 %v5681, %v5680
    %v5692 = vpack.c.bf16 %v5683, %v5682
    %v5693 = vpack.c.bf16 %v5685, %v5684
    %v5694 = vpack.c.bf16 %v5687, %v5686
    %v5695 = vpack.c.bf16 %v5689, %v5688
    %v5696 = vld [vmem:[%s15] sm:$0xf]
    %v5697 = vld [vmem:[%s15 + $0x4] sm:$0xf]
    %v5698 = vld [vmem:[%s15 + $0x8] sm:$0xf]
    %v5699 = vld [vmem:[%s15 + $0xc] sm:$0xf]
    %v5700 = vld [vmem:[%s15 + $0x10] sm:$0xf]
    %v5701 = vld [vmem:[%s15 + $0x14] sm:$0xf]
    %v5702 = vld [vmem:[%s15 + $0x18] sm:$0xf]
    %v5703 = vld [vmem:[%s15 + $0x1c] sm:$0xf]
    %v5704 = vld [vmem:[%s15 + $0x20] sm:$0xf]
    %v5705 = vld [vmem:[%s15 + $0x24] sm:$0xf]
    %v5716 = vunpack.c.l.b16 %v5696
    %v5717 = vunpack.c.l.b16 %v5697
    %v5718 = vunpack.c.l.b16 %v5698
    %v5719 = vunpack.c.l.b16 %v5699
    %v5720 = vunpack.c.l.b16 %v5700
    %v5721 = vunpack.c.l.b16 %v5701
    %v5722 = vunpack.c.l.b16 %v5702
    %v5723 = vunpack.c.l.b16 %v5703
    %v5724 = vunpack.c.l.b16 %v5704
    %v5725 = vunpack.c.l.b16 %v5705
    %v5726 = vpack.c.b16 %v5717, %v5716
    %v5727 = vpack.c.b16 %v5719, %v5718
    %v5728 = vpack.c.b16 %v5721, %v5720
    %v5729 = vpack.c.b16 %v5723, %v5722
    %v5730 = vpack.c.b16 %v5725, %v5724
    %v5737 = vsel %vm1375, %v5690, 0
    %v5740 = vsel %vm1375, %v5691, 0
    %v5743 = vsel %vm1375, %v5692, 0
    %v5746 = vsel %vm1375, %v5693, 0
    %v5749 = vsel %vm1375, %v5694, 0
    %v5752 = vsel %vm1375, %v5695, 0
    %5754 = vmatprep.subr.bf16.mxu0 0
    %5755 = vmatpush1.bf16.msra.mxu0 %v5726
    %5756 = vmatprep.subr.bf16.mxu0 0
    %5757 = vmatpush1.bf16.msra.mxu0 %v5727
    %5758 = vmatprep.subr.bf16.mxu0 0
    %5759 = vmatpush1.bf16.msra.mxu0 %v5728
    %5760 = vmatprep.subr.bf16.mxu0 0
    %5761 = vmatpush1.bf16.msra.mxu0 %v5729
    %5762 = vmatprep.subr.bf16.mxu0 0
    %5763 = vmatpush1.bf16.msra.mxu0 %v5730
    %5764 = vmatprep.subr.bf16.mxu0 0
    %5765 = vmatpush1.bf16.msra.mxu0 0
    %5766 = vmatprep.subr.bf16.mxu0 0
    %5767 = vmatpush1.bf16.msra.mxu0 0
    %5768 = vmatprep.subr.bf16.mxu0 0
    %5769 = vmatpush1.bf16.msra.mxu0 0
    %5770 = vmatprep.subr.bf16.mxu0 0
    %5771 = vmatpush1.bf16.msra.mxu0 0
    %5772 = vmatprep.subr.bf16.mxu0 0
    %5773 = vmatpush1.bf16.msra.mxu0 0
    %5774 = vmatprep.subr.bf16.mxu0 0
    %5775 = vmatpush1.bf16.msra.mxu0 0
    %5776 = vmatprep.subr.bf16.mxu0 0
    %5777 = vmatpush1.bf16.msra.mxu0 0
    %5778 = vmatprep.subr.bf16.mxu0 0
    %5779 = vmatpush1.bf16.msra.mxu0 0
    %5780 = vmatprep.subr.bf16.mxu0 0
    %5781 = vmatpush1.bf16.msra.mxu0 0
    %5782 = vmatprep.subr.bf16.mxu0 0
    %5783 = vmatpush1.bf16.msra.mxu0 0
    %5784 = vmatprep.subr.bf16.mxu0 0
    %5785 = vmatpush1.bf16.msra.mxu0 0
    %5786 = vmatprep.mubr.bf16.mxu0 0
    %5787 = vmatmul.mubr.bf16.gmra.mrb[0].mxu0 %v5737
    %v5788 = vpop.f32.mrb[0].mxu0
    %v5789 = vadd.f32 0.0, %v5788
    %v5790 = vpop.f32.mrb[0].mxu0
    %v5791 = vpop.f32.mrb[0].mxu0
    %v5792 = vadd.f32 0.0, %v5791
    %v5793 = vpop.f32.mrb[0].mxu0
    %5794 = vmatprep.mubr.bf16.mxu0 0
    %5795 = vmatmul.mubr.bf16.gmra.mrb[0].mxu0 %v5740
    %v5796 = vpop.f32.mrb[0].mxu0
    %v5797 = vadd.f32 0.0, %v5796
    %v5798 = vpop.f32.mrb[0].mxu0
    %v5799 = vpop.f32.mrb[0].mxu0
    %v5800 = vadd.f32 0.0, %v5799
    %v5801 = vpop.f32.mrb[0].mxu0
    %5802 = vmatprep.mubr.bf16.mxu0 0
    %5803 = vmatmul.mubr.bf16.gmra.mrb[0].mxu0 %v5743
    %v5804 = vpop.f32.mrb[0].mxu0
    %v5805 = vadd.f32 0.0, %v5804
    %v5806 = vpop.f32.mrb[0].mxu0
    %v5807 = vpop.f32.mrb[0].mxu0
    %v5808 = vadd.f32 0.0, %v5807
    %v5809 = vpop.f32.mrb[0].mxu0
    %5810 = vmatprep.mubr.bf16.mxu0 0
    %5811 = vmatmul.mubr.bf16.gmra.mrb[0].mxu0 %v5746
    %v5812 = vpop.f32.mrb[0].mxu0
    %v5813 = vadd.f32 0.0, %v5812
    %v5814 = vpop.f32.mrb[0].mxu0
    %v5815 = vpop.f32.mrb[0].mxu0
    %v5816 = vadd.f32 0.0, %v5815
    %v5817 = vpop.f32.mrb[0].mxu0
    %5818 = vmatprep.mubr.bf16.mxu0 0
    %5819 = vmatmul.mubr.bf16.gmra.mrb[0].mxu0 %v5749
    %v5820 = vpop.f32.mrb[0].mxu0
    %v5821 = vadd.f32 0.0, %v5820
    %v5822 = vpop.f32.mrb[0].mxu0
    %v5823 = vpop.f32.mrb[0].mxu0
    %v5824 = vadd.f32 0.0, %v5823
    %v5825 = vpop.f32.mrb[0].mxu0
    %5826 = vmatprep.mubr.bf16.mxu0 0
    %5827 = vmatmul.mubr.bf16.gmra.mrb[0].mxu0 %v5752
    %v5828 = vpop.f32.mrb[0].mxu0
    %v5829 = vadd.f32 0.0, %v5828
    %v5830 = vpop.f32.mrb[0].mxu0
    %v5831 = vpop.f32.mrb[0].mxu0
    %v5832 = vadd.f32 0.0, %v5831
    %v5833 = vpop.f32.mrb[0].mxu0
    %5834 = vdwg.mxu0
    %s5835 = scalar_lea.vmem %s15, 40
    %v5836 = vld [vmem:[%s5835] sm:$0xf]
    %v5837 = vld [vmem:[%s5835 + $0x4] sm:$0xf]
    %v5838 = vld [vmem:[%s5835 + $0x8] sm:$0xf]
    %v5839 = vld [vmem:[%s5835 + $0xc] sm:$0xf]
    %v5840 = vld [vmem:[%s5835 + $0x10] sm:$0xf]
    %v5841 = vld [vmem:[%s5835 + $0x14] sm:$0xf]
    %v5842 = vld [vmem:[%s5835 + $0x18] sm:$0xf]
    %v5843 = vld [vmem:[%s5835 + $0x1c] sm:$0xf]
    %v5844 = vld [vmem:[%s5835 + $0x20] sm:$0xf]
    %v5845 = vld [vmem:[%s5835 + $0x24] sm:$0xf]
    %v5856 = vunpack.c.l.b16 %v5836
    %v5857 = vunpack.c.l.b16 %v5837
    %v5858 = vunpack.c.l.b16 %v5838
    %v5859 = vunpack.c.l.b16 %v5839
    %v5860 = vunpack.c.l.b16 %v5840
    %v5861 = vunpack.c.l.b16 %v5841
    %v5862 = vunpack.c.l.b16 %v5842
    %v5863 = vunpack.c.l.b16 %v5843
    %v5864 = vunpack.c.l.b16 %v5844
    %v5865 = vunpack.c.l.b16 %v5845
    %v5866 = vpack.c.b16 %v5857, %v5856
    %v5867 = vpack.c.b16 %v5859, %v5858
    %v5868 = vpack.c.b16 %v5861, %v5860
    %v5869 = vpack.c.b16 %v5863, %v5862
    %v5870 = vpack.c.b16 %v5865, %v5864
    %5876 = vmatprep.subr.bf16.mxu0 0
    %5877 = vmatpush1.bf16.msra.mxu0 %v5866
    %5878 = vmatprep.subr.bf16.mxu0 0
    %5879 = vmatpush1.bf16.msra.mxu0 %v5867
    %5880 = vmatprep.subr.bf16.mxu0 0
    %5881 = vmatpush1.bf16.msra.mxu0 %v5868
    %5882 = vmatprep.subr.bf16.mxu0 0
    %5883 = vmatpush1.bf16.msra.mxu0 %v5869
    %5884 = vmatprep.subr.bf16.mxu0 0
    %5885 = vmatpush1.bf16.msra.mxu0 %v5870
    %5886 = vmatprep.subr.bf16.mxu0 0
    %5887 = vmatpush1.bf16.msra.mxu0 0
    %5888 = vmatprep.subr.bf16.mxu0 0
    %5889 = vmatpush1.bf16.msra.mxu0 0
    %5890 = vmatprep.subr.bf16.mxu0 0
    %5891 = vmatpush1.bf16.msra.mxu0 0
    %5892 = vmatprep.subr.bf16.mxu0 0
    %5893 = vmatpush1.bf16.msra.mxu0 0
    %5894 = vmatprep.subr.bf16.mxu0 0
    %5895 = vmatpush1.bf16.msra.mxu0 0
    %5896 = vmatprep.subr.bf16.mxu0 0
    %5897 = vmatpush1.bf16.msra.mxu0 0
    %5898 = vmatprep.subr.bf16.mxu0 0
    %5899 = vmatpush1.bf16.msra.mxu0 0
    %5900 = vmatprep.subr.bf16.mxu0 0
    %5901 = vmatpush1.bf16.msra.mxu0 0
    %5902 = vmatprep.subr.bf16.mxu0 0
    %5903 = vmatpush1.bf16.msra.mxu0 0
    %5904 = vmatprep.subr.bf16.mxu0 0
    %5905 = vmatpush1.bf16.msra.mxu0 0
    %5906 = vmatprep.subr.bf16.mxu0 0
    %5907 = vmatpush1.bf16.msra.mxu0 0
    %5908 = vmatprep.mubr.bf16.mxu0 0
    %5909 = vmatmul.mubr.bf16.gmra.mrb[0].mxu0 %v5737
    %v5910 = vpop.f32.mrb[0].mxu0
    %v5911 = vadd.f32 0.0, %v5910
    %v5912 = vpop.f32.mrb[0].mxu0
    %v5913 = vpop.f32.mrb[0].mxu0
    %v5914 = vadd.f32 0.0, %v5913
    %v5915 = vpop.f32.mrb[0].mxu0
    %5916 = vmatprep.mubr.bf16.mxu0 0
    %5917 = vmatmul.mubr.bf16.gmra.mrb[0].mxu0 %v5740
    %v5918 = vpop.f32.mrb[0].mxu0
    %v5919 = vadd.f32 0.0, %v5918
    %v5920 = vpop.f32.mrb[0].mxu0
    %v5921 = vpop.f32.mrb[0].mxu0
    %v5922 = vadd.f32 0.0, %v5921
    %v5923 = vpop.f32.mrb[0].mxu0
    %5924 = vmatprep.mubr.bf16.mxu0 0
    %5925 = vmatmul.mubr.bf16.gmra.mrb[0].mxu0 %v5743
    %v5926 = vpop.f32.mrb[0].mxu0
    %v5927 = vadd.f32 0.0, %v5926
    %v5928 = vpop.f32.mrb[0].mxu0
    %v5929 = vpop.f32.mrb[0].mxu0
    %v5930 = vadd.f32 0.0, %v5929
    %v5931 = vpop.f32.mrb[0].mxu0
    %5932 = vmatprep.mubr.bf16.mxu0 0
    %5933 = vmatmul.mubr.bf16.gmra.mrb[0].mxu0 %v5746
    %v5934 = vpop.f32.mrb[0].mxu0
    %v5935 = vadd.f32 0.0, %v5934
    %v5936 = vpop.f32.mrb[0].mxu0
    %v5937 = vpop.f32.mrb[0].mxu0
    %v5938 = vadd.f32 0.0, %v5937
    %v5939 = vpop.f32.mrb[0].mxu0
    %5940 = vmatprep.mubr.bf16.mxu0 0
    %5941 = vmatmul.mubr.bf16.gmra.mrb[0].mxu0 %v5749
    %v5942 = vpop.f32.mrb[0].mxu0
    %v5943 = vadd.f32 0.0, %v5942
    %v5944 = vpop.f32.mrb[0].mxu0
    %v5945 = vpop.f32.mrb[0].mxu0
    %v5946 = vadd.f32 0.0, %v5945
    %v5947 = vpop.f32.mrb[0].mxu0
    %5948 = vmatprep.mubr.bf16.mxu0 0
    %5949 = vmatmul.mubr.bf16.gmra.mrb[0].mxu0 %v5752
    %v5950 = vpop.f32.mrb[0].mxu0
    %v5951 = vadd.f32 0.0, %v5950
    %v5952 = vpop.f32.mrb[0].mxu0
    %v5953 = vpop.f32.mrb[0].mxu0
    %v5954 = vadd.f32 0.0, %v5953
    %v5955 = vpop.f32.mrb[0].mxu0
    %5956 = vdwg.mxu0
    %v5957 = vmax.f32 %v5789, %v5911
    %v5958 = vmax.f32 %v5792, %v5914
    %v5959 = vmax.f32 %v5797, %v5919
    %v5960 = vmax.f32 %v5800, %v5922
    %v5961 = vmax.f32 %v5805, %v5927
    %v5962 = vmax.f32 %v5808, %v5930
    %v5963 = vmax.f32 %v5813, %v5935
    %v5964 = vmax.f32 %v5816, %v5938
    %v5965 = vmax.f32 %v5821, %v5943
    %v5966 = vmax.f32 %v5824, %v5946
    %v5967 = vmax.f32 %v5829, %v5951
    %v5968 = vmax.f32 %v5832, %v5954
    %v5969 = vpack.c.bf16 %v5958, %v5957
    %v5970 = vpack.c.bf16 %v5960, %v5959
    %v5971 = vpack.c.bf16 %v5962, %v5961
    %v5972 = vpack.c.bf16 %v5964, %v5963
    %v5973 = vpack.c.bf16 %v5966, %v5965
    %v5974 = vpack.c.bf16 %v5968, %v5967
    %v5975 = vld [vmem:[%s16] sm:$0xf]
    %v5976 = vld [vmem:[%s16 + $0x4] sm:$0xf]
    %v5977 = vld [vmem:[%s16 + $0x8] sm:$0xf]
    %v5978 = vld [vmem:[%s16 + $0xc] sm:$0xf]
    %v5979 = vld [vmem:[%s16 + $0x10] sm:$0xf]
    %v5985 = vunpack.c.l.b16 %v5975
    %v5986 = vunpack.c.l.b16 %v5976
    %v5987 = vunpack.c.l.b16 %v5977
    %v5988 = vunpack.c.l.b16 %v5978
    %v5989 = vunpack.c.l.b16 %v5979
    %v5990 = vpack.c.b16 %v5986, %v5985
    %v5991 = vpack.c.b16 %v5988, %v5987
    %v5992 = vpack.c.b16 %v5989, %v5989
    %v5994 = vsel %vm4024, %v5990, 0
    %v5997 = vsel %vm4024, %v5991, 0
    %v6000 = vsel %vm4024, %v5992, 0
    %6002 = vmatprep.subr.bf16.mxu0 0
    %6003 = vmatpush1.bf16.msra.mxu0 %v5969
    %6004 = vmatprep.subr.bf16.mxu0 0
    %6005 = vmatpush1.bf16.msra.mxu0 %v5970
    %6006 = vmatprep.subr.bf16.mxu0 0
    %6007 = vmatpush1.bf16.msra.mxu0 %v5971
    %6008 = vmatprep.subr.bf16.mxu0 0
    %6009 = vmatpush1.bf16.msra.mxu0 %v5972
    %6010 = vmatprep.subr.bf16.mxu0 0
    %6011 = vmatpush1.bf16.msra.mxu0 %v5973
    %6012 = vmatprep.subr.bf16.mxu0 0
    %6013 = vmatpush1.bf16.msra.mxu0 %v5974
    %6014 = vmatprep.subr.bf16.mxu0 0
    %6015 = vmatpush1.bf16.msra.mxu0 0
    %6016 = vmatprep.subr.bf16.mxu0 0
    %6017 = vmatpush1.bf16.msra.mxu0 0
    %6018 = vmatprep.subr.bf16.mxu0 0
    %6019 = vmatpush1.bf16.msra.mxu0 0
    %6020 = vmatprep.subr.bf16.mxu0 0
    %6021 = vmatpush1.bf16.msra.mxu0 0
    %6022 = vmatprep.subr.bf16.mxu0 0
    %6023 = vmatpush1.bf16.msra.mxu0 0
    %6024 = vmatprep.subr.bf16.mxu0 0
    %6025 = vmatpush1.bf16.msra.mxu0 0
    %6026 = vmatprep.subr.bf16.mxu0 0
    %6027 = vmatpush1.bf16.msra.mxu0 0
    %6028 = vmatprep.subr.bf16.mxu0 0
    %6029 = vmatpush1.bf16.msra.mxu0 0
    %6030 = vmatprep.subr.bf16.mxu0 0
    %6031 = vmatpush1.bf16.msra.mxu0 0
    %6032 = vmatprep.subr.bf16.mxu0 0
    %6033 = vmatpush1.bf16.msra.mxu0 0
    %6034 = vmatprep.mubr.bf16.mxu0 0
    %6035 = vmatmul.mubr.bf16.gmra.mrb[0].mxu0 %v5994
    %v6036 = vpop.f32.mrb[0].mxu0
    %v6037 = vadd.f32 0.0, %v6036
    %v6038 = vpop.f32.mrb[0].mxu0
    %v6039 = vpop.f32.mrb[0].mxu0
    %v6040 = vadd.f32 0.0, %v6039
    %v6041 = vpop.f32.mrb[0].mxu0
    %6042 = vmatprep.mubr.bf16.mxu0 0
    %6043 = vmatmul.mubr.bf16.gmra.mrb[0].mxu0 %v5997
    %v6044 = vpop.f32.mrb[0].mxu0
    %v6045 = vadd.f32 0.0, %v6044
    %v6046 = vpop.f32.mrb[0].mxu0
    %v6047 = vpop.f32.mrb[0].mxu0
    %v6048 = vadd.f32 0.0, %v6047
    %v6049 = vpop.f32.mrb[0].mxu0
    %6050 = vmatprep.mubr.bf16.mxu0 0
    %6051 = vmatmul.mubr.bf16.gmra.mrb[0].mxu0 %v6000
    %v6052 = vpop.f32.mrb[0].mxu0
    %v6053 = vadd.f32 0.0, %v6052
    %v6054 = vpop.f32.mrb[0].mxu0
    %v6055 = vpop.f32.mrb[0].mxu0
    %v6056 = vpop.f32.mrb[0].mxu0
    %6057 = vdwg.mxu0
    %s6058 = scalar_lea.vmem %s16, 20
    %v6059 = vld [vmem:[%s6058] sm:$0xf]
    %v6060 = vld [vmem:[%s6058 + $0x4] sm:$0xf]
    %v6061 = vld [vmem:[%s6058 + $0x8] sm:$0xf]
    %v6062 = vld [vmem:[%s6058 + $0xc] sm:$0xf]
    %v6063 = vld [vmem:[%s6058 + $0x10] sm:$0xf]
    %v6069 = vunpack.c.l.b16 %v6059
    %v6070 = vunpack.c.l.b16 %v6060
    %v6071 = vunpack.c.l.b16 %v6061
    %v6072 = vunpack.c.l.b16 %v6062
    %v6073 = vunpack.c.l.b16 %v6063
    %v6074 = vpack.c.b16 %v6070, %v6069
    %v6075 = vpack.c.b16 %v6072, %v6071
    %v6076 = vpack.c.b16 %v6073, %v6073
    %v6078 = vsel %vm4024, %v6074, 0
    %v6081 = vsel %vm4024, %v6075, 0
    %v6084 = vsel %vm4024, %v6076, 0
    %6086 = vmatprep.subr.bf16.mxu0 0
    %6087 = vmatpush1.bf16.msra.mxu0 %v5969
    %6088 = vmatprep.subr.bf16.mxu0 0
    %6089 = vmatpush1.bf16.msra.mxu0 %v5970
    %6090 = vmatprep.subr.bf16.mxu0 0
    %6091 = vmatpush1.bf16.msra.mxu0 %v5971
    %6092 = vmatprep.subr.bf16.mxu0 0
    %6093 = vmatpush1.bf16.msra.mxu0 %v5972
    %6094 = vmatprep.subr.bf16.mxu0 0
    %6095 = vmatpush1.bf16.msra.mxu0 %v5973
    %6096 = vmatprep.subr.bf16.mxu0 0
    %6097 = vmatpush1.bf16.msra.mxu0 %v5974
    %6098 = vmatprep.subr.bf16.mxu0 0
    %6099 = vmatpush1.bf16.msra.mxu0 0
    %6100 = vmatprep.subr.bf16.mxu0 0
    %6101 = vmatpush1.bf16.msra.mxu0 0
    %6102 = vmatprep.subr.bf16.mxu0 0
    %6103 = vmatpush1.bf16.msra.mxu0 0
    %6104 = vmatprep.subr.bf16.mxu0 0
    %6105 = vmatpush1.bf16.msra.mxu0 0
    %6106 = vmatprep.subr.bf16.mxu0 0
    %6107 = vmatpush1.bf16.msra.mxu0 0
    %6108 = vmatprep.subr.bf16.mxu0 0
    %6109 = vmatpush1.bf16.msra.mxu0 0
    %6110 = vmatprep.subr.bf16.mxu0 0
    %6111 = vmatpush1.bf16.msra.mxu0 0
    %6112 = vmatprep.subr.bf16.mxu0 0
    %6113 = vmatpush1.bf16.msra.mxu0 0
    %6114 = vmatprep.subr.bf16.mxu0 0
    %6115 = vmatpush1.bf16.msra.mxu0 0
    %6116 = vmatprep.subr.bf16.mxu0 0
    %6117 = vmatpush1.bf16.msra.mxu0 0
    %6118 = vmatprep.mubr.bf16.mxu0 0
    %6119 = vmatmul.mubr.bf16.gmra.mrb[0].mxu0 %v6078
    %v6120 = vpop.f32.mrb[0].mxu0
    %v6121 = vadd.f32 0.0, %v6120
    %v6122 = vpop.f32.mrb[0].mxu0
    %v6123 = vpop.f32.mrb[0].mxu0
    %v6124 = vadd.f32 0.0, %v6123
    %v6125 = vpop.f32.mrb[0].mxu0
    %6126 = vmatprep.mubr.bf16.mxu0 0
    %6127 = vmatmul.mubr.bf16.gmra.mrb[0].mxu0 %v6081
    %v6128 = vpop.f32.mrb[0].mxu0
    %v6129 = vadd.f32 0.0, %v6128
    %v6130 = vpop.f32.mrb[0].mxu0
    %v6131 = vpop.f32.mrb[0].mxu0
    %v6132 = vadd.f32 0.0, %v6131
    %v6133 = vpop.f32.mrb[0].mxu0
    %6134 = vmatprep.mubr.bf16.mxu0 0
    %6135 = vmatmul.mubr.bf16.gmra.mrb[0].mxu0 %v6084
    %v6136 = vpop.f32.mrb[0].mxu0
    %v6137 = vadd.f32 0.0, %v6136
    %v6138 = vpop.f32.mrb[0].mxu0
    %v6139 = vpop.f32.mrb[0].mxu0
    %v6140 = vpop.f32.mrb[0].mxu0
    %6141 = vdwg.mxu0
    %v6142 = vmax.f32 %v6037, %v6121
    %v6143 = vmax.f32 %v6040, %v6124
    %v6144 = vmax.f32 %v6045, %v6129
    %v6145 = vmax.f32 %v6048, %v6132
    %v6146 = vmax.f32 %v6053, %v6137
    %v6147 = vld [vmem:[%s18] sm:$0x7]
    %v6148 = vld [vmem:[%s19] sm:$0xff]
    %v6149 = vld [vmem:[%s20] sm:$0xff]
    %v6150 = vld [vmem:[%s20 + $0x8] sm:$0xff]
    %v6151 = vld [vmem:[%s20 + $0x10] sm:$0xff]
    %v6152 = vld [vmem:[%s20 + $0x18] sm:$0xff]
    %v6153 = vld [vmem:[%s20 + $0x20] sm:$0xff]
    %v6154 = vld [vmem:[%s21] sm:$0xff]
    %v6155 = vld [vmem:[%s21 + $0x8] sm:$0xff]
    %v6156 = vld [vmem:[%s21 + $0x10] sm:$0xff]
    %v6157 = vld [vmem:[%s22] sm:$0xff]
    %vm6158 = vcmask 326656
    %6159 = vst.msk [vmem:[#allocation2] sm:$0xff] %vm6158, %v6142
    %6160 = vst.msk [vmem:[#allocation2 + $0x8] sm:$0xff] %vm6158, %v6143
    %6161 = vst.msk [vmem:[#allocation2 + $0x10] sm:$0xff] %vm6158, %v6144
    %6162 = vst.msk [vmem:[#allocation2 + $0x18] sm:$0xff] %vm6158, %v6145
    %6163 = vst.msk [vmem:[#allocation2 + $0x20] sm:$0xff] %vm6158, %v6146
    %6164 = vst.msk [vmem:[#allocation2 + $0x28] sm:$0xff] %vm6158, 0.0
    %v6165 = vpack.c.bf16 %v6143, %v6142
    %v6166 = vpack.c.bf16 %v6145, %v6144
    %v6167 = vpack.c.bf16 %v6146, %v6146
    %v6168 = vld [vmem:[%s17] sm:$0xf]
    %v6169 = vld [vmem:[%s17 + $0x4] sm:$0xf]
    %v6170 = vld [vmem:[%s17 + $0x8] sm:$0xf]
    %v6171 = vld [vmem:[%s17 + $0xc] sm:$0xf]
    %v6172 = vld [vmem:[%s17 + $0x10] sm:$0xf]
    %v6173 = vld [vmem:[#allocation2 + $0x1] sm:$0xff]
    %v6174 = vld [vmem:[#allocation2 + $0x9] sm:$0xff]
    %v6175 = vld [vmem:[#allocation2 + $0x11] sm:$0xff]
    %v6176 = vld [vmem:[#allocation2 + $0x19] sm:$0xff]
    %v6177 = vld [vmem:[#allocation2 + $0x21] sm:$0xff]
    %v6178 = vpack.c.bf16 %v6174, %v6173
    %v6179 = vpack.c.bf16 %v6176, %v6175
    %v6180 = vpack.c.bf16 %v6177, %v6177
    %s6181 = scalar_lea.vmem %s17, 20
    %v6182 = vld [vmem:[%s6181] sm:$0xf]
    %v6183 = vld [vmem:[%s6181 + $0x4] sm:$0xf]
    %v6184 = vld [vmem:[%s6181 + $0x8] sm:$0xf]
    %v6185 = vld [vmem:[%s6181 + $0xc] sm:$0xf]
    %v6186 = vld [vmem:[%s6181 + $0x10] sm:$0xf]
    %v6192 = vunpack.c.l.b16 %v6182
    %v6193 = vunpack.c.l.b16 %v6183
    %v6194 = vunpack.c.l.b16 %v6184
    %v6195 = vunpack.c.l.b16 %v6185
    %v6196 = vunpack.c.l.b16 %v6186
    %v6197 = vpack.c.b16 %v6193, %v6192
    %v6198 = vpack.c.b16 %v6195, %v6194
    %v6199 = vpack.c.b16 %v6196, %v6196
    %v6203 = vsel %vm6158, %v6178, 0
    %v6206 = vsel %vm6158, %v6179, 0
    %v6209 = vsel %vm6158, %v6180, 0
    %vm6211 = vcmask 1043456
    %v6213 = vsel %vm6211, %v6199, 0
    %6215 = vmatprep.subr.bf16.mxu0 0
    %6216 = vmatpush1.bf16.msra.mxu0 %v6197
    %6217 = vmatprep.subr.bf16.mxu0 0
    %6218 = vmatpush1.bf16.msra.mxu0 %v6198
    %6219 = vmatprep.subr.bf16.mxu0 0
    %6220 = vmatpush1.bf16.msra.mxu0 %v6213
    %6221 = vmatprep.subr.bf16.mxu0 0
    %6222 = vmatpush1.bf16.msra.mxu0 0
    %6223 = vmatprep.subr.bf16.mxu0 0
    %6224 = vmatpush1.bf16.msra.mxu0 0
    %6225 = vmatprep.subr.bf16.mxu0 0
    %6226 = vmatpush1.bf16.msra.mxu0 0
    %6227 = vmatprep.subr.bf16.mxu0 0
    %6228 = vmatpush1.bf16.msra.mxu0 0
    %6229 = vmatprep.subr.bf16.mxu0 0
    %6230 = vmatpush1.bf16.msra.mxu0 0
    %6231 = vmatprep.subr.bf16.mxu0 0
    %6232 = vmatpush1.bf16.msra.mxu0 0
    %6233 = vmatprep.subr.bf16.mxu0 0
    %6234 = vmatpush1.bf16.msra.mxu0 0
    %6235 = vmatprep.subr.bf16.mxu0 0
    %6236 = vmatpush1.bf16.msra.mxu0 0
    %6237 = vmatprep.subr.bf16.mxu0 0
    %6238 = vmatpush1.bf16.msra.mxu0 0
    %6239 = vmatprep.subr.bf16.mxu0 0
    %6240 = vmatpush1.bf16.msra.mxu0 0
    %6241 = vmatprep.subr.bf16.mxu0 0
    %6242 = vmatpush1.bf16.msra.mxu0 0
    %6243 = vmatprep.subr.bf16.mxu0 0
    %6244 = vmatpush1.bf16.msra.mxu0 0
    %6245 = vmatprep.subr.bf16.mxu0 0
    %6246 = vmatpush1.bf16.msra.mxu0 0
    %6247 = vmatprep.mubr.bf16.mxu0 0
    %6248 = vmatmul.mubr.bf16.gmra.mrb[0].mxu0 %v6203
    %v6249 = vpop.f32.mrb[0].mxu0
    %v6250 = vadd.f32 0.0, %v6249
    %v6251 = vpop.f32.mrb[0].mxu0
    %v6252 = vpop.f32.mrb[0].mxu0
    %v6253 = vadd.f32 0.0, %v6252
    %v6254 = vpop.f32.mrb[0].mxu0
    %6255 = vmatprep.mubr.bf16.mxu0 0
    %6256 = vmatmul.mubr.bf16.gmra.mrb[0].mxu0 %v6206
    %v6257 = vpop.f32.mrb[0].mxu0
    %v6258 = vadd.f32 0.0, %v6257
    %v6259 = vpop.f32.mrb[0].mxu0
    %v6260 = vpop.f32.mrb[0].mxu0
    %v6261 = vadd.f32 0.0, %v6260
    %v6262 = vpop.f32.mrb[0].mxu0
    %6263 = vmatprep.mubr.bf16.mxu0 0
    %6264 = vmatmul.mubr.bf16.gmra.mrb[0].mxu0 %v6209
    %v6265 = vpop.f32.mrb[0].mxu0
    %v6266 = vadd.f32 0.0, %v6265
    %v6267 = vpop.f32.mrb[0].mxu0
    %v6268 = vpop.f32.mrb[0].mxu0
    %v6269 = vpop.f32.mrb[0].mxu0
    %6270 = vdwg.mxu0
    %v6276 = vunpack.c.l.b16 %v6168
    %v6277 = vunpack.c.l.b16 %v6169
    %v6278 = vunpack.c.l.b16 %v6170
    %v6279 = vunpack.c.l.b16 %v6171
    %v6280 = vunpack.c.l.b16 %v6172
    %v6281 = vpack.c.b16 %v6277, %v6276
    %v6282 = vpack.c.b16 %v6279, %v6278
    %v6283 = vpack.c.b16 %v6280, %v6280
    %v6287 = vsel %vm6158, %v6165, 0
    %v6290 = vsel %vm6158, %v6166, 0
    %v6293 = vsel %vm6158, %v6167, 0
    %v6296 = vsel %vm6211, %v6283, 0
    %6298 = vmatprep.subr.bf16.mxu0 0
    %6299 = vmatpush1.bf16.msra.mxu0 %v6281
    %6300 = vmatprep.subr.bf16.mxu0 0
    %6301 = vmatpush1.bf16.msra.mxu0 %v6282
    %6302 = vmatprep.subr.bf16.mxu0 0
    %6303 = vmatpush1.bf16.msra.mxu0 %v6296
    %6304 = vmatprep.subr.bf16.mxu0 0
    %6305 = vmatpush1.bf16.msra.mxu0 0
    %6306 = vmatprep.subr.bf16.mxu0 0
    %6307 = vmatpush1.bf16.msra.mxu0 0
    %6308 = vmatprep.subr.bf16.mxu0 0
    %6309 = vmatpush1.bf16.msra.mxu0 0
    %6310 = vmatprep.subr.bf16.mxu0 0
    %6311 = vmatpush1.bf16.msra.mxu0 0
    %6312 = vmatprep.subr.bf16.mxu0 0
    %6313 = vmatpush1.bf16.msra.mxu0 0
    %6314 = vmatprep.subr.bf16.mxu0 0
    %6315 = vmatpush1.bf16.msra.mxu0 0
    %6316 = vmatprep.subr.bf16.mxu0 0
    %6317 = vmatpush1.bf16.msra.mxu0 0
    %6318 = vmatprep.subr.bf16.mxu0 0
    %6319 = vmatpush1.bf16.msra.mxu0 0
    %6320 = vmatprep.subr.bf16.mxu0 0
    %6321 = vmatpush1.bf16.msra.mxu0 0
    %6322 = vmatprep.subr.bf16.mxu0 0
    %6323 = vmatpush1.bf16.msra.mxu0 0
    %6324 = vmatprep.subr.bf16.mxu0 0
    %6325 = vmatpush1.bf16.msra.mxu0 0
    %6326 = vmatprep.subr.bf16.mxu0 0
    %6327 = vmatpush1.bf16.msra.mxu0 0
    %6328 = vmatprep.subr.bf16.mxu0 0
    %6329 = vmatpush1.bf16.msra.mxu0 0
    %6330 = vmatprep.mubr.bf16.mxu0 0
    %6331 = vmatmul.mubr.bf16.gmra.mrb[0].mxu0 %v6287
    %v6332 = vpop.f32.mrb[0].mxu0
    %v6333 = vadd.f32 %v6250, %v6332
    %v6334 = vpop.f32.mrb[0].mxu0
    %v6335 = vpop.f32.mrb[0].mxu0
    %v6336 = vadd.f32 %v6253, %v6335
    %v6337 = vpop.f32.mrb[0].mxu0
    %6338 = vmatprep.mubr.bf16.mxu0 0
    %6339 = vmatmul.mubr.bf16.gmra.mrb[0].mxu0 %v6290
    %v6340 = vpop.f32.mrb[0].mxu0
    %v6341 = vadd.f32 %v6258, %v6340
    %v6342 = vpop.f32.mrb[0].mxu0
    %v6343 = vpop.f32.mrb[0].mxu0
    %v6344 = vadd.f32 %v6261, %v6343
    %v6345 = vpop.f32.mrb[0].mxu0
    %6346 = vmatprep.mubr.bf16.mxu0 0
    %6347 = vmatmul.mubr.bf16.gmra.mrb[0].mxu0 %v6293
    %v6348 = vpop.f32.mrb[0].mxu0
    %v6349 = vadd.f32 %v6266, %v6348
    %v6350 = vpop.f32.mrb[0].mxu0
    %v6351 = vpop.f32.mrb[0].mxu0
    %v6352 = vpop.f32.mrb[0].mxu0
    %6353 = vdwg.mxu0
    %v6354 = vld [vmem:[#allocation2 + $0x2] sm:$0xff]
    %v6355 = vld [vmem:[#allocation2 + $0xa] sm:$0xff]
    %v6356 = vld [vmem:[#allocation2 + $0x12] sm:$0xff]
    %v6357 = vld [vmem:[#allocation2 + $0x1a] sm:$0xff]
    %v6358 = vld [vmem:[#allocation2 + $0x22] sm:$0xff]
    %v6359 = vpack.c.bf16 %v6355, %v6354
    %v6360 = vpack.c.bf16 %v6357, %v6356
    %v6361 = vpack.c.bf16 %v6358, %v6358
    %s6362 = scalar_lea.vmem %s17, 40
    %v6363 = vld [vmem:[%s6362] sm:$0xf]
    %v6364 = vld [vmem:[%s6362 + $0x4] sm:$0xf]
    %v6365 = vld [vmem:[%s6362 + $0x8] sm:$0xf]
    %v6366 = vld [vmem:[%s6362 + $0xc] sm:$0xf]
    %v6367 = vld [vmem:[%s6362 + $0x10] sm:$0xf]
    %v6373 = vunpack.c.l.b16 %v6363
    %v6374 = vunpack.c.l.b16 %v6364
    %v6375 = vunpack.c.l.b16 %v6365
    %v6376 = vunpack.c.l.b16 %v6366
    %v6377 = vunpack.c.l.b16 %v6367
    %v6378 = vpack.c.b16 %v6374, %v6373
    %v6379 = vpack.c.b16 %v6376, %v6375
    %v6380 = vpack.c.b16 %v6377, %v6377
    %v6384 = vsel %vm6158, %v6359, 0
    %v6387 = vsel %vm6158, %v6360, 0
    %v6390 = vsel %vm6158, %v6361, 0
    %v6393 = vsel %vm6211, %v6380, 0
    %6395 = vmatprep.subr.bf16.mxu0 0
    %6396 = vmatpush1.bf16.msra.mxu0 %v6378
    %6397 = vmatprep.subr.bf16.mxu0 0
    %6398 = vmatpush1.bf16.msra.mxu0 %v6379
    %6399 = vmatprep.subr.bf16.mxu0 0
    %6400 = vmatpush1.bf16.msra.mxu0 %v6393
    %6401 = vmatprep.subr.bf16.mxu0 0
    %6402 = vmatpush1.bf16.msra.mxu0 0
    %6403 = vmatprep.subr.bf16.mxu0 0
    %6404 = vmatpush1.bf16.msra.mxu0 0
    %6405 = vmatprep.subr.bf16.mxu0 0
    %6406 = vmatpush1.bf16.msra.mxu0 0
    %6407 = vmatprep.subr.bf16.mxu0 0
    %6408 = vmatpush1.bf16.msra.mxu0 0
    %6409 = vmatprep.subr.bf16.mxu0 0
    %6410 = vmatpush1.bf16.msra.mxu0 0
    %6411 = vmatprep.subr.bf16.mxu0 0
    %6412 = vmatpush1.bf16.msra.mxu0 0
    %6413 = vmatprep.subr.bf16.mxu0 0
    %6414 = vmatpush1.bf16.msra.mxu0 0
    %6415 = vmatprep.subr.bf16.mxu0 0
    %6416 = vmatpush1.bf16.msra.mxu0 0
    %6417 = vmatprep.subr.bf16.mxu0 0
    %6418 = vmatpush1.bf16.msra.mxu0 0
    %6419 = vmatprep.subr.bf16.mxu0 0
    %6420 = vmatpush1.bf16.msra.mxu0 0
    %6421 = vmatprep.subr.bf16.mxu0 0
    %6422 = vmatpush1.bf16.msra.mxu0 0
    %6423 = vmatprep.subr.bf16.mxu0 0
    %6424 = vmatpush1.bf16.msra.mxu0 0
    %6425 = vmatprep.subr.bf16.mxu0 0
    %6426 = vmatpush1.bf16.msra.mxu0 0
    %6427 = vmatprep.mubr.bf16.mxu0 0
    %6428 = vmatmul.mubr.bf16.gmra.mrb[0].mxu0 %v6384
    %v6429 = vpop.f32.mrb[0].mxu0
    %v6430 = vadd.f32 0.0, %v6429
    %v6431 = vpop.f32.mrb[0].mxu0
    %v6432 = vpop.f32.mrb[0].mxu0
    %v6433 = vadd.f32 0.0, %v6432
    %v6434 = vpop.f32.mrb[0].mxu0
    %6435 = vmatprep.mubr.bf16.mxu0 0
    %6436 = vmatmul.mubr.bf16.gmra.mrb[0].mxu0 %v6387
    %v6437 = vpop.f32.mrb[0].mxu0
    %v6438 = vadd.f32 0.0, %v6437
    %v6439 = vpop.f32.mrb[0].mxu0
    %v6440 = vpop.f32.mrb[0].mxu0
    %v6441 = vadd.f32 0.0, %v6440
    %v6442 = vpop.f32.mrb[0].mxu0
    %6443 = vmatprep.mubr.bf16.mxu0 0
    %6444 = vmatmul.mubr.bf16.gmra.mrb[0].mxu0 %v6390
    %v6445 = vpop.f32.mrb[0].mxu0
    %v6446 = vadd.f32 0.0, %v6445
    %v6447 = vpop.f32.mrb[0].mxu0
    %v6448 = vpop.f32.mrb[0].mxu0
    %v6449 = vpop.f32.mrb[0].mxu0
    %6450 = vdwg.mxu0
    %v6451 = vadd.f32 %v6333, %v6430
    %v6452 = vadd.f32 %v6336, %v6433
    %v6453 = vadd.f32 %v6341, %v6438
    %v6454 = vadd.f32 %v6344, %v6441
    %v6455 = vadd.f32 %v6349, %v6446
    %v6456 = vlaneseq
    %v6457 = vshrl.u32 %v6456, 7
    %v6458 = vsub.s32 0, %v6457
    %v6459 = vrot.slane %v6147, %v6458
    %v6460 = vadd.f32 %v6451, %v6459
    %v6461 = vadd.f32 %v6452, %v6459
    %v6462 = vadd.f32 %v6453, %v6459
    %v6463 = vadd.f32 %v6454, %v6459
    %v6464 = vadd.f32 %v6455, %v6459
    %vm6465 = vcmask 195584
    %v6467 = vsel %vm6465, %v6460, 0
    %v6470 = vsel %vm6465, %v6461, 0
    %v6473 = vsel %vm6465, %v6462, 0
    %v6476 = vsel %vm6465, %v6463, 0
    %v6479 = vsel %vm6465, %v6464, 0
    %6481 = vmatprep.subr.mxu0 0.0
    %6482 = vmatpush1.msra.mxu0 %v6154
    %6483 = vmatprep.subr.mxu0 0.0
    %6484 = vmatpush1.msra.mxu0 %v6155
    %6485 = vmatprep.subr.mxu0 0.0
    %6486 = vmatpush1.msra.mxu0 %v6156
    %6487 = vmatprep.subr.mxu0 0.0
    %6488 = vmatpush1.msra.mxu0 0.0
    %6489 = vmatprep.subr.mxu0 0.0
    %6490 = vmatpush1.msra.mxu0 0.0
    %6491 = vmatprep.subr.mxu0 0.0
    %6492 = vmatpush1.msra.mxu0 0.0
    %6493 = vmatprep.subr.mxu0 0.0
    %6494 = vmatpush1.msra.mxu0 0.0
    %6495 = vmatprep.subr.mxu0 0.0
    %6496 = vmatpush1.msra.mxu0 0.0
    %6497 = vmatprep.subr.mxu0 0.0
    %6498 = vmatpush1.msra.mxu0 0.0
    %6499 = vmatprep.subr.mxu0 0.0
    %6500 = vmatpush1.msra.mxu0 0.0
    %6501 = vmatprep.subr.mxu0 0.0
    %6502 = vmatpush1.msra.mxu0 0.0
    %6503 = vmatprep.subr.mxu0 0.0
    %6504 = vmatpush1.msra.mxu0 0.0
    %6505 = vmatprep.subr.mxu0 0.0
    %6506 = vmatpush1.msra.mxu0 0.0
    %6507 = vmatprep.subr.mxu0 0.0
    %6508 = vmatpush1.msra.mxu0 0.0
    %6509 = vmatprep.subr.mxu0 0.0
    %6510 = vmatpush1.msra.mxu0 0.0
    %6511 = vmatprep.subr.mxu0 0.0
    %6512 = vmatpush1.msra.mxu0 0.0
    %6513 = vmatprep.subr.mxu0 0.0
    %6514 = vmatpush1.msra.mxu0 0.0
    %6515 = vmatprep.subr.mxu0 0.0
    %6516 = vmatpush1.msra.mxu0 0.0
    %6517 = vmatprep.subr.mxu0 0.0
    %6518 = vmatpush1.msra.mxu0 0.0
    %6519 = vmatprep.subr.mxu0 0.0
    %6520 = vmatpush1.msra.mxu0 0.0
    %6521 = vmatprep.subr.mxu0 0.0
    %6522 = vmatpush1.msra.mxu0 0.0
    %6523 = vmatprep.subr.mxu0 0.0
    %6524 = vmatpush1.msra.mxu0 0.0
    %6525 = vmatprep.subr.mxu0 0.0
    %6526 = vmatpush1.msra.mxu0 0.0
    %6527 = vmatprep.subr.mxu0 0.0
    %6528 = vmatpush1.msra.mxu0 0.0
    %6529 = vmatprep.subr.mxu0 0.0
    %6530 = vmatpush1.msra.mxu0 0.0
    %6531 = vmatprep.subr.mxu0 0.0
    %6532 = vmatpush1.msra.mxu0 0.0
    %6533 = vmatprep.subr.mxu0 0.0
    %6534 = vmatpush1.msra.mxu0 0.0
    %6535 = vmatprep.subr.mxu0 0.0
    %6536 = vmatpush1.msra.mxu0 0.0
    %6537 = vmatprep.subr.mxu0 0.0
    %6538 = vmatpush1.msra.mxu0 0.0
    %6539 = vmatprep.subr.mxu0 0.0
    %6540 = vmatpush1.msra.mxu0 0.0
    %6541 = vmatprep.subr.mxu0 0.0
    %6542 = vmatpush1.msra.mxu0 0.0
    %6543 = vmatprep.subr.mxu0 0.0
    %6544 = vmatpush1.msra.mxu0 0.0
    %6545 = vmatprep.mubr.f32.mxu0 0.0
    %6546 = vmatmul.mubr.f32.gmra.mrb[0].mxu0 %v6467
    %v6547 = vpop.f32.mrb[0].mxu0
    %v6548 = vadd.f32 0.0, %v6547
    %v6549 = vpop.f32.mrb[0].mxu0
    %6550 = vmatprep.mubr.f32.mxu0 0.0
    %6551 = vmatmul.mubr.f32.gmra.mrb[0].mxu0 %v6470
    %v6552 = vpop.f32.mrb[0].mxu0
    %v6553 = vadd.f32 0.0, %v6552
    %v6554 = vpop.f32.mrb[0].mxu0
    %6555 = vmatprep.mubr.f32.mxu0 0.0
    %6556 = vmatmul.mubr.f32.gmra.mrb[0].mxu0 %v6473
    %v6557 = vpop.f32.mrb[0].mxu0
    %v6558 = vadd.f32 0.0, %v6557
    %v6559 = vpop.f32.mrb[0].mxu0
    %6560 = vmatprep.mubr.f32.mxu0 0.0
    %6561 = vmatmul.mubr.f32.gmra.mrb[0].mxu0 %v6476
    %v6562 = vpop.f32.mrb[0].mxu0
    %v6563 = vadd.f32 0.0, %v6562
    %v6564 = vpop.f32.mrb[0].mxu0
    %6565 = vmatprep.mubr.f32.mxu0 0.0
    %6566 = vmatmul.mubr.f32.gmra.mrb[0].mxu0 %v6479
    %v6567 = vpop.f32.mrb[0].mxu0
    %v6568 = vadd.f32 0.0, %v6567
    %v6569 = vpop.f32.mrb[0].mxu0
    %6570 = vdwg.mxu0
    %v6572 = vsel %vm6158, %v6148, 0
    %6574 = vmatprep.subr.mxu0 0.0
    %6575 = vmatpush1.msra.mxu0 %v6548
    %6576 = vmatprep.subr.mxu0 0.0
    %6577 = vmatpush1.msra.mxu0 %v6553
    %6578 = vmatprep.subr.mxu0 0.0
    %6579 = vmatpush1.msra.mxu0 %v6558
    %6580 = vmatprep.subr.mxu0 0.0
    %6581 = vmatpush1.msra.mxu0 %v6563
    %6582 = vmatprep.subr.mxu0 0.0
    %6583 = vmatpush1.msra.mxu0 %v6568
    %6584 = vmatprep.subr.mxu0 0.0
    %6585 = vmatpush1.msra.mxu0 0.0
    %6586 = vmatprep.subr.mxu0 0.0
    %6587 = vmatpush1.msra.mxu0 0.0
    %6588 = vmatprep.subr.mxu0 0.0
    %6589 = vmatpush1.msra.mxu0 0.0
    %6590 = vmatprep.subr.mxu0 0.0
    %6591 = vmatpush1.msra.mxu0 0.0
    %6592 = vmatprep.subr.mxu0 0.0
    %6593 = vmatpush1.msra.mxu0 0.0
    %6594 = vmatprep.subr.mxu0 0.0
    %6595 = vmatpush1.msra.mxu0 0.0
    %6596 = vmatprep.subr.mxu0 0.0
    %6597 = vmatpush1.msra.mxu0 0.0
    %6598 = vmatprep.subr.mxu0 0.0
    %6599 = vmatpush1.msra.mxu0 0.0
    %6600 = vmatprep.subr.mxu0 0.0
    %6601 = vmatpush1.msra.mxu0 0.0
    %6602 = vmatprep.subr.mxu0 0.0
    %6603 = vmatpush1.msra.mxu0 0.0
    %6604 = vmatprep.subr.mxu0 0.0
    %6605 = vmatpush1.msra.mxu0 0.0
    %6606 = vmatprep.subr.mxu0 0.0
    %6607 = vmatpush1.msra.mxu0 0.0
    %6608 = vmatprep.subr.mxu0 0.0
    %6609 = vmatpush1.msra.mxu0 0.0
    %6610 = vmatprep.subr.mxu0 0.0
    %6611 = vmatpush1.msra.mxu0 0.0
    %6612 = vmatprep.subr.mxu0 0.0
    %6613 = vmatpush1.msra.mxu0 0.0
    %6614 = vmatprep.subr.mxu0 0.0
    %6615 = vmatpush1.msra.mxu0 0.0
    %6616 = vmatprep.subr.mxu0 0.0
    %6617 = vmatpush1.msra.mxu0 0.0
    %6618 = vmatprep.subr.mxu0 0.0
    %6619 = vmatpush1.msra.mxu0 0.0
    %6620 = vmatprep.subr.mxu0 0.0
    %6621 = vmatpush1.msra.mxu0 0.0
    %6622 = vmatprep.subr.mxu0 0.0
    %6623 = vmatpush1.msra.mxu0 0.0
    %6624 = vmatprep.subr.mxu0 0.0
    %6625 = vmatpush1.msra.mxu0 0.0
    %6626 = vmatprep.subr.mxu0 0.0
    %6627 = vmatpush1.msra.mxu0 0.0
    %6628 = vmatprep.subr.mxu0 0.0
    %6629 = vmatpush1.msra.mxu0 0.0
    %6630 = vmatprep.subr.mxu0 0.0
    %6631 = vmatpush1.msra.mxu0 0.0
    %6632 = vmatprep.subr.mxu0 0.0
    %6633 = vmatpush1.msra.mxu0 0.0
    %6634 = vmatprep.subr.mxu0 0.0
    %6635 = vmatpush1.msra.mxu0 0.0
    %6636 = vmatprep.subr.mxu0 0.0
    %6637 = vmatpush1.msra.mxu0 0.0
    %6638 = vmatprep.mubr.f32.mxu0 0.0
    %6639 = vmatmul.mubr.f32.gmra.mrb[0].mxu0 %v6572
    %v6640 = vpop.f32.mrb[0].mxu0
    %v6641 = vadd.f32 0.0, %v6640
    %v6642 = vpop.f32.mrb[0].mxu0
    %6643 = vdwg.mxu0
    %v6644 = vmul.f32 %v6460, %v6460
    %v6645 = vmul.f32 %v6461, %v6461
    %v6646 = vmul.f32 %v6462, %v6462
    %v6647 = vmul.f32 %v6463, %v6463
    %v6648 = vmul.f32 %v6464, %v6464
    %v6650 = vsel %vm6465, %v6644, 0
    %v6653 = vsel %vm6465, %v6645, 0
    %v6656 = vsel %vm6465, %v6646, 0
    %v6659 = vsel %vm6465, %v6647, 0
    %v6662 = vsel %vm6465, %v6648, 0
    %6664 = vmatprep.subr.mxu0 0.0
    %6665 = vmatpush1.msra.mxu0 %v6154
    %6666 = vmatprep.subr.mxu0 0.0
    %6667 = vmatpush1.msra.mxu0 %v6155
    %6668 = vmatprep.subr.mxu0 0.0
    %6669 = vmatpush1.msra.mxu0 %v6156
    %6670 = vmatprep.subr.mxu0 0.0
    %6671 = vmatpush1.msra.mxu0 0.0
    %6672 = vmatprep.subr.mxu0 0.0
    %6673 = vmatpush1.msra.mxu0 0.0
    %6674 = vmatprep.subr.mxu0 0.0
    %6675 = vmatpush1.msra.mxu0 0.0
    %6676 = vmatprep.subr.mxu0 0.0
    %6677 = vmatpush1.msra.mxu0 0.0
    %6678 = vmatprep.subr.mxu0 0.0
    %6679 = vmatpush1.msra.mxu0 0.0
    %6680 = vmatprep.subr.mxu0 0.0
    %6681 = vmatpush1.msra.mxu0 0.0
    %6682 = vmatprep.subr.mxu0 0.0
    %6683 = vmatpush1.msra.mxu0 0.0
    %6684 = vmatprep.subr.mxu0 0.0
    %6685 = vmatpush1.msra.mxu0 0.0
    %6686 = vmatprep.subr.mxu0 0.0
    %6687 = vmatpush1.msra.mxu0 0.0
    %6688 = vmatprep.subr.mxu0 0.0
    %6689 = vmatpush1.msra.mxu0 0.0
    %6690 = vmatprep.subr.mxu0 0.0
    %6691 = vmatpush1.msra.mxu0 0.0
    %6692 = vmatprep.subr.mxu0 0.0
    %6693 = vmatpush1.msra.mxu0 0.0
    %6694 = vmatprep.subr.mxu0 0.0
    %6695 = vmatpush1.msra.mxu0 0.0
    %6696 = vmatprep.subr.mxu0 0.0
    %6697 = vmatpush1.msra.mxu0 0.0
    %6698 = vmatprep.subr.mxu0 0.0
    %6699 = vmatpush1.msra.mxu0 0.0
    %6700 = vmatprep.subr.mxu0 0.0
    %6701 = vmatpush1.msra.mxu0 0.0
    %6702 = vmatprep.subr.mxu0 0.0
    %6703 = vmatpush1.msra.mxu0 0.0
    %6704 = vmatprep.subr.mxu0 0.0
    %6705 = vmatpush1.msra.mxu0 0.0
    %6706 = vmatprep.subr.mxu0 0.0
    %6707 = vmatpush1.msra.mxu0 0.0
    %6708 = vmatprep.subr.mxu0 0.0
    %6709 = vmatpush1.msra.mxu0 0.0
    %6710 = vmatprep.subr.mxu0 0.0
    %6711 = vmatpush1.msra.mxu0 0.0
    %6712 = vmatprep.subr.mxu0 0.0
    %6713 = vmatpush1.msra.mxu0 0.0
    %6714 = vmatprep.subr.mxu0 0.0
    %6715 = vmatpush1.msra.mxu0 0.0
    %6716 = vmatprep.subr.mxu0 0.0
    %6717 = vmatpush1.msra.mxu0 0.0
    %6718 = vmatprep.subr.mxu0 0.0
    %6719 = vmatpush1.msra.mxu0 0.0
    %6720 = vmatprep.subr.mxu0 0.0
    %6721 = vmatpush1.msra.mxu0 0.0
    %6722 = vmatprep.subr.mxu0 0.0
    %6723 = vmatpush1.msra.mxu0 0.0
    %6724 = vmatprep.subr.mxu0 0.0
    %6725 = vmatpush1.msra.mxu0 0.0
    %6726 = vmatprep.subr.mxu0 0.0
    %6727 = vmatpush1.msra.mxu0 0.0
    %6728 = vmatprep.mubr.f32.mxu0 0.0
    %6729 = vmatmul.mubr.f32.gmra.mrb[0].mxu0 %v6650
    %v6730 = vpop.f32.mrb[0].mxu0
    %v6731 = vadd.f32 0.0, %v6730
    %v6732 = vpop.f32.mrb[0].mxu0
    %6733 = vmatprep.mubr.f32.mxu0 0.0
    %6734 = vmatmul.mubr.f32.gmra.mrb[0].mxu0 %v6653
    %v6735 = vpop.f32.mrb[0].mxu0
    %v6736 = vadd.f32 0.0, %v6735
    %v6737 = vpop.f32.mrb[0].mxu0
    %6738 = vmatprep.mubr.f32.mxu0 0.0
    %6739 = vmatmul.mubr.f32.gmra.mrb[0].mxu0 %v6656
    %v6740 = vpop.f32.mrb[0].mxu0
    %v6741 = vadd.f32 0.0, %v6740
    %v6742 = vpop.f32.mrb[0].mxu0
    %6743 = vmatprep.mubr.f32.mxu0 0.0
    %6744 = vmatmul.mubr.f32.gmra.mrb[0].mxu0 %v6659
    %v6745 = vpop.f32.mrb[0].mxu0
    %v6746 = vadd.f32 0.0, %v6745
    %v6747 = vpop.f32.mrb[0].mxu0
    %6748 = vmatprep.mubr.f32.mxu0 0.0
    %6749 = vmatmul.mubr.f32.gmra.mrb[0].mxu0 %v6662
    %v6750 = vpop.f32.mrb[0].mxu0
    %v6751 = vadd.f32 0.0, %v6750
    %v6752 = vpop.f32.mrb[0].mxu0
    %6753 = vdwg.mxu0
    %6754 = vmatprep.subr.mxu0 0.0
    %6755 = vmatpush1.msra.mxu0 %v6731
    %6756 = vmatprep.subr.mxu0 0.0
    %6757 = vmatpush1.msra.mxu0 %v6736
    %6758 = vmatprep.subr.mxu0 0.0
    %6759 = vmatpush1.msra.mxu0 %v6741
    %6760 = vmatprep.subr.mxu0 0.0
    %6761 = vmatpush1.msra.mxu0 %v6746
    %6762 = vmatprep.subr.mxu0 0.0
    %6763 = vmatpush1.msra.mxu0 %v6751
    %6764 = vmatprep.subr.mxu0 0.0
    %6765 = vmatpush1.msra.mxu0 0.0
    %6766 = vmatprep.subr.mxu0 0.0
    %6767 = vmatpush1.msra.mxu0 0.0
    %6768 = vmatprep.subr.mxu0 0.0
    %6769 = vmatpush1.msra.mxu0 0.0
    %6770 = vmatprep.subr.mxu0 0.0
    %6771 = vmatpush1.msra.mxu0 0.0
    %6772 = vmatprep.subr.mxu0 0.0
    %6773 = vmatpush1.msra.mxu0 0.0
    %6774 = vmatprep.subr.mxu0 0.0
    %6775 = vmatpush1.msra.mxu0 0.0
    %6776 = vmatprep.subr.mxu0 0.0
    %6777 = vmatpush1.msra.mxu0 0.0
    %6778 = vmatprep.subr.mxu0 0.0
    %6779 = vmatpush1.msra.mxu0 0.0
    %6780 = vmatprep.subr.mxu0 0.0
    %6781 = vmatpush1.msra.mxu0 0.0
    %6782 = vmatprep.subr.mxu0 0.0
    %6783 = vmatpush1.msra.mxu0 0.0
    %6784 = vmatprep.subr.mxu0 0.0
    %6785 = vmatpush1.msra.mxu0 0.0
    %6786 = vmatprep.subr.mxu0 0.0
    %6787 = vmatpush1.msra.mxu0 0.0
    %6788 = vmatprep.subr.mxu0 0.0
    %6789 = vmatpush1.msra.mxu0 0.0
    %6790 = vmatprep.subr.mxu0 0.0
    %6791 = vmatpush1.msra.mxu0 0.0
    %6792 = vmatprep.subr.mxu0 0.0
    %6793 = vmatpush1.msra.mxu0 0.0
    %6794 = vmatprep.subr.mxu0 0.0
    %6795 = vmatpush1.msra.mxu0 0.0
    %6796 = vmatprep.subr.mxu0 0.0
    %6797 = vmatpush1.msra.mxu0 0.0
    %6798 = vmatprep.subr.mxu0 0.0
    %6799 = vmatpush1.msra.mxu0 0.0
    %6800 = vmatprep.subr.mxu0 0.0
    %6801 = vmatpush1.msra.mxu0 0.0
    %6802 = vmatprep.subr.mxu0 0.0
    %6803 = vmatpush1.msra.mxu0 0.0
    %6804 = vmatprep.subr.mxu0 0.0
    %6805 = vmatpush1.msra.mxu0 0.0
    %6806 = vmatprep.subr.mxu0 0.0
    %6807 = vmatpush1.msra.mxu0 0.0
    %6808 = vmatprep.subr.mxu0 0.0
    %6809 = vmatpush1.msra.mxu0 0.0
    %6810 = vmatprep.subr.mxu0 0.0
    %6811 = vmatpush1.msra.mxu0 0.0
    %6812 = vmatprep.subr.mxu0 0.0
    %6813 = vmatpush1.msra.mxu0 0.0
    %6814 = vmatprep.subr.mxu0 0.0
    %6815 = vmatpush1.msra.mxu0 0.0
    %6816 = vmatprep.subr.mxu0 0.0
    %6817 = vmatpush1.msra.mxu0 0.0
    %6818 = vmatprep.mubr.f32.mxu0 0.0
    %6819 = vmatmul.mubr.f32.gmra.mrb[0].mxu0 %v6572
    %v6820 = vpop.f32.mrb[0].mxu0
    %v6821 = vadd.f32 0.0, %v6820
    %v6822 = vpop.f32.mrb[0].mxu0
    %6823 = vdwg.mxu0
    %v6824 = vmul.f32 %v6641, 0.11111111
    %v6825 = vmul.f32 %v6821, 0.11111111
    %v6826 = vmul.f32 %v6824, %v6824
    %v6827 = vsub.f32 %v6825, %v6826
    %v6828 = vmax.f32 %v6827, 0.0
    %v6829 = vadd.f32 %v6828, 1e-05
    %v6830 = vrsqrt.pop %v6829
    %v6831 = vlaneseq
    %v6832 = vshrl.u32 %v6831, 7
    %v6833 = vsub.s32 1, %v6832
    %v6834 = vrot.slane %v6147, %v6833
    %v6835 = vmul.f32 %v6830, %v6834
    %v6836 = vmul.f32 %v6824, %v6835
    %v6837 = vlaneseq
    %v6838 = vshrl.u32 %v6837, 7
    %v6839 = vsub.s32 2, %v6838
    %v6840 = vrot.slane %v6147, %v6839
    %v6841 = vsub.f32 %v6840, %v6836
    %v6843 = vsel %vm1862, %v6149, 0
    %v6846 = vsel %vm1862, %v6150, 0
    %v6849 = vsel %vm1862, %v6151, 0
    %v6852 = vsel %vm1862, %v6152, 0
    %v6855 = vsel %vm1862, %v6153, 0
    %6857 = vmatprep.subr.mxu0 0.0
    %6858 = vmatpush1.msra.mxu0 %v6835
    %6859 = vmatprep.subr.mxu0 0.0
    %6860 = vmatpush1.msra.mxu0 0.0
    %6861 = vmatprep.subr.mxu0 0.0
    %6862 = vmatpush1.msra.mxu0 0.0
    %6863 = vmatprep.subr.mxu0 0.0
    %6864 = vmatpush1.msra.mxu0 0.0
    %6865 = vmatprep.subr.mxu0 0.0
    %6866 = vmatpush1.msra.mxu0 0.0
    %6867 = vmatprep.subr.mxu0 0.0
    %6868 = vmatpush1.msra.mxu0 0.0
    %6869 = vmatprep.subr.mxu0 0.0
    %6870 = vmatpush1.msra.mxu0 0.0
    %6871 = vmatprep.subr.mxu0 0.0
    %6872 = vmatpush1.msra.mxu0 0.0
    %6873 = vmatprep.subr.mxu0 0.0
    %6874 = vmatpush1.msra.mxu0 0.0
    %6875 = vmatprep.subr.mxu0 0.0
    %6876 = vmatpush1.msra.mxu0 0.0
    %6877 = vmatprep.subr.mxu0 0.0
    %6878 = vmatpush1.msra.mxu0 0.0
    %6879 = vmatprep.subr.mxu0 0.0
    %6880 = vmatpush1.msra.mxu0 0.0
    %6881 = vmatprep.subr.mxu0 0.0
    %6882 = vmatpush1.msra.mxu0 0.0
    %6883 = vmatprep.subr.mxu0 0.0
    %6884 = vmatpush1.msra.mxu0 0.0
    %6885 = vmatprep.subr.mxu0 0.0
    %6886 = vmatpush1.msra.mxu0 0.0
    %6887 = vmatprep.subr.mxu0 0.0
    %6888 = vmatpush1.msra.mxu0 0.0
    %6889 = vmatprep.subr.mxu0 0.0
    %6890 = vmatpush1.msra.mxu0 0.0
    %6891 = vmatprep.subr.mxu0 0.0
    %6892 = vmatpush1.msra.mxu0 0.0
    %6893 = vmatprep.subr.mxu0 0.0
    %6894 = vmatpush1.msra.mxu0 0.0
    %6895 = vmatprep.subr.mxu0 0.0
    %6896 = vmatpush1.msra.mxu0 0.0
    %6897 = vmatprep.subr.mxu0 0.0
    %6898 = vmatpush1.msra.mxu0 0.0
    %6899 = vmatprep.subr.mxu0 0.0
    %6900 = vmatpush1.msra.mxu0 0.0
    %6901 = vmatprep.subr.mxu0 0.0
    %6902 = vmatpush1.msra.mxu0 0.0
    %6903 = vmatprep.subr.mxu0 0.0
    %6904 = vmatpush1.msra.mxu0 0.0
    %6905 = vmatprep.subr.mxu0 0.0
    %6906 = vmatpush1.msra.mxu0 0.0
    %6907 = vmatprep.subr.mxu0 0.0
    %6908 = vmatpush1.msra.mxu0 0.0
    %6909 = vmatprep.subr.mxu0 0.0
    %6910 = vmatpush1.msra.mxu0 0.0
    %6911 = vmatprep.subr.mxu0 0.0
    %6912 = vmatpush1.msra.mxu0 0.0
    %6913 = vmatprep.subr.mxu0 0.0
    %6914 = vmatpush1.msra.mxu0 0.0
    %6915 = vmatprep.subr.mxu0 0.0
    %6916 = vmatpush1.msra.mxu0 0.0
    %6917 = vmatprep.subr.mxu0 0.0
    %6918 = vmatpush1.msra.mxu0 0.0
    %6919 = vmatprep.subr.mxu0 0.0
    %6920 = vmatpush1.msra.mxu0 0.0
    %6921 = vmatprep.mubr.f32.mxu0 0.0
    %6922 = vmatmul.mubr.f32.gmra.mrb[0].mxu0 %v6843
    %v6923 = vpop.f32.mrb[0].mxu0
    %v6924 = vadd.f32 0.0, %v6923
    %v6925 = vpop.f32.mrb[0].mxu0
    %6926 = vmatprep.mubr.f32.mxu0 0.0
    %6927 = vmatmul.mubr.f32.gmra.mrb[0].mxu0 %v6846
    %v6928 = vpop.f32.mrb[0].mxu0
    %v6929 = vadd.f32 0.0, %v6928
    %v6930 = vpop.f32.mrb[0].mxu0
    %6931 = vmatprep.mubr.f32.mxu0 0.0
    %6932 = vmatmul.mubr.f32.gmra.mrb[0].mxu0 %v6849
    %v6933 = vpop.f32.mrb[0].mxu0
    %v6934 = vadd.f32 0.0, %v6933
    %v6935 = vpop.f32.mrb[0].mxu0
    %6936 = vmatprep.mubr.f32.mxu0 0.0
    %6937 = vmatmul.mubr.f32.gmra.mrb[0].mxu0 %v6852
    %v6938 = vpop.f32.mrb[0].mxu0
    %v6939 = vadd.f32 0.0, %v6938
    %v6940 = vpop.f32.mrb[0].mxu0
    %6941 = vmatprep.mubr.f32.mxu0 0.0
    %6942 = vmatmul.mubr.f32.gmra.mrb[0].mxu0 %v6855
    %v6943 = vpop.f32.mrb[0].mxu0
    %v6944 = vadd.f32 0.0, %v6943
    %v6945 = vpop.f32.mrb[0].mxu0
    %6946 = vdwg.mxu0
    %v6948 = vsel %vm1862, %v6924, 0
    %v6951 = vsel %vm1862, %v6929, 0
    %v6954 = vsel %vm1862, %v6934, 0
    %v6957 = vsel %vm1862, %v6939, 0
    %v6960 = vsel %vm1862, %v6944, 0
    %6962 = vmatprep.subr.mxu0 0.0
    %6963 = vmatpush1.msra.mxu0 %v6157
    %6964 = vmatprep.subr.mxu0 0.0
    %6965 = vmatpush1.msra.mxu0 0.0
    %6966 = vmatprep.subr.mxu0 0.0
    %6967 = vmatpush1.msra.mxu0 0.0
    %6968 = vmatprep.subr.mxu0 0.0
    %6969 = vmatpush1.msra.mxu0 0.0
    %6970 = vmatprep.subr.mxu0 0.0
    %6971 = vmatpush1.msra.mxu0 0.0
    %6972 = vmatprep.subr.mxu0 0.0
    %6973 = vmatpush1.msra.mxu0 0.0
    %6974 = vmatprep.subr.mxu0 0.0
    %6975 = vmatpush1.msra.mxu0 0.0
    %6976 = vmatprep.subr.mxu0 0.0
    %6977 = vmatpush1.msra.mxu0 0.0
    %6978 = vmatprep.subr.mxu0 0.0
    %6979 = vmatpush1.msra.mxu0 0.0
    %6980 = vmatprep.subr.mxu0 0.0
    %6981 = vmatpush1.msra.mxu0 0.0
    %6982 = vmatprep.subr.mxu0 0.0
    %6983 = vmatpush1.msra.mxu0 0.0
    %6984 = vmatprep.subr.mxu0 0.0
    %6985 = vmatpush1.msra.mxu0 0.0
    %6986 = vmatprep.subr.mxu0 0.0
    %6987 = vmatpush1.msra.mxu0 0.0
    %6988 = vmatprep.subr.mxu0 0.0
    %6989 = vmatpush1.msra.mxu0 0.0
    %6990 = vmatprep.subr.mxu0 0.0
    %6991 = vmatpush1.msra.mxu0 0.0
    %6992 = vmatprep.subr.mxu0 0.0
    %6993 = vmatpush1.msra.mxu0 0.0
    %6994 = vmatprep.subr.mxu0 0.0
    %6995 = vmatpush1.msra.mxu0 0.0
    %6996 = vmatprep.subr.mxu0 0.0
    %6997 = vmatpush1.msra.mxu0 0.0
    %6998 = vmatprep.subr.mxu0 0.0
    %6999 = vmatpush1.msra.mxu0 0.0
    %7000 = vmatprep.subr.mxu0 0.0
    %7001 = vmatpush1.msra.mxu0 0.0
    %7002 = vmatprep.subr.mxu0 0.0
    %7003 = vmatpush1.msra.mxu0 0.0
    %7004 = vmatprep.subr.mxu0 0.0
    %7005 = vmatpush1.msra.mxu0 0.0
    %7006 = vmatprep.subr.mxu0 0.0
    %7007 = vmatpush1.msra.mxu0 0.0
    %7008 = vmatprep.subr.mxu0 0.0
    %7009 = vmatpush1.msra.mxu0 0.0
    %7010 = vmatprep.subr.mxu0 0.0
    %7011 = vmatpush1.msra.mxu0 0.0
    %7012 = vmatprep.subr.mxu0 0.0
    %7013 = vmatpush1.msra.mxu0 0.0
    %7014 = vmatprep.subr.mxu0 0.0
    %7015 = vmatpush1.msra.mxu0 0.0
    %7016 = vmatprep.subr.mxu0 0.0
    %7017 = vmatpush1.msra.mxu0 0.0
    %7018 = vmatprep.subr.mxu0 0.0
    %7019 = vmatpush1.msra.mxu0 0.0
    %7020 = vmatprep.subr.mxu0 0.0
    %7021 = vmatpush1.msra.mxu0 0.0
    %7022 = vmatprep.subr.mxu0 0.0
    %7023 = vmatpush1.msra.mxu0 0.0
    %7024 = vmatprep.subr.mxu0 0.0
    %7025 = vmatpush1.msra.mxu0 0.0
    %7026 = vmatprep.mubr.f32.mxu0 0.0
    %7027 = vmatmul.mubr.f32.gmra.mrb[0].mxu0 %v6948
    %v7028 = vpop.f32.mrb[0].mxu0
    %v7029 = vadd.f32 0.0, %v7028
    %v7030 = vpop.f32.mrb[0].mxu0
    %7031 = vmatprep.mubr.f32.mxu0 0.0
    %7032 = vmatmul.mubr.f32.gmra.mrb[0].mxu0 %v6951
    %v7033 = vpop.f32.mrb[0].mxu0
    %v7034 = vadd.f32 0.0, %v7033
    %v7035 = vpop.f32.mrb[0].mxu0
    %7036 = vmatprep.mubr.f32.mxu0 0.0
    %7037 = vmatmul.mubr.f32.gmra.mrb[0].mxu0 %v6954
    %v7038 = vpop.f32.mrb[0].mxu0
    %v7039 = vadd.f32 0.0, %v7038
    %v7040 = vpop.f32.mrb[0].mxu0
    %7041 = vmatprep.mubr.f32.mxu0 0.0
    %7042 = vmatmul.mubr.f32.gmra.mrb[0].mxu0 %v6957
    %v7043 = vpop.f32.mrb[0].mxu0
    %v7044 = vadd.f32 0.0, %v7043
    %v7045 = vpop.f32.mrb[0].mxu0
    %7046 = vmatprep.mubr.f32.mxu0 0.0
    %7047 = vmatmul.mubr.f32.gmra.mrb[0].mxu0 %v6960
    %v7048 = vpop.f32.mrb[0].mxu0
    %v7049 = vadd.f32 0.0, %v7048
    %v7050 = vpop.f32.mrb[0].mxu0
    %7051 = vdwg.mxu0
    %7052 = vmatprep.subr.mxu0 0.0
    %7053 = vmatpush1.msra.mxu0 %v6841
    %7054 = vmatprep.subr.mxu0 0.0
    %7055 = vmatpush1.msra.mxu0 0.0
    %7056 = vmatprep.subr.mxu0 0.0
    %7057 = vmatpush1.msra.mxu0 0.0
    %7058 = vmatprep.subr.mxu0 0.0
    %7059 = vmatpush1.msra.mxu0 0.0
    %7060 = vmatprep.subr.mxu0 0.0
    %7061 = vmatpush1.msra.mxu0 0.0
    %7062 = vmatprep.subr.mxu0 0.0
    %7063 = vmatpush1.msra.mxu0 0.0
    %7064 = vmatprep.subr.mxu0 0.0
    %7065 = vmatpush1.msra.mxu0 0.0
    %7066 = vmatprep.subr.mxu0 0.0
    %7067 = vmatpush1.msra.mxu0 0.0
    %7068 = vmatprep.subr.mxu0 0.0
    %7069 = vmatpush1.msra.mxu0 0.0
    %7070 = vmatprep.subr.mxu0 0.0
    %7071 = vmatpush1.msra.mxu0 0.0
    %7072 = vmatprep.subr.mxu0 0.0
    %7073 = vmatpush1.msra.mxu0 0.0
    %7074 = vmatprep.subr.mxu0 0.0
    %7075 = vmatpush1.msra.mxu0 0.0
    %7076 = vmatprep.subr.mxu0 0.0
    %7077 = vmatpush1.msra.mxu0 0.0
    %7078 = vmatprep.subr.mxu0 0.0
    %7079 = vmatpush1.msra.mxu0 0.0
    %7080 = vmatprep.subr.mxu0 0.0
    %7081 = vmatpush1.msra.mxu0 0.0
    %7082 = vmatprep.subr.mxu0 0.0
    %7083 = vmatpush1.msra.mxu0 0.0
    %7084 = vmatprep.subr.mxu0 0.0
    %7085 = vmatpush1.msra.mxu0 0.0
    %7086 = vmatprep.subr.mxu0 0.0
    %7087 = vmatpush1.msra.mxu0 0.0
    %7088 = vmatprep.subr.mxu0 0.0
    %7089 = vmatpush1.msra.mxu0 0.0
    %7090 = vmatprep.subr.mxu0 0.0
    %7091 = vmatpush1.msra.mxu0 0.0
    %7092 = vmatprep.subr.mxu0 0.0
    %7093 = vmatpush1.msra.mxu0 0.0
    %7094 = vmatprep.subr.mxu0 0.0
    %7095 = vmatpush1.msra.mxu0 0.0
    %7096 = vmatprep.subr.mxu0 0.0
    %7097 = vmatpush1.msra.mxu0 0.0
    %7098 = vmatprep.subr.mxu0 0.0
    %7099 = vmatpush1.msra.mxu0 0.0
    %7100 = vmatprep.subr.mxu0 0.0
    %7101 = vmatpush1.msra.mxu0 0.0
    %7102 = vmatprep.subr.mxu0 0.0
    %7103 = vmatpush1.msra.mxu0 0.0
    %7104 = vmatprep.subr.mxu0 0.0
    %7105 = vmatpush1.msra.mxu0 0.0
    %7106 = vmatprep.subr.mxu0 0.0
    %7107 = vmatpush1.msra.mxu0 0.0
    %7108 = vmatprep.subr.mxu0 0.0
    %7109 = vmatpush1.msra.mxu0 0.0
    %7110 = vmatprep.subr.mxu0 0.0
    %7111 = vmatpush1.msra.mxu0 0.0
    %7112 = vmatprep.subr.mxu0 0.0
    %7113 = vmatpush1.msra.mxu0 0.0
    %7114 = vmatprep.subr.mxu0 0.0
    %7115 = vmatpush1.msra.mxu0 0.0
    %7116 = vmatprep.mubr.f32.mxu0 0.0
    %7117 = vmatmul.mubr.f32.gmra.mrb[0].mxu0 %v6843
    %v7118 = vpop.f32.mrb[0].mxu0
    %v7119 = vadd.f32 0.0, %v7118
    %v7120 = vpop.f32.mrb[0].mxu0
    %7121 = vmatprep.mubr.f32.mxu0 0.0
    %7122 = vmatmul.mubr.f32.gmra.mrb[0].mxu0 %v6846
    %v7123 = vpop.f32.mrb[0].mxu0
    %v7124 = vadd.f32 0.0, %v7123
    %v7125 = vpop.f32.mrb[0].mxu0
    %7126 = vmatprep.mubr.f32.mxu0 0.0
    %7127 = vmatmul.mubr.f32.gmra.mrb[0].mxu0 %v6849
    %v7128 = vpop.f32.mrb[0].mxu0
    %v7129 = vadd.f32 0.0, %v7128
    %v7130 = vpop.f32.mrb[0].mxu0
    %7131 = vmatprep.mubr.f32.mxu0 0.0
    %7132 = vmatmul.mubr.f32.gmra.mrb[0].mxu0 %v6852
    %v7133 = vpop.f32.mrb[0].mxu0
    %v7134 = vadd.f32 0.0, %v7133
    %v7135 = vpop.f32.mrb[0].mxu0
    %7136 = vmatprep.mubr.f32.mxu0 0.0
    %7137 = vmatmul.mubr.f32.gmra.mrb[0].mxu0 %v6855
    %v7138 = vpop.f32.mrb[0].mxu0
    %v7139 = vadd.f32 0.0, %v7138
    %v7140 = vpop.f32.mrb[0].mxu0
    %7141 = vdwg.mxu0
    %v7143 = vsel %vm1862, %v7119, 0
    %v7146 = vsel %vm1862, %v7124, 0
    %v7149 = vsel %vm1862, %v7129, 0
    %v7152 = vsel %vm1862, %v7134, 0
    %v7155 = vsel %vm1862, %v7139, 0
    %7157 = vmatprep.subr.mxu0 0.0
    %7158 = vmatpush1.msra.mxu0 %v6157
    %7159 = vmatprep.subr.mxu0 0.0
    %7160 = vmatpush1.msra.mxu0 0.0
    %7161 = vmatprep.subr.mxu0 0.0
    %7162 = vmatpush1.msra.mxu0 0.0
    %7163 = vmatprep.subr.mxu0 0.0
    %7164 = vmatpush1.msra.mxu0 0.0
    %7165 = vmatprep.subr.mxu0 0.0
    %7166 = vmatpush1.msra.mxu0 0.0
    %7167 = vmatprep.subr.mxu0 0.0
    %7168 = vmatpush1.msra.mxu0 0.0
    %7169 = vmatprep.subr.mxu0 0.0
    %7170 = vmatpush1.msra.mxu0 0.0
    %7171 = vmatprep.subr.mxu0 0.0
    %7172 = vmatpush1.msra.mxu0 0.0
    %7173 = vmatprep.subr.mxu0 0.0
    %7174 = vmatpush1.msra.mxu0 0.0
    %7175 = vmatprep.subr.mxu0 0.0
    %7176 = vmatpush1.msra.mxu0 0.0
    %7177 = vmatprep.subr.mxu0 0.0
    %7178 = vmatpush1.msra.mxu0 0.0
    %7179 = vmatprep.subr.mxu0 0.0
    %7180 = vmatpush1.msra.mxu0 0.0
    %7181 = vmatprep.subr.mxu0 0.0
    %7182 = vmatpush1.msra.mxu0 0.0
    %7183 = vmatprep.subr.mxu0 0.0
    %7184 = vmatpush1.msra.mxu0 0.0
    %7185 = vmatprep.subr.mxu0 0.0
    %7186 = vmatpush1.msra.mxu0 0.0
    %7187 = vmatprep.subr.mxu0 0.0
    %7188 = vmatpush1.msra.mxu0 0.0
    %7189 = vmatprep.subr.mxu0 0.0
    %7190 = vmatpush1.msra.mxu0 0.0
    %7191 = vmatprep.subr.mxu0 0.0
    %7192 = vmatpush1.msra.mxu0 0.0
    %7193 = vmatprep.subr.mxu0 0.0
    %7194 = vmatpush1.msra.mxu0 0.0
    %7195 = vmatprep.subr.mxu0 0.0
    %7196 = vmatpush1.msra.mxu0 0.0
    %7197 = vmatprep.subr.mxu0 0.0
    %7198 = vmatpush1.msra.mxu0 0.0
    %7199 = vmatprep.subr.mxu0 0.0
    %7200 = vmatpush1.msra.mxu0 0.0
    %7201 = vmatprep.subr.mxu0 0.0
    %7202 = vmatpush1.msra.mxu0 0.0
    %7203 = vmatprep.subr.mxu0 0.0
    %7204 = vmatpush1.msra.mxu0 0.0
    %7205 = vmatprep.subr.mxu0 0.0
    %7206 = vmatpush1.msra.mxu0 0.0
    %7207 = vmatprep.subr.mxu0 0.0
    %7208 = vmatpush1.msra.mxu0 0.0
    %7209 = vmatprep.subr.mxu0 0.0
    %7210 = vmatpush1.msra.mxu0 0.0
    %7211 = vmatprep.subr.mxu0 0.0
    %7212 = vmatpush1.msra.mxu0 0.0
    %7213 = vmatprep.subr.mxu0 0.0
    %7214 = vmatpush1.msra.mxu0 0.0
    %7215 = vmatprep.subr.mxu0 0.0
    %7216 = vmatpush1.msra.mxu0 0.0
    %7217 = vmatprep.subr.mxu0 0.0
    %7218 = vmatpush1.msra.mxu0 0.0
    %7219 = vmatprep.subr.mxu0 0.0
    %7220 = vmatpush1.msra.mxu0 0.0
    %7221 = vmatprep.mubr.f32.mxu0 0.0
    %7222 = vmatmul.mubr.f32.gmra.mrb[0].mxu0 %v7143
    %v7223 = vpop.f32.mrb[0].mxu0
    %v7224 = vadd.f32 0.0, %v7223
    %v7225 = vpop.f32.mrb[0].mxu0
    %7226 = vmatprep.mubr.f32.mxu0 0.0
    %7227 = vmatmul.mubr.f32.gmra.mrb[0].mxu0 %v7146
    %v7228 = vpop.f32.mrb[0].mxu0
    %v7229 = vadd.f32 0.0, %v7228
    %v7230 = vpop.f32.mrb[0].mxu0
    %7231 = vmatprep.mubr.f32.mxu0 0.0
    %7232 = vmatmul.mubr.f32.gmra.mrb[0].mxu0 %v7149
    %v7233 = vpop.f32.mrb[0].mxu0
    %v7234 = vadd.f32 0.0, %v7233
    %v7235 = vpop.f32.mrb[0].mxu0
    %7236 = vmatprep.mubr.f32.mxu0 0.0
    %7237 = vmatmul.mubr.f32.gmra.mrb[0].mxu0 %v7152
    %v7238 = vpop.f32.mrb[0].mxu0
    %v7239 = vadd.f32 0.0, %v7238
    %v7240 = vpop.f32.mrb[0].mxu0
    %7241 = vmatprep.mubr.f32.mxu0 0.0
    %7242 = vmatmul.mubr.f32.gmra.mrb[0].mxu0 %v7155
    %v7243 = vpop.f32.mrb[0].mxu0
    %v7244 = vadd.f32 0.0, %v7243
    %v7245 = vpop.f32.mrb[0].mxu0
    %7246 = vdwg.mxu0
    %v7247 = vmul.f32 %v6460, %v7029
    %v7248 = vmul.f32 %v6461, %v7034
    %v7249 = vmul.f32 %v6462, %v7039
    %v7250 = vmul.f32 %v6463, %v7044
    %v7251 = vmul.f32 %v6464, %v7049
    %v7252 = vadd.f32 %v7247, %v7224
    %v7253 = vadd.f32 %v7248, %v7229
    %v7254 = vadd.f32 %v7249, %v7234
    %v7255 = vadd.f32 %v7250, %v7239
    %v7256 = vadd.f32 %v7251, %v7244
    %v7257 = vmax.f32 %v7252, 0.0
    %v7258 = vmax.f32 %v7253, 0.0
    %v7259 = vmax.f32 %v7254, 0.0
    %v7260 = vmax.f32 %v7255, 0.0
    %v7261 = vmax.f32 %v7256, 0.0
    %v7262 = vld [vmem:[%s25] sm:$0x1]
    %v7263 = vld [vmem:[%s23] sm:$0xff]
    %v7265 = vsel %vm6158, %v7263, 0
    %7267 = vmatprep.subr.mxu0 0.0
    %7268 = vmatpush1.msra.mxu0 %v7257
    %7269 = vmatprep.subr.mxu0 0.0
    %7270 = vmatpush1.msra.mxu0 %v7258
    %7271 = vmatprep.subr.mxu0 0.0
    %7272 = vmatpush1.msra.mxu0 %v7259
    %7273 = vmatprep.subr.mxu0 0.0
    %7274 = vmatpush1.msra.mxu0 %v7260
    %7275 = vmatprep.subr.mxu0 0.0
    %7276 = vmatpush1.msra.mxu0 %v7261
    %7277 = vmatprep.subr.mxu0 0.0
    %7278 = vmatpush1.msra.mxu0 0.0
    %7279 = vmatprep.subr.mxu0 0.0
    %7280 = vmatpush1.msra.mxu0 0.0
    %7281 = vmatprep.subr.mxu0 0.0
    %7282 = vmatpush1.msra.mxu0 0.0
    %7283 = vmatprep.subr.mxu0 0.0
    %7284 = vmatpush1.msra.mxu0 0.0
    %7285 = vmatprep.subr.mxu0 0.0
    %7286 = vmatpush1.msra.mxu0 0.0
    %7287 = vmatprep.subr.mxu0 0.0
    %7288 = vmatpush1.msra.mxu0 0.0
    %7289 = vmatprep.subr.mxu0 0.0
    %7290 = vmatpush1.msra.mxu0 0.0
    %7291 = vmatprep.subr.mxu0 0.0
    %7292 = vmatpush1.msra.mxu0 0.0
    %7293 = vmatprep.subr.mxu0 0.0
    %7294 = vmatpush1.msra.mxu0 0.0
    %7295 = vmatprep.subr.mxu0 0.0
    %7296 = vmatpush1.msra.mxu0 0.0
    %7297 = vmatprep.subr.mxu0 0.0
    %7298 = vmatpush1.msra.mxu0 0.0
    %7299 = vmatprep.subr.mxu0 0.0
    %7300 = vmatpush1.msra.mxu0 0.0
    %7301 = vmatprep.subr.mxu0 0.0
    %7302 = vmatpush1.msra.mxu0 0.0
    %7303 = vmatprep.subr.mxu0 0.0
    %7304 = vmatpush1.msra.mxu0 0.0
    %7305 = vmatprep.subr.mxu0 0.0
    %7306 = vmatpush1.msra.mxu0 0.0
    %7307 = vmatprep.subr.mxu0 0.0
    %7308 = vmatpush1.msra.mxu0 0.0
    %7309 = vmatprep.subr.mxu0 0.0
    %7310 = vmatpush1.msra.mxu0 0.0
    %7311 = vmatprep.subr.mxu0 0.0
    %7312 = vmatpush1.msra.mxu0 0.0
    %7313 = vmatprep.subr.mxu0 0.0
    %7314 = vmatpush1.msra.mxu0 0.0
    %7315 = vmatprep.subr.mxu0 0.0
    %7316 = vmatpush1.msra.mxu0 0.0
    %7317 = vmatprep.subr.mxu0 0.0
    %7318 = vmatpush1.msra.mxu0 0.0
    %7319 = vmatprep.subr.mxu0 0.0
    %7320 = vmatpush1.msra.mxu0 0.0
    %7321 = vmatprep.subr.mxu0 0.0
    %7322 = vmatpush1.msra.mxu0 0.0
    %7323 = vmatprep.subr.mxu0 0.0
    %7324 = vmatpush1.msra.mxu0 0.0
    %7325 = vmatprep.subr.mxu0 0.0
    %7326 = vmatpush1.msra.mxu0 0.0
    %7327 = vmatprep.subr.mxu0 0.0
    %7328 = vmatpush1.msra.mxu0 0.0
    %7329 = vmatprep.subr.mxu0 0.0
    %7330 = vmatpush1.msra.mxu0 0.0
    %7331 = vmatprep.mubr.f32.mxu0 0.0
    %7332 = vmatmul.mubr.f32.gmra.mrb[0].mxu0 %v7265
    %v7333 = vpop.f32.mrb[0].mxu0
    %v7334 = vadd.f32 0.0, %v7333
    %v7335 = vpop.f32.mrb[0].mxu0
    %7336 = vdwg.mxu0
    %v7337 = vld [vmem:[%s24] sm:$0xff]
    %v7338 = vld [vmem:[%s24 + $0x8] sm:$0xff]
    %v7339 = vld [vmem:[%s24 + $0x10] sm:$0xff]
    %s7340 = scalar_lea.vmem %s23, 8
    %v7341 = vld [vmem:[%s7340] sm:$0xff]
    %v7343 = vsel %vm6158, %v7341, 0
    %7345 = vmatprep.subr.mxu0 0.0
    %7346 = vmatpush1.msra.mxu0 %v7257
    %7347 = vmatprep.subr.mxu0 0.0
    %7348 = vmatpush1.msra.mxu0 %v7258
    %7349 = vmatprep.subr.mxu0 0.0
    %7350 = vmatpush1.msra.mxu0 %v7259
    %7351 = vmatprep.subr.mxu0 0.0
    %7352 = vmatpush1.msra.mxu0 %v7260
    %7353 = vmatprep.subr.mxu0 0.0
    %7354 = vmatpush1.msra.mxu0 %v7261
    %7355 = vmatprep.subr.mxu0 0.0
    %7356 = vmatpush1.msra.mxu0 0.0
    %7357 = vmatprep.subr.mxu0 0.0
    %7358 = vmatpush1.msra.mxu0 0.0
    %7359 = vmatprep.subr.mxu0 0.0
    %7360 = vmatpush1.msra.mxu0 0.0
    %7361 = vmatprep.subr.mxu0 0.0
    %7362 = vmatpush1.msra.mxu0 0.0
    %7363 = vmatprep.subr.mxu0 0.0
    %7364 = vmatpush1.msra.mxu0 0.0
    %7365 = vmatprep.subr.mxu0 0.0
    %7366 = vmatpush1.msra.mxu0 0.0
    %7367 = vmatprep.subr.mxu0 0.0
    %7368 = vmatpush1.msra.mxu0 0.0
    %7369 = vmatprep.subr.mxu0 0.0
    %7370 = vmatpush1.msra.mxu0 0.0
    %7371 = vmatprep.subr.mxu0 0.0
    %7372 = vmatpush1.msra.mxu0 0.0
    %7373 = vmatprep.subr.mxu0 0.0
    %7374 = vmatpush1.msra.mxu0 0.0
    %7375 = vmatprep.subr.mxu0 0.0
    %7376 = vmatpush1.msra.mxu0 0.0
    %7377 = vmatprep.subr.mxu0 0.0
    %7378 = vmatpush1.msra.mxu0 0.0
    %7379 = vmatprep.subr.mxu0 0.0
    %7380 = vmatpush1.msra.mxu0 0.0
    %7381 = vmatprep.subr.mxu0 0.0
    %7382 = vmatpush1.msra.mxu0 0.0
    %7383 = vmatprep.subr.mxu0 0.0
    %7384 = vmatpush1.msra.mxu0 0.0
    %7385 = vmatprep.subr.mxu0 0.0
    %7386 = vmatpush1.msra.mxu0 0.0
    %7387 = vmatprep.subr.mxu0 0.0
    %7388 = vmatpush1.msra.mxu0 0.0
    %7389 = vmatprep.subr.mxu0 0.0
    %7390 = vmatpush1.msra.mxu0 0.0
    %7391 = vmatprep.subr.mxu0 0.0
    %7392 = vmatpush1.msra.mxu0 0.0
    %7393 = vmatprep.subr.mxu0 0.0
    %7394 = vmatpush1.msra.mxu0 0.0
    %7395 = vmatprep.subr.mxu0 0.0
    %7396 = vmatpush1.msra.mxu0 0.0
    %7397 = vmatprep.subr.mxu0 0.0
    %7398 = vmatpush1.msra.mxu0 0.0
    %7399 = vmatprep.subr.mxu0 0.0
    %7400 = vmatpush1.msra.mxu0 0.0
    %7401 = vmatprep.subr.mxu0 0.0
    %7402 = vmatpush1.msra.mxu0 0.0
    %7403 = vmatprep.subr.mxu0 0.0
    %7404 = vmatpush1.msra.mxu0 0.0
    %7405 = vmatprep.subr.mxu0 0.0
    %7406 = vmatpush1.msra.mxu0 0.0
    %7407 = vmatprep.subr.mxu0 0.0
    %7408 = vmatpush1.msra.mxu0 0.0
    %7409 = vmatprep.mubr.f32.mxu0 0.0
    %7410 = vmatmul.mubr.f32.gmra.mrb[0].mxu0 %v7343
    %v7411 = vpop.f32.mrb[0].mxu0
    %v7412 = vadd.f32 0.0, %v7411
    %v7413 = vpop.f32.mrb[0].mxu0
    %7414 = vdwg.mxu0
    %s7415 = scalar_lea.vmem %s24, 24
    %v7416 = vld [vmem:[%s7415] sm:$0xff]
    %v7417 = vld [vmem:[%s7415 + $0x8] sm:$0xff]
    %v7418 = vld [vmem:[%s7415 + $0x10] sm:$0xff]
    %v7420 = vsel %vm6465, %v7412, 0
    %7422 = vmatprep.subr.mxu0 0.0
    %7423 = vmatpush1.msra.mxu0 %v7416
    %7424 = vmatprep.subr.mxu0 0.0
    %7425 = vmatpush1.msra.mxu0 %v7417
    %7426 = vmatprep.subr.mxu0 0.0
    %7427 = vmatpush1.msra.mxu0 %v7418
    %7428 = vmatprep.subr.mxu0 0.0
    %7429 = vmatpush1.msra.mxu0 0.0
    %7430 = vmatprep.subr.mxu0 0.0
    %7431 = vmatpush1.msra.mxu0 0.0
    %7432 = vmatprep.subr.mxu0 0.0
    %7433 = vmatpush1.msra.mxu0 0.0
    %7434 = vmatprep.subr.mxu0 0.0
    %7435 = vmatpush1.msra.mxu0 0.0
    %7436 = vmatprep.subr.mxu0 0.0
    %7437 = vmatpush1.msra.mxu0 0.0
    %7438 = vmatprep.subr.mxu0 0.0
    %7439 = vmatpush1.msra.mxu0 0.0
    %7440 = vmatprep.subr.mxu0 0.0
    %7441 = vmatpush1.msra.mxu0 0.0
    %7442 = vmatprep.subr.mxu0 0.0
    %7443 = vmatpush1.msra.mxu0 0.0
    %7444 = vmatprep.subr.mxu0 0.0
    %7445 = vmatpush1.msra.mxu0 0.0
    %7446 = vmatprep.subr.mxu0 0.0
    %7447 = vmatpush1.msra.mxu0 0.0
    %7448 = vmatprep.subr.mxu0 0.0
    %7449 = vmatpush1.msra.mxu0 0.0
    %7450 = vmatprep.subr.mxu0 0.0
    %7451 = vmatpush1.msra.mxu0 0.0
    %7452 = vmatprep.subr.mxu0 0.0
    %7453 = vmatpush1.msra.mxu0 0.0
    %7454 = vmatprep.subr.mxu0 0.0
    %7455 = vmatpush1.msra.mxu0 0.0
    %7456 = vmatprep.subr.mxu0 0.0
    %7457 = vmatpush1.msra.mxu0 0.0
    %7458 = vmatprep.subr.mxu0 0.0
    %7459 = vmatpush1.msra.mxu0 0.0
    %7460 = vmatprep.subr.mxu0 0.0
    %7461 = vmatpush1.msra.mxu0 0.0
    %7462 = vmatprep.subr.mxu0 0.0
    %7463 = vmatpush1.msra.mxu0 0.0
    %7464 = vmatprep.subr.mxu0 0.0
    %7465 = vmatpush1.msra.mxu0 0.0
    %7466 = vmatprep.subr.mxu0 0.0
    %7467 = vmatpush1.msra.mxu0 0.0
    %7468 = vmatprep.subr.mxu0 0.0
    %7469 = vmatpush1.msra.mxu0 0.0
    %7470 = vmatprep.subr.mxu0 0.0
    %7471 = vmatpush1.msra.mxu0 0.0
    %7472 = vmatprep.subr.mxu0 0.0
    %7473 = vmatpush1.msra.mxu0 0.0
    %7474 = vmatprep.subr.mxu0 0.0
    %7475 = vmatpush1.msra.mxu0 0.0
    %7476 = vmatprep.subr.mxu0 0.0
    %7477 = vmatpush1.msra.mxu0 0.0
    %7478 = vmatprep.subr.mxu0 0.0
    %7479 = vmatpush1.msra.mxu0 0.0
    %7480 = vmatprep.subr.mxu0 0.0
    %7481 = vmatpush1.msra.mxu0 0.0
    %7482 = vmatprep.subr.mxu0 0.0
    %7483 = vmatpush1.msra.mxu0 0.0
    %7484 = vmatprep.subr.mxu0 0.0
    %7485 = vmatpush1.msra.mxu0 0.0
    %7486 = vmatprep.mubr.f32.mxu0 0.0
    %7487 = vmatmul.mubr.f32.gmra.mrb[0].mxu0 %v7420
    %v7488 = vpop.f32.mrb[0].mxu0
    %v7489 = vadd.f32 0.0, %v7488
    %v7490 = vpop.f32.mrb[0].mxu0
    %7491 = vdwg.mxu0
    %v7493 = vsel %vm6465, %v7334, 0
    %7495 = vmatprep.subr.mxu0 0.0
    %7496 = vmatpush1.msra.mxu0 %v7337
    %7497 = vmatprep.subr.mxu0 0.0
    %7498 = vmatpush1.msra.mxu0 %v7338
    %7499 = vmatprep.subr.mxu0 0.0
    %7500 = vmatpush1.msra.mxu0 %v7339
    %7501 = vmatprep.subr.mxu0 0.0
    %7502 = vmatpush1.msra.mxu0 0.0
    %7503 = vmatprep.subr.mxu0 0.0
    %7504 = vmatpush1.msra.mxu0 0.0
    %7505 = vmatprep.subr.mxu0 0.0
    %7506 = vmatpush1.msra.mxu0 0.0
    %7507 = vmatprep.subr.mxu0 0.0
    %7508 = vmatpush1.msra.mxu0 0.0
    %7509 = vmatprep.subr.mxu0 0.0
    %7510 = vmatpush1.msra.mxu0 0.0
    %7511 = vmatprep.subr.mxu0 0.0
    %7512 = vmatpush1.msra.mxu0 0.0
    %7513 = vmatprep.subr.mxu0 0.0
    %7514 = vmatpush1.msra.mxu0 0.0
    %7515 = vmatprep.subr.mxu0 0.0
    %7516 = vmatpush1.msra.mxu0 0.0
    %7517 = vmatprep.subr.mxu0 0.0
    %7518 = vmatpush1.msra.mxu0 0.0
    %7519 = vmatprep.subr.mxu0 0.0
    %7520 = vmatpush1.msra.mxu0 0.0
    %7521 = vmatprep.subr.mxu0 0.0
    %7522 = vmatpush1.msra.mxu0 0.0
    %7523 = vmatprep.subr.mxu0 0.0
    %7524 = vmatpush1.msra.mxu0 0.0
    %7525 = vmatprep.subr.mxu0 0.0
    %7526 = vmatpush1.msra.mxu0 0.0
    %7527 = vmatprep.subr.mxu0 0.0
    %7528 = vmatpush1.msra.mxu0 0.0
    %7529 = vmatprep.subr.mxu0 0.0
    %7530 = vmatpush1.msra.mxu0 0.0
    %7531 = vmatprep.subr.mxu0 0.0
    %7532 = vmatpush1.msra.mxu0 0.0
    %7533 = vmatprep.subr.mxu0 0.0
    %7534 = vmatpush1.msra.mxu0 0.0
    %7535 = vmatprep.subr.mxu0 0.0
    %7536 = vmatpush1.msra.mxu0 0.0
    %7537 = vmatprep.subr.mxu0 0.0
    %7538 = vmatpush1.msra.mxu0 0.0
    %7539 = vmatprep.subr.mxu0 0.0
    %7540 = vmatpush1.msra.mxu0 0.0
    %7541 = vmatprep.subr.mxu0 0.0
    %7542 = vmatpush1.msra.mxu0 0.0
    %7543 = vmatprep.subr.mxu0 0.0
    %7544 = vmatpush1.msra.mxu0 0.0
    %7545 = vmatprep.subr.mxu0 0.0
    %7546 = vmatpush1.msra.mxu0 0.0
    %7547 = vmatprep.subr.mxu0 0.0
    %7548 = vmatpush1.msra.mxu0 0.0
    %7549 = vmatprep.subr.mxu0 0.0
    %7550 = vmatpush1.msra.mxu0 0.0
    %7551 = vmatprep.subr.mxu0 0.0
    %7552 = vmatpush1.msra.mxu0 0.0
    %7553 = vmatprep.subr.mxu0 0.0
    %7554 = vmatpush1.msra.mxu0 0.0
    %7555 = vmatprep.subr.mxu0 0.0
    %7556 = vmatpush1.msra.mxu0 0.0
    %7557 = vmatprep.subr.mxu0 0.0
    %7558 = vmatpush1.msra.mxu0 0.0
    %7559 = vmatprep.mubr.f32.mxu0 0.0
    %7560 = vmatmul.mubr.f32.gmra.mrb[0].mxu0 %v7493
    %v7561 = vpop.f32.mrb[0].mxu0
    %v7562 = vadd.f32 %v7489, %v7561
    %v7563 = vpop.f32.mrb[0].mxu0
    %7564 = vdwg.mxu0
    %s7565 = scalar_lea.vmem %s23, 16
    %v7566 = vld [vmem:[%s7565] sm:$0xff]
    %v7568 = vsel %vm6158, %v7566, 0
    %7570 = vmatprep.subr.mxu0 0.0
    %7571 = vmatpush1.msra.mxu0 %v7257
    %7572 = vmatprep.subr.mxu0 0.0
    %7573 = vmatpush1.msra.mxu0 %v7258
    %7574 = vmatprep.subr.mxu0 0.0
    %7575 = vmatpush1.msra.mxu0 %v7259
    %7576 = vmatprep.subr.mxu0 0.0
    %7577 = vmatpush1.msra.mxu0 %v7260
    %7578 = vmatprep.subr.mxu0 0.0
    %7579 = vmatpush1.msra.mxu0 %v7261
    %7580 = vmatprep.subr.mxu0 0.0
    %7581 = vmatpush1.msra.mxu0 0.0
    %7582 = vmatprep.subr.mxu0 0.0
    %7583 = vmatpush1.msra.mxu0 0.0
    %7584 = vmatprep.subr.mxu0 0.0
    %7585 = vmatpush1.msra.mxu0 0.0
    %7586 = vmatprep.subr.mxu0 0.0
    %7587 = vmatpush1.msra.mxu0 0.0
    %7588 = vmatprep.subr.mxu0 0.0
    %7589 = vmatpush1.msra.mxu0 0.0
    %7590 = vmatprep.subr.mxu0 0.0
    %7591 = vmatpush1.msra.mxu0 0.0
    %7592 = vmatprep.subr.mxu0 0.0
    %7593 = vmatpush1.msra.mxu0 0.0
    %7594 = vmatprep.subr.mxu0 0.0
    %7595 = vmatpush1.msra.mxu0 0.0
    %7596 = vmatprep.subr.mxu0 0.0
    %7597 = vmatpush1.msra.mxu0 0.0
    %7598 = vmatprep.subr.mxu0 0.0
    %7599 = vmatpush1.msra.mxu0 0.0
    %7600 = vmatprep.subr.mxu0 0.0
    %7601 = vmatpush1.msra.mxu0 0.0
    %7602 = vmatprep.subr.mxu0 0.0
    %7603 = vmatpush1.msra.mxu0 0.0
    %7604 = vmatprep.subr.mxu0 0.0
    %7605 = vmatpush1.msra.mxu0 0.0
    %7606 = vmatprep.subr.mxu0 0.0
    %7607 = vmatpush1.msra.mxu0 0.0
    %7608 = vmatprep.subr.mxu0 0.0
    %7609 = vmatpush1.msra.mxu0 0.0
    %7610 = vmatprep.subr.mxu0 0.0
    %7611 = vmatpush1.msra.mxu0 0.0
    %7612 = vmatprep.subr.mxu0 0.0
    %7613 = vmatpush1.msra.mxu0 0.0
    %7614 = vmatprep.subr.mxu0 0.0
    %7615 = vmatpush1.msra.mxu0 0.0
    %7616 = vmatprep.subr.mxu0 0.0
    %7617 = vmatpush1.msra.mxu0 0.0
    %7618 = vmatprep.subr.mxu0 0.0
    %7619 = vmatpush1.msra.mxu0 0.0
    %7620 = vmatprep.subr.mxu0 0.0
    %7621 = vmatpush1.msra.mxu0 0.0
    %7622 = vmatprep.subr.mxu0 0.0
    %7623 = vmatpush1.msra.mxu0 0.0
    %7624 = vmatprep.subr.mxu0 0.0
    %7625 = vmatpush1.msra.mxu0 0.0
    %7626 = vmatprep.subr.mxu0 0.0
    %7627 = vmatpush1.msra.mxu0 0.0
    %7628 = vmatprep.subr.mxu0 0.0
    %7629 = vmatpush1.msra.mxu0 0.0
    %7630 = vmatprep.subr.mxu0 0.0
    %7631 = vmatpush1.msra.mxu0 0.0
    %7632 = vmatprep.subr.mxu0 0.0
    %7633 = vmatpush1.msra.mxu0 0.0
    %7634 = vmatprep.mubr.f32.mxu0 0.0
    %7635 = vmatmul.mubr.f32.gmra.mrb[0].mxu0 %v7568
    %v7636 = vpop.f32.mrb[0].mxu0
    %v7637 = vadd.f32 0.0, %v7636
    %v7638 = vpop.f32.mrb[0].mxu0
    %7639 = vdwg.mxu0
    %s7640 = scalar_lea.vmem %s24, 48
    %v7641 = vld [vmem:[%s7640] sm:$0xff]
    %v7642 = vld [vmem:[%s7640 + $0x8] sm:$0xff]
    %v7643 = vld [vmem:[%s7640 + $0x10] sm:$0xff]
    %v7645 = vsel %vm6465, %v7637, 0
    %7647 = vmatprep.subr.mxu0 0.0
    %7648 = vmatpush1.msra.mxu0 %v7641
    %7649 = vmatprep.subr.mxu0 0.0
    %7650 = vmatpush1.msra.mxu0 %v7642
    %7651 = vmatprep.subr.mxu0 0.0
    %7652 = vmatpush1.msra.mxu0 %v7643
    %7653 = vmatprep.subr.mxu0 0.0
    %7654 = vmatpush1.msra.mxu0 0.0
    %7655 = vmatprep.subr.mxu0 0.0
    %7656 = vmatpush1.msra.mxu0 0.0
    %7657 = vmatprep.subr.mxu0 0.0
    %7658 = vmatpush1.msra.mxu0 0.0
    %7659 = vmatprep.subr.mxu0 0.0
    %7660 = vmatpush1.msra.mxu0 0.0
    %7661 = vmatprep.subr.mxu0 0.0
    %7662 = vmatpush1.msra.mxu0 0.0
    %7663 = vmatprep.subr.mxu0 0.0
    %7664 = vmatpush1.msra.mxu0 0.0
    %7665 = vmatprep.subr.mxu0 0.0
    %7666 = vmatpush1.msra.mxu0 0.0
    %7667 = vmatprep.subr.mxu0 0.0
    %7668 = vmatpush1.msra.mxu0 0.0
    %7669 = vmatprep.subr.mxu0 0.0
    %7670 = vmatpush1.msra.mxu0 0.0
    %7671 = vmatprep.subr.mxu0 0.0
    %7672 = vmatpush1.msra.mxu0 0.0
    %7673 = vmatprep.subr.mxu0 0.0
    %7674 = vmatpush1.msra.mxu0 0.0
    %7675 = vmatprep.subr.mxu0 0.0
    %7676 = vmatpush1.msra.mxu0 0.0
    %7677 = vmatprep.subr.mxu0 0.0
    %7678 = vmatpush1.msra.mxu0 0.0
    %7679 = vmatprep.subr.mxu0 0.0
    %7680 = vmatpush1.msra.mxu0 0.0
    %7681 = vmatprep.subr.mxu0 0.0
    %7682 = vmatpush1.msra.mxu0 0.0
    %7683 = vmatprep.subr.mxu0 0.0
    %7684 = vmatpush1.msra.mxu0 0.0
    %7685 = vmatprep.subr.mxu0 0.0
    %7686 = vmatpush1.msra.mxu0 0.0
    %7687 = vmatprep.subr.mxu0 0.0
    %7688 = vmatpush1.msra.mxu0 0.0
    %7689 = vmatprep.subr.mxu0 0.0
    %7690 = vmatpush1.msra.mxu0 0.0
    %7691 = vmatprep.subr.mxu0 0.0
    %7692 = vmatpush1.msra.mxu0 0.0
    %7693 = vmatprep.subr.mxu0 0.0
    %7694 = vmatpush1.msra.mxu0 0.0
    %7695 = vmatprep.subr.mxu0 0.0
    %7696 = vmatpush1.msra.mxu0 0.0
    %7697 = vmatprep.subr.mxu0 0.0
    %7698 = vmatpush1.msra.mxu0 0.0
    %7699 = vmatprep.subr.mxu0 0.0
    %7700 = vmatpush1.msra.mxu0 0.0
    %7701 = vmatprep.subr.mxu0 0.0
    %7702 = vmatpush1.msra.mxu0 0.0
    %7703 = vmatprep.subr.mxu0 0.0
    %7704 = vmatpush1.msra.mxu0 0.0
    %7705 = vmatprep.subr.mxu0 0.0
    %7706 = vmatpush1.msra.mxu0 0.0
    %7707 = vmatprep.subr.mxu0 0.0
    %7708 = vmatpush1.msra.mxu0 0.0
    %7709 = vmatprep.subr.mxu0 0.0
    %7710 = vmatpush1.msra.mxu0 0.0
    %7711 = vmatprep.mubr.f32.mxu0 0.0
    %7712 = vmatmul.mubr.f32.gmra.mrb[0].mxu0 %v7645
    %v7713 = vpop.f32.mrb[0].mxu0
    %v7714 = vadd.f32 0.0, %v7713
    %v7715 = vpop.f32.mrb[0].mxu0
    %7716 = vdwg.mxu0
    %v7717 = vadd.f32 %v7562, %v7714
    %v7719 = vlaneseq
    %v7720 = vshrl.u32 %v7719, 7
    %v7721 = vsub.s32 0, %v7720
    %v7722 = vrot.slane %v7262, %v7721
    %v7724 = vadd.f32 %v7717, %v7722
    %v7725 = vsub.f32 0.0, %v7724
    %v7726 = vmul.f32 %v7725, 1.442695
    %v7727 = vpow.pop %v7726
    %v7728 = vadd.f32 %v7727, 1.0
    %v7729 = vrcp.pop %v7728
    %v7730 = vmul.f32 1.0, %v7729
    %vm7731 = vcmask 130048
    %7732 = vst.msk [vmem:[#allocation3] sm:$0xff] %vm7731, %v7730
    // Predicated region
    $region106: #{tpu_custom_call.1} parent=1 // pred_check
      _
    $region107: #{tpu_custom_call.1} parent=1 // pred_check_branch
      %7734 = sbr.rel (0) target = $region109
    $region108: #{tpu_custom_call.1} parent=1 // pred_region
      %s7736 = ssub.s32 128, 128
      %7737 = vsyncadd [#allocation4], %s7736
      %s7739 = sshll.u32 [#allocation3], 4
      %s7740 = int_to_ptr.vmem [resolvable:$true] %s7739
      %7742 = dma.vmem_to_hbm [thread:$0]  %s7740, 128, %s26, [#allocation4]
    $region109: #{tpu_custom_call.1} parent=1 // pred_fallthru
      _
    // Predicated region
    $region110: #{tpu_custom_call.1} parent=1 // pred_check
      _
    $region111: #{tpu_custom_call.1} parent=1 // pred_check_branch
      %7744 = sbr.rel (0) target = $region113
    $region112: #{tpu_custom_call.1} parent=1 // pred_region
      %7745 = dma.done [#allocation4], 128
    $region113: #{tpu_custom_call.1} parent=1 // pred_fallthru
      _
    %7746 = vsyncpa [#allocation4], 1

</llo_original>
